<compile_context>
chip_gen: v7x
topology: tpu7x:2x2x1
jax: 0.10.0
libtpu: 0.0.40
codegen_flags: <defaults>
</compile_context>

<pallas_src>
import jax
import jax.numpy as jnp
from jax.experimental import pallas as pl
from jax.experimental.pallas import tpu as pltpu

D_IN = 1
H1 = 5000
H2 = 500
D_OUT = 1

# H1 is zero-padded to NC * CK so the fused fc1/fc3 loop uses clean, aligned chunks;
# H2 is zero-padded to a lane multiple.  Zero pads contribute exactly 0 to the output.
CK = 1024
NC = 5
H1P = NC * CK          # 5120
H2P = 512


def mlp_kernel(x_ref, w1_ref, b1_ref, w3_ref, b3_ref, w2_ref, b2_ref, o_ref):
    cdt = w1_ref.dtype                        # bf16 on v6e/v7x, f32 on v5e / unknown
    xc = x_ref[...].astype(cdt)               # [tb, 1]
    nc = w3_ref.shape[0]

    # Fused fc1 + tanh + fc3: chunk the 5000-wide hidden layer so the [tb, H1] temp is
    # never materialized.  fc1 has K == 1, so it is a VPU broadcast multiply-add, not an
    # MXU pass; the fc3 chunk matmul is bf16 operands with f32 MXU accumulation.
    acc = None
    for c in range(nc):                       # static unroll, NC == 5
        z1 = xc * w1_ref[c] + b1_ref[c]                                    # [tb, CK]
        h1 = jnp.tanh(z1.astype(jnp.float32)).astype(jnp.bfloat16)         # [tb, CK] bf16
        p = jnp.dot(h1, w3_ref[c], preferred_element_type=jnp.float32)     # [tb, H2P] f32
        acc = p if acc is None else acc + p

    h2 = jnp.tanh(acc + b3_ref[...])                                       # [tb, H2P] f32

    # fc2 has N == 1: VPU multiply + lane reduction, keeping the MXU free.
    # The 50x and the input normalization are already folded into the weights.
    o_ref[...] = jnp.sum(h2 * w2_ref[...], axis=-1, keepdims=True) + b2_ref[...]


def _round_up(x, m):
    return ((x + m - 1) // m) * m


def _tpu_config():
    """Per-generation (batch_tile, fc1 compute dtype, vmem_limit_bytes, two_tensorcores)."""
    try:
        kind = jax.devices()[0].device_kind.lower()
    except Exception:
        kind = ""
    if ("v5e" in kind) or ("v5 lite" in kind) or ("v5lite" in kind):
        # 128-wide MXU: tb=512 ~80% MXU efficiency; no bf16 VPU/EUP -> f32 fc1;
        # 128 MiB physical VMEM -> generous scoped limit.
        return 512, jnp.float32, 96 << 20, False
    if ("v6" in kind) or ("trillium" in kind):
        # 256-wide MXU: tb=1024 ~80% efficiency; bf16 VPU/EUP available; 128 MiB VMEM.
        return 1024, jnp.bfloat16, 96 << 20, False
    if "v7" in kind:
        # 64 MiB VMEM/TC and 2 TCs/chip: cap the scoped limit, keep bf16 intermediates.
        return 1024, jnp.bfloat16, 56 << 20, True
    # Unknown chip: conservative defaults.
    return 256, jnp.float32, 48 << 20, False


def _prepare_params(params, *, compute_dtype):
    """One-time host-side weight prep: fold constants, pad, chunk, cast."""
    w1, b1, w3, b3, w2, b2 = params
    # Fold (x - 25) / 5 into fc1 and the trailing 50x into fc2.
    w1f = w1 * 0.2
    b1f = b1 - 5.0 * w1
    w2f = 50.0 * w2
    b2f = 50.0 * b2
    # Zero-pad H1 -> H1P and H2 -> H2P (pads contribute exactly 0).
    w1p = jnp.pad(w1f, ((0, 0), (0, H1P - H1)))
    b1p = jnp.pad(b1f, ((0, 0), (0, H1P - H1)))
    w3p = jnp.pad(w3, ((0, H1P - H1), (0, H2P - H2)))
    b3p = jnp.pad(b3, ((0, 0), (0, H2P - H2)))
    w2p = jnp.pad(w2f.reshape(1, H2), ((0, 0), (0, H2P - H2)))
    # Chunk H1 for the fused fc1/fc3 loop; bf16 for the dominant weight.
    w1c = w1p.reshape(NC, 1, CK).astype(compute_dtype)
    b1c = b1p.reshape(NC, 1, CK).astype(compute_dtype)
    w3c = w3p.reshape(NC, CK, H2P).astype(jnp.bfloat16)
    return w1c, b1c, w3c, b3p, w2p, b2f


def my_network_forward(x, params, *, tb=None):
    """x: [B, 1] float32  ->  [B, 1] float32."""
    B = x.shape[0]

    tb_default, cdt, vmem_limit, two_tc = _tpu_config()
    auto_tb = tb is None
    if auto_tb:
        tb = tb_default
    # Never use a tile bigger than the (sublane-aligned) batch itself.
    tb = min(tb, _round_up(B, 8))
    # v7x: if the whole batch would fit a single tile but is big enough that compute
    # (not the one-time weight load) dominates, split it so both TensorCores get work.
    if auto_tb and two_tc and B >= 512 and _round_up(B, 8) <= tb_default:
        tb = _round_up(-(-B // 2), 8)

    num_tiles = pl.cdiv(B, tb)
    B_pad = num_tiles * tb
    if B_pad != B:
        x = jnp.pad(x, ((0, B_pad - B), (0, 0)))

    w1c, b1c, w3c, b3p, w2p, b2f = _prepare_params(params, compute_dtype=cdt)

    const2 = lambda i: (0, 0)      # weights/biases: same block every grid step...
    const3 = lambda i: (0, 0, 0)
    single = pl.Buffered(1)        # ...so don't burn VMEM double-buffering them.

    out = pl.pallas_call(
        mlp_kernel,
        out_shape=jax.ShapeDtypeStruct((B_pad, D_OUT), jnp.float32),
        grid_spec=pltpu.PrefetchScalarGridSpec(
            num_scalar_prefetch=0,
            grid=(num_tiles,),
            in_specs=[
                pl.BlockSpec((tb, D_IN), lambda i: (i, 0)),                   # x tile
                pl.BlockSpec((NC, 1, CK), const3, pipeline_mode=single),      # w1 (folded, chunked)
                pl.BlockSpec((NC, 1, CK), const3, pipeline_mode=single),      # b1 (folded, chunked)
                pl.BlockSpec((NC, CK, H2P), const3, pipeline_mode=single),    # w3 (bf16, chunked)
                pl.BlockSpec((1, H2P), const2, pipeline_mode=single),         # b3
                pl.BlockSpec((1, H2P), const2, pipeline_mode=single),         # w2 row (50x folded)
                pl.BlockSpec((1, D_OUT), const2, pipeline_mode=single),       # b2 (50x folded)
            ],
            out_specs=pl.BlockSpec((tb, D_OUT), lambda i: (i, 0)),
        ),
        compiler_params=pltpu.CompilerParams(
            dimension_semantics=("parallel",),   # batch tiles split across TCs on v7x
            vmem_limit_bytes=vmem_limit,         # generation-gated (see _tpu_config)
        ),
    )(x, w1c, b1c, w3c, b3p, w2p, b2f)

    return out[:B]


def init_params(key):
    """Deterministic parameter init (uniform, roughly like PyTorch Linear default)."""
    k1, k2, k3, k4, k5, k6 = jax.random.split(key, 6)

    def lin(kw, kb, fan_in, fan_out):
        bound = 1.0 / jnp.sqrt(jnp.float32(fan_in))
        w = jax.random.uniform(kw, (fan_in, fan_out), jnp.float32, -bound, bound)
        b = jax.random.uniform(kb, (1, fan_out), jnp.float32, -bound, bound)
        return w, b

    w1, b1 = lin(k1, k2, D_IN, H1)
    w3, b3 = lin(k3, k4, H1, H2)
    w2, b2 = lin(k5, k6, H2, D_OUT)
    return (w1, b1, w3, b3, w2, b2)


def reference_forward(x, params):
    """Pure-f32 reference matching the PyTorch module."""
    w1, b1, w3, b3, w2, b2 = params
    h = jnp.tanh((x - 25.0) / 5.0 @ w1 + b1)
    h = jnp.tanh(h @ w3 + b3)
    return 50.0 * (h @ w2 + b2)


def reference_forward_mirror(x, params, compute_dtype):
    """Reference mirroring the kernel's dtype path (folded consts, low-precision fc1, bf16 matmul)."""
    w1, b1, w3, b3, w2, b2 = params
    w1f = (w1 * 0.2).astype(compute_dtype)
    b1f = (b1 - 5.0 * w1).astype(compute_dtype)
    z1 = x.astype(compute_dtype) * w1f + b1f            # D_IN == 1 -> broadcast == matmul
    h1 = jnp.tanh(z1.astype(jnp.float32)).astype(jnp.bfloat16)
    z2 = jnp.dot(h1, w3.astype(jnp.bfloat16), preferred_element_type=jnp.float32) + b3
    h2 = jnp.tanh(z2)
    return jnp.sum(h2 * (50.0 * w2).reshape(1, H2), axis=-1, keepdims=True) + 50.0 * b2


if __name__ == "__main__":
    key = jax.random.PRNGKey(0)
    kx, kp = jax.random.split(key)

    B = 8
    # x is originally a 1-D batch of scalars; x.unsqueeze(1) -> [B, 1]
    x = jax.random.uniform(kx, (B,), jnp.float32, 0.0, 50.0)[:, None]

    params = init_params(kp)

    out = my_network_forward(x, params)
    out = jax.block_until_ready(out)
    assert out.shape == (B, 1)

    # Check against a reference that takes the same reduced-precision path as the kernel.
    _, cdt, _, _ = _tpu_config()
    ref_mirror = reference_forward_mirror(x, params, cdt)
    assert jnp.allclose(out, ref_mirror, atol=5e-1, rtol=5e-2), (out, ref_mirror)

    # Loose check against the pure-f32 PyTorch-equivalent reference
    # (bf16 rounding on the 5000-term matmul + bf16 fc1 gives ~1e-1-scale drift after the 50x).
    ref_f32 = reference_forward(x, params)
    assert jnp.allclose(out, ref_f32, atol=2.0, rtol=5e-2), (out, ref_f32)

    print("KERNEL_OK")
</pallas_src>

<mosaic_0001>
module attributes {stable_mosaic.version = 11 : i64} {
  func.func @mlp_kernel(%arg0: i32, %arg1: memref<8x1xf32, #tpu.memory_space<vmem>>, %arg2: memref<5x1x1024xf32, #tpu.memory_space<vmem>>, %arg3: memref<5x1x1024xf32, #tpu.memory_space<vmem>>, %arg4: memref<5x1024x512xbf16, #tpu.memory_space<vmem>>, %arg5: memref<1x512xf32, #tpu.memory_space<vmem>>, %arg6: memref<1x512xf32, #tpu.memory_space<vmem>>, %arg7: memref<1x1xf32, #tpu.memory_space<vmem>>, %arg8: memref<8x1xf32, #tpu.memory_space<vmem>>) attributes {dimension_semantics = [#tpu.dimension_semantics<parallel>], iteration_bounds = array<i64: 1>, scalar_prefetch = 0 : i64, scratch_operands = 0 : i64, tpu.core_type = #tpu.core_type<tc>, window_params = [{transform_indices = @transform_0, window_bounds = array<i64: 8, 1>}, {pipeline_mode = #tpu.pipeline_mode<synchronous>, transform_indices = @transform_1, window_bounds = array<i64: 5, 1, 1024>}, {pipeline_mode = #tpu.pipeline_mode<synchronous>, transform_indices = @transform_2, window_bounds = array<i64: 5, 1, 1024>}, {pipeline_mode = #tpu.pipeline_mode<synchronous>, transform_indices = @transform_3, window_bounds = array<i64: 5, 1024, 512>}, {pipeline_mode = #tpu.pipeline_mode<synchronous>, transform_indices = @transform_4, window_bounds = array<i64: 1, 512>}, {pipeline_mode = #tpu.pipeline_mode<synchronous>, transform_indices = @transform_5, window_bounds = array<i64: 1, 512>}, {pipeline_mode = #tpu.pipeline_mode<synchronous>, transform_indices = @transform_6, window_bounds = array<i64: 1, 1>}, {transform_indices = @transform_7, window_bounds = array<i64: 8, 1>}]} {
    %c0 = arith.constant 0 : index
    %c0_0 = arith.constant 0 : index
    %0 = vector.load %arg1[%c0, %c0_0] : memref<8x1xf32, #tpu.memory_space<vmem>>, vector<8x1xf32>
    %c0_1 = arith.constant 0 : index
    %c0_2 = arith.constant 0 : index
    %c0_3 = arith.constant 0 : index
    %1 = vector.load %arg2[%c0_1, %c0_2, %c0_3] : memref<5x1x1024xf32, #tpu.memory_space<vmem>>, vector<1x1x1024xf32>
    %2 = vector.shape_cast %1 : vector<1x1x1024xf32> to vector<1x1024xf32>
    %3 = vector.broadcast %0 : vector<8x1xf32> to vector<8x1024xf32>
    %4 = vector.broadcast %2 : vector<1x1024xf32> to vector<8x1024xf32>
    %5 = arith.mulf %3, %4 : vector<8x1024xf32>
    %c0_4 = arith.constant 0 : index
    %c0_5 = arith.constant 0 : index
    %c0_6 = arith.constant 0 : index
    %6 = vector.load %arg3[%c0_4, %c0_5, %c0_6] : memref<5x1x1024xf32, #tpu.memory_space<vmem>>, vector<1x1x1024xf32>
    %7 = vector.shape_cast %6 : vector<1x1x1024xf32> to vector<1x1024xf32>
    %8 = vector.broadcast %7 : vector<1x1024xf32> to vector<8x1024xf32>
    %9 = arith.addf %5, %8 : vector<8x1024xf32>
    %10 = math.tanh %9 : vector<8x1024xf32>
    %11 = arith.truncf %10 : vector<8x1024xf32> to vector<8x1024xbf16>
    %c0_7 = arith.constant 0 : index
    %c0_8 = arith.constant 0 : index
    %c0_9 = arith.constant 0 : index
    %12 = vector.load %arg4[%c0_7, %c0_8, %c0_9] : memref<5x1024x512xbf16, #tpu.memory_space<vmem>>, vector<1x1024x512xbf16>
    %13 = vector.shape_cast %12 : vector<1x1024x512xbf16> to vector<1024x512xbf16>
    %cst = arith.constant dense<0.000000e+00> : vector<8x512xf32>
    %14 = tpu.matmul %11, %13, %cst {dimension_numbers = #tpu.dot_dimension_numbers<[1], [0], [0], [1], [0, 0, 1, 1], [], []>} : vector<8x1024xbf16>, vector<1024x512xbf16>, vector<8x512xf32> -> vector<8x512xf32>
    %c1 = arith.constant 1 : index
    %c0_10 = arith.constant 0 : index
    %c0_11 = arith.constant 0 : index
    %15 = vector.load %arg2[%c1, %c0_10, %c0_11] : memref<5x1x1024xf32, #tpu.memory_space<vmem>>, vector<1x1x1024xf32>
    %16 = vector.shape_cast %15 : vector<1x1x1024xf32> to vector<1x1024xf32>
    %17 = vector.broadcast %0 : vector<8x1xf32> to vector<8x1024xf32>
    %18 = vector.broadcast %16 : vector<1x1024xf32> to vector<8x1024xf32>
    %19 = arith.mulf %17, %18 : vector<8x1024xf32>
    %c1_12 = arith.constant 1 : index
    %c0_13 = arith.constant 0 : index
    %c0_14 = arith.constant 0 : index
    %20 = vector.load %arg3[%c1_12, %c0_13, %c0_14] : memref<5x1x1024xf32, #tpu.memory_space<vmem>>, vector<1x1x1024xf32>
    %21 = vector.shape_cast %20 : vector<1x1x1024xf32> to vector<1x1024xf32>
    %22 = vector.broadcast %21 : vector<1x1024xf32> to vector<8x1024xf32>
    %23 = arith.addf %19, %22 : vector<8x1024xf32>
    %24 = math.tanh %23 : vector<8x1024xf32>
    %25 = arith.truncf %24 : vector<8x1024xf32> to vector<8x1024xbf16>
    %c1_15 = arith.constant 1 : index
    %c0_16 = arith.constant 0 : index
    %c0_17 = arith.constant 0 : index
    %26 = vector.load %arg4[%c1_15, %c0_16, %c0_17] : memref<5x1024x512xbf16, #tpu.memory_space<vmem>>, vector<1x1024x512xbf16>
    %27 = vector.shape_cast %26 : vector<1x1024x512xbf16> to vector<1024x512xbf16>
    %cst_18 = arith.constant dense<0.000000e+00> : vector<8x512xf32>
    %28 = tpu.matmul %25, %27, %cst_18 {dimension_numbers = #tpu.dot_dimension_numbers<[1], [0], [0], [1], [0, 0, 1, 1], [], []>} : vector<8x1024xbf16>, vector<1024x512xbf16>, vector<8x512xf32> -> vector<8x512xf32>
    %29 = arith.addf %14, %28 : vector<8x512xf32>
    %c2 = arith.constant 2 : index
    %c0_19 = arith.constant 0 : index
    %c0_20 = arith.constant 0 : index
    %30 = vector.load %arg2[%c2, %c0_19, %c0_20] : memref<5x1x1024xf32, #tpu.memory_space<vmem>>, vector<1x1x1024xf32>
    %31 = vector.shape_cast %30 : vector<1x1x1024xf32> to vector<1x1024xf32>
    %32 = vector.broadcast %0 : vector<8x1xf32> to vector<8x1024xf32>
    %33 = vector.broadcast %31 : vector<1x1024xf32> to vector<8x1024xf32>
    %34 = arith.mulf %32, %33 : vector<8x1024xf32>
    %c2_21 = arith.constant 2 : index
    %c0_22 = arith.constant 0 : index
    %c0_23 = arith.constant 0 : index
    %35 = vector.load %arg3[%c2_21, %c0_22, %c0_23] : memref<5x1x1024xf32, #tpu.memory_space<vmem>>, vector<1x1x1024xf32>
    %36 = vector.shape_cast %35 : vector<1x1x1024xf32> to vector<1x1024xf32>
    %37 = vector.broadcast %36 : vector<1x1024xf32> to vector<8x1024xf32>
    %38 = arith.addf %34, %37 : vector<8x1024xf32>
    %39 = math.tanh %38 : vector<8x1024xf32>
    %40 = arith.truncf %39 : vector<8x1024xf32> to vector<8x1024xbf16>
    %c2_24 = arith.constant 2 : index
    %c0_25 = arith.constant 0 : index
    %c0_26 = arith.constant 0 : index
    %41 = vector.load %arg4[%c2_24, %c0_25, %c0_26] : memref<5x1024x512xbf16, #tpu.memory_space<vmem>>, vector<1x1024x512xbf16>
    %42 = vector.shape_cast %41 : vector<1x1024x512xbf16> to vector<1024x512xbf16>
    %cst_27 = arith.constant dense<0.000000e+00> : vector<8x512xf32>
    %43 = tpu.matmul %40, %42, %cst_27 {dimension_numbers = #tpu.dot_dimension_numbers<[1], [0], [0], [1], [0, 0, 1, 1], [], []>} : vector<8x1024xbf16>, vector<1024x512xbf16>, vector<8x512xf32> -> vector<8x512xf32>
    %44 = arith.addf %29, %43 : vector<8x512xf32>
    %c3 = arith.constant 3 : index
    %c0_28 = arith.constant 0 : index
    %c0_29 = arith.constant 0 : index
    %45 = vector.load %arg2[%c3, %c0_28, %c0_29] : memref<5x1x1024xf32, #tpu.memory_space<vmem>>, vector<1x1x1024xf32>
    %46 = vector.shape_cast %45 : vector<1x1x1024xf32> to vector<1x1024xf32>
    %47 = vector.broadcast %0 : vector<8x1xf32> to vector<8x1024xf32>
    %48 = vector.broadcast %46 : vector<1x1024xf32> to vector<8x1024xf32>
    %49 = arith.mulf %47, %48 : vector<8x1024xf32>
    %c3_30 = arith.constant 3 : index
    %c0_31 = arith.constant 0 : index
    %c0_32 = arith.constant 0 : index
    %50 = vector.load %arg3[%c3_30, %c0_31, %c0_32] : memref<5x1x1024xf32, #tpu.memory_space<vmem>>, vector<1x1x1024xf32>
    %51 = vector.shape_cast %50 : vector<1x1x1024xf32> to vector<1x1024xf32>
    %52 = vector.broadcast %51 : vector<1x1024xf32> to vector<8x1024xf32>
    %53 = arith.addf %49, %52 : vector<8x1024xf32>
    %54 = math.tanh %53 : vector<8x1024xf32>
    %55 = arith.truncf %54 : vector<8x1024xf32> to vector<8x1024xbf16>
    %c3_33 = arith.constant 3 : index
    %c0_34 = arith.constant 0 : index
    %c0_35 = arith.constant 0 : index
    %56 = vector.load %arg4[%c3_33, %c0_34, %c0_35] : memref<5x1024x512xbf16, #tpu.memory_space<vmem>>, vector<1x1024x512xbf16>
    %57 = vector.shape_cast %56 : vector<1x1024x512xbf16> to vector<1024x512xbf16>
    %cst_36 = arith.constant dense<0.000000e+00> : vector<8x512xf32>
    %58 = tpu.matmul %55, %57, %cst_36 {dimension_numbers = #tpu.dot_dimension_numbers<[1], [0], [0], [1], [0, 0, 1, 1], [], []>} : vector<8x1024xbf16>, vector<1024x512xbf16>, vector<8x512xf32> -> vector<8x512xf32>
    %59 = arith.addf %44, %58 : vector<8x512xf32>
    %c4 = arith.constant 4 : index
    %c0_37 = arith.constant 0 : index
    %c0_38 = arith.constant 0 : index
    %60 = vector.load %arg2[%c4, %c0_37, %c0_38] : memref<5x1x1024xf32, #tpu.memory_space<vmem>>, vector<1x1x1024xf32>
    %61 = vector.shape_cast %60 : vector<1x1x1024xf32> to vector<1x1024xf32>
    %62 = vector.broadcast %0 : vector<8x1xf32> to vector<8x1024xf32>
    %63 = vector.broadcast %61 : vector<1x1024xf32> to vector<8x1024xf32>
    %64 = arith.mulf %62, %63 : vector<8x1024xf32>
    %c4_39 = arith.constant 4 : index
    %c0_40 = arith.constant 0 : index
    %c0_41 = arith.constant 0 : index
    %65 = vector.load %arg3[%c4_39, %c0_40, %c0_41] : memref<5x1x1024xf32, #tpu.memory_space<vmem>>, vector<1x1x1024xf32>
    %66 = vector.shape_cast %65 : vector<1x1x1024xf32> to vector<1x1024xf32>
    %67 = vector.broadcast %66 : vector<1x1024xf32> to vector<8x1024xf32>
    %68 = arith.addf %64, %67 : vector<8x1024xf32>
    %69 = math.tanh %68 : vector<8x1024xf32>
    %70 = arith.truncf %69 : vector<8x1024xf32> to vector<8x1024xbf16>
    %c4_42 = arith.constant 4 : index
    %c0_43 = arith.constant 0 : index
    %c0_44 = arith.constant 0 : index
    %71 = vector.load %arg4[%c4_42, %c0_43, %c0_44] : memref<5x1024x512xbf16, #tpu.memory_space<vmem>>, vector<1x1024x512xbf16>
    %72 = vector.shape_cast %71 : vector<1x1024x512xbf16> to vector<1024x512xbf16>
    %cst_45 = arith.constant dense<0.000000e+00> : vector<8x512xf32>
    %73 = tpu.matmul %70, %72, %cst_45 {dimension_numbers = #tpu.dot_dimension_numbers<[1], [0], [0], [1], [0, 0, 1, 1], [], []>} : vector<8x1024xbf16>, vector<1024x512xbf16>, vector<8x512xf32> -> vector<8x512xf32>
    %74 = arith.addf %59, %73 : vector<8x512xf32>
    %c0_46 = arith.constant 0 : index
    %c0_47 = arith.constant 0 : index
    %75 = vector.load %arg5[%c0_46, %c0_47] : memref<1x512xf32, #tpu.memory_space<vmem>>, vector<1x512xf32>
    %76 = vector.broadcast %75 : vector<1x512xf32> to vector<8x512xf32>
    %77 = arith.addf %74, %76 : vector<8x512xf32>
    %78 = math.tanh %77 : vector<8x512xf32>
    %c0_48 = arith.constant 0 : index
    %c0_49 = arith.constant 0 : index
    %79 = vector.load %arg6[%c0_48, %c0_49] : memref<1x512xf32, #tpu.memory_space<vmem>>, vector<1x512xf32>
    %80 = vector.broadcast %79 : vector<1x512xf32> to vector<8x512xf32>
    %81 = arith.mulf %78, %80 : vector<8x512xf32>
    %cst_50 = arith.constant dense<0.000000e+00> : vector<8xf32>
    %82 = vector.multi_reduction <add>, %81, %cst_50 [1] : vector<8x512xf32> to vector<8xf32>
    %83 = vector.shape_cast %82 : vector<8xf32> to vector<8x1xf32>
    %c0_51 = arith.constant 0 : index
    %c0_52 = arith.constant 0 : index
    %84 = vector.load %arg7[%c0_51, %c0_52] : memref<1x1xf32, #tpu.memory_space<vmem>>, vector<1x1xf32>
    %85 = vector.broadcast %84 : vector<1x1xf32> to vector<8x1xf32>
    %86 = arith.addf %83, %85 : vector<8x1xf32>
    %c0_53 = arith.constant 0 : index
    %c0_54 = arith.constant 0 : index
    %87 = vector.load %arg8[%c0_53, %c0_54] : memref<8x1xf32, #tpu.memory_space<vmem>>, vector<8x1xf32>
    tpu.vector_store %arg8[%c0_53, %c0_54], %86 {strides = array<i32>} : memref<8x1xf32, #tpu.memory_space<vmem>>, vector<8x1xf32>,
    return
  }
  func.func @transform_0(%arg0: i32) -> (i32, i32) {
    %c0_i32 = arith.constant 0 : i32
    %c0_i32_0 = arith.constant 0 : i32
    return %arg0, %c0_i32 : i32, i32
  }
  func.func @transform_1(%arg0: i32) -> (i32, i32, i32) {
    %c0_i32 = arith.constant 0 : i32
    %c0_i32_0 = arith.constant 0 : i32
    %c0_i32_1 = arith.constant 0 : i32
    %c0_i32_2 = arith.constant 0 : i32
    return %c0_i32, %c0_i32_0, %c0_i32_1 : i32, i32, i32
  }
  func.func @transform_2(%arg0: i32) -> (i32, i32, i32) {
    %c0_i32 = arith.constant 0 : i32
    %c0_i32_0 = arith.constant 0 : i32
    %c0_i32_1 = arith.constant 0 : i32
    %c0_i32_2 = arith.constant 0 : i32
    return %c0_i32, %c0_i32_0, %c0_i32_1 : i32, i32, i32
  }
  func.func @transform_3(%arg0: i32) -> (i32, i32, i32) {
    %c0_i32 = arith.constant 0 : i32
    %c0_i32_0 = arith.constant 0 : i32
    %c0_i32_1 = arith.constant 0 : i32
    %c0_i32_2 = arith.constant 0 : i32
    return %c0_i32, %c0_i32_0, %c0_i32_1 : i32, i32, i32
  }
  func.func @transform_4(%arg0: i32) -> (i32, i32) {
    %c0_i32 = arith.constant 0 : i32
    %c0_i32_0 = arith.constant 0 : i32
    %c0_i32_1 = arith.constant 0 : i32
    return %c0_i32, %c0_i32_0 : i32, i32
  }
  func.func @transform_5(%arg0: i32) -> (i32, i32) {
    %c0_i32 = arith.constant 0 : i32
    %c0_i32_0 = arith.constant 0 : i32
    %c0_i32_1 = arith.constant 0 : i32
    return %c0_i32, %c0_i32_0 : i32, i32
  }
  func.func @transform_6(%arg0: i32) -> (i32, i32) {
    %c0_i32 = arith.constant 0 : i32
    %c0_i32_0 = arith.constant 0 : i32
    %c0_i32_1 = arith.constant 0 : i32
    return %c0_i32, %c0_i32_0 : i32, i32
  }
  func.func @transform_7(%arg0: i32) -> (i32, i32) {
    %c0_i32 = arith.constant 0 : i32
    %c0_i32_0 = arith.constant 0 : i32
    return %arg0, %c0_i32 : i32, i32
  }
}

</mosaic_0001>

<llo_original>
// kernel: tpu_custom_call.1
$region0: #{tpu_custom_call.1}
  #allocation0 [shape = 'u32[]', space=smem, size = 0x4, offset = 0x4, fixed_abs, tag = 'smem constant byte address 0x4 - core index']
  #allocation1 [shape = 'u32[144,128]{1,0:T(1,128)}', space=vmem, size = 0x12000, scoped, tag = 'internal scratch']
  #allocation2 [shape = 'f32[1,1]{1,0:T(1,128)S(1)}', space=vmem, size = 0x200, scoped, tag = 'scoped memory for tpu_custom_call.1']
  %s0 = inlined_call_operand.vmem [shape: f32[8,1], index: 0, kind: input, shape index: {}]
  %s1 = inlined_call_operand.hbm [shape: f32[5,1,1024], index: 1, kind: input, shape index: {}]
  %s2 = inlined_call_operand.hbm [shape: f32[5,1,1024], index: 2, kind: input, shape index: {}]
  %s3 = inlined_call_operand.hbm [shape: bf16[5,1024,512], index: 3, kind: input, shape index: {}]
  %s4 = inlined_call_operand.hbm [shape: f32[1,512], index: 4, kind: input, shape index: {}]
  %s5 = inlined_call_operand.hbm [shape: f32[1,512], index: 5, kind: input, shape index: {}]
  %s6 = inlined_call_operand.<no memory space> [shape: f32[1,1], index: 6, kind: input, shape index: {}]
  %s7 = inlined_call_operand.vmem [shape: f32[8,1], index: 7, kind: output, shape index: {}]
  %s8 = sld [smem:[#allocation0]]
  $region58: #{tpu_custom_call.1} parent=0
    _
  %s10 = ssub.s32 1, %s8
  %s11 = scalar_select 0, %s10, %s8
  %v12 = vstv %s6
  %13 = vst [vmem:[#allocation2] sm:$0x1] %v12
  $region1: #{tpu_custom_call.1} parent=0
    #allocation3 [shape = 'u8[20480]{0}', space=vmem, size = 0x5000, scoped, tag = 'input window, operand 1, single buffered']
    #allocation4 [shape = 's32[1]{0}', space=sflag, size = 0x4, scoped, tag = 'scoped memory for tpu_custom_call.1']
    #allocation5 [shape = 'u8[20480]{0}', space=vmem, size = 0x5000, scoped, tag = 'input window, operand 2, single buffered']
    #allocation6 [shape = 's32[1]{0}', space=sflag, size = 0x4, scoped, tag = 'scoped memory for tpu_custom_call.1']
    #allocation7 [shape = 'u8[5242880]{0}', space=vmem, size = 0x500000, scoped, tag = 'input window, operand 3, single buffered']
    #allocation8 [shape = 'u8[2048]{0}', space=vmem, size = 0x800, scoped, tag = 'input window, operand 4, single buffered']
    #allocation9 [shape = 's32[1]{0}', space=sflag, size = 0x4, scoped, tag = 'scoped memory for tpu_custom_call.1']
    #allocation10 [shape = 'u8[2048]{0}', space=vmem, size = 0x800, scoped, tag = 'input window, operand 5, single buffered']
    %14 = vsyncpa [#allocation4], 0
    %15 = vsyncpa [#allocation6], 0
    %16 = vsyncpa [#allocation9], 0
    // Predicated region
    $region2: #{tpu_custom_call.1} parent=1 // pred_check
      _
    $region3: #{tpu_custom_call.1} parent=1 // pred_check_branch
      %18 = sbr.rel (0) target = $region5
    $region4: #{tpu_custom_call.1} parent=1 // pred_region
      _
    $region5: #{tpu_custom_call.1} parent=1 // pred_fallthru
      _
    // Predicated region
    $region6: #{tpu_custom_call.1} parent=1 // pred_check
      _
    $region7: #{tpu_custom_call.1} parent=1 // pred_check_branch
      %20 = sbr.rel (0) target = $region9
    $region8: #{tpu_custom_call.1} parent=1 // pred_region
      %s22 = ssub.s32 640, 640
      %23 = vsyncadd [#allocation4], %s22
      %s24 = sshll.u32 [#allocation3], 4
      %s25 = int_to_ptr.vmem [resolvable:$true] %s24
      %30 = dma.hbm_to_vmem [thread:$0]  %s1, 640, %s25, [#allocation4], 128, 128, 8
    $region9: #{tpu_custom_call.1} parent=1 // pred_fallthru
      _
    // Predicated region
    $region10: #{tpu_custom_call.1} parent=1 // pred_check
      _
    $region11: #{tpu_custom_call.1} parent=1 // pred_check_branch
      %32 = sbr.rel (0) target = $region13
    $region12: #{tpu_custom_call.1} parent=1 // pred_region
      %s34 = ssub.s32 640, 640
      %35 = vsyncadd [#allocation6], %s34
      %s36 = sshll.u32 [#allocation5], 4
      %s37 = int_to_ptr.vmem [resolvable:$true] %s36
      %42 = dma.hbm_to_vmem [thread:$0]  %s2, 640, %s37, [#allocation6], 128, 128, 8
    $region13: #{tpu_custom_call.1} parent=1 // pred_fallthru
      _
    // Predicated region
    $region14: #{tpu_custom_call.1} parent=1 // pred_check
      _
    $region15: #{tpu_custom_call.1} parent=1 // pred_check_branch
      %44 = sbr.rel (0) target = $region17
    $region16: #{tpu_custom_call.1} parent=1 // pred_region
      %s46 = ssub.s32 163840, 163840
      %47 = vsyncadd [#allocation6], %s46
      %s48 = sshll.u32 [#allocation7], 4
      %s49 = int_to_ptr.vmem [resolvable:$true] %s48
      %54 = dma.hbm_to_vmem [thread:$0]  %s3, 163840, %s49, [#allocation6], 256, 256, 16
    $region17: #{tpu_custom_call.1} parent=1 // pred_fallthru
      _
    // Predicated region
    $region18: #{tpu_custom_call.1} parent=1 // pred_check
      _
    $region19: #{tpu_custom_call.1} parent=1 // pred_check_branch
      %56 = sbr.rel (0) target = $region21
    $region20: #{tpu_custom_call.1} parent=1 // pred_region
      %s58 = ssub.s32 64, 64
      %59 = vsyncadd [#allocation9], %s58
      %s61 = sshll.u32 [#allocation8], 4
      %s62 = int_to_ptr.vmem [resolvable:$true] %s61
      %64 = dma.hbm_to_vmem [thread:$0]  %s4, 64, %s62, [#allocation9]
    $region21: #{tpu_custom_call.1} parent=1 // pred_fallthru
      _
    // Predicated region
    $region22: #{tpu_custom_call.1} parent=1 // pred_check
      _
    $region23: #{tpu_custom_call.1} parent=1 // pred_check_branch
      %66 = sbr.rel (0) target = $region25
    $region24: #{tpu_custom_call.1} parent=1 // pred_region
      %s68 = ssub.s32 64, 64
      %69 = vsyncadd [#allocation9], %s68
      %s71 = sshll.u32 [#allocation10], 4
      %s72 = int_to_ptr.vmem [resolvable:$true] %s71
      %74 = dma.hbm_to_vmem [thread:$0]  %s5, 64, %s72, [#allocation9]
    $region25: #{tpu_custom_call.1} parent=1 // pred_fallthru
      _
    // Predicated region
    $region26: #{tpu_custom_call.1} parent=1 // pred_check
      _
    $region27: #{tpu_custom_call.1} parent=1 // pred_check_branch
      %76 = sbr.rel (0) target = $region29
    $region28: #{tpu_custom_call.1} parent=1 // pred_region
      _
    $region29: #{tpu_custom_call.1} parent=1 // pred_fallthru
      _
    // Predicated region
    $region30: #{tpu_custom_call.1} parent=1 // pred_check
      _
    $region31: #{tpu_custom_call.1} parent=1 // pred_check_branch
      %78 = sbr.rel (0) target = $region33
    $region32: #{tpu_custom_call.1} parent=1 // pred_region
      %79 = dma.done [#allocation4], 640
    $region33: #{tpu_custom_call.1} parent=1 // pred_fallthru
      _
    // Predicated region
    $region34: #{tpu_custom_call.1} parent=1 // pred_check
      _
    $region35: #{tpu_custom_call.1} parent=1 // pred_check_branch
      %81 = sbr.rel (0) target = $region37
    $region36: #{tpu_custom_call.1} parent=1 // pred_region
      %82 = dma.done [#allocation6], 640
    $region37: #{tpu_custom_call.1} parent=1 // pred_fallthru
      _
    // Predicated region
    $region38: #{tpu_custom_call.1} parent=1 // pred_check
      _
    $region39: #{tpu_custom_call.1} parent=1 // pred_check_branch
      %84 = sbr.rel (0) target = $region41
    $region40: #{tpu_custom_call.1} parent=1 // pred_region
      %85 = dma.done [#allocation6], 163840
    $region41: #{tpu_custom_call.1} parent=1 // pred_fallthru
      _
    // Predicated region
    $region42: #{tpu_custom_call.1} parent=1 // pred_check
      _
    $region43: #{tpu_custom_call.1} parent=1 // pred_check_branch
      %87 = sbr.rel (0) target = $region45
    $region44: #{tpu_custom_call.1} parent=1 // pred_region
      %88 = dma.done [#allocation9], 64
    $region45: #{tpu_custom_call.1} parent=1 // pred_fallthru
      _
    // Predicated region
    $region46: #{tpu_custom_call.1} parent=1 // pred_check
      _
    $region47: #{tpu_custom_call.1} parent=1 // pred_check_branch
      %90 = sbr.rel (0) target = $region49
    $region48: #{tpu_custom_call.1} parent=1 // pred_region
      %91 = dma.done [#allocation9], 64
    $region49: #{tpu_custom_call.1} parent=1 // pred_fallthru
      _
    %v92 = vld [vmem:[%s0] sm:$0xff]
    %v93 = vld [vmem:[#allocation3] sm:$0xff]
    %95 = vset.pattern.permute.xlu0 0
    %96 = vperm.xlu0 %95, %v92
    %v97 = vpop.permute.xlu0 %96
    %v100 = vlaneseq
    %v101 = vshrl.u32 %v100, 7
    %v102 = vsub.s32 0, %v101
    %v103 = vrot.slane %v93, %v102
    %v104 = vlaneseq
    %v105 = vshrl.u32 %v104, 7
    %v106 = vsub.s32 1, %v105
    %v107 = vrot.slane %v93, %v106
    %v108 = vlaneseq
    %v109 = vshrl.u32 %v108, 7
    %v110 = vsub.s32 2, %v109
    %v111 = vrot.slane %v93, %v110
    %v112 = vlaneseq
    %v113 = vshrl.u32 %v112, 7
    %v114 = vsub.s32 3, %v113
    %v115 = vrot.slane %v93, %v114
    %v116 = vlaneseq
    %v117 = vshrl.u32 %v116, 7
    %v118 = vsub.s32 4, %v117
    %v119 = vrot.slane %v93, %v118
    %v120 = vlaneseq
    %v121 = vshrl.u32 %v120, 7
    %v122 = vsub.s32 5, %v121
    %v123 = vrot.slane %v93, %v122
    %v124 = vlaneseq
    %v125 = vshrl.u32 %v124, 7
    %v126 = vsub.s32 6, %v125
    %v127 = vrot.slane %v93, %v126
    %v128 = vlaneseq
    %v129 = vshrl.u32 %v128, 7
    %v130 = vsub.s32 7, %v129
    %v131 = vrot.slane %v93, %v130
    %v140 = vmul.f32 %v97, %v103
    %v141 = vmul.f32 %v97, %v107
    %v142 = vmul.f32 %v97, %v111
    %v143 = vmul.f32 %v97, %v115
    %v144 = vmul.f32 %v97, %v119
    %v145 = vmul.f32 %v97, %v123
    %v146 = vmul.f32 %v97, %v127
    %v147 = vmul.f32 %v97, %v131
    %v148 = vld [vmem:[#allocation5] sm:$0xff]
    %v150 = vlaneseq
    %v151 = vshrl.u32 %v150, 7
    %v152 = vsub.s32 0, %v151
    %v153 = vrot.slane %v148, %v152
    %v154 = vlaneseq
    %v155 = vshrl.u32 %v154, 7
    %v156 = vsub.s32 1, %v155
    %v157 = vrot.slane %v148, %v156
    %v158 = vlaneseq
    %v159 = vshrl.u32 %v158, 7
    %v160 = vsub.s32 2, %v159
    %v161 = vrot.slane %v148, %v160
    %v162 = vlaneseq
    %v163 = vshrl.u32 %v162, 7
    %v164 = vsub.s32 3, %v163
    %v165 = vrot.slane %v148, %v164
    %v166 = vlaneseq
    %v167 = vshrl.u32 %v166, 7
    %v168 = vsub.s32 4, %v167
    %v169 = vrot.slane %v148, %v168
    %v170 = vlaneseq
    %v171 = vshrl.u32 %v170, 7
    %v172 = vsub.s32 5, %v171
    %v173 = vrot.slane %v148, %v172
    %v174 = vlaneseq
    %v175 = vshrl.u32 %v174, 7
    %v176 = vsub.s32 6, %v175
    %v177 = vrot.slane %v148, %v176
    %v178 = vlaneseq
    %v179 = vshrl.u32 %v178, 7
    %v180 = vsub.s32 7, %v179
    %v181 = vrot.slane %v148, %v180
    %v190 = vadd.f32 %v140, %v153
    %v191 = vadd.f32 %v141, %v157
    %v192 = vadd.f32 %v142, %v161
    %v193 = vadd.f32 %v143, %v165
    %v194 = vadd.f32 %v144, %v169
    %v195 = vadd.f32 %v145, %v173
    %v196 = vadd.f32 %v146, %v177
    %v197 = vadd.f32 %v147, %v181
    %v198 = vtanh.pop %v190
    %v199 = vtanh.pop %v191
    %v200 = vtanh.pop %v192
    %v201 = vtanh.pop %v193
    %v202 = vtanh.pop %v194
    %v203 = vtanh.pop %v195
    %v204 = vtanh.pop %v196
    %v205 = vtanh.pop %v197
    %v206 = vpack.c.bf16 %v198, %v198
    %v207 = vpack.c.bf16 %v199, %v199
    %v208 = vpack.c.bf16 %v200, %v200
    %v209 = vpack.c.bf16 %v201, %v201
    %v210 = vpack.c.bf16 %v202, %v202
    %v211 = vpack.c.bf16 %v203, %v203
    %v212 = vpack.c.bf16 %v204, %v204
    %v213 = vpack.c.bf16 %v205, %v205
    %v214 = vld [vmem:[#allocation7] sm:$0xff]
    %v215 = vld [vmem:[#allocation7 + $0x8] sm:$0xff]
    %v216 = vld [vmem:[#allocation7 + $0x10] sm:$0xff]
    %v217 = vld [vmem:[#allocation7 + $0x18] sm:$0xff]
    %v218 = vld [vmem:[#allocation7 + $0x20] sm:$0xff]
    %v219 = vld [vmem:[#allocation7 + $0x28] sm:$0xff]
    %v220 = vld [vmem:[#allocation7 + $0x30] sm:$0xff]
    %v221 = vld [vmem:[#allocation7 + $0x38] sm:$0xff]
    %v222 = vld [vmem:[#allocation7 + $0x40] sm:$0xff]
    %v223 = vld [vmem:[#allocation7 + $0x48] sm:$0xff]
    %v224 = vld [vmem:[#allocation7 + $0x50] sm:$0xff]
    %v225 = vld [vmem:[#allocation7 + $0x58] sm:$0xff]
    %v226 = vld [vmem:[#allocation7 + $0x60] sm:$0xff]
    %v227 = vld [vmem:[#allocation7 + $0x68] sm:$0xff]
    %v228 = vld [vmem:[#allocation7 + $0x70] sm:$0xff]
    %v229 = vld [vmem:[#allocation7 + $0x78] sm:$0xff]
    %v230 = vld [vmem:[#allocation7 + $0x80] sm:$0xff]
    %v231 = vld [vmem:[#allocation7 + $0x88] sm:$0xff]
    %v232 = vld [vmem:[#allocation7 + $0x90] sm:$0xff]
    %v233 = vld [vmem:[#allocation7 + $0x98] sm:$0xff]
    %v234 = vld [vmem:[#allocation7 + $0xa0] sm:$0xff]
    %v235 = vld [vmem:[#allocation7 + $0xa8] sm:$0xff]
    %v236 = vld [vmem:[#allocation7 + $0xb0] sm:$0xff]
    %v237 = vld [vmem:[#allocation7 + $0xb8] sm:$0xff]
    %v238 = vld [vmem:[#allocation7 + $0xc0] sm:$0xff]
    %v239 = vld [vmem:[#allocation7 + $0xc8] sm:$0xff]
    %v240 = vld [vmem:[#allocation7 + $0xd0] sm:$0xff]
    %v241 = vld [vmem:[#allocation7 + $0xd8] sm:$0xff]
    %v242 = vld [vmem:[#allocation7 + $0xe0] sm:$0xff]
    %v243 = vld [vmem:[#allocation7 + $0xe8] sm:$0xff]
    %v244 = vld [vmem:[#allocation7 + $0xf0] sm:$0xff]
    %v245 = vld [vmem:[#allocation7 + $0xf8] sm:$0xff]
    %v246 = vld [vmem:[#allocation7 + $0x100] sm:$0xff]
    %v247 = vld [vmem:[#allocation7 + $0x108] sm:$0xff]
    %v248 = vld [vmem:[#allocation7 + $0x110] sm:$0xff]
    %v249 = vld [vmem:[#allocation7 + $0x118] sm:$0xff]
    %v250 = vld [vmem:[#allocation7 + $0x120] sm:$0xff]
    %v251 = vld [vmem:[#allocation7 + $0x128] sm:$0xff]
    %v252 = vld [vmem:[#allocation7 + $0x130] sm:$0xff]
    %v253 = vld [vmem:[#allocation7 + $0x138] sm:$0xff]
    %v254 = vld [vmem:[#allocation7 + $0x140] sm:$0xff]
    %v255 = vld [vmem:[#allocation7 + $0x148] sm:$0xff]
    %v256 = vld [vmem:[#allocation7 + $0x150] sm:$0xff]
    %v257 = vld [vmem:[#allocation7 + $0x158] sm:$0xff]
    %v258 = vld [vmem:[#allocation7 + $0x160] sm:$0xff]
    %v259 = vld [vmem:[#allocation7 + $0x168] sm:$0xff]
    %v260 = vld [vmem:[#allocation7 + $0x170] sm:$0xff]
    %v261 = vld [vmem:[#allocation7 + $0x178] sm:$0xff]
    %v262 = vld [vmem:[#allocation7 + $0x180] sm:$0xff]
    %v263 = vld [vmem:[#allocation7 + $0x188] sm:$0xff]
    %v264 = vld [vmem:[#allocation7 + $0x190] sm:$0xff]
    %v265 = vld [vmem:[#allocation7 + $0x198] sm:$0xff]
    %v266 = vld [vmem:[#allocation7 + $0x1a0] sm:$0xff]
    %v267 = vld [vmem:[#allocation7 + $0x1a8] sm:$0xff]
    %v268 = vld [vmem:[#allocation7 + $0x1b0] sm:$0xff]
    %v269 = vld [vmem:[#allocation7 + $0x1b8] sm:$0xff]
    %v270 = vld [vmem:[#allocation7 + $0x1c0] sm:$0xff]
    %v271 = vld [vmem:[#allocation7 + $0x1c8] sm:$0xff]
    %v272 = vld [vmem:[#allocation7 + $0x1d0] sm:$0xff]
    %v273 = vld [vmem:[#allocation7 + $0x1d8] sm:$0xff]
    %v274 = vld [vmem:[#allocation7 + $0x1e0] sm:$0xff]
    %v275 = vld [vmem:[#allocation7 + $0x1e8] sm:$0xff]
    %v276 = vld [vmem:[#allocation7 + $0x1f0] sm:$0xff]
    %v277 = vld [vmem:[#allocation7 + $0x1f8] sm:$0xff]
    %v278 = vld [vmem:[#allocation7 + $0x200] sm:$0xff]
    %v279 = vld [vmem:[#allocation7 + $0x208] sm:$0xff]
    %v280 = vld [vmem:[#allocation7 + $0x210] sm:$0xff]
    %v281 = vld [vmem:[#allocation7 + $0x218] sm:$0xff]
    %v282 = vld [vmem:[#allocation7 + $0x220] sm:$0xff]
    %v283 = vld [vmem:[#allocation7 + $0x228] sm:$0xff]
    %v284 = vld [vmem:[#allocation7 + $0x230] sm:$0xff]
    %v285 = vld [vmem:[#allocation7 + $0x238] sm:$0xff]
    %v286 = vld [vmem:[#allocation7 + $0x240] sm:$0xff]
    %v287 = vld [vmem:[#allocation7 + $0x248] sm:$0xff]
    %v288 = vld [vmem:[#allocation7 + $0x250] sm:$0xff]
    %v289 = vld [vmem:[#allocation7 + $0x258] sm:$0xff]
    %v290 = vld [vmem:[#allocation7 + $0x260] sm:$0xff]
    %v291 = vld [vmem:[#allocation7 + $0x268] sm:$0xff]
    %v292 = vld [vmem:[#allocation7 + $0x270] sm:$0xff]
    %v293 = vld [vmem:[#allocation7 + $0x278] sm:$0xff]
    %v294 = vld [vmem:[#allocation7 + $0x280] sm:$0xff]
    %v295 = vld [vmem:[#allocation7 + $0x288] sm:$0xff]
    %v296 = vld [vmem:[#allocation7 + $0x290] sm:$0xff]
    %v297 = vld [vmem:[#allocation7 + $0x298] sm:$0xff]
    %v298 = vld [vmem:[#allocation7 + $0x2a0] sm:$0xff]
    %v299 = vld [vmem:[#allocation7 + $0x2a8] sm:$0xff]
    %v300 = vld [vmem:[#allocation7 + $0x2b0] sm:$0xff]
    %v301 = vld [vmem:[#allocation7 + $0x2b8] sm:$0xff]
    %v302 = vld [vmem:[#allocation7 + $0x2c0] sm:$0xff]
    %v303 = vld [vmem:[#allocation7 + $0x2c8] sm:$0xff]
    %v304 = vld [vmem:[#allocation7 + $0x2d0] sm:$0xff]
    %v305 = vld [vmem:[#allocation7 + $0x2d8] sm:$0xff]
    %v306 = vld [vmem:[#allocation7 + $0x2e0] sm:$0xff]
    %v307 = vld [vmem:[#allocation7 + $0x2e8] sm:$0xff]
    %v308 = vld [vmem:[#allocation7 + $0x2f0] sm:$0xff]
    %v309 = vld [vmem:[#allocation7 + $0x2f8] sm:$0xff]
    %v310 = vld [vmem:[#allocation7 + $0x300] sm:$0xff]
    %v311 = vld [vmem:[#allocation7 + $0x308] sm:$0xff]
    %v312 = vld [vmem:[#allocation7 + $0x310] sm:$0xff]
    %v313 = vld [vmem:[#allocation7 + $0x318] sm:$0xff]
    %v314 = vld [vmem:[#allocation7 + $0x320] sm:$0xff]
    %v315 = vld [vmem:[#allocation7 + $0x328] sm:$0xff]
    %v316 = vld [vmem:[#allocation7 + $0x330] sm:$0xff]
    %v317 = vld [vmem:[#allocation7 + $0x338] sm:$0xff]
    %v318 = vld [vmem:[#allocation7 + $0x340] sm:$0xff]
    %v319 = vld [vmem:[#allocation7 + $0x348] sm:$0xff]
    %v320 = vld [vmem:[#allocation7 + $0x350] sm:$0xff]
    %v321 = vld [vmem:[#allocation7 + $0x358] sm:$0xff]
    %v322 = vld [vmem:[#allocation7 + $0x360] sm:$0xff]
    %v323 = vld [vmem:[#allocation7 + $0x368] sm:$0xff]
    %v324 = vld [vmem:[#allocation7 + $0x370] sm:$0xff]
    %v325 = vld [vmem:[#allocation7 + $0x378] sm:$0xff]
    %v326 = vld [vmem:[#allocation7 + $0x380] sm:$0xff]
    %v327 = vld [vmem:[#allocation7 + $0x388] sm:$0xff]
    %v328 = vld [vmem:[#allocation7 + $0x390] sm:$0xff]
    %v329 = vld [vmem:[#allocation7 + $0x398] sm:$0xff]
    %v330 = vld [vmem:[#allocation7 + $0x3a0] sm:$0xff]
    %v331 = vld [vmem:[#allocation7 + $0x3a8] sm:$0xff]
    %v332 = vld [vmem:[#allocation7 + $0x3b0] sm:$0xff]
    %v333 = vld [vmem:[#allocation7 + $0x3b8] sm:$0xff]
    %v334 = vld [vmem:[#allocation7 + $0x3c0] sm:$0xff]
    %v335 = vld [vmem:[#allocation7 + $0x3c8] sm:$0xff]
    %v336 = vld [vmem:[#allocation7 + $0x3d0] sm:$0xff]
    %v337 = vld [vmem:[#allocation7 + $0x3d8] sm:$0xff]
    %v338 = vld [vmem:[#allocation7 + $0x3e0] sm:$0xff]
    %v339 = vld [vmem:[#allocation7 + $0x3e8] sm:$0xff]
    %v340 = vld [vmem:[#allocation7 + $0x3f0] sm:$0xff]
    %v341 = vld [vmem:[#allocation7 + $0x3f8] sm:$0xff]
    %v342 = vld [vmem:[#allocation7 + $0x400] sm:$0xff]
    %v343 = vld [vmem:[#allocation7 + $0x408] sm:$0xff]
    %v344 = vld [vmem:[#allocation7 + $0x410] sm:$0xff]
    %v345 = vld [vmem:[#allocation7 + $0x418] sm:$0xff]
    %v346 = vld [vmem:[#allocation7 + $0x420] sm:$0xff]
    %v347 = vld [vmem:[#allocation7 + $0x428] sm:$0xff]
    %v348 = vld [vmem:[#allocation7 + $0x430] sm:$0xff]
    %v349 = vld [vmem:[#allocation7 + $0x438] sm:$0xff]
    %v350 = vld [vmem:[#allocation7 + $0x440] sm:$0xff]
    %v351 = vld [vmem:[#allocation7 + $0x448] sm:$0xff]
    %v352 = vld [vmem:[#allocation7 + $0x450] sm:$0xff]
    %v353 = vld [vmem:[#allocation7 + $0x458] sm:$0xff]
    %v354 = vld [vmem:[#allocation7 + $0x460] sm:$0xff]
    %v355 = vld [vmem:[#allocation7 + $0x468] sm:$0xff]
    %v356 = vld [vmem:[#allocation7 + $0x470] sm:$0xff]
    %v357 = vld [vmem:[#allocation7 + $0x478] sm:$0xff]
    %v358 = vld [vmem:[#allocation7 + $0x480] sm:$0xff]
    %v359 = vld [vmem:[#allocation7 + $0x488] sm:$0xff]
    %v360 = vld [vmem:[#allocation7 + $0x490] sm:$0xff]
    %v361 = vld [vmem:[#allocation7 + $0x498] sm:$0xff]
    %v362 = vld [vmem:[#allocation7 + $0x4a0] sm:$0xff]
    %v363 = vld [vmem:[#allocation7 + $0x4a8] sm:$0xff]
    %v364 = vld [vmem:[#allocation7 + $0x4b0] sm:$0xff]
    %v365 = vld [vmem:[#allocation7 + $0x4b8] sm:$0xff]
    %v366 = vld [vmem:[#allocation7 + $0x4c0] sm:$0xff]
    %v367 = vld [vmem:[#allocation7 + $0x4c8] sm:$0xff]
    %v368 = vld [vmem:[#allocation7 + $0x4d0] sm:$0xff]
    %v369 = vld [vmem:[#allocation7 + $0x4d8] sm:$0xff]
    %v370 = vld [vmem:[#allocation7 + $0x4e0] sm:$0xff]
    %v371 = vld [vmem:[#allocation7 + $0x4e8] sm:$0xff]
    %v372 = vld [vmem:[#allocation7 + $0x4f0] sm:$0xff]
    %v373 = vld [vmem:[#allocation7 + $0x4f8] sm:$0xff]
    %v374 = vld [vmem:[#allocation7 + $0x500] sm:$0xff]
    %v375 = vld [vmem:[#allocation7 + $0x508] sm:$0xff]
    %v376 = vld [vmem:[#allocation7 + $0x510] sm:$0xff]
    %v377 = vld [vmem:[#allocation7 + $0x518] sm:$0xff]
    %v378 = vld [vmem:[#allocation7 + $0x520] sm:$0xff]
    %v379 = vld [vmem:[#allocation7 + $0x528] sm:$0xff]
    %v380 = vld [vmem:[#allocation7 + $0x530] sm:$0xff]
    %v381 = vld [vmem:[#allocation7 + $0x538] sm:$0xff]
    %v382 = vld [vmem:[#allocation7 + $0x540] sm:$0xff]
    %v383 = vld [vmem:[#allocation7 + $0x548] sm:$0xff]
    %v384 = vld [vmem:[#allocation7 + $0x550] sm:$0xff]
    %v385 = vld [vmem:[#allocation7 + $0x558] sm:$0xff]
    %v386 = vld [vmem:[#allocation7 + $0x560] sm:$0xff]
    %v387 = vld [vmem:[#allocation7 + $0x568] sm:$0xff]
    %v388 = vld [vmem:[#allocation7 + $0x570] sm:$0xff]
    %v389 = vld [vmem:[#allocation7 + $0x578] sm:$0xff]
    %v390 = vld [vmem:[#allocation7 + $0x580] sm:$0xff]
    %v391 = vld [vmem:[#allocation7 + $0x588] sm:$0xff]
    %v392 = vld [vmem:[#allocation7 + $0x590] sm:$0xff]
    %v393 = vld [vmem:[#allocation7 + $0x598] sm:$0xff]
    %v394 = vld [vmem:[#allocation7 + $0x5a0] sm:$0xff]
    %v395 = vld [vmem:[#allocation7 + $0x5a8] sm:$0xff]
    %v396 = vld [vmem:[#allocation7 + $0x5b0] sm:$0xff]
    %v397 = vld [vmem:[#allocation7 + $0x5b8] sm:$0xff]
    %v398 = vld [vmem:[#allocation7 + $0x5c0] sm:$0xff]
    %v399 = vld [vmem:[#allocation7 + $0x5c8] sm:$0xff]
    %v400 = vld [vmem:[#allocation7 + $0x5d0] sm:$0xff]
    %v401 = vld [vmem:[#allocation7 + $0x5d8] sm:$0xff]
    %v402 = vld [vmem:[#allocation7 + $0x5e0] sm:$0xff]
    %v403 = vld [vmem:[#allocation7 + $0x5e8] sm:$0xff]
    %v404 = vld [vmem:[#allocation7 + $0x5f0] sm:$0xff]
    %v405 = vld [vmem:[#allocation7 + $0x5f8] sm:$0xff]
    %v406 = vld [vmem:[#allocation7 + $0x600] sm:$0xff]
    %v407 = vld [vmem:[#allocation7 + $0x608] sm:$0xff]
    %v408 = vld [vmem:[#allocation7 + $0x610] sm:$0xff]
    %v409 = vld [vmem:[#allocation7 + $0x618] sm:$0xff]
    %v410 = vld [vmem:[#allocation7 + $0x620] sm:$0xff]
    %v411 = vld [vmem:[#allocation7 + $0x628] sm:$0xff]
    %v412 = vld [vmem:[#allocation7 + $0x630] sm:$0xff]
    %v413 = vld [vmem:[#allocation7 + $0x638] sm:$0xff]
    %v414 = vld [vmem:[#allocation7 + $0x640] sm:$0xff]
    %v415 = vld [vmem:[#allocation7 + $0x648] sm:$0xff]
    %v416 = vld [vmem:[#allocation7 + $0x650] sm:$0xff]
    %v417 = vld [vmem:[#allocation7 + $0x658] sm:$0xff]
    %v418 = vld [vmem:[#allocation7 + $0x660] sm:$0xff]
    %v419 = vld [vmem:[#allocation7 + $0x668] sm:$0xff]
    %v420 = vld [vmem:[#allocation7 + $0x670] sm:$0xff]
    %v421 = vld [vmem:[#allocation7 + $0x678] sm:$0xff]
    %v422 = vld [vmem:[#allocation7 + $0x680] sm:$0xff]
    %v423 = vld [vmem:[#allocation7 + $0x688] sm:$0xff]
    %v424 = vld [vmem:[#allocation7 + $0x690] sm:$0xff]
    %v425 = vld [vmem:[#allocation7 + $0x698] sm:$0xff]
    %v426 = vld [vmem:[#allocation7 + $0x6a0] sm:$0xff]
    %v427 = vld [vmem:[#allocation7 + $0x6a8] sm:$0xff]
    %v428 = vld [vmem:[#allocation7 + $0x6b0] sm:$0xff]
    %v429 = vld [vmem:[#allocation7 + $0x6b8] sm:$0xff]
    %v430 = vld [vmem:[#allocation7 + $0x6c0] sm:$0xff]
    %v431 = vld [vmem:[#allocation7 + $0x6c8] sm:$0xff]
    %v432 = vld [vmem:[#allocation7 + $0x6d0] sm:$0xff]
    %v433 = vld [vmem:[#allocation7 + $0x6d8] sm:$0xff]
    %v434 = vld [vmem:[#allocation7 + $0x6e0] sm:$0xff]
    %v435 = vld [vmem:[#allocation7 + $0x6e8] sm:$0xff]
    %v436 = vld [vmem:[#allocation7 + $0x6f0] sm:$0xff]
    %v437 = vld [vmem:[#allocation7 + $0x6f8] sm:$0xff]
    %v438 = vld [vmem:[#allocation7 + $0x700] sm:$0xff]
    %v439 = vld [vmem:[#allocation7 + $0x708] sm:$0xff]
    %v440 = vld [vmem:[#allocation7 + $0x710] sm:$0xff]
    %v441 = vld [vmem:[#allocation7 + $0x718] sm:$0xff]
    %v442 = vld [vmem:[#allocation7 + $0x720] sm:$0xff]
    %v443 = vld [vmem:[#allocation7 + $0x728] sm:$0xff]
    %v444 = vld [vmem:[#allocation7 + $0x730] sm:$0xff]
    %v445 = vld [vmem:[#allocation7 + $0x738] sm:$0xff]
    %v446 = vld [vmem:[#allocation7 + $0x740] sm:$0xff]
    %v447 = vld [vmem:[#allocation7 + $0x748] sm:$0xff]
    %v448 = vld [vmem:[#allocation7 + $0x750] sm:$0xff]
    %v449 = vld [vmem:[#allocation7 + $0x758] sm:$0xff]
    %v450 = vld [vmem:[#allocation7 + $0x760] sm:$0xff]
    %v451 = vld [vmem:[#allocation7 + $0x768] sm:$0xff]
    %v452 = vld [vmem:[#allocation7 + $0x770] sm:$0xff]
    %v453 = vld [vmem:[#allocation7 + $0x778] sm:$0xff]
    %v454 = vld [vmem:[#allocation7 + $0x780] sm:$0xff]
    %v455 = vld [vmem:[#allocation7 + $0x788] sm:$0xff]
    %v456 = vld [vmem:[#allocation7 + $0x790] sm:$0xff]
    %v457 = vld [vmem:[#allocation7 + $0x798] sm:$0xff]
    %v458 = vld [vmem:[#allocation7 + $0x7a0] sm:$0xff]
    %v459 = vld [vmem:[#allocation7 + $0x7a8] sm:$0xff]
    %v460 = vld [vmem:[#allocation7 + $0x7b0] sm:$0xff]
    %v461 = vld [vmem:[#allocation7 + $0x7b8] sm:$0xff]
    %v462 = vld [vmem:[#allocation7 + $0x7c0] sm:$0xff]
    %v463 = vld [vmem:[#allocation7 + $0x7c8] sm:$0xff]
    %v464 = vld [vmem:[#allocation7 + $0x7d0] sm:$0xff]
    %v465 = vld [vmem:[#allocation7 + $0x7d8] sm:$0xff]
    %v466 = vld [vmem:[#allocation7 + $0x7e0] sm:$0xff]
    %v467 = vld [vmem:[#allocation7 + $0x7e8] sm:$0xff]
    %v468 = vld [vmem:[#allocation7 + $0x7f0] sm:$0xff]
    %v469 = vld [vmem:[#allocation7 + $0x7f8] sm:$0xff]
    %s470 = scalar_lea.vmem [#allocation3], 8
    %v471 = vld [vmem:[%s470] sm:$0xff]
    %v473 = vlaneseq
    %v474 = vshrl.u32 %v473, 7
    %v475 = vsub.s32 0, %v474
    %v476 = vrot.slane %v471, %v475
    %v477 = vlaneseq
    %v478 = vshrl.u32 %v477, 7
    %v479 = vsub.s32 1, %v478
    %v480 = vrot.slane %v471, %v479
    %v481 = vlaneseq
    %v482 = vshrl.u32 %v481, 7
    %v483 = vsub.s32 2, %v482
    %v484 = vrot.slane %v471, %v483
    %v485 = vlaneseq
    %v486 = vshrl.u32 %v485, 7
    %v487 = vsub.s32 3, %v486
    %v488 = vrot.slane %v471, %v487
    %v489 = vlaneseq
    %v490 = vshrl.u32 %v489, 7
    %v491 = vsub.s32 4, %v490
    %v492 = vrot.slane %v471, %v491
    %v493 = vlaneseq
    %v494 = vshrl.u32 %v493, 7
    %v495 = vsub.s32 5, %v494
    %v496 = vrot.slane %v471, %v495
    %v497 = vlaneseq
    %v498 = vshrl.u32 %v497, 7
    %v499 = vsub.s32 6, %v498
    %v500 = vrot.slane %v471, %v499
    %v501 = vlaneseq
    %v502 = vshrl.u32 %v501, 7
    %v503 = vsub.s32 7, %v502
    %v504 = vrot.slane %v471, %v503
    %v513 = vmul.f32 %v97, %v476
    %v514 = vmul.f32 %v97, %v480
    %v515 = vmul.f32 %v97, %v484
    %v516 = vmul.f32 %v97, %v488
    %v517 = vmul.f32 %v97, %v492
    %v518 = vmul.f32 %v97, %v496
    %v519 = vmul.f32 %v97, %v500
    %v520 = vmul.f32 %v97, %v504
    %s521 = scalar_lea.vmem [#allocation5], 8
    %v522 = vld [vmem:[%s521] sm:$0xff]
    %v524 = vlaneseq
    %v525 = vshrl.u32 %v524, 7
    %v526 = vsub.s32 0, %v525
    %v527 = vrot.slane %v522, %v526
    %v528 = vlaneseq
    %v529 = vshrl.u32 %v528, 7
    %v530 = vsub.s32 1, %v529
    %v531 = vrot.slane %v522, %v530
    %v532 = vlaneseq
    %v533 = vshrl.u32 %v532, 7
    %v534 = vsub.s32 2, %v533
    %v535 = vrot.slane %v522, %v534
    %v536 = vlaneseq
    %v537 = vshrl.u32 %v536, 7
    %v538 = vsub.s32 3, %v537
    %v539 = vrot.slane %v522, %v538
    %v540 = vlaneseq
    %v541 = vshrl.u32 %v540, 7
    %v542 = vsub.s32 4, %v541
    %v543 = vrot.slane %v522, %v542
    %v544 = vlaneseq
    %v545 = vshrl.u32 %v544, 7
    %v546 = vsub.s32 5, %v545
    %v547 = vrot.slane %v522, %v546
    %v548 = vlaneseq
    %v549 = vshrl.u32 %v548, 7
    %v550 = vsub.s32 6, %v549
    %v551 = vrot.slane %v522, %v550
    %v552 = vlaneseq
    %v553 = vshrl.u32 %v552, 7
    %v554 = vsub.s32 7, %v553
    %v555 = vrot.slane %v522, %v554
    %v564 = vadd.f32 %v513, %v527
    %v565 = vadd.f32 %v514, %v531
    %v566 = vadd.f32 %v515, %v535
    %v567 = vadd.f32 %v516, %v539
    %v568 = vadd.f32 %v517, %v543
    %v569 = vadd.f32 %v518, %v547
    %v570 = vadd.f32 %v519, %v551
    %v571 = vadd.f32 %v520, %v555
    %v572 = vtanh.pop %v564
    %v573 = vtanh.pop %v565
    %v574 = vtanh.pop %v566
    %v575 = vtanh.pop %v567
    %v576 = vtanh.pop %v568
    %v577 = vtanh.pop %v569
    %v578 = vtanh.pop %v570
    %v579 = vtanh.pop %v571
    %v580 = vpack.c.bf16 %v572, %v572
    %v581 = vpack.c.bf16 %v573, %v573
    %v582 = vpack.c.bf16 %v574, %v574
    %v583 = vpack.c.bf16 %v575, %v575
    %v584 = vpack.c.bf16 %v576, %v576
    %v585 = vpack.c.bf16 %v577, %v577
    %v586 = vpack.c.bf16 %v578, %v578
    %v587 = vpack.c.bf16 %v579, %v579
    %s588 = scalar_lea.vmem [#allocation7], 2048
    %v589 = vld [vmem:[%s588] sm:$0xff]
    %v590 = vld [vmem:[%s588 + $0x8] sm:$0xff]
    %v591 = vld [vmem:[%s588 + $0x10] sm:$0xff]
    %v592 = vld [vmem:[%s588 + $0x18] sm:$0xff]
    %v593 = vld [vmem:[%s588 + $0x20] sm:$0xff]
    %v594 = vld [vmem:[%s588 + $0x28] sm:$0xff]
    %v595 = vld [vmem:[%s588 + $0x30] sm:$0xff]
    %v596 = vld [vmem:[%s588 + $0x38] sm:$0xff]
    %v597 = vld [vmem:[%s588 + $0x40] sm:$0xff]
    %v598 = vld [vmem:[%s588 + $0x48] sm:$0xff]
    %v599 = vld [vmem:[%s588 + $0x50] sm:$0xff]
    %v600 = vld [vmem:[%s588 + $0x58] sm:$0xff]
    %v601 = vld [vmem:[%s588 + $0x60] sm:$0xff]
    %v602 = vld [vmem:[%s588 + $0x68] sm:$0xff]
    %v603 = vld [vmem:[%s588 + $0x70] sm:$0xff]
    %v604 = vld [vmem:[%s588 + $0x78] sm:$0xff]
    %v605 = vld [vmem:[%s588 + $0x80] sm:$0xff]
    %v606 = vld [vmem:[%s588 + $0x88] sm:$0xff]
    %v607 = vld [vmem:[%s588 + $0x90] sm:$0xff]
    %v608 = vld [vmem:[%s588 + $0x98] sm:$0xff]
    %v609 = vld [vmem:[%s588 + $0xa0] sm:$0xff]
    %v610 = vld [vmem:[%s588 + $0xa8] sm:$0xff]
    %v611 = vld [vmem:[%s588 + $0xb0] sm:$0xff]
    %v612 = vld [vmem:[%s588 + $0xb8] sm:$0xff]
    %v613 = vld [vmem:[%s588 + $0xc0] sm:$0xff]
    %v614 = vld [vmem:[%s588 + $0xc8] sm:$0xff]
    %v615 = vld [vmem:[%s588 + $0xd0] sm:$0xff]
    %v616 = vld [vmem:[%s588 + $0xd8] sm:$0xff]
    %v617 = vld [vmem:[%s588 + $0xe0] sm:$0xff]
    %v618 = vld [vmem:[%s588 + $0xe8] sm:$0xff]
    %v619 = vld [vmem:[%s588 + $0xf0] sm:$0xff]
    %v620 = vld [vmem:[%s588 + $0xf8] sm:$0xff]
    %v621 = vld [vmem:[%s588 + $0x100] sm:$0xff]
    %v622 = vld [vmem:[%s588 + $0x108] sm:$0xff]
    %v623 = vld [vmem:[%s588 + $0x110] sm:$0xff]
    %v624 = vld [vmem:[%s588 + $0x118] sm:$0xff]
    %v625 = vld [vmem:[%s588 + $0x120] sm:$0xff]
    %v626 = vld [vmem:[%s588 + $0x128] sm:$0xff]
    %v627 = vld [vmem:[%s588 + $0x130] sm:$0xff]
    %v628 = vld [vmem:[%s588 + $0x138] sm:$0xff]
    %v629 = vld [vmem:[%s588 + $0x140] sm:$0xff]
    %v630 = vld [vmem:[%s588 + $0x148] sm:$0xff]
    %v631 = vld [vmem:[%s588 + $0x150] sm:$0xff]
    %v632 = vld [vmem:[%s588 + $0x158] sm:$0xff]
    %v633 = vld [vmem:[%s588 + $0x160] sm:$0xff]
    %v634 = vld [vmem:[%s588 + $0x168] sm:$0xff]
    %v635 = vld [vmem:[%s588 + $0x170] sm:$0xff]
    %v636 = vld [vmem:[%s588 + $0x178] sm:$0xff]
    %v637 = vld [vmem:[%s588 + $0x180] sm:$0xff]
    %v638 = vld [vmem:[%s588 + $0x188] sm:$0xff]
    %v639 = vld [vmem:[%s588 + $0x190] sm:$0xff]
    %v640 = vld [vmem:[%s588 + $0x198] sm:$0xff]
    %v641 = vld [vmem:[%s588 + $0x1a0] sm:$0xff]
    %v642 = vld [vmem:[%s588 + $0x1a8] sm:$0xff]
    %v643 = vld [vmem:[%s588 + $0x1b0] sm:$0xff]
    %v644 = vld [vmem:[%s588 + $0x1b8] sm:$0xff]
    %v645 = vld [vmem:[%s588 + $0x1c0] sm:$0xff]
    %v646 = vld [vmem:[%s588 + $0x1c8] sm:$0xff]
    %v647 = vld [vmem:[%s588 + $0x1d0] sm:$0xff]
    %v648 = vld [vmem:[%s588 + $0x1d8] sm:$0xff]
    %v649 = vld [vmem:[%s588 + $0x1e0] sm:$0xff]
    %v650 = vld [vmem:[%s588 + $0x1e8] sm:$0xff]
    %v651 = vld [vmem:[%s588 + $0x1f0] sm:$0xff]
    %v652 = vld [vmem:[%s588 + $0x1f8] sm:$0xff]
    %v653 = vld [vmem:[%s588 + $0x200] sm:$0xff]
    %v654 = vld [vmem:[%s588 + $0x208] sm:$0xff]
    %v655 = vld [vmem:[%s588 + $0x210] sm:$0xff]
    %v656 = vld [vmem:[%s588 + $0x218] sm:$0xff]
    %v657 = vld [vmem:[%s588 + $0x220] sm:$0xff]
    %v658 = vld [vmem:[%s588 + $0x228] sm:$0xff]
    %v659 = vld [vmem:[%s588 + $0x230] sm:$0xff]
    %v660 = vld [vmem:[%s588 + $0x238] sm:$0xff]
    %v661 = vld [vmem:[%s588 + $0x240] sm:$0xff]
    %v662 = vld [vmem:[%s588 + $0x248] sm:$0xff]
    %v663 = vld [vmem:[%s588 + $0x250] sm:$0xff]
    %v664 = vld [vmem:[%s588 + $0x258] sm:$0xff]
    %v665 = vld [vmem:[%s588 + $0x260] sm:$0xff]
    %v666 = vld [vmem:[%s588 + $0x268] sm:$0xff]
    %v667 = vld [vmem:[%s588 + $0x270] sm:$0xff]
    %v668 = vld [vmem:[%s588 + $0x278] sm:$0xff]
    %v669 = vld [vmem:[%s588 + $0x280] sm:$0xff]
    %v670 = vld [vmem:[%s588 + $0x288] sm:$0xff]
    %v671 = vld [vmem:[%s588 + $0x290] sm:$0xff]
    %v672 = vld [vmem:[%s588 + $0x298] sm:$0xff]
    %v673 = vld [vmem:[%s588 + $0x2a0] sm:$0xff]
    %v674 = vld [vmem:[%s588 + $0x2a8] sm:$0xff]
    %v675 = vld [vmem:[%s588 + $0x2b0] sm:$0xff]
    %v676 = vld [vmem:[%s588 + $0x2b8] sm:$0xff]
    %v677 = vld [vmem:[%s588 + $0x2c0] sm:$0xff]
    %v678 = vld [vmem:[%s588 + $0x2c8] sm:$0xff]
    %v679 = vld [vmem:[%s588 + $0x2d0] sm:$0xff]
    %v680 = vld [vmem:[%s588 + $0x2d8] sm:$0xff]
    %v681 = vld [vmem:[%s588 + $0x2e0] sm:$0xff]
    %v682 = vld [vmem:[%s588 + $0x2e8] sm:$0xff]
    %v683 = vld [vmem:[%s588 + $0x2f0] sm:$0xff]
    %v684 = vld [vmem:[%s588 + $0x2f8] sm:$0xff]
    %v685 = vld [vmem:[%s588 + $0x300] sm:$0xff]
    %v686 = vld [vmem:[%s588 + $0x308] sm:$0xff]
    %v687 = vld [vmem:[%s588 + $0x310] sm:$0xff]
    %v688 = vld [vmem:[%s588 + $0x318] sm:$0xff]
    %v689 = vld [vmem:[%s588 + $0x320] sm:$0xff]
    %v690 = vld [vmem:[%s588 + $0x328] sm:$0xff]
    %v691 = vld [vmem:[%s588 + $0x330] sm:$0xff]
    %v692 = vld [vmem:[%s588 + $0x338] sm:$0xff]
    %v693 = vld [vmem:[%s588 + $0x340] sm:$0xff]
    %v694 = vld [vmem:[%s588 + $0x348] sm:$0xff]
    %v695 = vld [vmem:[%s588 + $0x350] sm:$0xff]
    %v696 = vld [vmem:[%s588 + $0x358] sm:$0xff]
    %v697 = vld [vmem:[%s588 + $0x360] sm:$0xff]
    %v698 = vld [vmem:[%s588 + $0x368] sm:$0xff]
    %v699 = vld [vmem:[%s588 + $0x370] sm:$0xff]
    %v700 = vld [vmem:[%s588 + $0x378] sm:$0xff]
    %v701 = vld [vmem:[%s588 + $0x380] sm:$0xff]
    %v702 = vld [vmem:[%s588 + $0x388] sm:$0xff]
    %v703 = vld [vmem:[%s588 + $0x390] sm:$0xff]
    %v704 = vld [vmem:[%s588 + $0x398] sm:$0xff]
    %v705 = vld [vmem:[%s588 + $0x3a0] sm:$0xff]
    %v706 = vld [vmem:[%s588 + $0x3a8] sm:$0xff]
    %v707 = vld [vmem:[%s588 + $0x3b0] sm:$0xff]
    %v708 = vld [vmem:[%s588 + $0x3b8] sm:$0xff]
    %v709 = vld [vmem:[%s588 + $0x3c0] sm:$0xff]
    %v710 = vld [vmem:[%s588 + $0x3c8] sm:$0xff]
    %v711 = vld [vmem:[%s588 + $0x3d0] sm:$0xff]
    %v712 = vld [vmem:[%s588 + $0x3d8] sm:$0xff]
    %v713 = vld [vmem:[%s588 + $0x3e0] sm:$0xff]
    %v714 = vld [vmem:[%s588 + $0x3e8] sm:$0xff]
    %v715 = vld [vmem:[%s588 + $0x3f0] sm:$0xff]
    %v716 = vld [vmem:[%s588 + $0x3f8] sm:$0xff]
    %v717 = vld [vmem:[%s588 + $0x400] sm:$0xff]
    %v718 = vld [vmem:[%s588 + $0x408] sm:$0xff]
    %v719 = vld [vmem:[%s588 + $0x410] sm:$0xff]
    %v720 = vld [vmem:[%s588 + $0x418] sm:$0xff]
    %v721 = vld [vmem:[%s588 + $0x420] sm:$0xff]
    %v722 = vld [vmem:[%s588 + $0x428] sm:$0xff]
    %v723 = vld [vmem:[%s588 + $0x430] sm:$0xff]
    %v724 = vld [vmem:[%s588 + $0x438] sm:$0xff]
    %v725 = vld [vmem:[%s588 + $0x440] sm:$0xff]
    %v726 = vld [vmem:[%s588 + $0x448] sm:$0xff]
    %v727 = vld [vmem:[%s588 + $0x450] sm:$0xff]
    %v728 = vld [vmem:[%s588 + $0x458] sm:$0xff]
    %v729 = vld [vmem:[%s588 + $0x460] sm:$0xff]
    %v730 = vld [vmem:[%s588 + $0x468] sm:$0xff]
    %v731 = vld [vmem:[%s588 + $0x470] sm:$0xff]
    %v732 = vld [vmem:[%s588 + $0x478] sm:$0xff]
    %v733 = vld [vmem:[%s588 + $0x480] sm:$0xff]
    %v734 = vld [vmem:[%s588 + $0x488] sm:$0xff]
    %v735 = vld [vmem:[%s588 + $0x490] sm:$0xff]
    %v736 = vld [vmem:[%s588 + $0x498] sm:$0xff]
    %v737 = vld [vmem:[%s588 + $0x4a0] sm:$0xff]
    %v738 = vld [vmem:[%s588 + $0x4a8] sm:$0xff]
    %v739 = vld [vmem:[%s588 + $0x4b0] sm:$0xff]
    %v740 = vld [vmem:[%s588 + $0x4b8] sm:$0xff]
    %v741 = vld [vmem:[%s588 + $0x4c0] sm:$0xff]
    %v742 = vld [vmem:[%s588 + $0x4c8] sm:$0xff]
    %v743 = vld [vmem:[%s588 + $0x4d0] sm:$0xff]
    %v744 = vld [vmem:[%s588 + $0x4d8] sm:$0xff]
    %v745 = vld [vmem:[%s588 + $0x4e0] sm:$0xff]
    %v746 = vld [vmem:[%s588 + $0x4e8] sm:$0xff]
    %v747 = vld [vmem:[%s588 + $0x4f0] sm:$0xff]
    %v748 = vld [vmem:[%s588 + $0x4f8] sm:$0xff]
    %v749 = vld [vmem:[%s588 + $0x500] sm:$0xff]
    %v750 = vld [vmem:[%s588 + $0x508] sm:$0xff]
    %v751 = vld [vmem:[%s588 + $0x510] sm:$0xff]
    %v752 = vld [vmem:[%s588 + $0x518] sm:$0xff]
    %v753 = vld [vmem:[%s588 + $0x520] sm:$0xff]
    %v754 = vld [vmem:[%s588 + $0x528] sm:$0xff]
    %v755 = vld [vmem:[%s588 + $0x530] sm:$0xff]
    %v756 = vld [vmem:[%s588 + $0x538] sm:$0xff]
    %v757 = vld [vmem:[%s588 + $0x540] sm:$0xff]
    %v758 = vld [vmem:[%s588 + $0x548] sm:$0xff]
    %v759 = vld [vmem:[%s588 + $0x550] sm:$0xff]
    %v760 = vld [vmem:[%s588 + $0x558] sm:$0xff]
    %v761 = vld [vmem:[%s588 + $0x560] sm:$0xff]
    %v762 = vld [vmem:[%s588 + $0x568] sm:$0xff]
    %v763 = vld [vmem:[%s588 + $0x570] sm:$0xff]
    %v764 = vld [vmem:[%s588 + $0x578] sm:$0xff]
    %v765 = vld [vmem:[%s588 + $0x580] sm:$0xff]
    %v766 = vld [vmem:[%s588 + $0x588] sm:$0xff]
    %v767 = vld [vmem:[%s588 + $0x590] sm:$0xff]
    %v768 = vld [vmem:[%s588 + $0x598] sm:$0xff]
    %v769 = vld [vmem:[%s588 + $0x5a0] sm:$0xff]
    %v770 = vld [vmem:[%s588 + $0x5a8] sm:$0xff]
    %v771 = vld [vmem:[%s588 + $0x5b0] sm:$0xff]
    %v772 = vld [vmem:[%s588 + $0x5b8] sm:$0xff]
    %v773 = vld [vmem:[%s588 + $0x5c0] sm:$0xff]
    %v774 = vld [vmem:[%s588 + $0x5c8] sm:$0xff]
    %v775 = vld [vmem:[%s588 + $0x5d0] sm:$0xff]
    %v776 = vld [vmem:[%s588 + $0x5d8] sm:$0xff]
    %v777 = vld [vmem:[%s588 + $0x5e0] sm:$0xff]
    %v778 = vld [vmem:[%s588 + $0x5e8] sm:$0xff]
    %v779 = vld [vmem:[%s588 + $0x5f0] sm:$0xff]
    %v780 = vld [vmem:[%s588 + $0x5f8] sm:$0xff]
    %v781 = vld [vmem:[%s588 + $0x600] sm:$0xff]
    %v782 = vld [vmem:[%s588 + $0x608] sm:$0xff]
    %v783 = vld [vmem:[%s588 + $0x610] sm:$0xff]
    %v784 = vld [vmem:[%s588 + $0x618] sm:$0xff]
    %v785 = vld [vmem:[%s588 + $0x620] sm:$0xff]
    %v786 = vld [vmem:[%s588 + $0x628] sm:$0xff]
    %v787 = vld [vmem:[%s588 + $0x630] sm:$0xff]
    %v788 = vld [vmem:[%s588 + $0x638] sm:$0xff]
    %v789 = vld [vmem:[%s588 + $0x640] sm:$0xff]
    %v790 = vld [vmem:[%s588 + $0x648] sm:$0xff]
    %v791 = vld [vmem:[%s588 + $0x650] sm:$0xff]
    %v792 = vld [vmem:[%s588 + $0x658] sm:$0xff]
    %v793 = vld [vmem:[%s588 + $0x660] sm:$0xff]
    %v794 = vld [vmem:[%s588 + $0x668] sm:$0xff]
    %v795 = vld [vmem:[%s588 + $0x670] sm:$0xff]
    %v796 = vld [vmem:[%s588 + $0x678] sm:$0xff]
    %v797 = vld [vmem:[%s588 + $0x680] sm:$0xff]
    %v798 = vld [vmem:[%s588 + $0x688] sm:$0xff]
    %v799 = vld [vmem:[%s588 + $0x690] sm:$0xff]
    %v800 = vld [vmem:[%s588 + $0x698] sm:$0xff]
    %v801 = vld [vmem:[%s588 + $0x6a0] sm:$0xff]
    %v802 = vld [vmem:[%s588 + $0x6a8] sm:$0xff]
    %v803 = vld [vmem:[%s588 + $0x6b0] sm:$0xff]
    %v804 = vld [vmem:[%s588 + $0x6b8] sm:$0xff]
    %v805 = vld [vmem:[%s588 + $0x6c0] sm:$0xff]
    %v806 = vld [vmem:[%s588 + $0x6c8] sm:$0xff]
    %v807 = vld [vmem:[%s588 + $0x6d0] sm:$0xff]
    %v808 = vld [vmem:[%s588 + $0x6d8] sm:$0xff]
    %v809 = vld [vmem:[%s588 + $0x6e0] sm:$0xff]
    %v810 = vld [vmem:[%s588 + $0x6e8] sm:$0xff]
    %v811 = vld [vmem:[%s588 + $0x6f0] sm:$0xff]
    %v812 = vld [vmem:[%s588 + $0x6f8] sm:$0xff]
    %v813 = vld [vmem:[%s588 + $0x700] sm:$0xff]
    %v814 = vld [vmem:[%s588 + $0x708] sm:$0xff]
    %v815 = vld [vmem:[%s588 + $0x710] sm:$0xff]
    %v816 = vld [vmem:[%s588 + $0x718] sm:$0xff]
    %v817 = vld [vmem:[%s588 + $0x720] sm:$0xff]
    %v818 = vld [vmem:[%s588 + $0x728] sm:$0xff]
    %v819 = vld [vmem:[%s588 + $0x730] sm:$0xff]
    %v820 = vld [vmem:[%s588 + $0x738] sm:$0xff]
    %v821 = vld [vmem:[%s588 + $0x740] sm:$0xff]
    %v822 = vld [vmem:[%s588 + $0x748] sm:$0xff]
    %v823 = vld [vmem:[%s588 + $0x750] sm:$0xff]
    %v824 = vld [vmem:[%s588 + $0x758] sm:$0xff]
    %v825 = vld [vmem:[%s588 + $0x760] sm:$0xff]
    %v826 = vld [vmem:[%s588 + $0x768] sm:$0xff]
    %v827 = vld [vmem:[%s588 + $0x770] sm:$0xff]
    %v828 = vld [vmem:[%s588 + $0x778] sm:$0xff]
    %v829 = vld [vmem:[%s588 + $0x780] sm:$0xff]
    %v830 = vld [vmem:[%s588 + $0x788] sm:$0xff]
    %v831 = vld [vmem:[%s588 + $0x790] sm:$0xff]
    %v832 = vld [vmem:[%s588 + $0x798] sm:$0xff]
    %v833 = vld [vmem:[%s588 + $0x7a0] sm:$0xff]
    %v834 = vld [vmem:[%s588 + $0x7a8] sm:$0xff]
    %v835 = vld [vmem:[%s588 + $0x7b0] sm:$0xff]
    %v836 = vld [vmem:[%s588 + $0x7b8] sm:$0xff]
    %v837 = vld [vmem:[%s588 + $0x7c0] sm:$0xff]
    %v838 = vld [vmem:[%s588 + $0x7c8] sm:$0xff]
    %v839 = vld [vmem:[%s588 + $0x7d0] sm:$0xff]
    %v840 = vld [vmem:[%s588 + $0x7d8] sm:$0xff]
    %v841 = vld [vmem:[%s588 + $0x7e0] sm:$0xff]
    %v842 = vld [vmem:[%s588 + $0x7e8] sm:$0xff]
    %v843 = vld [vmem:[%s588 + $0x7f0] sm:$0xff]
    %v844 = vld [vmem:[%s588 + $0x7f8] sm:$0xff]
    %v1101 = vunpack.c.l.b16 %v589
    %v1102 = vunpack.c.h.b16 %v589
    %v1103 = vunpack.c.l.b16 %v590
    %v1104 = vunpack.c.h.b16 %v590
    %v1105 = vunpack.c.l.b16 %v591
    %v1106 = vunpack.c.h.b16 %v591
    %v1107 = vunpack.c.l.b16 %v592
    %v1108 = vunpack.c.h.b16 %v592
    %v1109 = vunpack.c.l.b16 %v593
    %v1110 = vunpack.c.h.b16 %v593
    %v1111 = vunpack.c.l.b16 %v594
    %v1112 = vunpack.c.h.b16 %v594
    %v1113 = vunpack.c.l.b16 %v595
    %v1114 = vunpack.c.h.b16 %v595
    %v1115 = vunpack.c.l.b16 %v596
    %v1116 = vunpack.c.h.b16 %v596
    %v1117 = vunpack.c.l.b16 %v597
    %v1118 = vunpack.c.h.b16 %v597
    %v1119 = vunpack.c.l.b16 %v598
    %v1120 = vunpack.c.h.b16 %v598
    %v1121 = vunpack.c.l.b16 %v599
    %v1122 = vunpack.c.h.b16 %v599
    %v1123 = vunpack.c.l.b16 %v600
    %v1124 = vunpack.c.h.b16 %v600
    %v1125 = vunpack.c.l.b16 %v601
    %v1126 = vunpack.c.h.b16 %v601
    %v1127 = vunpack.c.l.b16 %v602
    %v1128 = vunpack.c.h.b16 %v602
    %v1129 = vunpack.c.l.b16 %v603
    %v1130 = vunpack.c.h.b16 %v603
    %v1131 = vunpack.c.l.b16 %v604
    %v1132 = vunpack.c.h.b16 %v604
    %v1133 = vunpack.c.l.b16 %v605
    %v1134 = vunpack.c.h.b16 %v605
    %v1135 = vunpack.c.l.b16 %v606
    %v1136 = vunpack.c.h.b16 %v606
    %v1137 = vunpack.c.l.b16 %v607
    %v1138 = vunpack.c.h.b16 %v607
    %v1139 = vunpack.c.l.b16 %v608
    %v1140 = vunpack.c.h.b16 %v608
    %v1141 = vunpack.c.l.b16 %v609
    %v1142 = vunpack.c.h.b16 %v609
    %v1143 = vunpack.c.l.b16 %v610
    %v1144 = vunpack.c.h.b16 %v610
    %v1145 = vunpack.c.l.b16 %v611
    %v1146 = vunpack.c.h.b16 %v611
    %v1147 = vunpack.c.l.b16 %v612
    %v1148 = vunpack.c.h.b16 %v612
    %v1149 = vunpack.c.l.b16 %v613
    %v1150 = vunpack.c.h.b16 %v613
    %v1151 = vunpack.c.l.b16 %v614
    %v1152 = vunpack.c.h.b16 %v614
    %v1153 = vunpack.c.l.b16 %v615
    %v1154 = vunpack.c.h.b16 %v615
    %v1155 = vunpack.c.l.b16 %v616
    %v1156 = vunpack.c.h.b16 %v616
    %v1157 = vunpack.c.l.b16 %v617
    %v1158 = vunpack.c.h.b16 %v617
    %v1159 = vunpack.c.l.b16 %v618
    %v1160 = vunpack.c.h.b16 %v618
    %v1161 = vunpack.c.l.b16 %v619
    %v1162 = vunpack.c.h.b16 %v619
    %v1163 = vunpack.c.l.b16 %v620
    %v1164 = vunpack.c.h.b16 %v620
    %v1165 = vunpack.c.l.b16 %v621
    %v1166 = vunpack.c.h.b16 %v621
    %v1167 = vunpack.c.l.b16 %v622
    %v1168 = vunpack.c.h.b16 %v622
    %v1169 = vunpack.c.l.b16 %v623
    %v1170 = vunpack.c.h.b16 %v623
    %v1171 = vunpack.c.l.b16 %v624
    %v1172 = vunpack.c.h.b16 %v624
    %v1173 = vunpack.c.l.b16 %v625
    %v1174 = vunpack.c.h.b16 %v625
    %v1175 = vunpack.c.l.b16 %v626
    %v1176 = vunpack.c.h.b16 %v626
    %v1177 = vunpack.c.l.b16 %v627
    %v1178 = vunpack.c.h.b16 %v627
    %v1179 = vunpack.c.l.b16 %v628
    %v1180 = vunpack.c.h.b16 %v628
    %v1181 = vunpack.c.l.b16 %v629
    %v1182 = vunpack.c.h.b16 %v629
    %v1183 = vunpack.c.l.b16 %v630
    %v1184 = vunpack.c.h.b16 %v630
    %v1185 = vunpack.c.l.b16 %v631
    %v1186 = vunpack.c.h.b16 %v631
    %v1187 = vunpack.c.l.b16 %v632
    %v1188 = vunpack.c.h.b16 %v632
    %v1189 = vunpack.c.l.b16 %v633
    %v1190 = vunpack.c.h.b16 %v633
    %v1191 = vunpack.c.l.b16 %v634
    %v1192 = vunpack.c.h.b16 %v634
    %v1193 = vunpack.c.l.b16 %v635
    %v1194 = vunpack.c.h.b16 %v635
    %v1195 = vunpack.c.l.b16 %v636
    %v1196 = vunpack.c.h.b16 %v636
    %v1197 = vunpack.c.l.b16 %v637
    %v1198 = vunpack.c.h.b16 %v637
    %v1199 = vunpack.c.l.b16 %v638
    %v1200 = vunpack.c.h.b16 %v638
    %v1201 = vunpack.c.l.b16 %v639
    %v1202 = vunpack.c.h.b16 %v639
    %v1203 = vunpack.c.l.b16 %v640
    %v1204 = vunpack.c.h.b16 %v640
    %v1205 = vunpack.c.l.b16 %v641
    %v1206 = vunpack.c.h.b16 %v641
    %v1207 = vunpack.c.l.b16 %v642
    %v1208 = vunpack.c.h.b16 %v642
    %v1209 = vunpack.c.l.b16 %v643
    %v1210 = vunpack.c.h.b16 %v643
    %v1211 = vunpack.c.l.b16 %v644
    %v1212 = vunpack.c.h.b16 %v644
    %v1213 = vunpack.c.l.b16 %v645
    %v1214 = vunpack.c.h.b16 %v645
    %v1215 = vunpack.c.l.b16 %v646
    %v1216 = vunpack.c.h.b16 %v646
    %v1217 = vunpack.c.l.b16 %v647
    %v1218 = vunpack.c.h.b16 %v647
    %v1219 = vunpack.c.l.b16 %v648
    %v1220 = vunpack.c.h.b16 %v648
    %v1221 = vunpack.c.l.b16 %v649
    %v1222 = vunpack.c.h.b16 %v649
    %v1223 = vunpack.c.l.b16 %v650
    %v1224 = vunpack.c.h.b16 %v650
    %v1225 = vunpack.c.l.b16 %v651
    %v1226 = vunpack.c.h.b16 %v651
    %v1227 = vunpack.c.l.b16 %v652
    %v1228 = vunpack.c.h.b16 %v652
    %v1229 = vunpack.c.l.b16 %v653
    %v1230 = vunpack.c.h.b16 %v653
    %v1231 = vunpack.c.l.b16 %v654
    %v1232 = vunpack.c.h.b16 %v654
    %v1233 = vunpack.c.l.b16 %v655
    %v1234 = vunpack.c.h.b16 %v655
    %v1235 = vunpack.c.l.b16 %v656
    %v1236 = vunpack.c.h.b16 %v656
    %v1237 = vunpack.c.l.b16 %v657
    %v1238 = vunpack.c.h.b16 %v657
    %v1239 = vunpack.c.l.b16 %v658
    %v1240 = vunpack.c.h.b16 %v658
    %v1241 = vunpack.c.l.b16 %v659
    %v1242 = vunpack.c.h.b16 %v659
    %v1243 = vunpack.c.l.b16 %v660
    %v1244 = vunpack.c.h.b16 %v660
    %v1245 = vunpack.c.l.b16 %v661
    %v1246 = vunpack.c.h.b16 %v661
    %v1247 = vunpack.c.l.b16 %v662
    %v1248 = vunpack.c.h.b16 %v662
    %v1249 = vunpack.c.l.b16 %v663
    %v1250 = vunpack.c.h.b16 %v663
    %v1251 = vunpack.c.l.b16 %v664
    %v1252 = vunpack.c.h.b16 %v664
    %v1253 = vunpack.c.l.b16 %v665
    %v1254 = vunpack.c.h.b16 %v665
    %v1255 = vunpack.c.l.b16 %v666
    %v1256 = vunpack.c.h.b16 %v666
    %v1257 = vunpack.c.l.b16 %v667
    %v1258 = vunpack.c.h.b16 %v667
    %v1259 = vunpack.c.l.b16 %v668
    %v1260 = vunpack.c.h.b16 %v668
    %v1261 = vunpack.c.l.b16 %v669
    %v1262 = vunpack.c.h.b16 %v669
    %v1263 = vunpack.c.l.b16 %v670
    %v1264 = vunpack.c.h.b16 %v670
    %v1265 = vunpack.c.l.b16 %v671
    %v1266 = vunpack.c.h.b16 %v671
    %v1267 = vunpack.c.l.b16 %v672
    %v1268 = vunpack.c.h.b16 %v672
    %v1269 = vunpack.c.l.b16 %v673
    %v1270 = vunpack.c.h.b16 %v673
    %v1271 = vunpack.c.l.b16 %v674
    %v1272 = vunpack.c.h.b16 %v674
    %v1273 = vunpack.c.l.b16 %v675
    %v1274 = vunpack.c.h.b16 %v675
    %v1275 = vunpack.c.l.b16 %v676
    %v1276 = vunpack.c.h.b16 %v676
    %v1277 = vunpack.c.l.b16 %v677
    %v1278 = vunpack.c.h.b16 %v677
    %v1279 = vunpack.c.l.b16 %v678
    %v1280 = vunpack.c.h.b16 %v678
    %v1281 = vunpack.c.l.b16 %v679
    %v1282 = vunpack.c.h.b16 %v679
    %v1283 = vunpack.c.l.b16 %v680
    %v1284 = vunpack.c.h.b16 %v680
    %v1285 = vunpack.c.l.b16 %v681
    %v1286 = vunpack.c.h.b16 %v681
    %v1287 = vunpack.c.l.b16 %v682
    %v1288 = vunpack.c.h.b16 %v682
    %v1289 = vunpack.c.l.b16 %v683
    %v1290 = vunpack.c.h.b16 %v683
    %v1291 = vunpack.c.l.b16 %v684
    %v1292 = vunpack.c.h.b16 %v684
    %v1293 = vunpack.c.l.b16 %v685
    %v1294 = vunpack.c.h.b16 %v685
    %v1295 = vunpack.c.l.b16 %v686
    %v1296 = vunpack.c.h.b16 %v686
    %v1297 = vunpack.c.l.b16 %v687
    %v1298 = vunpack.c.h.b16 %v687
    %v1299 = vunpack.c.l.b16 %v688
    %v1300 = vunpack.c.h.b16 %v688
    %v1301 = vunpack.c.l.b16 %v689
    %v1302 = vunpack.c.h.b16 %v689
    %v1303 = vunpack.c.l.b16 %v690
    %v1304 = vunpack.c.h.b16 %v690
    %v1305 = vunpack.c.l.b16 %v691
    %v1306 = vunpack.c.h.b16 %v691
    %v1307 = vunpack.c.l.b16 %v692
    %v1308 = vunpack.c.h.b16 %v692
    %v1309 = vunpack.c.l.b16 %v693
    %v1310 = vunpack.c.h.b16 %v693
    %v1311 = vunpack.c.l.b16 %v694
    %v1312 = vunpack.c.h.b16 %v694
    %v1313 = vunpack.c.l.b16 %v695
    %v1314 = vunpack.c.h.b16 %v695
    %v1315 = vunpack.c.l.b16 %v696
    %v1316 = vunpack.c.h.b16 %v696
    %v1317 = vunpack.c.l.b16 %v697
    %v1318 = vunpack.c.h.b16 %v697
    %v1319 = vunpack.c.l.b16 %v698
    %v1320 = vunpack.c.h.b16 %v698
    %v1321 = vunpack.c.l.b16 %v699
    %v1322 = vunpack.c.h.b16 %v699
    %v1323 = vunpack.c.l.b16 %v700
    %v1324 = vunpack.c.h.b16 %v700
    %v1325 = vunpack.c.l.b16 %v701
    %v1326 = vunpack.c.h.b16 %v701
    %v1327 = vunpack.c.l.b16 %v702
    %v1328 = vunpack.c.h.b16 %v702
    %v1329 = vunpack.c.l.b16 %v703
    %v1330 = vunpack.c.h.b16 %v703
    %v1331 = vunpack.c.l.b16 %v704
    %v1332 = vunpack.c.h.b16 %v704
    %v1333 = vunpack.c.l.b16 %v705
    %v1334 = vunpack.c.h.b16 %v705
    %v1335 = vunpack.c.l.b16 %v706
    %v1336 = vunpack.c.h.b16 %v706
    %v1337 = vunpack.c.l.b16 %v707
    %v1338 = vunpack.c.h.b16 %v707
    %v1339 = vunpack.c.l.b16 %v708
    %v1340 = vunpack.c.h.b16 %v708
    %v1341 = vunpack.c.l.b16 %v709
    %v1342 = vunpack.c.h.b16 %v709
    %v1343 = vunpack.c.l.b16 %v710
    %v1344 = vunpack.c.h.b16 %v710
    %v1345 = vunpack.c.l.b16 %v711
    %v1346 = vunpack.c.h.b16 %v711
    %v1347 = vunpack.c.l.b16 %v712
    %v1348 = vunpack.c.h.b16 %v712
    %v1349 = vunpack.c.l.b16 %v713
    %v1350 = vunpack.c.h.b16 %v713
    %v1351 = vunpack.c.l.b16 %v714
    %v1352 = vunpack.c.h.b16 %v714
    %v1353 = vunpack.c.l.b16 %v715
    %v1354 = vunpack.c.h.b16 %v715
    %v1355 = vunpack.c.l.b16 %v716
    %v1356 = vunpack.c.h.b16 %v716
    %v1357 = vunpack.c.l.b16 %v717
    %v1358 = vunpack.c.h.b16 %v717
    %v1359 = vunpack.c.l.b16 %v718
    %v1360 = vunpack.c.h.b16 %v718
    %v1361 = vunpack.c.l.b16 %v719
    %v1362 = vunpack.c.h.b16 %v719
    %v1363 = vunpack.c.l.b16 %v720
    %v1364 = vunpack.c.h.b16 %v720
    %v1365 = vunpack.c.l.b16 %v721
    %v1366 = vunpack.c.h.b16 %v721
    %v1367 = vunpack.c.l.b16 %v722
    %v1368 = vunpack.c.h.b16 %v722
    %v1369 = vunpack.c.l.b16 %v723
    %v1370 = vunpack.c.h.b16 %v723
    %v1371 = vunpack.c.l.b16 %v724
    %v1372 = vunpack.c.h.b16 %v724
    %v1373 = vunpack.c.l.b16 %v725
    %v1374 = vunpack.c.h.b16 %v725
    %v1375 = vunpack.c.l.b16 %v726
    %v1376 = vunpack.c.h.b16 %v726
    %v1377 = vunpack.c.l.b16 %v727
    %v1378 = vunpack.c.h.b16 %v727
    %v1379 = vunpack.c.l.b16 %v728
    %v1380 = vunpack.c.h.b16 %v728
    %v1381 = vunpack.c.l.b16 %v729
    %v1382 = vunpack.c.h.b16 %v729
    %v1383 = vunpack.c.l.b16 %v730
    %v1384 = vunpack.c.h.b16 %v730
    %v1385 = vunpack.c.l.b16 %v731
    %v1386 = vunpack.c.h.b16 %v731
    %v1387 = vunpack.c.l.b16 %v732
    %v1388 = vunpack.c.h.b16 %v732
    %v1389 = vunpack.c.l.b16 %v733
    %v1390 = vunpack.c.h.b16 %v733
    %v1391 = vunpack.c.l.b16 %v734
    %v1392 = vunpack.c.h.b16 %v734
    %v1393 = vunpack.c.l.b16 %v735
    %v1394 = vunpack.c.h.b16 %v735
    %v1395 = vunpack.c.l.b16 %v736
    %v1396 = vunpack.c.h.b16 %v736
    %v1397 = vunpack.c.l.b16 %v737
    %v1398 = vunpack.c.h.b16 %v737
    %v1399 = vunpack.c.l.b16 %v738
    %v1400 = vunpack.c.h.b16 %v738
    %v1401 = vunpack.c.l.b16 %v739
    %v1402 = vunpack.c.h.b16 %v739
    %v1403 = vunpack.c.l.b16 %v740
    %v1404 = vunpack.c.h.b16 %v740
    %v1405 = vunpack.c.l.b16 %v741
    %v1406 = vunpack.c.h.b16 %v741
    %v1407 = vunpack.c.l.b16 %v742
    %v1408 = vunpack.c.h.b16 %v742
    %v1409 = vunpack.c.l.b16 %v743
    %v1410 = vunpack.c.h.b16 %v743
    %v1411 = vunpack.c.l.b16 %v744
    %v1412 = vunpack.c.h.b16 %v744
    %v1413 = vunpack.c.l.b16 %v745
    %v1414 = vunpack.c.h.b16 %v745
    %v1415 = vunpack.c.l.b16 %v746
    %v1416 = vunpack.c.h.b16 %v746
    %v1417 = vunpack.c.l.b16 %v747
    %v1418 = vunpack.c.h.b16 %v747
    %v1419 = vunpack.c.l.b16 %v748
    %v1420 = vunpack.c.h.b16 %v748
    %v1421 = vunpack.c.l.b16 %v749
    %v1422 = vunpack.c.h.b16 %v749
    %v1423 = vunpack.c.l.b16 %v750
    %v1424 = vunpack.c.h.b16 %v750
    %v1425 = vunpack.c.l.b16 %v751
    %v1426 = vunpack.c.h.b16 %v751
    %v1427 = vunpack.c.l.b16 %v752
    %v1428 = vunpack.c.h.b16 %v752
    %v1429 = vunpack.c.l.b16 %v753
    %v1430 = vunpack.c.h.b16 %v753
    %v1431 = vunpack.c.l.b16 %v754
    %v1432 = vunpack.c.h.b16 %v754
    %v1433 = vunpack.c.l.b16 %v755
    %v1434 = vunpack.c.h.b16 %v755
    %v1435 = vunpack.c.l.b16 %v756
    %v1436 = vunpack.c.h.b16 %v756
    %v1437 = vunpack.c.l.b16 %v757
    %v1438 = vunpack.c.h.b16 %v757
    %v1439 = vunpack.c.l.b16 %v758
    %v1440 = vunpack.c.h.b16 %v758
    %v1441 = vunpack.c.l.b16 %v759
    %v1442 = vunpack.c.h.b16 %v759
    %v1443 = vunpack.c.l.b16 %v760
    %v1444 = vunpack.c.h.b16 %v760
    %v1445 = vunpack.c.l.b16 %v761
    %v1446 = vunpack.c.h.b16 %v761
    %v1447 = vunpack.c.l.b16 %v762
    %v1448 = vunpack.c.h.b16 %v762
    %v1449 = vunpack.c.l.b16 %v763
    %v1450 = vunpack.c.h.b16 %v763
    %v1451 = vunpack.c.l.b16 %v764
    %v1452 = vunpack.c.h.b16 %v764
    %v1453 = vunpack.c.l.b16 %v765
    %v1454 = vunpack.c.h.b16 %v765
    %v1455 = vunpack.c.l.b16 %v766
    %v1456 = vunpack.c.h.b16 %v766
    %v1457 = vunpack.c.l.b16 %v767
    %v1458 = vunpack.c.h.b16 %v767
    %v1459 = vunpack.c.l.b16 %v768
    %v1460 = vunpack.c.h.b16 %v768
    %v1461 = vunpack.c.l.b16 %v769
    %v1462 = vunpack.c.h.b16 %v769
    %v1463 = vunpack.c.l.b16 %v770
    %v1464 = vunpack.c.h.b16 %v770
    %v1465 = vunpack.c.l.b16 %v771
    %v1466 = vunpack.c.h.b16 %v771
    %v1467 = vunpack.c.l.b16 %v772
    %v1468 = vunpack.c.h.b16 %v772
    %v1469 = vunpack.c.l.b16 %v773
    %v1470 = vunpack.c.h.b16 %v773
    %v1471 = vunpack.c.l.b16 %v774
    %v1472 = vunpack.c.h.b16 %v774
    %v1473 = vunpack.c.l.b16 %v775
    %v1474 = vunpack.c.h.b16 %v775
    %v1475 = vunpack.c.l.b16 %v776
    %v1476 = vunpack.c.h.b16 %v776
    %v1477 = vunpack.c.l.b16 %v777
    %v1478 = vunpack.c.h.b16 %v777
    %v1479 = vunpack.c.l.b16 %v778
    %v1480 = vunpack.c.h.b16 %v778
    %v1481 = vunpack.c.l.b16 %v779
    %v1482 = vunpack.c.h.b16 %v779
    %v1483 = vunpack.c.l.b16 %v780
    %v1484 = vunpack.c.h.b16 %v780
    %v1485 = vunpack.c.l.b16 %v781
    %v1486 = vunpack.c.h.b16 %v781
    %v1487 = vunpack.c.l.b16 %v782
    %v1488 = vunpack.c.h.b16 %v782
    %v1489 = vunpack.c.l.b16 %v783
    %v1490 = vunpack.c.h.b16 %v783
    %v1491 = vunpack.c.l.b16 %v784
    %v1492 = vunpack.c.h.b16 %v784
    %v1493 = vunpack.c.l.b16 %v785
    %v1494 = vunpack.c.h.b16 %v785
    %v1495 = vunpack.c.l.b16 %v786
    %v1496 = vunpack.c.h.b16 %v786
    %v1497 = vunpack.c.l.b16 %v787
    %v1498 = vunpack.c.h.b16 %v787
    %v1499 = vunpack.c.l.b16 %v788
    %v1500 = vunpack.c.h.b16 %v788
    %v1501 = vunpack.c.l.b16 %v789
    %v1502 = vunpack.c.h.b16 %v789
    %v1503 = vunpack.c.l.b16 %v790
    %v1504 = vunpack.c.h.b16 %v790
    %v1505 = vunpack.c.l.b16 %v791
    %v1506 = vunpack.c.h.b16 %v791
    %v1507 = vunpack.c.l.b16 %v792
    %v1508 = vunpack.c.h.b16 %v792
    %v1509 = vunpack.c.l.b16 %v793
    %v1510 = vunpack.c.h.b16 %v793
    %v1511 = vunpack.c.l.b16 %v794
    %v1512 = vunpack.c.h.b16 %v794
    %v1513 = vunpack.c.l.b16 %v795
    %v1514 = vunpack.c.h.b16 %v795
    %v1515 = vunpack.c.l.b16 %v796
    %v1516 = vunpack.c.h.b16 %v796
    %v1517 = vunpack.c.l.b16 %v797
    %v1518 = vunpack.c.h.b16 %v797
    %v1519 = vunpack.c.l.b16 %v798
    %v1520 = vunpack.c.h.b16 %v798
    %v1521 = vunpack.c.l.b16 %v799
    %v1522 = vunpack.c.h.b16 %v799
    %v1523 = vunpack.c.l.b16 %v800
    %v1524 = vunpack.c.h.b16 %v800
    %v1525 = vunpack.c.l.b16 %v801
    %v1526 = vunpack.c.h.b16 %v801
    %v1527 = vunpack.c.l.b16 %v802
    %v1528 = vunpack.c.h.b16 %v802
    %v1529 = vunpack.c.l.b16 %v803
    %v1530 = vunpack.c.h.b16 %v803
    %v1531 = vunpack.c.l.b16 %v804
    %v1532 = vunpack.c.h.b16 %v804
    %v1533 = vunpack.c.l.b16 %v805
    %v1534 = vunpack.c.h.b16 %v805
    %v1535 = vunpack.c.l.b16 %v806
    %v1536 = vunpack.c.h.b16 %v806
    %v1537 = vunpack.c.l.b16 %v807
    %v1538 = vunpack.c.h.b16 %v807
    %v1539 = vunpack.c.l.b16 %v808
    %v1540 = vunpack.c.h.b16 %v808
    %v1541 = vunpack.c.l.b16 %v809
    %v1542 = vunpack.c.h.b16 %v809
    %v1543 = vunpack.c.l.b16 %v810
    %v1544 = vunpack.c.h.b16 %v810
    %v1545 = vunpack.c.l.b16 %v811
    %v1546 = vunpack.c.h.b16 %v811
    %v1547 = vunpack.c.l.b16 %v812
    %v1548 = vunpack.c.h.b16 %v812
    %v1549 = vunpack.c.l.b16 %v813
    %v1550 = vunpack.c.h.b16 %v813
    %v1551 = vunpack.c.l.b16 %v814
    %v1552 = vunpack.c.h.b16 %v814
    %v1553 = vunpack.c.l.b16 %v815
    %v1554 = vunpack.c.h.b16 %v815
    %v1555 = vunpack.c.l.b16 %v816
    %v1556 = vunpack.c.h.b16 %v816
    %v1557 = vunpack.c.l.b16 %v817
    %v1558 = vunpack.c.h.b16 %v817
    %v1559 = vunpack.c.l.b16 %v818
    %v1560 = vunpack.c.h.b16 %v818
    %v1561 = vunpack.c.l.b16 %v819
    %v1562 = vunpack.c.h.b16 %v819
    %v1563 = vunpack.c.l.b16 %v820
    %v1564 = vunpack.c.h.b16 %v820
    %v1565 = vunpack.c.l.b16 %v821
    %v1566 = vunpack.c.h.b16 %v821
    %v1567 = vunpack.c.l.b16 %v822
    %v1568 = vunpack.c.h.b16 %v822
    %v1569 = vunpack.c.l.b16 %v823
    %v1570 = vunpack.c.h.b16 %v823
    %v1571 = vunpack.c.l.b16 %v824
    %v1572 = vunpack.c.h.b16 %v824
    %v1573 = vunpack.c.l.b16 %v825
    %v1574 = vunpack.c.h.b16 %v825
    %v1575 = vunpack.c.l.b16 %v826
    %v1576 = vunpack.c.h.b16 %v826
    %v1577 = vunpack.c.l.b16 %v827
    %v1578 = vunpack.c.h.b16 %v827
    %v1579 = vunpack.c.l.b16 %v828
    %v1580 = vunpack.c.h.b16 %v828
    %v1581 = vunpack.c.l.b16 %v829
    %v1582 = vunpack.c.h.b16 %v829
    %v1583 = vunpack.c.l.b16 %v830
    %v1584 = vunpack.c.h.b16 %v830
    %v1585 = vunpack.c.l.b16 %v831
    %v1586 = vunpack.c.h.b16 %v831
    %v1587 = vunpack.c.l.b16 %v832
    %v1588 = vunpack.c.h.b16 %v832
    %v1589 = vunpack.c.l.b16 %v833
    %v1590 = vunpack.c.h.b16 %v833
    %v1591 = vunpack.c.l.b16 %v834
    %v1592 = vunpack.c.h.b16 %v834
    %v1593 = vunpack.c.l.b16 %v835
    %v1594 = vunpack.c.h.b16 %v835
    %v1595 = vunpack.c.l.b16 %v836
    %v1596 = vunpack.c.h.b16 %v836
    %v1597 = vunpack.c.l.b16 %v837
    %v1598 = vunpack.c.h.b16 %v837
    %v1599 = vunpack.c.l.b16 %v838
    %v1600 = vunpack.c.h.b16 %v838
    %v1601 = vunpack.c.l.b16 %v839
    %v1602 = vunpack.c.h.b16 %v839
    %v1603 = vunpack.c.l.b16 %v840
    %v1604 = vunpack.c.h.b16 %v840
    %v1605 = vunpack.c.l.b16 %v841
    %v1606 = vunpack.c.h.b16 %v841
    %v1607 = vunpack.c.l.b16 %v842
    %v1608 = vunpack.c.h.b16 %v842
    %v1609 = vunpack.c.l.b16 %v843
    %v1610 = vunpack.c.h.b16 %v843
    %v1611 = vunpack.c.l.b16 %v844
    %v1612 = vunpack.c.h.b16 %v844
    %v1613 = vpack.c.b16 %v1105, %v1101
    %v1614 = vpack.c.b16 %v1106, %v1102
    %v1615 = vpack.c.b16 %v1107, %v1103
    %v1616 = vpack.c.b16 %v1108, %v1104
    %v1617 = vpack.c.b16 %v1113, %v1109
    %v1618 = vpack.c.b16 %v1114, %v1110
    %v1619 = vpack.c.b16 %v1115, %v1111
    %v1620 = vpack.c.b16 %v1116, %v1112
    %v1621 = vpack.c.b16 %v1121, %v1117
    %v1622 = vpack.c.b16 %v1122, %v1118
    %v1623 = vpack.c.b16 %v1123, %v1119
    %v1624 = vpack.c.b16 %v1124, %v1120
    %v1625 = vpack.c.b16 %v1129, %v1125
    %v1626 = vpack.c.b16 %v1130, %v1126
    %v1627 = vpack.c.b16 %v1131, %v1127
    %v1628 = vpack.c.b16 %v1132, %v1128
    %v1629 = vpack.c.b16 %v1137, %v1133
    %v1630 = vpack.c.b16 %v1138, %v1134
    %v1631 = vpack.c.b16 %v1139, %v1135
    %v1632 = vpack.c.b16 %v1140, %v1136
    %v1633 = vpack.c.b16 %v1145, %v1141
    %v1634 = vpack.c.b16 %v1146, %v1142
    %v1635 = vpack.c.b16 %v1147, %v1143
    %v1636 = vpack.c.b16 %v1148, %v1144
    %v1637 = vpack.c.b16 %v1153, %v1149
    %v1638 = vpack.c.b16 %v1154, %v1150
    %v1639 = vpack.c.b16 %v1155, %v1151
    %v1640 = vpack.c.b16 %v1156, %v1152
    %v1641 = vpack.c.b16 %v1161, %v1157
    %v1642 = vpack.c.b16 %v1162, %v1158
    %v1643 = vpack.c.b16 %v1163, %v1159
    %v1644 = vpack.c.b16 %v1164, %v1160
    %v1645 = vpack.c.b16 %v1169, %v1165
    %v1646 = vpack.c.b16 %v1170, %v1166
    %v1647 = vpack.c.b16 %v1171, %v1167
    %v1648 = vpack.c.b16 %v1172, %v1168
    %v1649 = vpack.c.b16 %v1177, %v1173
    %v1650 = vpack.c.b16 %v1178, %v1174
    %v1651 = vpack.c.b16 %v1179, %v1175
    %v1652 = vpack.c.b16 %v1180, %v1176
    %v1653 = vpack.c.b16 %v1185, %v1181
    %v1654 = vpack.c.b16 %v1186, %v1182
    %v1655 = vpack.c.b16 %v1187, %v1183
    %v1656 = vpack.c.b16 %v1188, %v1184
    %v1657 = vpack.c.b16 %v1193, %v1189
    %v1658 = vpack.c.b16 %v1194, %v1190
    %v1659 = vpack.c.b16 %v1195, %v1191
    %v1660 = vpack.c.b16 %v1196, %v1192
    %v1661 = vpack.c.b16 %v1201, %v1197
    %v1662 = vpack.c.b16 %v1202, %v1198
    %v1663 = vpack.c.b16 %v1203, %v1199
    %v1664 = vpack.c.b16 %v1204, %v1200
    %v1665 = vpack.c.b16 %v1209, %v1205
    %v1666 = vpack.c.b16 %v1210, %v1206
    %v1667 = vpack.c.b16 %v1211, %v1207
    %v1668 = vpack.c.b16 %v1212, %v1208
    %v1669 = vpack.c.b16 %v1217, %v1213
    %v1670 = vpack.c.b16 %v1218, %v1214
    %v1671 = vpack.c.b16 %v1219, %v1215
    %v1672 = vpack.c.b16 %v1220, %v1216
    %v1673 = vpack.c.b16 %v1225, %v1221
    %v1674 = vpack.c.b16 %v1226, %v1222
    %v1675 = vpack.c.b16 %v1227, %v1223
    %v1676 = vpack.c.b16 %v1228, %v1224
    %v1677 = vpack.c.b16 %v1233, %v1229
    %v1678 = vpack.c.b16 %v1234, %v1230
    %v1679 = vpack.c.b16 %v1235, %v1231
    %v1680 = vpack.c.b16 %v1236, %v1232
    %v1681 = vpack.c.b16 %v1241, %v1237
    %v1682 = vpack.c.b16 %v1242, %v1238
    %v1683 = vpack.c.b16 %v1243, %v1239
    %v1684 = vpack.c.b16 %v1244, %v1240
    %v1685 = vpack.c.b16 %v1249, %v1245
    %v1686 = vpack.c.b16 %v1250, %v1246
    %v1687 = vpack.c.b16 %v1251, %v1247
    %v1688 = vpack.c.b16 %v1252, %v1248
    %v1689 = vpack.c.b16 %v1257, %v1253
    %v1690 = vpack.c.b16 %v1258, %v1254
    %v1691 = vpack.c.b16 %v1259, %v1255
    %v1692 = vpack.c.b16 %v1260, %v1256
    %v1693 = vpack.c.b16 %v1265, %v1261
    %v1694 = vpack.c.b16 %v1266, %v1262
    %v1695 = vpack.c.b16 %v1267, %v1263
    %v1696 = vpack.c.b16 %v1268, %v1264
    %v1697 = vpack.c.b16 %v1273, %v1269
    %v1698 = vpack.c.b16 %v1274, %v1270
    %v1699 = vpack.c.b16 %v1275, %v1271
    %v1700 = vpack.c.b16 %v1276, %v1272
    %v1701 = vpack.c.b16 %v1281, %v1277
    %v1702 = vpack.c.b16 %v1282, %v1278
    %v1703 = vpack.c.b16 %v1283, %v1279
    %v1704 = vpack.c.b16 %v1284, %v1280
    %v1705 = vpack.c.b16 %v1289, %v1285
    %v1706 = vpack.c.b16 %v1290, %v1286
    %v1707 = vpack.c.b16 %v1291, %v1287
    %v1708 = vpack.c.b16 %v1292, %v1288
    %v1709 = vpack.c.b16 %v1297, %v1293
    %v1710 = vpack.c.b16 %v1298, %v1294
    %v1711 = vpack.c.b16 %v1299, %v1295
    %v1712 = vpack.c.b16 %v1300, %v1296
    %v1713 = vpack.c.b16 %v1305, %v1301
    %v1714 = vpack.c.b16 %v1306, %v1302
    %v1715 = vpack.c.b16 %v1307, %v1303
    %v1716 = vpack.c.b16 %v1308, %v1304
    %v1717 = vpack.c.b16 %v1313, %v1309
    %v1718 = vpack.c.b16 %v1314, %v1310
    %v1719 = vpack.c.b16 %v1315, %v1311
    %v1720 = vpack.c.b16 %v1316, %v1312
    %v1721 = vpack.c.b16 %v1321, %v1317
    %v1722 = vpack.c.b16 %v1322, %v1318
    %v1723 = vpack.c.b16 %v1323, %v1319
    %v1724 = vpack.c.b16 %v1324, %v1320
    %v1725 = vpack.c.b16 %v1329, %v1325
    %v1726 = vpack.c.b16 %v1330, %v1326
    %v1727 = vpack.c.b16 %v1331, %v1327
    %v1728 = vpack.c.b16 %v1332, %v1328
    %v1729 = vpack.c.b16 %v1337, %v1333
    %v1730 = vpack.c.b16 %v1338, %v1334
    %v1731 = vpack.c.b16 %v1339, %v1335
    %v1732 = vpack.c.b16 %v1340, %v1336
    %v1733 = vpack.c.b16 %v1345, %v1341
    %v1734 = vpack.c.b16 %v1346, %v1342
    %v1735 = vpack.c.b16 %v1347, %v1343
    %v1736 = vpack.c.b16 %v1348, %v1344
    %v1737 = vpack.c.b16 %v1353, %v1349
    %v1738 = vpack.c.b16 %v1354, %v1350
    %v1739 = vpack.c.b16 %v1355, %v1351
    %v1740 = vpack.c.b16 %v1356, %v1352
    %v1741 = vpack.c.b16 %v1361, %v1357
    %v1742 = vpack.c.b16 %v1362, %v1358
    %v1743 = vpack.c.b16 %v1363, %v1359
    %v1744 = vpack.c.b16 %v1364, %v1360
    %v1745 = vpack.c.b16 %v1369, %v1365
    %v1746 = vpack.c.b16 %v1370, %v1366
    %v1747 = vpack.c.b16 %v1371, %v1367
    %v1748 = vpack.c.b16 %v1372, %v1368
    %v1749 = vpack.c.b16 %v1377, %v1373
    %v1750 = vpack.c.b16 %v1378, %v1374
    %v1751 = vpack.c.b16 %v1379, %v1375
    %v1752 = vpack.c.b16 %v1380, %v1376
    %v1753 = vpack.c.b16 %v1385, %v1381
    %v1754 = vpack.c.b16 %v1386, %v1382
    %v1755 = vpack.c.b16 %v1387, %v1383
    %v1756 = vpack.c.b16 %v1388, %v1384
    %v1757 = vpack.c.b16 %v1393, %v1389
    %v1758 = vpack.c.b16 %v1394, %v1390
    %v1759 = vpack.c.b16 %v1395, %v1391
    %v1760 = vpack.c.b16 %v1396, %v1392
    %v1761 = vpack.c.b16 %v1401, %v1397
    %v1762 = vpack.c.b16 %v1402, %v1398
    %v1763 = vpack.c.b16 %v1403, %v1399
    %v1764 = vpack.c.b16 %v1404, %v1400
    %v1765 = vpack.c.b16 %v1409, %v1405
    %v1766 = vpack.c.b16 %v1410, %v1406
    %v1767 = vpack.c.b16 %v1411, %v1407
    %v1768 = vpack.c.b16 %v1412, %v1408
    %v1769 = vpack.c.b16 %v1417, %v1413
    %v1770 = vpack.c.b16 %v1418, %v1414
    %v1771 = vpack.c.b16 %v1419, %v1415
    %v1772 = vpack.c.b16 %v1420, %v1416
    %v1773 = vpack.c.b16 %v1425, %v1421
    %v1774 = vpack.c.b16 %v1426, %v1422
    %v1775 = vpack.c.b16 %v1427, %v1423
    %v1776 = vpack.c.b16 %v1428, %v1424
    %v1777 = vpack.c.b16 %v1433, %v1429
    %v1778 = vpack.c.b16 %v1434, %v1430
    %v1779 = vpack.c.b16 %v1435, %v1431
    %v1780 = vpack.c.b16 %v1436, %v1432
    %v1781 = vpack.c.b16 %v1441, %v1437
    %v1782 = vpack.c.b16 %v1442, %v1438
    %v1783 = vpack.c.b16 %v1443, %v1439
    %v1784 = vpack.c.b16 %v1444, %v1440
    %v1785 = vpack.c.b16 %v1449, %v1445
    %v1786 = vpack.c.b16 %v1450, %v1446
    %v1787 = vpack.c.b16 %v1451, %v1447
    %v1788 = vpack.c.b16 %v1452, %v1448
    %v1789 = vpack.c.b16 %v1457, %v1453
    %v1790 = vpack.c.b16 %v1458, %v1454
    %v1791 = vpack.c.b16 %v1459, %v1455
    %v1792 = vpack.c.b16 %v1460, %v1456
    %v1793 = vpack.c.b16 %v1465, %v1461
    %v1794 = vpack.c.b16 %v1466, %v1462
    %v1795 = vpack.c.b16 %v1467, %v1463
    %v1796 = vpack.c.b16 %v1468, %v1464
    %v1797 = vpack.c.b16 %v1473, %v1469
    %v1798 = vpack.c.b16 %v1474, %v1470
    %v1799 = vpack.c.b16 %v1475, %v1471
    %v1800 = vpack.c.b16 %v1476, %v1472
    %v1801 = vpack.c.b16 %v1481, %v1477
    %v1802 = vpack.c.b16 %v1482, %v1478
    %v1803 = vpack.c.b16 %v1483, %v1479
    %v1804 = vpack.c.b16 %v1484, %v1480
    %v1805 = vpack.c.b16 %v1489, %v1485
    %v1806 = vpack.c.b16 %v1490, %v1486
    %v1807 = vpack.c.b16 %v1491, %v1487
    %v1808 = vpack.c.b16 %v1492, %v1488
    %v1809 = vpack.c.b16 %v1497, %v1493
    %v1810 = vpack.c.b16 %v1498, %v1494
    %v1811 = vpack.c.b16 %v1499, %v1495
    %v1812 = vpack.c.b16 %v1500, %v1496
    %v1813 = vpack.c.b16 %v1505, %v1501
    %v1814 = vpack.c.b16 %v1506, %v1502
    %v1815 = vpack.c.b16 %v1507, %v1503
    %v1816 = vpack.c.b16 %v1508, %v1504
    %v1817 = vpack.c.b16 %v1513, %v1509
    %v1818 = vpack.c.b16 %v1514, %v1510
    %v1819 = vpack.c.b16 %v1515, %v1511
    %v1820 = vpack.c.b16 %v1516, %v1512
    %v1821 = vpack.c.b16 %v1521, %v1517
    %v1822 = vpack.c.b16 %v1522, %v1518
    %v1823 = vpack.c.b16 %v1523, %v1519
    %v1824 = vpack.c.b16 %v1524, %v1520
    %v1825 = vpack.c.b16 %v1529, %v1525
    %v1826 = vpack.c.b16 %v1530, %v1526
    %v1827 = vpack.c.b16 %v1531, %v1527
    %v1828 = vpack.c.b16 %v1532, %v1528
    %v1829 = vpack.c.b16 %v1537, %v1533
    %v1830 = vpack.c.b16 %v1538, %v1534
    %v1831 = vpack.c.b16 %v1539, %v1535
    %v1832 = vpack.c.b16 %v1540, %v1536
    %v1833 = vpack.c.b16 %v1545, %v1541
    %v1834 = vpack.c.b16 %v1546, %v1542
    %v1835 = vpack.c.b16 %v1547, %v1543
    %v1836 = vpack.c.b16 %v1548, %v1544
    %v1837 = vpack.c.b16 %v1553, %v1549
    %v1838 = vpack.c.b16 %v1554, %v1550
    %v1839 = vpack.c.b16 %v1555, %v1551
    %v1840 = vpack.c.b16 %v1556, %v1552
    %v1841 = vpack.c.b16 %v1561, %v1557
    %v1842 = vpack.c.b16 %v1562, %v1558
    %v1843 = vpack.c.b16 %v1563, %v1559
    %v1844 = vpack.c.b16 %v1564, %v1560
    %v1845 = vpack.c.b16 %v1569, %v1565
    %v1846 = vpack.c.b16 %v1570, %v1566
    %v1847 = vpack.c.b16 %v1571, %v1567
    %v1848 = vpack.c.b16 %v1572, %v1568
    %v1849 = vpack.c.b16 %v1577, %v1573
    %v1850 = vpack.c.b16 %v1578, %v1574
    %v1851 = vpack.c.b16 %v1579, %v1575
    %v1852 = vpack.c.b16 %v1580, %v1576
    %v1853 = vpack.c.b16 %v1585, %v1581
    %v1854 = vpack.c.b16 %v1586, %v1582
    %v1855 = vpack.c.b16 %v1587, %v1583
    %v1856 = vpack.c.b16 %v1588, %v1584
    %v1857 = vpack.c.b16 %v1593, %v1589
    %v1858 = vpack.c.b16 %v1594, %v1590
    %v1859 = vpack.c.b16 %v1595, %v1591
    %v1860 = vpack.c.b16 %v1596, %v1592
    %v1861 = vpack.c.b16 %v1601, %v1597
    %v1862 = vpack.c.b16 %v1602, %v1598
    %v1863 = vpack.c.b16 %v1603, %v1599
    %v1864 = vpack.c.b16 %v1604, %v1600
    %v1865 = vpack.c.b16 %v1609, %v1605
    %v1866 = vpack.c.b16 %v1610, %v1606
    %v1867 = vpack.c.b16 %v1611, %v1607
    %v1868 = vpack.c.b16 %v1612, %v1608
    %2125 = vmatprep.subr.bf16.mxu0 %v1614
    %2126 = vmatpush1.bf16.msra.mxu0 %v1613
    %2127 = vmatprep.subr.bf16.mxu0 %v1618
    %2128 = vmatpush1.bf16.msra.mxu0 %v1617
    %2129 = vmatprep.subr.bf16.mxu0 %v1622
    %2130 = vmatpush1.bf16.msra.mxu0 %v1621
    %2131 = vmatprep.subr.bf16.mxu0 %v1626
    %2132 = vmatpush1.bf16.msra.mxu0 %v1625
    %2133 = vmatprep.subr.bf16.mxu0 %v1630
    %2134 = vmatpush1.bf16.msra.mxu0 %v1629
    %2135 = vmatprep.subr.bf16.mxu0 %v1634
    %2136 = vmatpush1.bf16.msra.mxu0 %v1633
    %2137 = vmatprep.subr.bf16.mxu0 %v1638
    %2138 = vmatpush1.bf16.msra.mxu0 %v1637
    %2139 = vmatprep.subr.bf16.mxu0 %v1642
    %2140 = vmatpush1.bf16.msra.mxu0 %v1641
    %2141 = vmatprep.subr.bf16.mxu0 %v1646
    %2142 = vmatpush1.bf16.msra.mxu0 %v1645
    %2143 = vmatprep.subr.bf16.mxu0 %v1650
    %2144 = vmatpush1.bf16.msra.mxu0 %v1649
    %2145 = vmatprep.subr.bf16.mxu0 %v1654
    %2146 = vmatpush1.bf16.msra.mxu0 %v1653
    %2147 = vmatprep.subr.bf16.mxu0 %v1658
    %2148 = vmatpush1.bf16.msra.mxu0 %v1657
    %2149 = vmatprep.subr.bf16.mxu0 %v1662
    %2150 = vmatpush1.bf16.msra.mxu0 %v1661
    %2151 = vmatprep.subr.bf16.mxu0 %v1666
    %2152 = vmatpush1.bf16.msra.mxu0 %v1665
    %2153 = vmatprep.subr.bf16.mxu0 %v1670
    %2154 = vmatpush1.bf16.msra.mxu0 %v1669
    %2155 = vmatprep.subr.bf16.mxu0 %v1674
    %2156 = vmatpush1.bf16.msra.mxu0 %v1673
    %2157 = vmatprep.mubr.bf16.mxu0 %v581
    %2158 = vmatmul.mubr.bf16.gmra.mrb[0].mxu0 %v580
    %v2159 = vpop.f32.mrb[0].mxu0
    %v2160 = vadd.f32 0.0, %v2159
    %v2161 = vpop.f32.mrb[0].mxu0
    %v2162 = vadd.f32 0.0, %v2161
    %v2163 = vpop.f32.mrb[0].mxu0
    %v2164 = vpop.f32.mrb[0].mxu0
    %2165 = vdwg.mxu0
    %2166 = vmatprep.subr.bf16.mxu0 %v1678
    %2167 = vmatpush1.bf16.msra.mxu0 %v1677
    %2168 = vmatprep.subr.bf16.mxu0 %v1682
    %2169 = vmatpush1.bf16.msra.mxu0 %v1681
    %2170 = vmatprep.subr.bf16.mxu0 %v1686
    %2171 = vmatpush1.bf16.msra.mxu0 %v1685
    %2172 = vmatprep.subr.bf16.mxu0 %v1690
    %2173 = vmatpush1.bf16.msra.mxu0 %v1689
    %2174 = vmatprep.subr.bf16.mxu0 %v1694
    %2175 = vmatpush1.bf16.msra.mxu0 %v1693
    %2176 = vmatprep.subr.bf16.mxu0 %v1698
    %2177 = vmatpush1.bf16.msra.mxu0 %v1697
    %2178 = vmatprep.subr.bf16.mxu0 %v1702
    %2179 = vmatpush1.bf16.msra.mxu0 %v1701
    %2180 = vmatprep.subr.bf16.mxu0 %v1706
    %2181 = vmatpush1.bf16.msra.mxu0 %v1705
    %2182 = vmatprep.subr.bf16.mxu0 %v1710
    %2183 = vmatpush1.bf16.msra.mxu0 %v1709
    %2184 = vmatprep.subr.bf16.mxu0 %v1714
    %2185 = vmatpush1.bf16.msra.mxu0 %v1713
    %2186 = vmatprep.subr.bf16.mxu0 %v1718
    %2187 = vmatpush1.bf16.msra.mxu0 %v1717
    %2188 = vmatprep.subr.bf16.mxu0 %v1722
    %2189 = vmatpush1.bf16.msra.mxu0 %v1721
    %2190 = vmatprep.subr.bf16.mxu0 %v1726
    %2191 = vmatpush1.bf16.msra.mxu0 %v1725
    %2192 = vmatprep.subr.bf16.mxu0 %v1730
    %2193 = vmatpush1.bf16.msra.mxu0 %v1729
    %2194 = vmatprep.subr.bf16.mxu0 %v1734
    %2195 = vmatpush1.bf16.msra.mxu0 %v1733
    %2196 = vmatprep.subr.bf16.mxu0 %v1738
    %2197 = vmatpush1.bf16.msra.mxu0 %v1737
    %2198 = vmatprep.mubr.bf16.mxu0 %v583
    %2199 = vmatmul.mubr.bf16.gmra.mrb[0].mxu0 %v582
    %v2200 = vpop.f32.mrb[0].mxu0
    %v2201 = vadd.f32 %v2160, %v2200
    %v2202 = vpop.f32.mrb[0].mxu0
    %v2203 = vadd.f32 %v2162, %v2202
    %v2204 = vpop.f32.mrb[0].mxu0
    %v2205 = vpop.f32.mrb[0].mxu0
    %2206 = vdwg.mxu0
    %2207 = vmatprep.subr.bf16.mxu0 %v1742
    %2208 = vmatpush1.bf16.msra.mxu0 %v1741
    %2209 = vmatprep.subr.bf16.mxu0 %v1746
    %2210 = vmatpush1.bf16.msra.mxu0 %v1745
    %2211 = vmatprep.subr.bf16.mxu0 %v1750
    %2212 = vmatpush1.bf16.msra.mxu0 %v1749
    %2213 = vmatprep.subr.bf16.mxu0 %v1754
    %2214 = vmatpush1.bf16.msra.mxu0 %v1753
    %2215 = vmatprep.subr.bf16.mxu0 %v1758
    %2216 = vmatpush1.bf16.msra.mxu0 %v1757
    %2217 = vmatprep.subr.bf16.mxu0 %v1762
    %2218 = vmatpush1.bf16.msra.mxu0 %v1761
    %2219 = vmatprep.subr.bf16.mxu0 %v1766
    %2220 = vmatpush1.bf16.msra.mxu0 %v1765
    %2221 = vmatprep.subr.bf16.mxu0 %v1770
    %2222 = vmatpush1.bf16.msra.mxu0 %v1769
    %2223 = vmatprep.subr.bf16.mxu0 %v1774
    %2224 = vmatpush1.bf16.msra.mxu0 %v1773
    %2225 = vmatprep.subr.bf16.mxu0 %v1778
    %2226 = vmatpush1.bf16.msra.mxu0 %v1777
    %2227 = vmatprep.subr.bf16.mxu0 %v1782
    %2228 = vmatpush1.bf16.msra.mxu0 %v1781
    %2229 = vmatprep.subr.bf16.mxu0 %v1786
    %2230 = vmatpush1.bf16.msra.mxu0 %v1785
    %2231 = vmatprep.subr.bf16.mxu0 %v1790
    %2232 = vmatpush1.bf16.msra.mxu0 %v1789
    %2233 = vmatprep.subr.bf16.mxu0 %v1794
    %2234 = vmatpush1.bf16.msra.mxu0 %v1793
    %2235 = vmatprep.subr.bf16.mxu0 %v1798
    %2236 = vmatpush1.bf16.msra.mxu0 %v1797
    %2237 = vmatprep.subr.bf16.mxu0 %v1802
    %2238 = vmatpush1.bf16.msra.mxu0 %v1801
    %2239 = vmatprep.mubr.bf16.mxu0 %v585
    %2240 = vmatmul.mubr.bf16.gmra.mrb[0].mxu0 %v584
    %v2241 = vpop.f32.mrb[0].mxu0
    %v2242 = vadd.f32 %v2201, %v2241
    %v2243 = vpop.f32.mrb[0].mxu0
    %v2244 = vadd.f32 %v2203, %v2243
    %v2245 = vpop.f32.mrb[0].mxu0
    %v2246 = vpop.f32.mrb[0].mxu0
    %2247 = vdwg.mxu0
    %2248 = vmatprep.subr.bf16.mxu0 %v1806
    %2249 = vmatpush1.bf16.msra.mxu0 %v1805
    %2250 = vmatprep.subr.bf16.mxu0 %v1810
    %2251 = vmatpush1.bf16.msra.mxu0 %v1809
    %2252 = vmatprep.subr.bf16.mxu0 %v1814
    %2253 = vmatpush1.bf16.msra.mxu0 %v1813
    %2254 = vmatprep.subr.bf16.mxu0 %v1818
    %2255 = vmatpush1.bf16.msra.mxu0 %v1817
    %2256 = vmatprep.subr.bf16.mxu0 %v1822
    %2257 = vmatpush1.bf16.msra.mxu0 %v1821
    %2258 = vmatprep.subr.bf16.mxu0 %v1826
    %2259 = vmatpush1.bf16.msra.mxu0 %v1825
    %2260 = vmatprep.subr.bf16.mxu0 %v1830
    %2261 = vmatpush1.bf16.msra.mxu0 %v1829
    %2262 = vmatprep.subr.bf16.mxu0 %v1834
    %2263 = vmatpush1.bf16.msra.mxu0 %v1833
    %2264 = vmatprep.subr.bf16.mxu0 %v1838
    %2265 = vmatpush1.bf16.msra.mxu0 %v1837
    %2266 = vmatprep.subr.bf16.mxu0 %v1842
    %2267 = vmatpush1.bf16.msra.mxu0 %v1841
    %2268 = vmatprep.subr.bf16.mxu0 %v1846
    %2269 = vmatpush1.bf16.msra.mxu0 %v1845
    %2270 = vmatprep.subr.bf16.mxu0 %v1850
    %2271 = vmatpush1.bf16.msra.mxu0 %v1849
    %2272 = vmatprep.subr.bf16.mxu0 %v1854
    %2273 = vmatpush1.bf16.msra.mxu0 %v1853
    %2274 = vmatprep.subr.bf16.mxu0 %v1858
    %2275 = vmatpush1.bf16.msra.mxu0 %v1857
    %2276 = vmatprep.subr.bf16.mxu0 %v1862
    %2277 = vmatpush1.bf16.msra.mxu0 %v1861
    %2278 = vmatprep.subr.bf16.mxu0 %v1866
    %2279 = vmatpush1.bf16.msra.mxu0 %v1865
    %2280 = vmatprep.mubr.bf16.mxu0 %v587
    %2281 = vmatmul.mubr.bf16.gmra.mrb[0].mxu0 %v586
    %v2282 = vpop.f32.mrb[0].mxu0
    %v2283 = vadd.f32 %v2242, %v2282
    %v2284 = vpop.f32.mrb[0].mxu0
    %v2285 = vadd.f32 %v2244, %v2284
    %v2286 = vpop.f32.mrb[0].mxu0
    %v2287 = vpop.f32.mrb[0].mxu0
    %2288 = vdwg.mxu0
    %2289 = vmatprep.subr.bf16.mxu0 %v1616
    %2290 = vmatpush1.bf16.msra.mxu0 %v1615
    %2291 = vmatprep.subr.bf16.mxu0 %v1620
    %2292 = vmatpush1.bf16.msra.mxu0 %v1619
    %2293 = vmatprep.subr.bf16.mxu0 %v1624
    %2294 = vmatpush1.bf16.msra.mxu0 %v1623
    %2295 = vmatprep.subr.bf16.mxu0 %v1628
    %2296 = vmatpush1.bf16.msra.mxu0 %v1627
    %2297 = vmatprep.subr.bf16.mxu0 %v1632
    %2298 = vmatpush1.bf16.msra.mxu0 %v1631
    %2299 = vmatprep.subr.bf16.mxu0 %v1636
    %2300 = vmatpush1.bf16.msra.mxu0 %v1635
    %2301 = vmatprep.subr.bf16.mxu0 %v1640
    %2302 = vmatpush1.bf16.msra.mxu0 %v1639
    %2303 = vmatprep.subr.bf16.mxu0 %v1644
    %2304 = vmatpush1.bf16.msra.mxu0 %v1643
    %2305 = vmatprep.subr.bf16.mxu0 %v1648
    %2306 = vmatpush1.bf16.msra.mxu0 %v1647
    %2307 = vmatprep.subr.bf16.mxu0 %v1652
    %2308 = vmatpush1.bf16.msra.mxu0 %v1651
    %2309 = vmatprep.subr.bf16.mxu0 %v1656
    %2310 = vmatpush1.bf16.msra.mxu0 %v1655
    %2311 = vmatprep.subr.bf16.mxu0 %v1660
    %2312 = vmatpush1.bf16.msra.mxu0 %v1659
    %2313 = vmatprep.subr.bf16.mxu0 %v1664
    %2314 = vmatpush1.bf16.msra.mxu0 %v1663
    %2315 = vmatprep.subr.bf16.mxu0 %v1668
    %2316 = vmatpush1.bf16.msra.mxu0 %v1667
    %2317 = vmatprep.subr.bf16.mxu0 %v1672
    %2318 = vmatpush1.bf16.msra.mxu0 %v1671
    %2319 = vmatprep.subr.bf16.mxu0 %v1676
    %2320 = vmatpush1.bf16.msra.mxu0 %v1675
    %2321 = vmatprep.mubr.bf16.mxu0 %v581
    %2322 = vmatmul.mubr.bf16.gmra.mrb[0].mxu0 %v580
    %v2323 = vpop.f32.mrb[0].mxu0
    %v2324 = vadd.f32 0.0, %v2323
    %v2325 = vpop.f32.mrb[0].mxu0
    %v2326 = vadd.f32 0.0, %v2325
    %v2327 = vpop.f32.mrb[0].mxu0
    %v2328 = vpop.f32.mrb[0].mxu0
    %2329 = vdwg.mxu0
    %2330 = vmatprep.subr.bf16.mxu0 %v1680
    %2331 = vmatpush1.bf16.msra.mxu0 %v1679
    %2332 = vmatprep.subr.bf16.mxu0 %v1684
    %2333 = vmatpush1.bf16.msra.mxu0 %v1683
    %2334 = vmatprep.subr.bf16.mxu0 %v1688
    %2335 = vmatpush1.bf16.msra.mxu0 %v1687
    %2336 = vmatprep.subr.bf16.mxu0 %v1692
    %2337 = vmatpush1.bf16.msra.mxu0 %v1691
    %2338 = vmatprep.subr.bf16.mxu0 %v1696
    %2339 = vmatpush1.bf16.msra.mxu0 %v1695
    %2340 = vmatprep.subr.bf16.mxu0 %v1700
    %2341 = vmatpush1.bf16.msra.mxu0 %v1699
    %2342 = vmatprep.subr.bf16.mxu0 %v1704
    %2343 = vmatpush1.bf16.msra.mxu0 %v1703
    %2344 = vmatprep.subr.bf16.mxu0 %v1708
    %2345 = vmatpush1.bf16.msra.mxu0 %v1707
    %2346 = vmatprep.subr.bf16.mxu0 %v1712
    %2347 = vmatpush1.bf16.msra.mxu0 %v1711
    %2348 = vmatprep.subr.bf16.mxu0 %v1716
    %2349 = vmatpush1.bf16.msra.mxu0 %v1715
    %2350 = vmatprep.subr.bf16.mxu0 %v1720
    %2351 = vmatpush1.bf16.msra.mxu0 %v1719
    %2352 = vmatprep.subr.bf16.mxu0 %v1724
    %2353 = vmatpush1.bf16.msra.mxu0 %v1723
    %2354 = vmatprep.subr.bf16.mxu0 %v1728
    %2355 = vmatpush1.bf16.msra.mxu0 %v1727
    %2356 = vmatprep.subr.bf16.mxu0 %v1732
    %2357 = vmatpush1.bf16.msra.mxu0 %v1731
    %2358 = vmatprep.subr.bf16.mxu0 %v1736
    %2359 = vmatpush1.bf16.msra.mxu0 %v1735
    %2360 = vmatprep.subr.bf16.mxu0 %v1740
    %2361 = vmatpush1.bf16.msra.mxu0 %v1739
    %2362 = vmatprep.mubr.bf16.mxu0 %v583
    %2363 = vmatmul.mubr.bf16.gmra.mrb[0].mxu0 %v582
    %v2364 = vpop.f32.mrb[0].mxu0
    %v2365 = vadd.f32 %v2324, %v2364
    %v2366 = vpop.f32.mrb[0].mxu0
    %v2367 = vadd.f32 %v2326, %v2366
    %v2368 = vpop.f32.mrb[0].mxu0
    %v2369 = vpop.f32.mrb[0].mxu0
    %2370 = vdwg.mxu0
    %2371 = vmatprep.subr.bf16.mxu0 %v1744
    %2372 = vmatpush1.bf16.msra.mxu0 %v1743
    %2373 = vmatprep.subr.bf16.mxu0 %v1748
    %2374 = vmatpush1.bf16.msra.mxu0 %v1747
    %2375 = vmatprep.subr.bf16.mxu0 %v1752
    %2376 = vmatpush1.bf16.msra.mxu0 %v1751
    %2377 = vmatprep.subr.bf16.mxu0 %v1756
    %2378 = vmatpush1.bf16.msra.mxu0 %v1755
    %2379 = vmatprep.subr.bf16.mxu0 %v1760
    %2380 = vmatpush1.bf16.msra.mxu0 %v1759
    %2381 = vmatprep.subr.bf16.mxu0 %v1764
    %2382 = vmatpush1.bf16.msra.mxu0 %v1763
    %2383 = vmatprep.subr.bf16.mxu0 %v1768
    %2384 = vmatpush1.bf16.msra.mxu0 %v1767
    %2385 = vmatprep.subr.bf16.mxu0 %v1772
    %2386 = vmatpush1.bf16.msra.mxu0 %v1771
    %2387 = vmatprep.subr.bf16.mxu0 %v1776
    %2388 = vmatpush1.bf16.msra.mxu0 %v1775
    %2389 = vmatprep.subr.bf16.mxu0 %v1780
    %2390 = vmatpush1.bf16.msra.mxu0 %v1779
    %2391 = vmatprep.subr.bf16.mxu0 %v1784
    %2392 = vmatpush1.bf16.msra.mxu0 %v1783
    %2393 = vmatprep.subr.bf16.mxu0 %v1788
    %2394 = vmatpush1.bf16.msra.mxu0 %v1787
    %2395 = vmatprep.subr.bf16.mxu0 %v1792
    %2396 = vmatpush1.bf16.msra.mxu0 %v1791
    %2397 = vmatprep.subr.bf16.mxu0 %v1796
    %2398 = vmatpush1.bf16.msra.mxu0 %v1795
    %2399 = vmatprep.subr.bf16.mxu0 %v1800
    %2400 = vmatpush1.bf16.msra.mxu0 %v1799
    %2401 = vmatprep.subr.bf16.mxu0 %v1804
    %2402 = vmatpush1.bf16.msra.mxu0 %v1803
    %2403 = vmatprep.mubr.bf16.mxu0 %v585
    %2404 = vmatmul.mubr.bf16.gmra.mrb[0].mxu0 %v584
    %v2405 = vpop.f32.mrb[0].mxu0
    %v2406 = vadd.f32 %v2365, %v2405
    %v2407 = vpop.f32.mrb[0].mxu0
    %v2408 = vadd.f32 %v2367, %v2407
    %v2409 = vpop.f32.mrb[0].mxu0
    %v2410 = vpop.f32.mrb[0].mxu0
    %2411 = vdwg.mxu0
    %2412 = vmatprep.subr.bf16.mxu0 %v1808
    %2413 = vmatpush1.bf16.msra.mxu0 %v1807
    %2414 = vmatprep.subr.bf16.mxu0 %v1812
    %2415 = vmatpush1.bf16.msra.mxu0 %v1811
    %2416 = vmatprep.subr.bf16.mxu0 %v1816
    %2417 = vmatpush1.bf16.msra.mxu0 %v1815
    %2418 = vmatprep.subr.bf16.mxu0 %v1820
    %2419 = vmatpush1.bf16.msra.mxu0 %v1819
    %2420 = vmatprep.subr.bf16.mxu0 %v1824
    %2421 = vmatpush1.bf16.msra.mxu0 %v1823
    %2422 = vmatprep.subr.bf16.mxu0 %v1828
    %2423 = vmatpush1.bf16.msra.mxu0 %v1827
    %2424 = vmatprep.subr.bf16.mxu0 %v1832
    %2425 = vmatpush1.bf16.msra.mxu0 %v1831
    %2426 = vmatprep.subr.bf16.mxu0 %v1836
    %2427 = vmatpush1.bf16.msra.mxu0 %v1835
    %2428 = vmatprep.subr.bf16.mxu0 %v1840
    %2429 = vmatpush1.bf16.msra.mxu0 %v1839
    %2430 = vmatprep.subr.bf16.mxu0 %v1844
    %2431 = vmatpush1.bf16.msra.mxu0 %v1843
    %2432 = vmatprep.subr.bf16.mxu0 %v1848
    %2433 = vmatpush1.bf16.msra.mxu0 %v1847
    %2434 = vmatprep.subr.bf16.mxu0 %v1852
    %2435 = vmatpush1.bf16.msra.mxu0 %v1851
    %2436 = vmatprep.subr.bf16.mxu0 %v1856
    %2437 = vmatpush1.bf16.msra.mxu0 %v1855
    %2438 = vmatprep.subr.bf16.mxu0 %v1860
    %2439 = vmatpush1.bf16.msra.mxu0 %v1859
    %2440 = vmatprep.subr.bf16.mxu0 %v1864
    %2441 = vmatpush1.bf16.msra.mxu0 %v1863
    %2442 = vmatprep.subr.bf16.mxu0 %v1868
    %2443 = vmatpush1.bf16.msra.mxu0 %v1867
    %2444 = vmatprep.mubr.bf16.mxu0 %v587
    %2445 = vmatmul.mubr.bf16.gmra.mrb[0].mxu0 %v586
    %v2446 = vpop.f32.mrb[0].mxu0
    %v2447 = vadd.f32 %v2406, %v2446
    %v2448 = vpop.f32.mrb[0].mxu0
    %v2449 = vadd.f32 %v2408, %v2448
    %v2450 = vpop.f32.mrb[0].mxu0
    %v2451 = vpop.f32.mrb[0].mxu0
    %2452 = vdwg.mxu0
    %v2709 = vunpack.c.l.b16 %v214
    %v2710 = vunpack.c.h.b16 %v214
    %v2711 = vunpack.c.l.b16 %v215
    %v2712 = vunpack.c.h.b16 %v215
    %v2713 = vunpack.c.l.b16 %v216
    %v2714 = vunpack.c.h.b16 %v216
    %v2715 = vunpack.c.l.b16 %v217
    %v2716 = vunpack.c.h.b16 %v217
    %v2717 = vunpack.c.l.b16 %v218
    %v2718 = vunpack.c.h.b16 %v218
    %v2719 = vunpack.c.l.b16 %v219
    %v2720 = vunpack.c.h.b16 %v219
    %v2721 = vunpack.c.l.b16 %v220
    %v2722 = vunpack.c.h.b16 %v220
    %v2723 = vunpack.c.l.b16 %v221
    %v2724 = vunpack.c.h.b16 %v221
    %v2725 = vunpack.c.l.b16 %v222
    %v2726 = vunpack.c.h.b16 %v222
    %v2727 = vunpack.c.l.b16 %v223
    %v2728 = vunpack.c.h.b16 %v223
    %v2729 = vunpack.c.l.b16 %v224
    %v2730 = vunpack.c.h.b16 %v224
    %v2731 = vunpack.c.l.b16 %v225
    %v2732 = vunpack.c.h.b16 %v225
    %v2733 = vunpack.c.l.b16 %v226
    %v2734 = vunpack.c.h.b16 %v226
    %v2735 = vunpack.c.l.b16 %v227
    %v2736 = vunpack.c.h.b16 %v227
    %v2737 = vunpack.c.l.b16 %v228
    %v2738 = vunpack.c.h.b16 %v228
    %v2739 = vunpack.c.l.b16 %v229
    %v2740 = vunpack.c.h.b16 %v229
    %v2741 = vunpack.c.l.b16 %v230
    %v2742 = vunpack.c.h.b16 %v230
    %v2743 = vunpack.c.l.b16 %v231
    %v2744 = vunpack.c.h.b16 %v231
    %v2745 = vunpack.c.l.b16 %v232
    %v2746 = vunpack.c.h.b16 %v232
    %v2747 = vunpack.c.l.b16 %v233
    %v2748 = vunpack.c.h.b16 %v233
    %v2749 = vunpack.c.l.b16 %v234
    %v2750 = vunpack.c.h.b16 %v234
    %v2751 = vunpack.c.l.b16 %v235
    %v2752 = vunpack.c.h.b16 %v235
    %v2753 = vunpack.c.l.b16 %v236
    %v2754 = vunpack.c.h.b16 %v236
    %v2755 = vunpack.c.l.b16 %v237
    %v2756 = vunpack.c.h.b16 %v237
    %v2757 = vunpack.c.l.b16 %v238
    %v2758 = vunpack.c.h.b16 %v238
    %v2759 = vunpack.c.l.b16 %v239
    %v2760 = vunpack.c.h.b16 %v239
    %v2761 = vunpack.c.l.b16 %v240
    %v2762 = vunpack.c.h.b16 %v240
    %v2763 = vunpack.c.l.b16 %v241
    %v2764 = vunpack.c.h.b16 %v241
    %v2765 = vunpack.c.l.b16 %v242
    %v2766 = vunpack.c.h.b16 %v242
    %v2767 = vunpack.c.l.b16 %v243
    %v2768 = vunpack.c.h.b16 %v243
    %v2769 = vunpack.c.l.b16 %v244
    %v2770 = vunpack.c.h.b16 %v244
    %v2771 = vunpack.c.l.b16 %v245
    %v2772 = vunpack.c.h.b16 %v245
    %v2773 = vunpack.c.l.b16 %v246
    %v2774 = vunpack.c.h.b16 %v246
    %v2775 = vunpack.c.l.b16 %v247
    %v2776 = vunpack.c.h.b16 %v247
    %v2777 = vunpack.c.l.b16 %v248
    %v2778 = vunpack.c.h.b16 %v248
    %v2779 = vunpack.c.l.b16 %v249
    %v2780 = vunpack.c.h.b16 %v249
    %v2781 = vunpack.c.l.b16 %v250
    %v2782 = vunpack.c.h.b16 %v250
    %v2783 = vunpack.c.l.b16 %v251
    %v2784 = vunpack.c.h.b16 %v251
    %v2785 = vunpack.c.l.b16 %v252
    %v2786 = vunpack.c.h.b16 %v252
    %v2787 = vunpack.c.l.b16 %v253
    %v2788 = vunpack.c.h.b16 %v253
    %v2789 = vunpack.c.l.b16 %v254
    %v2790 = vunpack.c.h.b16 %v254
    %v2791 = vunpack.c.l.b16 %v255
    %v2792 = vunpack.c.h.b16 %v255
    %v2793 = vunpack.c.l.b16 %v256
    %v2794 = vunpack.c.h.b16 %v256
    %v2795 = vunpack.c.l.b16 %v257
    %v2796 = vunpack.c.h.b16 %v257
    %v2797 = vunpack.c.l.b16 %v258
    %v2798 = vunpack.c.h.b16 %v258
    %v2799 = vunpack.c.l.b16 %v259
    %v2800 = vunpack.c.h.b16 %v259
    %v2801 = vunpack.c.l.b16 %v260
    %v2802 = vunpack.c.h.b16 %v260
    %v2803 = vunpack.c.l.b16 %v261
    %v2804 = vunpack.c.h.b16 %v261
    %v2805 = vunpack.c.l.b16 %v262
    %v2806 = vunpack.c.h.b16 %v262
    %v2807 = vunpack.c.l.b16 %v263
    %v2808 = vunpack.c.h.b16 %v263
    %v2809 = vunpack.c.l.b16 %v264
    %v2810 = vunpack.c.h.b16 %v264
    %v2811 = vunpack.c.l.b16 %v265
    %v2812 = vunpack.c.h.b16 %v265
    %v2813 = vunpack.c.l.b16 %v266
    %v2814 = vunpack.c.h.b16 %v266
    %v2815 = vunpack.c.l.b16 %v267
    %v2816 = vunpack.c.h.b16 %v267
    %v2817 = vunpack.c.l.b16 %v268
    %v2818 = vunpack.c.h.b16 %v268
    %v2819 = vunpack.c.l.b16 %v269
    %v2820 = vunpack.c.h.b16 %v269
    %v2821 = vunpack.c.l.b16 %v270
    %v2822 = vunpack.c.h.b16 %v270
    %v2823 = vunpack.c.l.b16 %v271
    %v2824 = vunpack.c.h.b16 %v271
    %v2825 = vunpack.c.l.b16 %v272
    %v2826 = vunpack.c.h.b16 %v272
    %v2827 = vunpack.c.l.b16 %v273
    %v2828 = vunpack.c.h.b16 %v273
    %v2829 = vunpack.c.l.b16 %v274
    %v2830 = vunpack.c.h.b16 %v274
    %v2831 = vunpack.c.l.b16 %v275
    %v2832 = vunpack.c.h.b16 %v275
    %v2833 = vunpack.c.l.b16 %v276
    %v2834 = vunpack.c.h.b16 %v276
    %v2835 = vunpack.c.l.b16 %v277
    %v2836 = vunpack.c.h.b16 %v277
    %v2837 = vunpack.c.l.b16 %v278
    %v2838 = vunpack.c.h.b16 %v278
    %v2839 = vunpack.c.l.b16 %v279
    %v2840 = vunpack.c.h.b16 %v279
    %v2841 = vunpack.c.l.b16 %v280
    %v2842 = vunpack.c.h.b16 %v280
    %v2843 = vunpack.c.l.b16 %v281
    %v2844 = vunpack.c.h.b16 %v281
    %v2845 = vunpack.c.l.b16 %v282
    %v2846 = vunpack.c.h.b16 %v282
    %v2847 = vunpack.c.l.b16 %v283
    %v2848 = vunpack.c.h.b16 %v283
    %v2849 = vunpack.c.l.b16 %v284
    %v2850 = vunpack.c.h.b16 %v284
    %v2851 = vunpack.c.l.b16 %v285
    %v2852 = vunpack.c.h.b16 %v285
    %v2853 = vunpack.c.l.b16 %v286
    %v2854 = vunpack.c.h.b16 %v286
    %v2855 = vunpack.c.l.b16 %v287
    %v2856 = vunpack.c.h.b16 %v287
    %v2857 = vunpack.c.l.b16 %v288
    %v2858 = vunpack.c.h.b16 %v288
    %v2859 = vunpack.c.l.b16 %v289
    %v2860 = vunpack.c.h.b16 %v289
    %v2861 = vunpack.c.l.b16 %v290
    %v2862 = vunpack.c.h.b16 %v290
    %v2863 = vunpack.c.l.b16 %v291
    %v2864 = vunpack.c.h.b16 %v291
    %v2865 = vunpack.c.l.b16 %v292
    %v2866 = vunpack.c.h.b16 %v292
    %v2867 = vunpack.c.l.b16 %v293
    %v2868 = vunpack.c.h.b16 %v293
    %v2869 = vunpack.c.l.b16 %v294
    %v2870 = vunpack.c.h.b16 %v294
    %v2871 = vunpack.c.l.b16 %v295
    %v2872 = vunpack.c.h.b16 %v295
    %v2873 = vunpack.c.l.b16 %v296
    %v2874 = vunpack.c.h.b16 %v296
    %v2875 = vunpack.c.l.b16 %v297
    %v2876 = vunpack.c.h.b16 %v297
    %v2877 = vunpack.c.l.b16 %v298
    %v2878 = vunpack.c.h.b16 %v298
    %v2879 = vunpack.c.l.b16 %v299
    %v2880 = vunpack.c.h.b16 %v299
    %v2881 = vunpack.c.l.b16 %v300
    %v2882 = vunpack.c.h.b16 %v300
    %v2883 = vunpack.c.l.b16 %v301
    %v2884 = vunpack.c.h.b16 %v301
    %v2885 = vunpack.c.l.b16 %v302
    %v2886 = vunpack.c.h.b16 %v302
    %v2887 = vunpack.c.l.b16 %v303
    %v2888 = vunpack.c.h.b16 %v303
    %v2889 = vunpack.c.l.b16 %v304
    %v2890 = vunpack.c.h.b16 %v304
    %v2891 = vunpack.c.l.b16 %v305
    %v2892 = vunpack.c.h.b16 %v305
    %v2893 = vunpack.c.l.b16 %v306
    %v2894 = vunpack.c.h.b16 %v306
    %v2895 = vunpack.c.l.b16 %v307
    %v2896 = vunpack.c.h.b16 %v307
    %v2897 = vunpack.c.l.b16 %v308
    %v2898 = vunpack.c.h.b16 %v308
    %v2899 = vunpack.c.l.b16 %v309
    %v2900 = vunpack.c.h.b16 %v309
    %v2901 = vunpack.c.l.b16 %v310
    %v2902 = vunpack.c.h.b16 %v310
    %v2903 = vunpack.c.l.b16 %v311
    %v2904 = vunpack.c.h.b16 %v311
    %v2905 = vunpack.c.l.b16 %v312
    %v2906 = vunpack.c.h.b16 %v312
    %v2907 = vunpack.c.l.b16 %v313
    %v2908 = vunpack.c.h.b16 %v313
    %v2909 = vunpack.c.l.b16 %v314
    %v2910 = vunpack.c.h.b16 %v314
    %v2911 = vunpack.c.l.b16 %v315
    %v2912 = vunpack.c.h.b16 %v315
    %v2913 = vunpack.c.l.b16 %v316
    %v2914 = vunpack.c.h.b16 %v316
    %v2915 = vunpack.c.l.b16 %v317
    %v2916 = vunpack.c.h.b16 %v317
    %v2917 = vunpack.c.l.b16 %v318
    %v2918 = vunpack.c.h.b16 %v318
    %v2919 = vunpack.c.l.b16 %v319
    %v2920 = vunpack.c.h.b16 %v319
    %v2921 = vunpack.c.l.b16 %v320
    %v2922 = vunpack.c.h.b16 %v320
    %v2923 = vunpack.c.l.b16 %v321
    %v2924 = vunpack.c.h.b16 %v321
    %v2925 = vunpack.c.l.b16 %v322
    %v2926 = vunpack.c.h.b16 %v322
    %v2927 = vunpack.c.l.b16 %v323
    %v2928 = vunpack.c.h.b16 %v323
    %v2929 = vunpack.c.l.b16 %v324
    %v2930 = vunpack.c.h.b16 %v324
    %v2931 = vunpack.c.l.b16 %v325
    %v2932 = vunpack.c.h.b16 %v325
    %v2933 = vunpack.c.l.b16 %v326
    %v2934 = vunpack.c.h.b16 %v326
    %v2935 = vunpack.c.l.b16 %v327
    %v2936 = vunpack.c.h.b16 %v327
    %v2937 = vunpack.c.l.b16 %v328
    %v2938 = vunpack.c.h.b16 %v328
    %v2939 = vunpack.c.l.b16 %v329
    %v2940 = vunpack.c.h.b16 %v329
    %v2941 = vunpack.c.l.b16 %v330
    %v2942 = vunpack.c.h.b16 %v330
    %v2943 = vunpack.c.l.b16 %v331
    %v2944 = vunpack.c.h.b16 %v331
    %v2945 = vunpack.c.l.b16 %v332
    %v2946 = vunpack.c.h.b16 %v332
    %v2947 = vunpack.c.l.b16 %v333
    %v2948 = vunpack.c.h.b16 %v333
    %v2949 = vunpack.c.l.b16 %v334
    %v2950 = vunpack.c.h.b16 %v334
    %v2951 = vunpack.c.l.b16 %v335
    %v2952 = vunpack.c.h.b16 %v335
    %v2953 = vunpack.c.l.b16 %v336
    %v2954 = vunpack.c.h.b16 %v336
    %v2955 = vunpack.c.l.b16 %v337
    %v2956 = vunpack.c.h.b16 %v337
    %v2957 = vunpack.c.l.b16 %v338
    %v2958 = vunpack.c.h.b16 %v338
    %v2959 = vunpack.c.l.b16 %v339
    %v2960 = vunpack.c.h.b16 %v339
    %v2961 = vunpack.c.l.b16 %v340
    %v2962 = vunpack.c.h.b16 %v340
    %v2963 = vunpack.c.l.b16 %v341
    %v2964 = vunpack.c.h.b16 %v341
    %v2965 = vunpack.c.l.b16 %v342
    %v2966 = vunpack.c.h.b16 %v342
    %v2967 = vunpack.c.l.b16 %v343
    %v2968 = vunpack.c.h.b16 %v343
    %v2969 = vunpack.c.l.b16 %v344
    %v2970 = vunpack.c.h.b16 %v344
    %v2971 = vunpack.c.l.b16 %v345
    %v2972 = vunpack.c.h.b16 %v345
    %v2973 = vunpack.c.l.b16 %v346
    %v2974 = vunpack.c.h.b16 %v346
    %v2975 = vunpack.c.l.b16 %v347
    %v2976 = vunpack.c.h.b16 %v347
    %v2977 = vunpack.c.l.b16 %v348
    %v2978 = vunpack.c.h.b16 %v348
    %v2979 = vunpack.c.l.b16 %v349
    %v2980 = vunpack.c.h.b16 %v349
    %v2981 = vunpack.c.l.b16 %v350
    %v2982 = vunpack.c.h.b16 %v350
    %v2983 = vunpack.c.l.b16 %v351
    %v2984 = vunpack.c.h.b16 %v351
    %v2985 = vunpack.c.l.b16 %v352
    %v2986 = vunpack.c.h.b16 %v352
    %v2987 = vunpack.c.l.b16 %v353
    %v2988 = vunpack.c.h.b16 %v353
    %v2989 = vunpack.c.l.b16 %v354
    %v2990 = vunpack.c.h.b16 %v354
    %v2991 = vunpack.c.l.b16 %v355
    %v2992 = vunpack.c.h.b16 %v355
    %v2993 = vunpack.c.l.b16 %v356
    %v2994 = vunpack.c.h.b16 %v356
    %v2995 = vunpack.c.l.b16 %v357
    %v2996 = vunpack.c.h.b16 %v357
    %v2997 = vunpack.c.l.b16 %v358
    %v2998 = vunpack.c.h.b16 %v358
    %v2999 = vunpack.c.l.b16 %v359
    %v3000 = vunpack.c.h.b16 %v359
    %v3001 = vunpack.c.l.b16 %v360
    %v3002 = vunpack.c.h.b16 %v360
    %v3003 = vunpack.c.l.b16 %v361
    %v3004 = vunpack.c.h.b16 %v361
    %v3005 = vunpack.c.l.b16 %v362
    %v3006 = vunpack.c.h.b16 %v362
    %v3007 = vunpack.c.l.b16 %v363
    %v3008 = vunpack.c.h.b16 %v363
    %v3009 = vunpack.c.l.b16 %v364
    %v3010 = vunpack.c.h.b16 %v364
    %v3011 = vunpack.c.l.b16 %v365
    %v3012 = vunpack.c.h.b16 %v365
    %v3013 = vunpack.c.l.b16 %v366
    %v3014 = vunpack.c.h.b16 %v366
    %v3015 = vunpack.c.l.b16 %v367
    %v3016 = vunpack.c.h.b16 %v367
    %v3017 = vunpack.c.l.b16 %v368
    %v3018 = vunpack.c.h.b16 %v368
    %v3019 = vunpack.c.l.b16 %v369
    %v3020 = vunpack.c.h.b16 %v369
    %v3021 = vunpack.c.l.b16 %v370
    %v3022 = vunpack.c.h.b16 %v370
    %v3023 = vunpack.c.l.b16 %v371
    %v3024 = vunpack.c.h.b16 %v371
    %v3025 = vunpack.c.l.b16 %v372
    %v3026 = vunpack.c.h.b16 %v372
    %v3027 = vunpack.c.l.b16 %v373
    %v3028 = vunpack.c.h.b16 %v373
    %v3029 = vunpack.c.l.b16 %v374
    %v3030 = vunpack.c.h.b16 %v374
    %v3031 = vunpack.c.l.b16 %v375
    %v3032 = vunpack.c.h.b16 %v375
    %v3033 = vunpack.c.l.b16 %v376
    %v3034 = vunpack.c.h.b16 %v376
    %v3035 = vunpack.c.l.b16 %v377
    %v3036 = vunpack.c.h.b16 %v377
    %v3037 = vunpack.c.l.b16 %v378
    %v3038 = vunpack.c.h.b16 %v378
    %v3039 = vunpack.c.l.b16 %v379
    %v3040 = vunpack.c.h.b16 %v379
    %v3041 = vunpack.c.l.b16 %v380
    %v3042 = vunpack.c.h.b16 %v380
    %v3043 = vunpack.c.l.b16 %v381
    %v3044 = vunpack.c.h.b16 %v381
    %v3045 = vunpack.c.l.b16 %v382
    %v3046 = vunpack.c.h.b16 %v382
    %v3047 = vunpack.c.l.b16 %v383
    %v3048 = vunpack.c.h.b16 %v383
    %v3049 = vunpack.c.l.b16 %v384
    %v3050 = vunpack.c.h.b16 %v384
    %v3051 = vunpack.c.l.b16 %v385
    %v3052 = vunpack.c.h.b16 %v385
    %v3053 = vunpack.c.l.b16 %v386
    %v3054 = vunpack.c.h.b16 %v386
    %v3055 = vunpack.c.l.b16 %v387
    %v3056 = vunpack.c.h.b16 %v387
    %v3057 = vunpack.c.l.b16 %v388
    %v3058 = vunpack.c.h.b16 %v388
    %v3059 = vunpack.c.l.b16 %v389
    %v3060 = vunpack.c.h.b16 %v389
    %v3061 = vunpack.c.l.b16 %v390
    %v3062 = vunpack.c.h.b16 %v390
    %v3063 = vunpack.c.l.b16 %v391
    %v3064 = vunpack.c.h.b16 %v391
    %v3065 = vunpack.c.l.b16 %v392
    %v3066 = vunpack.c.h.b16 %v392
    %v3067 = vunpack.c.l.b16 %v393
    %v3068 = vunpack.c.h.b16 %v393
    %v3069 = vunpack.c.l.b16 %v394
    %v3070 = vunpack.c.h.b16 %v394
    %v3071 = vunpack.c.l.b16 %v395
    %v3072 = vunpack.c.h.b16 %v395
    %v3073 = vunpack.c.l.b16 %v396
    %v3074 = vunpack.c.h.b16 %v396
    %v3075 = vunpack.c.l.b16 %v397
    %v3076 = vunpack.c.h.b16 %v397
    %v3077 = vunpack.c.l.b16 %v398
    %v3078 = vunpack.c.h.b16 %v398
    %v3079 = vunpack.c.l.b16 %v399
    %v3080 = vunpack.c.h.b16 %v399
    %v3081 = vunpack.c.l.b16 %v400
    %v3082 = vunpack.c.h.b16 %v400
    %v3083 = vunpack.c.l.b16 %v401
    %v3084 = vunpack.c.h.b16 %v401
    %v3085 = vunpack.c.l.b16 %v402
    %v3086 = vunpack.c.h.b16 %v402
    %v3087 = vunpack.c.l.b16 %v403
    %v3088 = vunpack.c.h.b16 %v403
    %v3089 = vunpack.c.l.b16 %v404
    %v3090 = vunpack.c.h.b16 %v404
    %v3091 = vunpack.c.l.b16 %v405
    %v3092 = vunpack.c.h.b16 %v405
    %v3093 = vunpack.c.l.b16 %v406
    %v3094 = vunpack.c.h.b16 %v406
    %v3095 = vunpack.c.l.b16 %v407
    %v3096 = vunpack.c.h.b16 %v407
    %v3097 = vunpack.c.l.b16 %v408
    %v3098 = vunpack.c.h.b16 %v408
    %v3099 = vunpack.c.l.b16 %v409
    %v3100 = vunpack.c.h.b16 %v409
    %v3101 = vunpack.c.l.b16 %v410
    %v3102 = vunpack.c.h.b16 %v410
    %v3103 = vunpack.c.l.b16 %v411
    %v3104 = vunpack.c.h.b16 %v411
    %v3105 = vunpack.c.l.b16 %v412
    %v3106 = vunpack.c.h.b16 %v412
    %v3107 = vunpack.c.l.b16 %v413
    %v3108 = vunpack.c.h.b16 %v413
    %v3109 = vunpack.c.l.b16 %v414
    %v3110 = vunpack.c.h.b16 %v414
    %v3111 = vunpack.c.l.b16 %v415
    %v3112 = vunpack.c.h.b16 %v415
    %v3113 = vunpack.c.l.b16 %v416
    %v3114 = vunpack.c.h.b16 %v416
    %v3115 = vunpack.c.l.b16 %v417
    %v3116 = vunpack.c.h.b16 %v417
    %v3117 = vunpack.c.l.b16 %v418
    %v3118 = vunpack.c.h.b16 %v418
    %v3119 = vunpack.c.l.b16 %v419
    %v3120 = vunpack.c.h.b16 %v419
    %v3121 = vunpack.c.l.b16 %v420
    %v3122 = vunpack.c.h.b16 %v420
    %v3123 = vunpack.c.l.b16 %v421
    %v3124 = vunpack.c.h.b16 %v421
    %v3125 = vunpack.c.l.b16 %v422
    %v3126 = vunpack.c.h.b16 %v422
    %v3127 = vunpack.c.l.b16 %v423
    %v3128 = vunpack.c.h.b16 %v423
    %v3129 = vunpack.c.l.b16 %v424
    %v3130 = vunpack.c.h.b16 %v424
    %v3131 = vunpack.c.l.b16 %v425
    %v3132 = vunpack.c.h.b16 %v425
    %v3133 = vunpack.c.l.b16 %v426
    %v3134 = vunpack.c.h.b16 %v426
    %v3135 = vunpack.c.l.b16 %v427
    %v3136 = vunpack.c.h.b16 %v427
    %v3137 = vunpack.c.l.b16 %v428
    %v3138 = vunpack.c.h.b16 %v428
    %v3139 = vunpack.c.l.b16 %v429
    %v3140 = vunpack.c.h.b16 %v429
    %v3141 = vunpack.c.l.b16 %v430
    %v3142 = vunpack.c.h.b16 %v430
    %v3143 = vunpack.c.l.b16 %v431
    %v3144 = vunpack.c.h.b16 %v431
    %v3145 = vunpack.c.l.b16 %v432
    %v3146 = vunpack.c.h.b16 %v432
    %v3147 = vunpack.c.l.b16 %v433
    %v3148 = vunpack.c.h.b16 %v433
    %v3149 = vunpack.c.l.b16 %v434
    %v3150 = vunpack.c.h.b16 %v434
    %v3151 = vunpack.c.l.b16 %v435
    %v3152 = vunpack.c.h.b16 %v435
    %v3153 = vunpack.c.l.b16 %v436
    %v3154 = vunpack.c.h.b16 %v436
    %v3155 = vunpack.c.l.b16 %v437
    %v3156 = vunpack.c.h.b16 %v437
    %v3157 = vunpack.c.l.b16 %v438
    %v3158 = vunpack.c.h.b16 %v438
    %v3159 = vunpack.c.l.b16 %v439
    %v3160 = vunpack.c.h.b16 %v439
    %v3161 = vunpack.c.l.b16 %v440
    %v3162 = vunpack.c.h.b16 %v440
    %v3163 = vunpack.c.l.b16 %v441
    %v3164 = vunpack.c.h.b16 %v441
    %v3165 = vunpack.c.l.b16 %v442
    %v3166 = vunpack.c.h.b16 %v442
    %v3167 = vunpack.c.l.b16 %v443
    %v3168 = vunpack.c.h.b16 %v443
    %v3169 = vunpack.c.l.b16 %v444
    %v3170 = vunpack.c.h.b16 %v444
    %v3171 = vunpack.c.l.b16 %v445
    %v3172 = vunpack.c.h.b16 %v445
    %v3173 = vunpack.c.l.b16 %v446
    %v3174 = vunpack.c.h.b16 %v446
    %v3175 = vunpack.c.l.b16 %v447
    %v3176 = vunpack.c.h.b16 %v447
    %v3177 = vunpack.c.l.b16 %v448
    %v3178 = vunpack.c.h.b16 %v448
    %v3179 = vunpack.c.l.b16 %v449
    %v3180 = vunpack.c.h.b16 %v449
    %v3181 = vunpack.c.l.b16 %v450
    %v3182 = vunpack.c.h.b16 %v450
    %v3183 = vunpack.c.l.b16 %v451
    %v3184 = vunpack.c.h.b16 %v451
    %v3185 = vunpack.c.l.b16 %v452
    %v3186 = vunpack.c.h.b16 %v452
    %v3187 = vunpack.c.l.b16 %v453
    %v3188 = vunpack.c.h.b16 %v453
    %v3189 = vunpack.c.l.b16 %v454
    %v3190 = vunpack.c.h.b16 %v454
    %v3191 = vunpack.c.l.b16 %v455
    %v3192 = vunpack.c.h.b16 %v455
    %v3193 = vunpack.c.l.b16 %v456
    %v3194 = vunpack.c.h.b16 %v456
    %v3195 = vunpack.c.l.b16 %v457
    %v3196 = vunpack.c.h.b16 %v457
    %v3197 = vunpack.c.l.b16 %v458
    %v3198 = vunpack.c.h.b16 %v458
    %v3199 = vunpack.c.l.b16 %v459
    %v3200 = vunpack.c.h.b16 %v459
    %v3201 = vunpack.c.l.b16 %v460
    %v3202 = vunpack.c.h.b16 %v460
    %v3203 = vunpack.c.l.b16 %v461
    %v3204 = vunpack.c.h.b16 %v461
    %v3205 = vunpack.c.l.b16 %v462
    %v3206 = vunpack.c.h.b16 %v462
    %v3207 = vunpack.c.l.b16 %v463
    %v3208 = vunpack.c.h.b16 %v463
    %v3209 = vunpack.c.l.b16 %v464
    %v3210 = vunpack.c.h.b16 %v464
    %v3211 = vunpack.c.l.b16 %v465
    %v3212 = vunpack.c.h.b16 %v465
    %v3213 = vunpack.c.l.b16 %v466
    %v3214 = vunpack.c.h.b16 %v466
    %v3215 = vunpack.c.l.b16 %v467
    %v3216 = vunpack.c.h.b16 %v467
    %v3217 = vunpack.c.l.b16 %v468
    %v3218 = vunpack.c.h.b16 %v468
    %v3219 = vunpack.c.l.b16 %v469
    %v3220 = vunpack.c.h.b16 %v469
    %v3221 = vpack.c.b16 %v2713, %v2709
    %v3222 = vpack.c.b16 %v2714, %v2710
    %v3223 = vpack.c.b16 %v2715, %v2711
    %v3224 = vpack.c.b16 %v2716, %v2712
    %v3225 = vpack.c.b16 %v2721, %v2717
    %v3226 = vpack.c.b16 %v2722, %v2718
    %v3227 = vpack.c.b16 %v2723, %v2719
    %v3228 = vpack.c.b16 %v2724, %v2720
    %v3229 = vpack.c.b16 %v2729, %v2725
    %v3230 = vpack.c.b16 %v2730, %v2726
    %v3231 = vpack.c.b16 %v2731, %v2727
    %v3232 = vpack.c.b16 %v2732, %v2728
    %v3233 = vpack.c.b16 %v2737, %v2733
    %v3234 = vpack.c.b16 %v2738, %v2734
    %v3235 = vpack.c.b16 %v2739, %v2735
    %v3236 = vpack.c.b16 %v2740, %v2736
    %v3237 = vpack.c.b16 %v2745, %v2741
    %v3238 = vpack.c.b16 %v2746, %v2742
    %v3239 = vpack.c.b16 %v2747, %v2743
    %v3240 = vpack.c.b16 %v2748, %v2744
    %v3241 = vpack.c.b16 %v2753, %v2749
    %v3242 = vpack.c.b16 %v2754, %v2750
    %v3243 = vpack.c.b16 %v2755, %v2751
    %v3244 = vpack.c.b16 %v2756, %v2752
    %v3245 = vpack.c.b16 %v2761, %v2757
    %v3246 = vpack.c.b16 %v2762, %v2758
    %v3247 = vpack.c.b16 %v2763, %v2759
    %v3248 = vpack.c.b16 %v2764, %v2760
    %v3249 = vpack.c.b16 %v2769, %v2765
    %v3250 = vpack.c.b16 %v2770, %v2766
    %v3251 = vpack.c.b16 %v2771, %v2767
    %v3252 = vpack.c.b16 %v2772, %v2768
    %v3253 = vpack.c.b16 %v2777, %v2773
    %v3254 = vpack.c.b16 %v2778, %v2774
    %v3255 = vpack.c.b16 %v2779, %v2775
    %v3256 = vpack.c.b16 %v2780, %v2776
    %v3257 = vpack.c.b16 %v2785, %v2781
    %v3258 = vpack.c.b16 %v2786, %v2782
    %v3259 = vpack.c.b16 %v2787, %v2783
    %v3260 = vpack.c.b16 %v2788, %v2784
    %v3261 = vpack.c.b16 %v2793, %v2789
    %v3262 = vpack.c.b16 %v2794, %v2790
    %v3263 = vpack.c.b16 %v2795, %v2791
    %v3264 = vpack.c.b16 %v2796, %v2792
    %v3265 = vpack.c.b16 %v2801, %v2797
    %v3266 = vpack.c.b16 %v2802, %v2798
    %v3267 = vpack.c.b16 %v2803, %v2799
    %v3268 = vpack.c.b16 %v2804, %v2800
    %v3269 = vpack.c.b16 %v2809, %v2805
    %v3270 = vpack.c.b16 %v2810, %v2806
    %v3271 = vpack.c.b16 %v2811, %v2807
    %v3272 = vpack.c.b16 %v2812, %v2808
    %v3273 = vpack.c.b16 %v2817, %v2813
    %v3274 = vpack.c.b16 %v2818, %v2814
    %v3275 = vpack.c.b16 %v2819, %v2815
    %v3276 = vpack.c.b16 %v2820, %v2816
    %v3277 = vpack.c.b16 %v2825, %v2821
    %v3278 = vpack.c.b16 %v2826, %v2822
    %v3279 = vpack.c.b16 %v2827, %v2823
    %v3280 = vpack.c.b16 %v2828, %v2824
    %v3281 = vpack.c.b16 %v2833, %v2829
    %v3282 = vpack.c.b16 %v2834, %v2830
    %v3283 = vpack.c.b16 %v2835, %v2831
    %v3284 = vpack.c.b16 %v2836, %v2832
    %v3285 = vpack.c.b16 %v2841, %v2837
    %v3286 = vpack.c.b16 %v2842, %v2838
    %v3287 = vpack.c.b16 %v2843, %v2839
    %v3288 = vpack.c.b16 %v2844, %v2840
    %v3289 = vpack.c.b16 %v2849, %v2845
    %v3290 = vpack.c.b16 %v2850, %v2846
    %v3291 = vpack.c.b16 %v2851, %v2847
    %v3292 = vpack.c.b16 %v2852, %v2848
    %v3293 = vpack.c.b16 %v2857, %v2853
    %v3294 = vpack.c.b16 %v2858, %v2854
    %v3295 = vpack.c.b16 %v2859, %v2855
    %v3296 = vpack.c.b16 %v2860, %v2856
    %v3297 = vpack.c.b16 %v2865, %v2861
    %v3298 = vpack.c.b16 %v2866, %v2862
    %v3299 = vpack.c.b16 %v2867, %v2863
    %v3300 = vpack.c.b16 %v2868, %v2864
    %v3301 = vpack.c.b16 %v2873, %v2869
    %v3302 = vpack.c.b16 %v2874, %v2870
    %v3303 = vpack.c.b16 %v2875, %v2871
    %v3304 = vpack.c.b16 %v2876, %v2872
    %v3305 = vpack.c.b16 %v2881, %v2877
    %v3306 = vpack.c.b16 %v2882, %v2878
    %v3307 = vpack.c.b16 %v2883, %v2879
    %v3308 = vpack.c.b16 %v2884, %v2880
    %v3309 = vpack.c.b16 %v2889, %v2885
    %v3310 = vpack.c.b16 %v2890, %v2886
    %v3311 = vpack.c.b16 %v2891, %v2887
    %v3312 = vpack.c.b16 %v2892, %v2888
    %v3313 = vpack.c.b16 %v2897, %v2893
    %v3314 = vpack.c.b16 %v2898, %v2894
    %v3315 = vpack.c.b16 %v2899, %v2895
    %v3316 = vpack.c.b16 %v2900, %v2896
    %v3317 = vpack.c.b16 %v2905, %v2901
    %v3318 = vpack.c.b16 %v2906, %v2902
    %v3319 = vpack.c.b16 %v2907, %v2903
    %v3320 = vpack.c.b16 %v2908, %v2904
    %v3321 = vpack.c.b16 %v2913, %v2909
    %v3322 = vpack.c.b16 %v2914, %v2910
    %v3323 = vpack.c.b16 %v2915, %v2911
    %v3324 = vpack.c.b16 %v2916, %v2912
    %v3325 = vpack.c.b16 %v2921, %v2917
    %v3326 = vpack.c.b16 %v2922, %v2918
    %v3327 = vpack.c.b16 %v2923, %v2919
    %v3328 = vpack.c.b16 %v2924, %v2920
    %v3329 = vpack.c.b16 %v2929, %v2925
    %v3330 = vpack.c.b16 %v2930, %v2926
    %v3331 = vpack.c.b16 %v2931, %v2927
    %v3332 = vpack.c.b16 %v2932, %v2928
    %v3333 = vpack.c.b16 %v2937, %v2933
    %v3334 = vpack.c.b16 %v2938, %v2934
    %v3335 = vpack.c.b16 %v2939, %v2935
    %v3336 = vpack.c.b16 %v2940, %v2936
    %v3337 = vpack.c.b16 %v2945, %v2941
    %v3338 = vpack.c.b16 %v2946, %v2942
    %v3339 = vpack.c.b16 %v2947, %v2943
    %v3340 = vpack.c.b16 %v2948, %v2944
    %v3341 = vpack.c.b16 %v2953, %v2949
    %v3342 = vpack.c.b16 %v2954, %v2950
    %v3343 = vpack.c.b16 %v2955, %v2951
    %v3344 = vpack.c.b16 %v2956, %v2952
    %v3345 = vpack.c.b16 %v2961, %v2957
    %v3346 = vpack.c.b16 %v2962, %v2958
    %v3347 = vpack.c.b16 %v2963, %v2959
    %v3348 = vpack.c.b16 %v2964, %v2960
    %v3349 = vpack.c.b16 %v2969, %v2965
    %v3350 = vpack.c.b16 %v2970, %v2966
    %v3351 = vpack.c.b16 %v2971, %v2967
    %v3352 = vpack.c.b16 %v2972, %v2968
    %v3353 = vpack.c.b16 %v2977, %v2973
    %v3354 = vpack.c.b16 %v2978, %v2974
    %v3355 = vpack.c.b16 %v2979, %v2975
    %v3356 = vpack.c.b16 %v2980, %v2976
    %v3357 = vpack.c.b16 %v2985, %v2981
    %v3358 = vpack.c.b16 %v2986, %v2982
    %v3359 = vpack.c.b16 %v2987, %v2983
    %v3360 = vpack.c.b16 %v2988, %v2984
    %v3361 = vpack.c.b16 %v2993, %v2989
    %v3362 = vpack.c.b16 %v2994, %v2990
    %v3363 = vpack.c.b16 %v2995, %v2991
    %v3364 = vpack.c.b16 %v2996, %v2992
    %v3365 = vpack.c.b16 %v3001, %v2997
    %v3366 = vpack.c.b16 %v3002, %v2998
    %v3367 = vpack.c.b16 %v3003, %v2999
    %v3368 = vpack.c.b16 %v3004, %v3000
    %v3369 = vpack.c.b16 %v3009, %v3005
    %v3370 = vpack.c.b16 %v3010, %v3006
    %v3371 = vpack.c.b16 %v3011, %v3007
    %v3372 = vpack.c.b16 %v3012, %v3008
    %v3373 = vpack.c.b16 %v3017, %v3013
    %v3374 = vpack.c.b16 %v3018, %v3014
    %v3375 = vpack.c.b16 %v3019, %v3015
    %v3376 = vpack.c.b16 %v3020, %v3016
    %v3377 = vpack.c.b16 %v3025, %v3021
    %v3378 = vpack.c.b16 %v3026, %v3022
    %v3379 = vpack.c.b16 %v3027, %v3023
    %v3380 = vpack.c.b16 %v3028, %v3024
    %v3381 = vpack.c.b16 %v3033, %v3029
    %v3382 = vpack.c.b16 %v3034, %v3030
    %v3383 = vpack.c.b16 %v3035, %v3031
    %v3384 = vpack.c.b16 %v3036, %v3032
    %v3385 = vpack.c.b16 %v3041, %v3037
    %v3386 = vpack.c.b16 %v3042, %v3038
    %v3387 = vpack.c.b16 %v3043, %v3039
    %v3388 = vpack.c.b16 %v3044, %v3040
    %v3389 = vpack.c.b16 %v3049, %v3045
    %v3390 = vpack.c.b16 %v3050, %v3046
    %v3391 = vpack.c.b16 %v3051, %v3047
    %v3392 = vpack.c.b16 %v3052, %v3048
    %v3393 = vpack.c.b16 %v3057, %v3053
    %v3394 = vpack.c.b16 %v3058, %v3054
    %v3395 = vpack.c.b16 %v3059, %v3055
    %v3396 = vpack.c.b16 %v3060, %v3056
    %v3397 = vpack.c.b16 %v3065, %v3061
    %v3398 = vpack.c.b16 %v3066, %v3062
    %v3399 = vpack.c.b16 %v3067, %v3063
    %v3400 = vpack.c.b16 %v3068, %v3064
    %v3401 = vpack.c.b16 %v3073, %v3069
    %v3402 = vpack.c.b16 %v3074, %v3070
    %v3403 = vpack.c.b16 %v3075, %v3071
    %v3404 = vpack.c.b16 %v3076, %v3072
    %v3405 = vpack.c.b16 %v3081, %v3077
    %v3406 = vpack.c.b16 %v3082, %v3078
    %v3407 = vpack.c.b16 %v3083, %v3079
    %v3408 = vpack.c.b16 %v3084, %v3080
    %v3409 = vpack.c.b16 %v3089, %v3085
    %v3410 = vpack.c.b16 %v3090, %v3086
    %v3411 = vpack.c.b16 %v3091, %v3087
    %v3412 = vpack.c.b16 %v3092, %v3088
    %v3413 = vpack.c.b16 %v3097, %v3093
    %v3414 = vpack.c.b16 %v3098, %v3094
    %v3415 = vpack.c.b16 %v3099, %v3095
    %v3416 = vpack.c.b16 %v3100, %v3096
    %v3417 = vpack.c.b16 %v3105, %v3101
    %v3418 = vpack.c.b16 %v3106, %v3102
    %v3419 = vpack.c.b16 %v3107, %v3103
    %v3420 = vpack.c.b16 %v3108, %v3104
    %v3421 = vpack.c.b16 %v3113, %v3109
    %v3422 = vpack.c.b16 %v3114, %v3110
    %v3423 = vpack.c.b16 %v3115, %v3111
    %v3424 = vpack.c.b16 %v3116, %v3112
    %v3425 = vpack.c.b16 %v3121, %v3117
    %v3426 = vpack.c.b16 %v3122, %v3118
    %v3427 = vpack.c.b16 %v3123, %v3119
    %v3428 = vpack.c.b16 %v3124, %v3120
    %v3429 = vpack.c.b16 %v3129, %v3125
    %v3430 = vpack.c.b16 %v3130, %v3126
    %v3431 = vpack.c.b16 %v3131, %v3127
    %v3432 = vpack.c.b16 %v3132, %v3128
    %v3433 = vpack.c.b16 %v3137, %v3133
    %v3434 = vpack.c.b16 %v3138, %v3134
    %v3435 = vpack.c.b16 %v3139, %v3135
    %v3436 = vpack.c.b16 %v3140, %v3136
    %v3437 = vpack.c.b16 %v3145, %v3141
    %v3438 = vpack.c.b16 %v3146, %v3142
    %v3439 = vpack.c.b16 %v3147, %v3143
    %v3440 = vpack.c.b16 %v3148, %v3144
    %v3441 = vpack.c.b16 %v3153, %v3149
    %v3442 = vpack.c.b16 %v3154, %v3150
    %v3443 = vpack.c.b16 %v3155, %v3151
    %v3444 = vpack.c.b16 %v3156, %v3152
    %v3445 = vpack.c.b16 %v3161, %v3157
    %v3446 = vpack.c.b16 %v3162, %v3158
    %v3447 = vpack.c.b16 %v3163, %v3159
    %v3448 = vpack.c.b16 %v3164, %v3160
    %v3449 = vpack.c.b16 %v3169, %v3165
    %v3450 = vpack.c.b16 %v3170, %v3166
    %v3451 = vpack.c.b16 %v3171, %v3167
    %v3452 = vpack.c.b16 %v3172, %v3168
    %v3453 = vpack.c.b16 %v3177, %v3173
    %v3454 = vpack.c.b16 %v3178, %v3174
    %v3455 = vpack.c.b16 %v3179, %v3175
    %v3456 = vpack.c.b16 %v3180, %v3176
    %v3457 = vpack.c.b16 %v3185, %v3181
    %v3458 = vpack.c.b16 %v3186, %v3182
    %v3459 = vpack.c.b16 %v3187, %v3183
    %v3460 = vpack.c.b16 %v3188, %v3184
    %v3461 = vpack.c.b16 %v3193, %v3189
    %v3462 = vpack.c.b16 %v3194, %v3190
    %v3463 = vpack.c.b16 %v3195, %v3191
    %v3464 = vpack.c.b16 %v3196, %v3192
    %v3465 = vpack.c.b16 %v3201, %v3197
    %v3466 = vpack.c.b16 %v3202, %v3198
    %v3467 = vpack.c.b16 %v3203, %v3199
    %v3468 = vpack.c.b16 %v3204, %v3200
    %v3469 = vpack.c.b16 %v3209, %v3205
    %v3470 = vpack.c.b16 %v3210, %v3206
    %v3471 = vpack.c.b16 %v3211, %v3207
    %v3472 = vpack.c.b16 %v3212, %v3208
    %v3473 = vpack.c.b16 %v3217, %v3213
    %v3474 = vpack.c.b16 %v3218, %v3214
    %v3475 = vpack.c.b16 %v3219, %v3215
    %v3476 = vpack.c.b16 %v3220, %v3216
    %3733 = vmatprep.subr.bf16.mxu0 %v3222
    %3734 = vmatpush1.bf16.msra.mxu0 %v3221
    %3735 = vmatprep.subr.bf16.mxu0 %v3226
    %3736 = vmatpush1.bf16.msra.mxu0 %v3225
    %3737 = vmatprep.subr.bf16.mxu0 %v3230
    %3738 = vmatpush1.bf16.msra.mxu0 %v3229
    %3739 = vmatprep.subr.bf16.mxu0 %v3234
    %3740 = vmatpush1.bf16.msra.mxu0 %v3233
    %3741 = vmatprep.subr.bf16.mxu0 %v3238
    %3742 = vmatpush1.bf16.msra.mxu0 %v3237
    %3743 = vmatprep.subr.bf16.mxu0 %v3242
    %3744 = vmatpush1.bf16.msra.mxu0 %v3241
    %3745 = vmatprep.subr.bf16.mxu0 %v3246
    %3746 = vmatpush1.bf16.msra.mxu0 %v3245
    %3747 = vmatprep.subr.bf16.mxu0 %v3250
    %3748 = vmatpush1.bf16.msra.mxu0 %v3249
    %3749 = vmatprep.subr.bf16.mxu0 %v3254
    %3750 = vmatpush1.bf16.msra.mxu0 %v3253
    %3751 = vmatprep.subr.bf16.mxu0 %v3258
    %3752 = vmatpush1.bf16.msra.mxu0 %v3257
    %3753 = vmatprep.subr.bf16.mxu0 %v3262
    %3754 = vmatpush1.bf16.msra.mxu0 %v3261
    %3755 = vmatprep.subr.bf16.mxu0 %v3266
    %3756 = vmatpush1.bf16.msra.mxu0 %v3265
    %3757 = vmatprep.subr.bf16.mxu0 %v3270
    %3758 = vmatpush1.bf16.msra.mxu0 %v3269
    %3759 = vmatprep.subr.bf16.mxu0 %v3274
    %3760 = vmatpush1.bf16.msra.mxu0 %v3273
    %3761 = vmatprep.subr.bf16.mxu0 %v3278
    %3762 = vmatpush1.bf16.msra.mxu0 %v3277
    %3763 = vmatprep.subr.bf16.mxu0 %v3282
    %3764 = vmatpush1.bf16.msra.mxu0 %v3281
    %3765 = vmatprep.mubr.bf16.mxu0 %v207
    %3766 = vmatmul.mubr.bf16.gmra.mrb[0].mxu0 %v206
    %v3767 = vpop.f32.mrb[0].mxu0
    %v3768 = vadd.f32 %v2283, %v3767
    %v3769 = vpop.f32.mrb[0].mxu0
    %v3770 = vadd.f32 %v2285, %v3769
    %v3771 = vpop.f32.mrb[0].mxu0
    %v3772 = vpop.f32.mrb[0].mxu0
    %3773 = vdwg.mxu0
    %3774 = vmatprep.subr.bf16.mxu0 %v3286
    %3775 = vmatpush1.bf16.msra.mxu0 %v3285
    %3776 = vmatprep.subr.bf16.mxu0 %v3290
    %3777 = vmatpush1.bf16.msra.mxu0 %v3289
    %3778 = vmatprep.subr.bf16.mxu0 %v3294
    %3779 = vmatpush1.bf16.msra.mxu0 %v3293
    %3780 = vmatprep.subr.bf16.mxu0 %v3298
    %3781 = vmatpush1.bf16.msra.mxu0 %v3297
    %3782 = vmatprep.subr.bf16.mxu0 %v3302
    %3783 = vmatpush1.bf16.msra.mxu0 %v3301
    %3784 = vmatprep.subr.bf16.mxu0 %v3306
    %3785 = vmatpush1.bf16.msra.mxu0 %v3305
    %3786 = vmatprep.subr.bf16.mxu0 %v3310
    %3787 = vmatpush1.bf16.msra.mxu0 %v3309
    %3788 = vmatprep.subr.bf16.mxu0 %v3314
    %3789 = vmatpush1.bf16.msra.mxu0 %v3313
    %3790 = vmatprep.subr.bf16.mxu0 %v3318
    %3791 = vmatpush1.bf16.msra.mxu0 %v3317
    %3792 = vmatprep.subr.bf16.mxu0 %v3322
    %3793 = vmatpush1.bf16.msra.mxu0 %v3321
    %3794 = vmatprep.subr.bf16.mxu0 %v3326
    %3795 = vmatpush1.bf16.msra.mxu0 %v3325
    %3796 = vmatprep.subr.bf16.mxu0 %v3330
    %3797 = vmatpush1.bf16.msra.mxu0 %v3329
    %3798 = vmatprep.subr.bf16.mxu0 %v3334
    %3799 = vmatpush1.bf16.msra.mxu0 %v3333
    %3800 = vmatprep.subr.bf16.mxu0 %v3338
    %3801 = vmatpush1.bf16.msra.mxu0 %v3337
    %3802 = vmatprep.subr.bf16.mxu0 %v3342
    %3803 = vmatpush1.bf16.msra.mxu0 %v3341
    %3804 = vmatprep.subr.bf16.mxu0 %v3346
    %3805 = vmatpush1.bf16.msra.mxu0 %v3345
    %3806 = vmatprep.mubr.bf16.mxu0 %v209
    %3807 = vmatmul.mubr.bf16.gmra.mrb[0].mxu0 %v208
    %v3808 = vpop.f32.mrb[0].mxu0
    %v3809 = vadd.f32 %v3768, %v3808
    %v3810 = vpop.f32.mrb[0].mxu0
    %v3811 = vadd.f32 %v3770, %v3810
    %v3812 = vpop.f32.mrb[0].mxu0
    %v3813 = vpop.f32.mrb[0].mxu0
    %3814 = vdwg.mxu0
    %3815 = vmatprep.subr.bf16.mxu0 %v3350
    %3816 = vmatpush1.bf16.msra.mxu0 %v3349
    %3817 = vmatprep.subr.bf16.mxu0 %v3354
    %3818 = vmatpush1.bf16.msra.mxu0 %v3353
    %3819 = vmatprep.subr.bf16.mxu0 %v3358
    %3820 = vmatpush1.bf16.msra.mxu0 %v3357
    %3821 = vmatprep.subr.bf16.mxu0 %v3362
    %3822 = vmatpush1.bf16.msra.mxu0 %v3361
    %3823 = vmatprep.subr.bf16.mxu0 %v3366
    %3824 = vmatpush1.bf16.msra.mxu0 %v3365
    %3825 = vmatprep.subr.bf16.mxu0 %v3370
    %3826 = vmatpush1.bf16.msra.mxu0 %v3369
    %3827 = vmatprep.subr.bf16.mxu0 %v3374
    %3828 = vmatpush1.bf16.msra.mxu0 %v3373
    %3829 = vmatprep.subr.bf16.mxu0 %v3378
    %3830 = vmatpush1.bf16.msra.mxu0 %v3377
    %3831 = vmatprep.subr.bf16.mxu0 %v3382
    %3832 = vmatpush1.bf16.msra.mxu0 %v3381
    %3833 = vmatprep.subr.bf16.mxu0 %v3386
    %3834 = vmatpush1.bf16.msra.mxu0 %v3385
    %3835 = vmatprep.subr.bf16.mxu0 %v3390
    %3836 = vmatpush1.bf16.msra.mxu0 %v3389
    %3837 = vmatprep.subr.bf16.mxu0 %v3394
    %3838 = vmatpush1.bf16.msra.mxu0 %v3393
    %3839 = vmatprep.subr.bf16.mxu0 %v3398
    %3840 = vmatpush1.bf16.msra.mxu0 %v3397
    %3841 = vmatprep.subr.bf16.mxu0 %v3402
    %3842 = vmatpush1.bf16.msra.mxu0 %v3401
    %3843 = vmatprep.subr.bf16.mxu0 %v3406
    %3844 = vmatpush1.bf16.msra.mxu0 %v3405
    %3845 = vmatprep.subr.bf16.mxu0 %v3410
    %3846 = vmatpush1.bf16.msra.mxu0 %v3409
    %3847 = vmatprep.mubr.bf16.mxu0 %v211
    %3848 = vmatmul.mubr.bf16.gmra.mrb[0].mxu0 %v210
    %v3849 = vpop.f32.mrb[0].mxu0
    %v3850 = vadd.f32 %v3809, %v3849
    %v3851 = vpop.f32.mrb[0].mxu0
    %v3852 = vadd.f32 %v3811, %v3851
    %v3853 = vpop.f32.mrb[0].mxu0
    %v3854 = vpop.f32.mrb[0].mxu0
    %3855 = vdwg.mxu0
    %3856 = vmatprep.subr.bf16.mxu0 %v3414
    %3857 = vmatpush1.bf16.msra.mxu0 %v3413
    %3858 = vmatprep.subr.bf16.mxu0 %v3418
    %3859 = vmatpush1.bf16.msra.mxu0 %v3417
    %3860 = vmatprep.subr.bf16.mxu0 %v3422
    %3861 = vmatpush1.bf16.msra.mxu0 %v3421
    %3862 = vmatprep.subr.bf16.mxu0 %v3426
    %3863 = vmatpush1.bf16.msra.mxu0 %v3425
    %3864 = vmatprep.subr.bf16.mxu0 %v3430
    %3865 = vmatpush1.bf16.msra.mxu0 %v3429
    %3866 = vmatprep.subr.bf16.mxu0 %v3434
    %3867 = vmatpush1.bf16.msra.mxu0 %v3433
    %3868 = vmatprep.subr.bf16.mxu0 %v3438
    %3869 = vmatpush1.bf16.msra.mxu0 %v3437
    %3870 = vmatprep.subr.bf16.mxu0 %v3442
    %3871 = vmatpush1.bf16.msra.mxu0 %v3441
    %3872 = vmatprep.subr.bf16.mxu0 %v3446
    %3873 = vmatpush1.bf16.msra.mxu0 %v3445
    %3874 = vmatprep.subr.bf16.mxu0 %v3450
    %3875 = vmatpush1.bf16.msra.mxu0 %v3449
    %3876 = vmatprep.subr.bf16.mxu0 %v3454
    %3877 = vmatpush1.bf16.msra.mxu0 %v3453
    %3878 = vmatprep.subr.bf16.mxu0 %v3458
    %3879 = vmatpush1.bf16.msra.mxu0 %v3457
    %3880 = vmatprep.subr.bf16.mxu0 %v3462
    %3881 = vmatpush1.bf16.msra.mxu0 %v3461
    %3882 = vmatprep.subr.bf16.mxu0 %v3466
    %3883 = vmatpush1.bf16.msra.mxu0 %v3465
    %3884 = vmatprep.subr.bf16.mxu0 %v3470
    %3885 = vmatpush1.bf16.msra.mxu0 %v3469
    %3886 = vmatprep.subr.bf16.mxu0 %v3474
    %3887 = vmatpush1.bf16.msra.mxu0 %v3473
    %3888 = vmatprep.mubr.bf16.mxu0 %v213
    %3889 = vmatmul.mubr.bf16.gmra.mrb[0].mxu0 %v212
    %v3890 = vpop.f32.mrb[0].mxu0
    %v3891 = vadd.f32 %v3850, %v3890
    %v3892 = vpop.f32.mrb[0].mxu0
    %v3893 = vadd.f32 %v3852, %v3892
    %v3894 = vpop.f32.mrb[0].mxu0
    %v3895 = vpop.f32.mrb[0].mxu0
    %3896 = vdwg.mxu0
    %3897 = vmatprep.subr.bf16.mxu0 %v3224
    %3898 = vmatpush1.bf16.msra.mxu0 %v3223
    %3899 = vmatprep.subr.bf16.mxu0 %v3228
    %3900 = vmatpush1.bf16.msra.mxu0 %v3227
    %3901 = vmatprep.subr.bf16.mxu0 %v3232
    %3902 = vmatpush1.bf16.msra.mxu0 %v3231
    %3903 = vmatprep.subr.bf16.mxu0 %v3236
    %3904 = vmatpush1.bf16.msra.mxu0 %v3235
    %3905 = vmatprep.subr.bf16.mxu0 %v3240
    %3906 = vmatpush1.bf16.msra.mxu0 %v3239
    %3907 = vmatprep.subr.bf16.mxu0 %v3244
    %3908 = vmatpush1.bf16.msra.mxu0 %v3243
    %3909 = vmatprep.subr.bf16.mxu0 %v3248
    %3910 = vmatpush1.bf16.msra.mxu0 %v3247
    %3911 = vmatprep.subr.bf16.mxu0 %v3252
    %3912 = vmatpush1.bf16.msra.mxu0 %v3251
    %3913 = vmatprep.subr.bf16.mxu0 %v3256
    %3914 = vmatpush1.bf16.msra.mxu0 %v3255
    %3915 = vmatprep.subr.bf16.mxu0 %v3260
    %3916 = vmatpush1.bf16.msra.mxu0 %v3259
    %3917 = vmatprep.subr.bf16.mxu0 %v3264
    %3918 = vmatpush1.bf16.msra.mxu0 %v3263
    %3919 = vmatprep.subr.bf16.mxu0 %v3268
    %3920 = vmatpush1.bf16.msra.mxu0 %v3267
    %3921 = vmatprep.subr.bf16.mxu0 %v3272
    %3922 = vmatpush1.bf16.msra.mxu0 %v3271
    %3923 = vmatprep.subr.bf16.mxu0 %v3276
    %3924 = vmatpush1.bf16.msra.mxu0 %v3275
    %3925 = vmatprep.subr.bf16.mxu0 %v3280
    %3926 = vmatpush1.bf16.msra.mxu0 %v3279
    %3927 = vmatprep.subr.bf16.mxu0 %v3284
    %3928 = vmatpush1.bf16.msra.mxu0 %v3283
    %3929 = vmatprep.mubr.bf16.mxu0 %v207
    %3930 = vmatmul.mubr.bf16.gmra.mrb[0].mxu0 %v206
    %v3931 = vpop.f32.mrb[0].mxu0
    %v3932 = vadd.f32 %v2447, %v3931
    %v3933 = vpop.f32.mrb[0].mxu0
    %v3934 = vadd.f32 %v2449, %v3933
    %v3935 = vpop.f32.mrb[0].mxu0
    %v3936 = vpop.f32.mrb[0].mxu0
    %3937 = vdwg.mxu0
    %3938 = vmatprep.subr.bf16.mxu0 %v3288
    %3939 = vmatpush1.bf16.msra.mxu0 %v3287
    %3940 = vmatprep.subr.bf16.mxu0 %v3292
    %3941 = vmatpush1.bf16.msra.mxu0 %v3291
    %3942 = vmatprep.subr.bf16.mxu0 %v3296
    %3943 = vmatpush1.bf16.msra.mxu0 %v3295
    %3944 = vmatprep.subr.bf16.mxu0 %v3300
    %3945 = vmatpush1.bf16.msra.mxu0 %v3299
    %3946 = vmatprep.subr.bf16.mxu0 %v3304
    %3947 = vmatpush1.bf16.msra.mxu0 %v3303
    %3948 = vmatprep.subr.bf16.mxu0 %v3308
    %3949 = vmatpush1.bf16.msra.mxu0 %v3307
    %3950 = vmatprep.subr.bf16.mxu0 %v3312
    %3951 = vmatpush1.bf16.msra.mxu0 %v3311
    %3952 = vmatprep.subr.bf16.mxu0 %v3316
    %3953 = vmatpush1.bf16.msra.mxu0 %v3315
    %3954 = vmatprep.subr.bf16.mxu0 %v3320
    %3955 = vmatpush1.bf16.msra.mxu0 %v3319
    %3956 = vmatprep.subr.bf16.mxu0 %v3324
    %3957 = vmatpush1.bf16.msra.mxu0 %v3323
    %3958 = vmatprep.subr.bf16.mxu0 %v3328
    %3959 = vmatpush1.bf16.msra.mxu0 %v3327
    %3960 = vmatprep.subr.bf16.mxu0 %v3332
    %3961 = vmatpush1.bf16.msra.mxu0 %v3331
    %3962 = vmatprep.subr.bf16.mxu0 %v3336
    %3963 = vmatpush1.bf16.msra.mxu0 %v3335
    %3964 = vmatprep.subr.bf16.mxu0 %v3340
    %3965 = vmatpush1.bf16.msra.mxu0 %v3339
    %3966 = vmatprep.subr.bf16.mxu0 %v3344
    %3967 = vmatpush1.bf16.msra.mxu0 %v3343
    %3968 = vmatprep.subr.bf16.mxu0 %v3348
    %3969 = vmatpush1.bf16.msra.mxu0 %v3347
    %3970 = vmatprep.mubr.bf16.mxu0 %v209
    %3971 = vmatmul.mubr.bf16.gmra.mrb[0].mxu0 %v208
    %v3972 = vpop.f32.mrb[0].mxu0
    %v3973 = vadd.f32 %v3932, %v3972
    %v3974 = vpop.f32.mrb[0].mxu0
    %v3975 = vadd.f32 %v3934, %v3974
    %v3976 = vpop.f32.mrb[0].mxu0
    %v3977 = vpop.f32.mrb[0].mxu0
    %3978 = vdwg.mxu0
    %3979 = vmatprep.subr.bf16.mxu0 %v3352
    %3980 = vmatpush1.bf16.msra.mxu0 %v3351
    %3981 = vmatprep.subr.bf16.mxu0 %v3356
    %3982 = vmatpush1.bf16.msra.mxu0 %v3355
    %3983 = vmatprep.subr.bf16.mxu0 %v3360
    %3984 = vmatpush1.bf16.msra.mxu0 %v3359
    %3985 = vmatprep.subr.bf16.mxu0 %v3364
    %3986 = vmatpush1.bf16.msra.mxu0 %v3363
    %3987 = vmatprep.subr.bf16.mxu0 %v3368
    %3988 = vmatpush1.bf16.msra.mxu0 %v3367
    %3989 = vmatprep.subr.bf16.mxu0 %v3372
    %3990 = vmatpush1.bf16.msra.mxu0 %v3371
    %3991 = vmatprep.subr.bf16.mxu0 %v3376
    %3992 = vmatpush1.bf16.msra.mxu0 %v3375
    %3993 = vmatprep.subr.bf16.mxu0 %v3380
    %3994 = vmatpush1.bf16.msra.mxu0 %v3379
    %3995 = vmatprep.subr.bf16.mxu0 %v3384
    %3996 = vmatpush1.bf16.msra.mxu0 %v3383
    %3997 = vmatprep.subr.bf16.mxu0 %v3388
    %3998 = vmatpush1.bf16.msra.mxu0 %v3387
    %3999 = vmatprep.subr.bf16.mxu0 %v3392
    %4000 = vmatpush1.bf16.msra.mxu0 %v3391
    %4001 = vmatprep.subr.bf16.mxu0 %v3396
    %4002 = vmatpush1.bf16.msra.mxu0 %v3395
    %4003 = vmatprep.subr.bf16.mxu0 %v3400
    %4004 = vmatpush1.bf16.msra.mxu0 %v3399
    %4005 = vmatprep.subr.bf16.mxu0 %v3404
    %4006 = vmatpush1.bf16.msra.mxu0 %v3403
    %4007 = vmatprep.subr.bf16.mxu0 %v3408
    %4008 = vmatpush1.bf16.msra.mxu0 %v3407
    %4009 = vmatprep.subr.bf16.mxu0 %v3412
    %4010 = vmatpush1.bf16.msra.mxu0 %v3411
    %4011 = vmatprep.mubr.bf16.mxu0 %v211
    %4012 = vmatmul.mubr.bf16.gmra.mrb[0].mxu0 %v210
    %v4013 = vpop.f32.mrb[0].mxu0
    %v4014 = vadd.f32 %v3973, %v4013
    %v4015 = vpop.f32.mrb[0].mxu0
    %v4016 = vadd.f32 %v3975, %v4015
    %v4017 = vpop.f32.mrb[0].mxu0
    %v4018 = vpop.f32.mrb[0].mxu0
    %4019 = vdwg.mxu0
    %4020 = vmatprep.subr.bf16.mxu0 %v3416
    %4021 = vmatpush1.bf16.msra.mxu0 %v3415
    %4022 = vmatprep.subr.bf16.mxu0 %v3420
    %4023 = vmatpush1.bf16.msra.mxu0 %v3419
    %4024 = vmatprep.subr.bf16.mxu0 %v3424
    %4025 = vmatpush1.bf16.msra.mxu0 %v3423
    %4026 = vmatprep.subr.bf16.mxu0 %v3428
    %4027 = vmatpush1.bf16.msra.mxu0 %v3427
    %4028 = vmatprep.subr.bf16.mxu0 %v3432
    %4029 = vmatpush1.bf16.msra.mxu0 %v3431
    %4030 = vmatprep.subr.bf16.mxu0 %v3436
    %4031 = vmatpush1.bf16.msra.mxu0 %v3435
    %4032 = vmatprep.subr.bf16.mxu0 %v3440
    %4033 = vmatpush1.bf16.msra.mxu0 %v3439
    %4034 = vmatprep.subr.bf16.mxu0 %v3444
    %4035 = vmatpush1.bf16.msra.mxu0 %v3443
    %4036 = vmatprep.subr.bf16.mxu0 %v3448
    %4037 = vmatpush1.bf16.msra.mxu0 %v3447
    %4038 = vmatprep.subr.bf16.mxu0 %v3452
    %4039 = vmatpush1.bf16.msra.mxu0 %v3451
    %4040 = vmatprep.subr.bf16.mxu0 %v3456
    %4041 = vmatpush1.bf16.msra.mxu0 %v3455
    %4042 = vmatprep.subr.bf16.mxu0 %v3460
    %4043 = vmatpush1.bf16.msra.mxu0 %v3459
    %4044 = vmatprep.subr.bf16.mxu0 %v3464
    %4045 = vmatpush1.bf16.msra.mxu0 %v3463
    %4046 = vmatprep.subr.bf16.mxu0 %v3468
    %4047 = vmatpush1.bf16.msra.mxu0 %v3467
    %4048 = vmatprep.subr.bf16.mxu0 %v3472
    %4049 = vmatpush1.bf16.msra.mxu0 %v3471
    %4050 = vmatprep.subr.bf16.mxu0 %v3476
    %4051 = vmatpush1.bf16.msra.mxu0 %v3475
    %4052 = vmatprep.mubr.bf16.mxu0 %v213
    %4053 = vmatmul.mubr.bf16.gmra.mrb[0].mxu0 %v212
    %v4054 = vpop.f32.mrb[0].mxu0
    %v4055 = vadd.f32 %v4014, %v4054
    %v4056 = vpop.f32.mrb[0].mxu0
    %v4057 = vadd.f32 %v4016, %v4056
    %v4058 = vpop.f32.mrb[0].mxu0
    %v4059 = vpop.f32.mrb[0].mxu0
    %4060 = vdwg.mxu0
    %s4061 = scalar_lea.vmem [#allocation3], 16
    %v4062 = vld [vmem:[%s4061] sm:$0xff]
    %v4064 = vlaneseq
    %v4065 = vshrl.u32 %v4064, 7
    %v4066 = vsub.s32 0, %v4065
    %v4067 = vrot.slane %v4062, %v4066
    %v4068 = vlaneseq
    %v4069 = vshrl.u32 %v4068, 7
    %v4070 = vsub.s32 1, %v4069
    %v4071 = vrot.slane %v4062, %v4070
    %v4072 = vlaneseq
    %v4073 = vshrl.u32 %v4072, 7
    %v4074 = vsub.s32 2, %v4073
    %v4075 = vrot.slane %v4062, %v4074
    %v4076 = vlaneseq
    %v4077 = vshrl.u32 %v4076, 7
    %v4078 = vsub.s32 3, %v4077
    %v4079 = vrot.slane %v4062, %v4078
    %v4080 = vlaneseq
    %v4081 = vshrl.u32 %v4080, 7
    %v4082 = vsub.s32 4, %v4081
    %v4083 = vrot.slane %v4062, %v4082
    %v4084 = vlaneseq
    %v4085 = vshrl.u32 %v4084, 7
    %v4086 = vsub.s32 5, %v4085
    %v4087 = vrot.slane %v4062, %v4086
    %v4088 = vlaneseq
    %v4089 = vshrl.u32 %v4088, 7
    %v4090 = vsub.s32 6, %v4089
    %v4091 = vrot.slane %v4062, %v4090
    %v4092 = vlaneseq
    %v4093 = vshrl.u32 %v4092, 7
    %v4094 = vsub.s32 7, %v4093
    %v4095 = vrot.slane %v4062, %v4094
    %v4104 = vmul.f32 %v97, %v4067
    %v4105 = vmul.f32 %v97, %v4071
    %v4106 = vmul.f32 %v97, %v4075
    %v4107 = vmul.f32 %v97, %v4079
    %v4108 = vmul.f32 %v97, %v4083
    %v4109 = vmul.f32 %v97, %v4087
    %v4110 = vmul.f32 %v97, %v4091
    %v4111 = vmul.f32 %v97, %v4095
    %s4112 = scalar_lea.vmem [#allocation5], 16
    %v4113 = vld [vmem:[%s4112] sm:$0xff]
    %v4115 = vlaneseq
    %v4116 = vshrl.u32 %v4115, 7
    %v4117 = vsub.s32 0, %v4116
    %v4118 = vrot.slane %v4113, %v4117
    %v4119 = vlaneseq
    %v4120 = vshrl.u32 %v4119, 7
    %v4121 = vsub.s32 1, %v4120
    %v4122 = vrot.slane %v4113, %v4121
    %v4123 = vlaneseq
    %v4124 = vshrl.u32 %v4123, 7
    %v4125 = vsub.s32 2, %v4124
    %v4126 = vrot.slane %v4113, %v4125
    %v4127 = vlaneseq
    %v4128 = vshrl.u32 %v4127, 7
    %v4129 = vsub.s32 3, %v4128
    %v4130 = vrot.slane %v4113, %v4129
    %v4131 = vlaneseq
    %v4132 = vshrl.u32 %v4131, 7
    %v4133 = vsub.s32 4, %v4132
    %v4134 = vrot.slane %v4113, %v4133
    %v4135 = vlaneseq
    %v4136 = vshrl.u32 %v4135, 7
    %v4137 = vsub.s32 5, %v4136
    %v4138 = vrot.slane %v4113, %v4137
    %v4139 = vlaneseq
    %v4140 = vshrl.u32 %v4139, 7
    %v4141 = vsub.s32 6, %v4140
    %v4142 = vrot.slane %v4113, %v4141
    %v4143 = vlaneseq
    %v4144 = vshrl.u32 %v4143, 7
    %v4145 = vsub.s32 7, %v4144
    %v4146 = vrot.slane %v4113, %v4145
    %v4155 = vadd.f32 %v4104, %v4118
    %v4156 = vadd.f32 %v4105, %v4122
    %v4157 = vadd.f32 %v4106, %v4126
    %v4158 = vadd.f32 %v4107, %v4130
    %v4159 = vadd.f32 %v4108, %v4134
    %v4160 = vadd.f32 %v4109, %v4138
    %v4161 = vadd.f32 %v4110, %v4142
    %v4162 = vadd.f32 %v4111, %v4146
    %v4163 = vtanh.pop %v4155
    %v4164 = vtanh.pop %v4156
    %v4165 = vtanh.pop %v4157
    %v4166 = vtanh.pop %v4158
    %v4167 = vtanh.pop %v4159
    %v4168 = vtanh.pop %v4160
    %v4169 = vtanh.pop %v4161
    %v4170 = vtanh.pop %v4162
    %v4171 = vpack.c.bf16 %v4163, %v4163
    %v4172 = vpack.c.bf16 %v4164, %v4164
    %v4173 = vpack.c.bf16 %v4165, %v4165
    %v4174 = vpack.c.bf16 %v4166, %v4166
    %v4175 = vpack.c.bf16 %v4167, %v4167
    %v4176 = vpack.c.bf16 %v4168, %v4168
    %v4177 = vpack.c.bf16 %v4169, %v4169
    %v4178 = vpack.c.bf16 %v4170, %v4170
    %s4179 = scalar_lea.vmem [#allocation7], 4096
    %v4180 = vld [vmem:[%s4179] sm:$0xff]
    %v4181 = vld [vmem:[%s4179 + $0x8] sm:$0xff]
    %v4182 = vld [vmem:[%s4179 + $0x10] sm:$0xff]
    %v4183 = vld [vmem:[%s4179 + $0x18] sm:$0xff]
    %v4184 = vld [vmem:[%s4179 + $0x20] sm:$0xff]
    %v4185 = vld [vmem:[%s4179 + $0x28] sm:$0xff]
    %v4186 = vld [vmem:[%s4179 + $0x30] sm:$0xff]
    %v4187 = vld [vmem:[%s4179 + $0x38] sm:$0xff]
    %v4188 = vld [vmem:[%s4179 + $0x40] sm:$0xff]
    %v4189 = vld [vmem:[%s4179 + $0x48] sm:$0xff]
    %v4190 = vld [vmem:[%s4179 + $0x50] sm:$0xff]
    %v4191 = vld [vmem:[%s4179 + $0x58] sm:$0xff]
    %v4192 = vld [vmem:[%s4179 + $0x60] sm:$0xff]
    %v4193 = vld [vmem:[%s4179 + $0x68] sm:$0xff]
    %v4194 = vld [vmem:[%s4179 + $0x70] sm:$0xff]
    %v4195 = vld [vmem:[%s4179 + $0x78] sm:$0xff]
    %v4196 = vld [vmem:[%s4179 + $0x80] sm:$0xff]
    %v4197 = vld [vmem:[%s4179 + $0x88] sm:$0xff]
    %v4198 = vld [vmem:[%s4179 + $0x90] sm:$0xff]
    %v4199 = vld [vmem:[%s4179 + $0x98] sm:$0xff]
    %v4200 = vld [vmem:[%s4179 + $0xa0] sm:$0xff]
    %v4201 = vld [vmem:[%s4179 + $0xa8] sm:$0xff]
    %v4202 = vld [vmem:[%s4179 + $0xb0] sm:$0xff]
    %v4203 = vld [vmem:[%s4179 + $0xb8] sm:$0xff]
    %v4204 = vld [vmem:[%s4179 + $0xc0] sm:$0xff]
    %v4205 = vld [vmem:[%s4179 + $0xc8] sm:$0xff]
    %v4206 = vld [vmem:[%s4179 + $0xd0] sm:$0xff]
    %v4207 = vld [vmem:[%s4179 + $0xd8] sm:$0xff]
    %v4208 = vld [vmem:[%s4179 + $0xe0] sm:$0xff]
    %v4209 = vld [vmem:[%s4179 + $0xe8] sm:$0xff]
    %v4210 = vld [vmem:[%s4179 + $0xf0] sm:$0xff]
    %v4211 = vld [vmem:[%s4179 + $0xf8] sm:$0xff]
    %v4212 = vld [vmem:[%s4179 + $0x100] sm:$0xff]
    %v4213 = vld [vmem:[%s4179 + $0x108] sm:$0xff]
    %v4214 = vld [vmem:[%s4179 + $0x110] sm:$0xff]
    %v4215 = vld [vmem:[%s4179 + $0x118] sm:$0xff]
    %v4216 = vld [vmem:[%s4179 + $0x120] sm:$0xff]
    %v4217 = vld [vmem:[%s4179 + $0x128] sm:$0xff]
    %v4218 = vld [vmem:[%s4179 + $0x130] sm:$0xff]
    %v4219 = vld [vmem:[%s4179 + $0x138] sm:$0xff]
    %v4220 = vld [vmem:[%s4179 + $0x140] sm:$0xff]
    %v4221 = vld [vmem:[%s4179 + $0x148] sm:$0xff]
    %v4222 = vld [vmem:[%s4179 + $0x150] sm:$0xff]
    %v4223 = vld [vmem:[%s4179 + $0x158] sm:$0xff]
    %v4224 = vld [vmem:[%s4179 + $0x160] sm:$0xff]
    %v4225 = vld [vmem:[%s4179 + $0x168] sm:$0xff]
    %v4226 = vld [vmem:[%s4179 + $0x170] sm:$0xff]
    %v4227 = vld [vmem:[%s4179 + $0x178] sm:$0xff]
    %v4228 = vld [vmem:[%s4179 + $0x180] sm:$0xff]
    %v4229 = vld [vmem:[%s4179 + $0x188] sm:$0xff]
    %v4230 = vld [vmem:[%s4179 + $0x190] sm:$0xff]
    %v4231 = vld [vmem:[%s4179 + $0x198] sm:$0xff]
    %v4232 = vld [vmem:[%s4179 + $0x1a0] sm:$0xff]
    %v4233 = vld [vmem:[%s4179 + $0x1a8] sm:$0xff]
    %v4234 = vld [vmem:[%s4179 + $0x1b0] sm:$0xff]
    %v4235 = vld [vmem:[%s4179 + $0x1b8] sm:$0xff]
    %v4236 = vld [vmem:[%s4179 + $0x1c0] sm:$0xff]
    %v4237 = vld [vmem:[%s4179 + $0x1c8] sm:$0xff]
    %v4238 = vld [vmem:[%s4179 + $0x1d0] sm:$0xff]
    %v4239 = vld [vmem:[%s4179 + $0x1d8] sm:$0xff]
    %v4240 = vld [vmem:[%s4179 + $0x1e0] sm:$0xff]
    %v4241 = vld [vmem:[%s4179 + $0x1e8] sm:$0xff]
    %v4242 = vld [vmem:[%s4179 + $0x1f0] sm:$0xff]
    %v4243 = vld [vmem:[%s4179 + $0x1f8] sm:$0xff]
    %v4244 = vld [vmem:[%s4179 + $0x200] sm:$0xff]
    %v4245 = vld [vmem:[%s4179 + $0x208] sm:$0xff]
    %v4246 = vld [vmem:[%s4179 + $0x210] sm:$0xff]
    %v4247 = vld [vmem:[%s4179 + $0x218] sm:$0xff]
    %v4248 = vld [vmem:[%s4179 + $0x220] sm:$0xff]
    %v4249 = vld [vmem:[%s4179 + $0x228] sm:$0xff]
    %v4250 = vld [vmem:[%s4179 + $0x230] sm:$0xff]
    %v4251 = vld [vmem:[%s4179 + $0x238] sm:$0xff]
    %v4252 = vld [vmem:[%s4179 + $0x240] sm:$0xff]
    %v4253 = vld [vmem:[%s4179 + $0x248] sm:$0xff]
    %v4254 = vld [vmem:[%s4179 + $0x250] sm:$0xff]
    %v4255 = vld [vmem:[%s4179 + $0x258] sm:$0xff]
    %v4256 = vld [vmem:[%s4179 + $0x260] sm:$0xff]
    %v4257 = vld [vmem:[%s4179 + $0x268] sm:$0xff]
    %v4258 = vld [vmem:[%s4179 + $0x270] sm:$0xff]
    %v4259 = vld [vmem:[%s4179 + $0x278] sm:$0xff]
    %v4260 = vld [vmem:[%s4179 + $0x280] sm:$0xff]
    %v4261 = vld [vmem:[%s4179 + $0x288] sm:$0xff]
    %v4262 = vld [vmem:[%s4179 + $0x290] sm:$0xff]
    %v4263 = vld [vmem:[%s4179 + $0x298] sm:$0xff]
    %v4264 = vld [vmem:[%s4179 + $0x2a0] sm:$0xff]
    %v4265 = vld [vmem:[%s4179 + $0x2a8] sm:$0xff]
    %v4266 = vld [vmem:[%s4179 + $0x2b0] sm:$0xff]
    %v4267 = vld [vmem:[%s4179 + $0x2b8] sm:$0xff]
    %v4268 = vld [vmem:[%s4179 + $0x2c0] sm:$0xff]
    %v4269 = vld [vmem:[%s4179 + $0x2c8] sm:$0xff]
    %v4270 = vld [vmem:[%s4179 + $0x2d0] sm:$0xff]
    %v4271 = vld [vmem:[%s4179 + $0x2d8] sm:$0xff]
    %v4272 = vld [vmem:[%s4179 + $0x2e0] sm:$0xff]
    %v4273 = vld [vmem:[%s4179 + $0x2e8] sm:$0xff]
    %v4274 = vld [vmem:[%s4179 + $0x2f0] sm:$0xff]
    %v4275 = vld [vmem:[%s4179 + $0x2f8] sm:$0xff]
    %v4276 = vld [vmem:[%s4179 + $0x300] sm:$0xff]
    %v4277 = vld [vmem:[%s4179 + $0x308] sm:$0xff]
    %v4278 = vld [vmem:[%s4179 + $0x310] sm:$0xff]
    %v4279 = vld [vmem:[%s4179 + $0x318] sm:$0xff]
    %v4280 = vld [vmem:[%s4179 + $0x320] sm:$0xff]
    %v4281 = vld [vmem:[%s4179 + $0x328] sm:$0xff]
    %v4282 = vld [vmem:[%s4179 + $0x330] sm:$0xff]
    %v4283 = vld [vmem:[%s4179 + $0x338] sm:$0xff]
    %v4284 = vld [vmem:[%s4179 + $0x340] sm:$0xff]
    %v4285 = vld [vmem:[%s4179 + $0x348] sm:$0xff]
    %v4286 = vld [vmem:[%s4179 + $0x350] sm:$0xff]
    %v4287 = vld [vmem:[%s4179 + $0x358] sm:$0xff]
    %v4288 = vld [vmem:[%s4179 + $0x360] sm:$0xff]
    %v4289 = vld [vmem:[%s4179 + $0x368] sm:$0xff]
    %v4290 = vld [vmem:[%s4179 + $0x370] sm:$0xff]
    %v4291 = vld [vmem:[%s4179 + $0x378] sm:$0xff]
    %v4292 = vld [vmem:[%s4179 + $0x380] sm:$0xff]
    %v4293 = vld [vmem:[%s4179 + $0x388] sm:$0xff]
    %v4294 = vld [vmem:[%s4179 + $0x390] sm:$0xff]
    %v4295 = vld [vmem:[%s4179 + $0x398] sm:$0xff]
    %v4296 = vld [vmem:[%s4179 + $0x3a0] sm:$0xff]
    %v4297 = vld [vmem:[%s4179 + $0x3a8] sm:$0xff]
    %v4298 = vld [vmem:[%s4179 + $0x3b0] sm:$0xff]
    %v4299 = vld [vmem:[%s4179 + $0x3b8] sm:$0xff]
    %v4300 = vld [vmem:[%s4179 + $0x3c0] sm:$0xff]
    %v4301 = vld [vmem:[%s4179 + $0x3c8] sm:$0xff]
    %v4302 = vld [vmem:[%s4179 + $0x3d0] sm:$0xff]
    %v4303 = vld [vmem:[%s4179 + $0x3d8] sm:$0xff]
    %v4304 = vld [vmem:[%s4179 + $0x3e0] sm:$0xff]
    %v4305 = vld [vmem:[%s4179 + $0x3e8] sm:$0xff]
    %v4306 = vld [vmem:[%s4179 + $0x3f0] sm:$0xff]
    %v4307 = vld [vmem:[%s4179 + $0x3f8] sm:$0xff]
    %v4308 = vld [vmem:[%s4179 + $0x400] sm:$0xff]
    %v4309 = vld [vmem:[%s4179 + $0x408] sm:$0xff]
    %v4310 = vld [vmem:[%s4179 + $0x410] sm:$0xff]
    %v4311 = vld [vmem:[%s4179 + $0x418] sm:$0xff]
    %v4312 = vld [vmem:[%s4179 + $0x420] sm:$0xff]
    %v4313 = vld [vmem:[%s4179 + $0x428] sm:$0xff]
    %v4314 = vld [vmem:[%s4179 + $0x430] sm:$0xff]
    %v4315 = vld [vmem:[%s4179 + $0x438] sm:$0xff]
    %v4316 = vld [vmem:[%s4179 + $0x440] sm:$0xff]
    %v4317 = vld [vmem:[%s4179 + $0x448] sm:$0xff]
    %v4318 = vld [vmem:[%s4179 + $0x450] sm:$0xff]
    %v4319 = vld [vmem:[%s4179 + $0x458] sm:$0xff]
    %v4320 = vld [vmem:[%s4179 + $0x460] sm:$0xff]
    %v4321 = vld [vmem:[%s4179 + $0x468] sm:$0xff]
    %v4322 = vld [vmem:[%s4179 + $0x470] sm:$0xff]
    %v4323 = vld [vmem:[%s4179 + $0x478] sm:$0xff]
    %v4324 = vld [vmem:[%s4179 + $0x480] sm:$0xff]
    %v4325 = vld [vmem:[%s4179 + $0x488] sm:$0xff]
    %v4326 = vld [vmem:[%s4179 + $0x490] sm:$0xff]
    %v4327 = vld [vmem:[%s4179 + $0x498] sm:$0xff]
    %v4328 = vld [vmem:[%s4179 + $0x4a0] sm:$0xff]
    %v4329 = vld [vmem:[%s4179 + $0x4a8] sm:$0xff]
    %v4330 = vld [vmem:[%s4179 + $0x4b0] sm:$0xff]
    %v4331 = vld [vmem:[%s4179 + $0x4b8] sm:$0xff]
    %v4332 = vld [vmem:[%s4179 + $0x4c0] sm:$0xff]
    %v4333 = vld [vmem:[%s4179 + $0x4c8] sm:$0xff]
    %v4334 = vld [vmem:[%s4179 + $0x4d0] sm:$0xff]
    %v4335 = vld [vmem:[%s4179 + $0x4d8] sm:$0xff]
    %v4336 = vld [vmem:[%s4179 + $0x4e0] sm:$0xff]
    %v4337 = vld [vmem:[%s4179 + $0x4e8] sm:$0xff]
    %v4338 = vld [vmem:[%s4179 + $0x4f0] sm:$0xff]
    %v4339 = vld [vmem:[%s4179 + $0x4f8] sm:$0xff]
    %v4340 = vld [vmem:[%s4179 + $0x500] sm:$0xff]
    %v4341 = vld [vmem:[%s4179 + $0x508] sm:$0xff]
    %v4342 = vld [vmem:[%s4179 + $0x510] sm:$0xff]
    %v4343 = vld [vmem:[%s4179 + $0x518] sm:$0xff]
    %v4344 = vld [vmem:[%s4179 + $0x520] sm:$0xff]
    %v4345 = vld [vmem:[%s4179 + $0x528] sm:$0xff]
    %v4346 = vld [vmem:[%s4179 + $0x530] sm:$0xff]
    %v4347 = vld [vmem:[%s4179 + $0x538] sm:$0xff]
    %v4348 = vld [vmem:[%s4179 + $0x540] sm:$0xff]
    %v4349 = vld [vmem:[%s4179 + $0x548] sm:$0xff]
    %v4350 = vld [vmem:[%s4179 + $0x550] sm:$0xff]
    %v4351 = vld [vmem:[%s4179 + $0x558] sm:$0xff]
    %v4352 = vld [vmem:[%s4179 + $0x560] sm:$0xff]
    %v4353 = vld [vmem:[%s4179 + $0x568] sm:$0xff]
    %v4354 = vld [vmem:[%s4179 + $0x570] sm:$0xff]
    %v4355 = vld [vmem:[%s4179 + $0x578] sm:$0xff]
    %v4356 = vld [vmem:[%s4179 + $0x580] sm:$0xff]
    %v4357 = vld [vmem:[%s4179 + $0x588] sm:$0xff]
    %v4358 = vld [vmem:[%s4179 + $0x590] sm:$0xff]
    %v4359 = vld [vmem:[%s4179 + $0x598] sm:$0xff]
    %v4360 = vld [vmem:[%s4179 + $0x5a0] sm:$0xff]
    %v4361 = vld [vmem:[%s4179 + $0x5a8] sm:$0xff]
    %v4362 = vld [vmem:[%s4179 + $0x5b0] sm:$0xff]
    %v4363 = vld [vmem:[%s4179 + $0x5b8] sm:$0xff]
    %v4364 = vld [vmem:[%s4179 + $0x5c0] sm:$0xff]
    %v4365 = vld [vmem:[%s4179 + $0x5c8] sm:$0xff]
    %v4366 = vld [vmem:[%s4179 + $0x5d0] sm:$0xff]
    %v4367 = vld [vmem:[%s4179 + $0x5d8] sm:$0xff]
    %v4368 = vld [vmem:[%s4179 + $0x5e0] sm:$0xff]
    %v4369 = vld [vmem:[%s4179 + $0x5e8] sm:$0xff]
    %v4370 = vld [vmem:[%s4179 + $0x5f0] sm:$0xff]
    %v4371 = vld [vmem:[%s4179 + $0x5f8] sm:$0xff]
    %v4372 = vld [vmem:[%s4179 + $0x600] sm:$0xff]
    %v4373 = vld [vmem:[%s4179 + $0x608] sm:$0xff]
    %v4374 = vld [vmem:[%s4179 + $0x610] sm:$0xff]
    %v4375 = vld [vmem:[%s4179 + $0x618] sm:$0xff]
    %v4376 = vld [vmem:[%s4179 + $0x620] sm:$0xff]
    %v4377 = vld [vmem:[%s4179 + $0x628] sm:$0xff]
    %v4378 = vld [vmem:[%s4179 + $0x630] sm:$0xff]
    %v4379 = vld [vmem:[%s4179 + $0x638] sm:$0xff]
    %v4380 = vld [vmem:[%s4179 + $0x640] sm:$0xff]
    %v4381 = vld [vmem:[%s4179 + $0x648] sm:$0xff]
    %v4382 = vld [vmem:[%s4179 + $0x650] sm:$0xff]
    %v4383 = vld [vmem:[%s4179 + $0x658] sm:$0xff]
    %v4384 = vld [vmem:[%s4179 + $0x660] sm:$0xff]
    %v4385 = vld [vmem:[%s4179 + $0x668] sm:$0xff]
    %v4386 = vld [vmem:[%s4179 + $0x670] sm:$0xff]
    %v4387 = vld [vmem:[%s4179 + $0x678] sm:$0xff]
    %v4388 = vld [vmem:[%s4179 + $0x680] sm:$0xff]
    %v4389 = vld [vmem:[%s4179 + $0x688] sm:$0xff]
    %v4390 = vld [vmem:[%s4179 + $0x690] sm:$0xff]
    %v4391 = vld [vmem:[%s4179 + $0x698] sm:$0xff]
    %v4392 = vld [vmem:[%s4179 + $0x6a0] sm:$0xff]
    %v4393 = vld [vmem:[%s4179 + $0x6a8] sm:$0xff]
    %v4394 = vld [vmem:[%s4179 + $0x6b0] sm:$0xff]
    %v4395 = vld [vmem:[%s4179 + $0x6b8] sm:$0xff]
    %v4396 = vld [vmem:[%s4179 + $0x6c0] sm:$0xff]
    %v4397 = vld [vmem:[%s4179 + $0x6c8] sm:$0xff]
    %v4398 = vld [vmem:[%s4179 + $0x6d0] sm:$0xff]
    %v4399 = vld [vmem:[%s4179 + $0x6d8] sm:$0xff]
    %v4400 = vld [vmem:[%s4179 + $0x6e0] sm:$0xff]
    %v4401 = vld [vmem:[%s4179 + $0x6e8] sm:$0xff]
    %v4402 = vld [vmem:[%s4179 + $0x6f0] sm:$0xff]
    %v4403 = vld [vmem:[%s4179 + $0x6f8] sm:$0xff]
    %v4404 = vld [vmem:[%s4179 + $0x700] sm:$0xff]
    %v4405 = vld [vmem:[%s4179 + $0x708] sm:$0xff]
    %v4406 = vld [vmem:[%s4179 + $0x710] sm:$0xff]
    %v4407 = vld [vmem:[%s4179 + $0x718] sm:$0xff]
    %v4408 = vld [vmem:[%s4179 + $0x720] sm:$0xff]
    %v4409 = vld [vmem:[%s4179 + $0x728] sm:$0xff]
    %v4410 = vld [vmem:[%s4179 + $0x730] sm:$0xff]
    %v4411 = vld [vmem:[%s4179 + $0x738] sm:$0xff]
    %v4412 = vld [vmem:[%s4179 + $0x740] sm:$0xff]
    %v4413 = vld [vmem:[%s4179 + $0x748] sm:$0xff]
    %v4414 = vld [vmem:[%s4179 + $0x750] sm:$0xff]
    %v4415 = vld [vmem:[%s4179 + $0x758] sm:$0xff]
    %v4416 = vld [vmem:[%s4179 + $0x760] sm:$0xff]
    %v4417 = vld [vmem:[%s4179 + $0x768] sm:$0xff]
    %v4418 = vld [vmem:[%s4179 + $0x770] sm:$0xff]
    %v4419 = vld [vmem:[%s4179 + $0x778] sm:$0xff]
    %v4420 = vld [vmem:[%s4179 + $0x780] sm:$0xff]
    %v4421 = vld [vmem:[%s4179 + $0x788] sm:$0xff]
    %v4422 = vld [vmem:[%s4179 + $0x790] sm:$0xff]
    %v4423 = vld [vmem:[%s4179 + $0x798] sm:$0xff]
    %v4424 = vld [vmem:[%s4179 + $0x7a0] sm:$0xff]
    %v4425 = vld [vmem:[%s4179 + $0x7a8] sm:$0xff]
    %v4426 = vld [vmem:[%s4179 + $0x7b0] sm:$0xff]
    %v4427 = vld [vmem:[%s4179 + $0x7b8] sm:$0xff]
    %v4428 = vld [vmem:[%s4179 + $0x7c0] sm:$0xff]
    %v4429 = vld [vmem:[%s4179 + $0x7c8] sm:$0xff]
    %v4430 = vld [vmem:[%s4179 + $0x7d0] sm:$0xff]
    %v4431 = vld [vmem:[%s4179 + $0x7d8] sm:$0xff]
    %v4432 = vld [vmem:[%s4179 + $0x7e0] sm:$0xff]
    %v4433 = vld [vmem:[%s4179 + $0x7e8] sm:$0xff]
    %v4434 = vld [vmem:[%s4179 + $0x7f0] sm:$0xff]
    %v4435 = vld [vmem:[%s4179 + $0x7f8] sm:$0xff]
    %v4692 = vunpack.c.l.b16 %v4180
    %v4693 = vunpack.c.h.b16 %v4180
    %v4694 = vunpack.c.l.b16 %v4181
    %v4695 = vunpack.c.h.b16 %v4181
    %v4696 = vunpack.c.l.b16 %v4182
    %v4697 = vunpack.c.h.b16 %v4182
    %v4698 = vunpack.c.l.b16 %v4183
    %v4699 = vunpack.c.h.b16 %v4183
    %v4700 = vunpack.c.l.b16 %v4184
    %v4701 = vunpack.c.h.b16 %v4184
    %v4702 = vunpack.c.l.b16 %v4185
    %v4703 = vunpack.c.h.b16 %v4185
    %v4704 = vunpack.c.l.b16 %v4186
    %v4705 = vunpack.c.h.b16 %v4186
    %v4706 = vunpack.c.l.b16 %v4187
    %v4707 = vunpack.c.h.b16 %v4187
    %v4708 = vunpack.c.l.b16 %v4188
    %v4709 = vunpack.c.h.b16 %v4188
    %v4710 = vunpack.c.l.b16 %v4189
    %v4711 = vunpack.c.h.b16 %v4189
    %v4712 = vunpack.c.l.b16 %v4190
    %v4713 = vunpack.c.h.b16 %v4190
    %v4714 = vunpack.c.l.b16 %v4191
    %v4715 = vunpack.c.h.b16 %v4191
    %v4716 = vunpack.c.l.b16 %v4192
    %v4717 = vunpack.c.h.b16 %v4192
    %v4718 = vunpack.c.l.b16 %v4193
    %v4719 = vunpack.c.h.b16 %v4193
    %v4720 = vunpack.c.l.b16 %v4194
    %v4721 = vunpack.c.h.b16 %v4194
    %v4722 = vunpack.c.l.b16 %v4195
    %v4723 = vunpack.c.h.b16 %v4195
    %v4724 = vunpack.c.l.b16 %v4196
    %v4725 = vunpack.c.h.b16 %v4196
    %v4726 = vunpack.c.l.b16 %v4197
    %v4727 = vunpack.c.h.b16 %v4197
    %v4728 = vunpack.c.l.b16 %v4198
    %v4729 = vunpack.c.h.b16 %v4198
    %v4730 = vunpack.c.l.b16 %v4199
    %v4731 = vunpack.c.h.b16 %v4199
    %v4732 = vunpack.c.l.b16 %v4200
    %v4733 = vunpack.c.h.b16 %v4200
    %v4734 = vunpack.c.l.b16 %v4201
    %v4735 = vunpack.c.h.b16 %v4201
    %v4736 = vunpack.c.l.b16 %v4202
    %v4737 = vunpack.c.h.b16 %v4202
    %v4738 = vunpack.c.l.b16 %v4203
    %v4739 = vunpack.c.h.b16 %v4203
    %v4740 = vunpack.c.l.b16 %v4204
    %v4741 = vunpack.c.h.b16 %v4204
    %v4742 = vunpack.c.l.b16 %v4205
    %v4743 = vunpack.c.h.b16 %v4205
    %v4744 = vunpack.c.l.b16 %v4206
    %v4745 = vunpack.c.h.b16 %v4206
    %v4746 = vunpack.c.l.b16 %v4207
    %v4747 = vunpack.c.h.b16 %v4207
    %v4748 = vunpack.c.l.b16 %v4208
    %v4749 = vunpack.c.h.b16 %v4208
    %v4750 = vunpack.c.l.b16 %v4209
    %v4751 = vunpack.c.h.b16 %v4209
    %v4752 = vunpack.c.l.b16 %v4210
    %v4753 = vunpack.c.h.b16 %v4210
    %v4754 = vunpack.c.l.b16 %v4211
    %v4755 = vunpack.c.h.b16 %v4211
    %v4756 = vunpack.c.l.b16 %v4212
    %v4757 = vunpack.c.h.b16 %v4212
    %v4758 = vunpack.c.l.b16 %v4213
    %v4759 = vunpack.c.h.b16 %v4213
    %v4760 = vunpack.c.l.b16 %v4214
    %v4761 = vunpack.c.h.b16 %v4214
    %v4762 = vunpack.c.l.b16 %v4215
    %v4763 = vunpack.c.h.b16 %v4215
    %v4764 = vunpack.c.l.b16 %v4216
    %v4765 = vunpack.c.h.b16 %v4216
    %v4766 = vunpack.c.l.b16 %v4217
    %v4767 = vunpack.c.h.b16 %v4217
    %v4768 = vunpack.c.l.b16 %v4218
    %v4769 = vunpack.c.h.b16 %v4218
    %v4770 = vunpack.c.l.b16 %v4219
    %v4771 = vunpack.c.h.b16 %v4219
    %v4772 = vunpack.c.l.b16 %v4220
    %v4773 = vunpack.c.h.b16 %v4220
    %v4774 = vunpack.c.l.b16 %v4221
    %v4775 = vunpack.c.h.b16 %v4221
    %v4776 = vunpack.c.l.b16 %v4222
    %v4777 = vunpack.c.h.b16 %v4222
    %v4778 = vunpack.c.l.b16 %v4223
    %v4779 = vunpack.c.h.b16 %v4223
    %v4780 = vunpack.c.l.b16 %v4224
    %v4781 = vunpack.c.h.b16 %v4224
    %v4782 = vunpack.c.l.b16 %v4225
    %v4783 = vunpack.c.h.b16 %v4225
    %v4784 = vunpack.c.l.b16 %v4226
    %v4785 = vunpack.c.h.b16 %v4226
    %v4786 = vunpack.c.l.b16 %v4227
    %v4787 = vunpack.c.h.b16 %v4227
    %v4788 = vunpack.c.l.b16 %v4228
    %v4789 = vunpack.c.h.b16 %v4228
    %v4790 = vunpack.c.l.b16 %v4229
    %v4791 = vunpack.c.h.b16 %v4229
    %v4792 = vunpack.c.l.b16 %v4230
    %v4793 = vunpack.c.h.b16 %v4230
    %v4794 = vunpack.c.l.b16 %v4231
    %v4795 = vunpack.c.h.b16 %v4231
    %v4796 = vunpack.c.l.b16 %v4232
    %v4797 = vunpack.c.h.b16 %v4232
    %v4798 = vunpack.c.l.b16 %v4233
    %v4799 = vunpack.c.h.b16 %v4233
    %v4800 = vunpack.c.l.b16 %v4234
    %v4801 = vunpack.c.h.b16 %v4234
    %v4802 = vunpack.c.l.b16 %v4235
    %v4803 = vunpack.c.h.b16 %v4235
    %v4804 = vunpack.c.l.b16 %v4236
    %v4805 = vunpack.c.h.b16 %v4236
    %v4806 = vunpack.c.l.b16 %v4237
    %v4807 = vunpack.c.h.b16 %v4237
    %v4808 = vunpack.c.l.b16 %v4238
    %v4809 = vunpack.c.h.b16 %v4238
    %v4810 = vunpack.c.l.b16 %v4239
    %v4811 = vunpack.c.h.b16 %v4239
    %v4812 = vunpack.c.l.b16 %v4240
    %v4813 = vunpack.c.h.b16 %v4240
    %v4814 = vunpack.c.l.b16 %v4241
    %v4815 = vunpack.c.h.b16 %v4241
    %v4816 = vunpack.c.l.b16 %v4242
    %v4817 = vunpack.c.h.b16 %v4242
    %v4818 = vunpack.c.l.b16 %v4243
    %v4819 = vunpack.c.h.b16 %v4243
    %v4820 = vunpack.c.l.b16 %v4244
    %v4821 = vunpack.c.h.b16 %v4244
    %v4822 = vunpack.c.l.b16 %v4245
    %v4823 = vunpack.c.h.b16 %v4245
    %v4824 = vunpack.c.l.b16 %v4246
    %v4825 = vunpack.c.h.b16 %v4246
    %v4826 = vunpack.c.l.b16 %v4247
    %v4827 = vunpack.c.h.b16 %v4247
    %v4828 = vunpack.c.l.b16 %v4248
    %v4829 = vunpack.c.h.b16 %v4248
    %v4830 = vunpack.c.l.b16 %v4249
    %v4831 = vunpack.c.h.b16 %v4249
    %v4832 = vunpack.c.l.b16 %v4250
    %v4833 = vunpack.c.h.b16 %v4250
    %v4834 = vunpack.c.l.b16 %v4251
    %v4835 = vunpack.c.h.b16 %v4251
    %v4836 = vunpack.c.l.b16 %v4252
    %v4837 = vunpack.c.h.b16 %v4252
    %v4838 = vunpack.c.l.b16 %v4253
    %v4839 = vunpack.c.h.b16 %v4253
    %v4840 = vunpack.c.l.b16 %v4254
    %v4841 = vunpack.c.h.b16 %v4254
    %v4842 = vunpack.c.l.b16 %v4255
    %v4843 = vunpack.c.h.b16 %v4255
    %v4844 = vunpack.c.l.b16 %v4256
    %v4845 = vunpack.c.h.b16 %v4256
    %v4846 = vunpack.c.l.b16 %v4257
    %v4847 = vunpack.c.h.b16 %v4257
    %v4848 = vunpack.c.l.b16 %v4258
    %v4849 = vunpack.c.h.b16 %v4258
    %v4850 = vunpack.c.l.b16 %v4259
    %v4851 = vunpack.c.h.b16 %v4259
    %v4852 = vunpack.c.l.b16 %v4260
    %v4853 = vunpack.c.h.b16 %v4260
    %v4854 = vunpack.c.l.b16 %v4261
    %v4855 = vunpack.c.h.b16 %v4261
    %v4856 = vunpack.c.l.b16 %v4262
    %v4857 = vunpack.c.h.b16 %v4262
    %v4858 = vunpack.c.l.b16 %v4263
    %v4859 = vunpack.c.h.b16 %v4263
    %v4860 = vunpack.c.l.b16 %v4264
    %v4861 = vunpack.c.h.b16 %v4264
    %v4862 = vunpack.c.l.b16 %v4265
    %v4863 = vunpack.c.h.b16 %v4265
    %v4864 = vunpack.c.l.b16 %v4266
    %v4865 = vunpack.c.h.b16 %v4266
    %v4866 = vunpack.c.l.b16 %v4267
    %v4867 = vunpack.c.h.b16 %v4267
    %v4868 = vunpack.c.l.b16 %v4268
    %v4869 = vunpack.c.h.b16 %v4268
    %v4870 = vunpack.c.l.b16 %v4269
    %v4871 = vunpack.c.h.b16 %v4269
    %v4872 = vunpack.c.l.b16 %v4270
    %v4873 = vunpack.c.h.b16 %v4270
    %v4874 = vunpack.c.l.b16 %v4271
    %v4875 = vunpack.c.h.b16 %v4271
    %v4876 = vunpack.c.l.b16 %v4272
    %v4877 = vunpack.c.h.b16 %v4272
    %v4878 = vunpack.c.l.b16 %v4273
    %v4879 = vunpack.c.h.b16 %v4273
    %v4880 = vunpack.c.l.b16 %v4274
    %v4881 = vunpack.c.h.b16 %v4274
    %v4882 = vunpack.c.l.b16 %v4275
    %v4883 = vunpack.c.h.b16 %v4275
    %v4884 = vunpack.c.l.b16 %v4276
    %v4885 = vunpack.c.h.b16 %v4276
    %v4886 = vunpack.c.l.b16 %v4277
    %v4887 = vunpack.c.h.b16 %v4277
    %v4888 = vunpack.c.l.b16 %v4278
    %v4889 = vunpack.c.h.b16 %v4278
    %v4890 = vunpack.c.l.b16 %v4279
    %v4891 = vunpack.c.h.b16 %v4279
    %v4892 = vunpack.c.l.b16 %v4280
    %v4893 = vunpack.c.h.b16 %v4280
    %v4894 = vunpack.c.l.b16 %v4281
    %v4895 = vunpack.c.h.b16 %v4281
    %v4896 = vunpack.c.l.b16 %v4282
    %v4897 = vunpack.c.h.b16 %v4282
    %v4898 = vunpack.c.l.b16 %v4283
    %v4899 = vunpack.c.h.b16 %v4283
    %v4900 = vunpack.c.l.b16 %v4284
    %v4901 = vunpack.c.h.b16 %v4284
    %v4902 = vunpack.c.l.b16 %v4285
    %v4903 = vunpack.c.h.b16 %v4285
    %v4904 = vunpack.c.l.b16 %v4286
    %v4905 = vunpack.c.h.b16 %v4286
    %v4906 = vunpack.c.l.b16 %v4287
    %v4907 = vunpack.c.h.b16 %v4287
    %v4908 = vunpack.c.l.b16 %v4288
    %v4909 = vunpack.c.h.b16 %v4288
    %v4910 = vunpack.c.l.b16 %v4289
    %v4911 = vunpack.c.h.b16 %v4289
    %v4912 = vunpack.c.l.b16 %v4290
    %v4913 = vunpack.c.h.b16 %v4290
    %v4914 = vunpack.c.l.b16 %v4291
    %v4915 = vunpack.c.h.b16 %v4291
    %v4916 = vunpack.c.l.b16 %v4292
    %v4917 = vunpack.c.h.b16 %v4292
    %v4918 = vunpack.c.l.b16 %v4293
    %v4919 = vunpack.c.h.b16 %v4293
    %v4920 = vunpack.c.l.b16 %v4294
    %v4921 = vunpack.c.h.b16 %v4294
    %v4922 = vunpack.c.l.b16 %v4295
    %v4923 = vunpack.c.h.b16 %v4295
    %v4924 = vunpack.c.l.b16 %v4296
    %v4925 = vunpack.c.h.b16 %v4296
    %v4926 = vunpack.c.l.b16 %v4297
    %v4927 = vunpack.c.h.b16 %v4297
    %v4928 = vunpack.c.l.b16 %v4298
    %v4929 = vunpack.c.h.b16 %v4298
    %v4930 = vunpack.c.l.b16 %v4299
    %v4931 = vunpack.c.h.b16 %v4299
    %v4932 = vunpack.c.l.b16 %v4300
    %v4933 = vunpack.c.h.b16 %v4300
    %v4934 = vunpack.c.l.b16 %v4301
    %v4935 = vunpack.c.h.b16 %v4301
    %v4936 = vunpack.c.l.b16 %v4302
    %v4937 = vunpack.c.h.b16 %v4302
    %v4938 = vunpack.c.l.b16 %v4303
    %v4939 = vunpack.c.h.b16 %v4303
    %v4940 = vunpack.c.l.b16 %v4304
    %v4941 = vunpack.c.h.b16 %v4304
    %v4942 = vunpack.c.l.b16 %v4305
    %v4943 = vunpack.c.h.b16 %v4305
    %v4944 = vunpack.c.l.b16 %v4306
    %v4945 = vunpack.c.h.b16 %v4306
    %v4946 = vunpack.c.l.b16 %v4307
    %v4947 = vunpack.c.h.b16 %v4307
    %v4948 = vunpack.c.l.b16 %v4308
    %v4949 = vunpack.c.h.b16 %v4308
    %v4950 = vunpack.c.l.b16 %v4309
    %v4951 = vunpack.c.h.b16 %v4309
    %v4952 = vunpack.c.l.b16 %v4310
    %v4953 = vunpack.c.h.b16 %v4310
    %v4954 = vunpack.c.l.b16 %v4311
    %v4955 = vunpack.c.h.b16 %v4311
    %v4956 = vunpack.c.l.b16 %v4312
    %v4957 = vunpack.c.h.b16 %v4312
    %v4958 = vunpack.c.l.b16 %v4313
    %v4959 = vunpack.c.h.b16 %v4313
    %v4960 = vunpack.c.l.b16 %v4314
    %v4961 = vunpack.c.h.b16 %v4314
    %v4962 = vunpack.c.l.b16 %v4315
    %v4963 = vunpack.c.h.b16 %v4315
    %v4964 = vunpack.c.l.b16 %v4316
    %v4965 = vunpack.c.h.b16 %v4316
    %v4966 = vunpack.c.l.b16 %v4317
    %v4967 = vunpack.c.h.b16 %v4317
    %v4968 = vunpack.c.l.b16 %v4318
    %v4969 = vunpack.c.h.b16 %v4318
    %v4970 = vunpack.c.l.b16 %v4319
    %v4971 = vunpack.c.h.b16 %v4319
    %v4972 = vunpack.c.l.b16 %v4320
    %v4973 = vunpack.c.h.b16 %v4320
    %v4974 = vunpack.c.l.b16 %v4321
    %v4975 = vunpack.c.h.b16 %v4321
    %v4976 = vunpack.c.l.b16 %v4322
    %v4977 = vunpack.c.h.b16 %v4322
    %v4978 = vunpack.c.l.b16 %v4323
    %v4979 = vunpack.c.h.b16 %v4323
    %v4980 = vunpack.c.l.b16 %v4324
    %v4981 = vunpack.c.h.b16 %v4324
    %v4982 = vunpack.c.l.b16 %v4325
    %v4983 = vunpack.c.h.b16 %v4325
    %v4984 = vunpack.c.l.b16 %v4326
    %v4985 = vunpack.c.h.b16 %v4326
    %v4986 = vunpack.c.l.b16 %v4327
    %v4987 = vunpack.c.h.b16 %v4327
    %v4988 = vunpack.c.l.b16 %v4328
    %v4989 = vunpack.c.h.b16 %v4328
    %v4990 = vunpack.c.l.b16 %v4329
    %v4991 = vunpack.c.h.b16 %v4329
    %v4992 = vunpack.c.l.b16 %v4330
    %v4993 = vunpack.c.h.b16 %v4330
    %v4994 = vunpack.c.l.b16 %v4331
    %v4995 = vunpack.c.h.b16 %v4331
    %v4996 = vunpack.c.l.b16 %v4332
    %v4997 = vunpack.c.h.b16 %v4332
    %v4998 = vunpack.c.l.b16 %v4333
    %v4999 = vunpack.c.h.b16 %v4333
    %v5000 = vunpack.c.l.b16 %v4334
    %v5001 = vunpack.c.h.b16 %v4334
    %v5002 = vunpack.c.l.b16 %v4335
    %v5003 = vunpack.c.h.b16 %v4335
    %v5004 = vunpack.c.l.b16 %v4336
    %v5005 = vunpack.c.h.b16 %v4336
    %v5006 = vunpack.c.l.b16 %v4337
    %v5007 = vunpack.c.h.b16 %v4337
    %v5008 = vunpack.c.l.b16 %v4338
    %v5009 = vunpack.c.h.b16 %v4338
    %v5010 = vunpack.c.l.b16 %v4339
    %v5011 = vunpack.c.h.b16 %v4339
    %v5012 = vunpack.c.l.b16 %v4340
    %v5013 = vunpack.c.h.b16 %v4340
    %v5014 = vunpack.c.l.b16 %v4341
    %v5015 = vunpack.c.h.b16 %v4341
    %v5016 = vunpack.c.l.b16 %v4342
    %v5017 = vunpack.c.h.b16 %v4342
    %v5018 = vunpack.c.l.b16 %v4343
    %v5019 = vunpack.c.h.b16 %v4343
    %v5020 = vunpack.c.l.b16 %v4344
    %v5021 = vunpack.c.h.b16 %v4344
    %v5022 = vunpack.c.l.b16 %v4345
    %v5023 = vunpack.c.h.b16 %v4345
    %v5024 = vunpack.c.l.b16 %v4346
    %v5025 = vunpack.c.h.b16 %v4346
    %v5026 = vunpack.c.l.b16 %v4347
    %v5027 = vunpack.c.h.b16 %v4347
    %v5028 = vunpack.c.l.b16 %v4348
    %v5029 = vunpack.c.h.b16 %v4348
    %v5030 = vunpack.c.l.b16 %v4349
    %v5031 = vunpack.c.h.b16 %v4349
    %v5032 = vunpack.c.l.b16 %v4350
    %v5033 = vunpack.c.h.b16 %v4350
    %v5034 = vunpack.c.l.b16 %v4351
    %v5035 = vunpack.c.h.b16 %v4351
    %v5036 = vunpack.c.l.b16 %v4352
    %v5037 = vunpack.c.h.b16 %v4352
    %v5038 = vunpack.c.l.b16 %v4353
    %v5039 = vunpack.c.h.b16 %v4353
    %v5040 = vunpack.c.l.b16 %v4354
    %v5041 = vunpack.c.h.b16 %v4354
    %v5042 = vunpack.c.l.b16 %v4355
    %v5043 = vunpack.c.h.b16 %v4355
    %v5044 = vunpack.c.l.b16 %v4356
    %v5045 = vunpack.c.h.b16 %v4356
    %v5046 = vunpack.c.l.b16 %v4357
    %v5047 = vunpack.c.h.b16 %v4357
    %v5048 = vunpack.c.l.b16 %v4358
    %v5049 = vunpack.c.h.b16 %v4358
    %v5050 = vunpack.c.l.b16 %v4359
    %v5051 = vunpack.c.h.b16 %v4359
    %v5052 = vunpack.c.l.b16 %v4360
    %v5053 = vunpack.c.h.b16 %v4360
    %v5054 = vunpack.c.l.b16 %v4361
    %v5055 = vunpack.c.h.b16 %v4361
    %v5056 = vunpack.c.l.b16 %v4362
    %v5057 = vunpack.c.h.b16 %v4362
    %v5058 = vunpack.c.l.b16 %v4363
    %v5059 = vunpack.c.h.b16 %v4363
    %v5060 = vunpack.c.l.b16 %v4364
    %v5061 = vunpack.c.h.b16 %v4364
    %v5062 = vunpack.c.l.b16 %v4365
    %v5063 = vunpack.c.h.b16 %v4365
    %v5064 = vunpack.c.l.b16 %v4366
    %v5065 = vunpack.c.h.b16 %v4366
    %v5066 = vunpack.c.l.b16 %v4367
    %v5067 = vunpack.c.h.b16 %v4367
    %v5068 = vunpack.c.l.b16 %v4368
    %v5069 = vunpack.c.h.b16 %v4368
    %v5070 = vunpack.c.l.b16 %v4369
    %v5071 = vunpack.c.h.b16 %v4369
    %v5072 = vunpack.c.l.b16 %v4370
    %v5073 = vunpack.c.h.b16 %v4370
    %v5074 = vunpack.c.l.b16 %v4371
    %v5075 = vunpack.c.h.b16 %v4371
    %v5076 = vunpack.c.l.b16 %v4372
    %v5077 = vunpack.c.h.b16 %v4372
    %v5078 = vunpack.c.l.b16 %v4373
    %v5079 = vunpack.c.h.b16 %v4373
    %v5080 = vunpack.c.l.b16 %v4374
    %v5081 = vunpack.c.h.b16 %v4374
    %v5082 = vunpack.c.l.b16 %v4375
    %v5083 = vunpack.c.h.b16 %v4375
    %v5084 = vunpack.c.l.b16 %v4376
    %v5085 = vunpack.c.h.b16 %v4376
    %v5086 = vunpack.c.l.b16 %v4377
    %v5087 = vunpack.c.h.b16 %v4377
    %v5088 = vunpack.c.l.b16 %v4378
    %v5089 = vunpack.c.h.b16 %v4378
    %v5090 = vunpack.c.l.b16 %v4379
    %v5091 = vunpack.c.h.b16 %v4379
    %v5092 = vunpack.c.l.b16 %v4380
    %v5093 = vunpack.c.h.b16 %v4380
    %v5094 = vunpack.c.l.b16 %v4381
    %v5095 = vunpack.c.h.b16 %v4381
    %v5096 = vunpack.c.l.b16 %v4382
    %v5097 = vunpack.c.h.b16 %v4382
    %v5098 = vunpack.c.l.b16 %v4383
    %v5099 = vunpack.c.h.b16 %v4383
    %v5100 = vunpack.c.l.b16 %v4384
    %v5101 = vunpack.c.h.b16 %v4384
    %v5102 = vunpack.c.l.b16 %v4385
    %v5103 = vunpack.c.h.b16 %v4385
    %v5104 = vunpack.c.l.b16 %v4386
    %v5105 = vunpack.c.h.b16 %v4386
    %v5106 = vunpack.c.l.b16 %v4387
    %v5107 = vunpack.c.h.b16 %v4387
    %v5108 = vunpack.c.l.b16 %v4388
    %v5109 = vunpack.c.h.b16 %v4388
    %v5110 = vunpack.c.l.b16 %v4389
    %v5111 = vunpack.c.h.b16 %v4389
    %v5112 = vunpack.c.l.b16 %v4390
    %v5113 = vunpack.c.h.b16 %v4390
    %v5114 = vunpack.c.l.b16 %v4391
    %v5115 = vunpack.c.h.b16 %v4391
    %v5116 = vunpack.c.l.b16 %v4392
    %v5117 = vunpack.c.h.b16 %v4392
    %v5118 = vunpack.c.l.b16 %v4393
    %v5119 = vunpack.c.h.b16 %v4393
    %v5120 = vunpack.c.l.b16 %v4394
    %v5121 = vunpack.c.h.b16 %v4394
    %v5122 = vunpack.c.l.b16 %v4395
    %v5123 = vunpack.c.h.b16 %v4395
    %v5124 = vunpack.c.l.b16 %v4396
    %v5125 = vunpack.c.h.b16 %v4396
    %v5126 = vunpack.c.l.b16 %v4397
    %v5127 = vunpack.c.h.b16 %v4397
    %v5128 = vunpack.c.l.b16 %v4398
    %v5129 = vunpack.c.h.b16 %v4398
    %v5130 = vunpack.c.l.b16 %v4399
    %v5131 = vunpack.c.h.b16 %v4399
    %v5132 = vunpack.c.l.b16 %v4400
    %v5133 = vunpack.c.h.b16 %v4400
    %v5134 = vunpack.c.l.b16 %v4401
    %v5135 = vunpack.c.h.b16 %v4401
    %v5136 = vunpack.c.l.b16 %v4402
    %v5137 = vunpack.c.h.b16 %v4402
    %v5138 = vunpack.c.l.b16 %v4403
    %v5139 = vunpack.c.h.b16 %v4403
    %v5140 = vunpack.c.l.b16 %v4404
    %v5141 = vunpack.c.h.b16 %v4404
    %v5142 = vunpack.c.l.b16 %v4405
    %v5143 = vunpack.c.h.b16 %v4405
    %v5144 = vunpack.c.l.b16 %v4406
    %v5145 = vunpack.c.h.b16 %v4406
    %v5146 = vunpack.c.l.b16 %v4407
    %v5147 = vunpack.c.h.b16 %v4407
    %v5148 = vunpack.c.l.b16 %v4408
    %v5149 = vunpack.c.h.b16 %v4408
    %v5150 = vunpack.c.l.b16 %v4409
    %v5151 = vunpack.c.h.b16 %v4409
    %v5152 = vunpack.c.l.b16 %v4410
    %v5153 = vunpack.c.h.b16 %v4410
    %v5154 = vunpack.c.l.b16 %v4411
    %v5155 = vunpack.c.h.b16 %v4411
    %v5156 = vunpack.c.l.b16 %v4412
    %v5157 = vunpack.c.h.b16 %v4412
    %v5158 = vunpack.c.l.b16 %v4413
    %v5159 = vunpack.c.h.b16 %v4413
    %v5160 = vunpack.c.l.b16 %v4414
    %v5161 = vunpack.c.h.b16 %v4414
    %v5162 = vunpack.c.l.b16 %v4415
    %v5163 = vunpack.c.h.b16 %v4415
    %v5164 = vunpack.c.l.b16 %v4416
    %v5165 = vunpack.c.h.b16 %v4416
    %v5166 = vunpack.c.l.b16 %v4417
    %v5167 = vunpack.c.h.b16 %v4417
    %v5168 = vunpack.c.l.b16 %v4418
    %v5169 = vunpack.c.h.b16 %v4418
    %v5170 = vunpack.c.l.b16 %v4419
    %v5171 = vunpack.c.h.b16 %v4419
    %v5172 = vunpack.c.l.b16 %v4420
    %v5173 = vunpack.c.h.b16 %v4420
    %v5174 = vunpack.c.l.b16 %v4421
    %v5175 = vunpack.c.h.b16 %v4421
    %v5176 = vunpack.c.l.b16 %v4422
    %v5177 = vunpack.c.h.b16 %v4422
    %v5178 = vunpack.c.l.b16 %v4423
    %v5179 = vunpack.c.h.b16 %v4423
    %v5180 = vunpack.c.l.b16 %v4424
    %v5181 = vunpack.c.h.b16 %v4424
    %v5182 = vunpack.c.l.b16 %v4425
    %v5183 = vunpack.c.h.b16 %v4425
    %v5184 = vunpack.c.l.b16 %v4426
    %v5185 = vunpack.c.h.b16 %v4426
    %v5186 = vunpack.c.l.b16 %v4427
    %v5187 = vunpack.c.h.b16 %v4427
    %v5188 = vunpack.c.l.b16 %v4428
    %v5189 = vunpack.c.h.b16 %v4428
    %v5190 = vunpack.c.l.b16 %v4429
    %v5191 = vunpack.c.h.b16 %v4429
    %v5192 = vunpack.c.l.b16 %v4430
    %v5193 = vunpack.c.h.b16 %v4430
    %v5194 = vunpack.c.l.b16 %v4431
    %v5195 = vunpack.c.h.b16 %v4431
    %v5196 = vunpack.c.l.b16 %v4432
    %v5197 = vunpack.c.h.b16 %v4432
    %v5198 = vunpack.c.l.b16 %v4433
    %v5199 = vunpack.c.h.b16 %v4433
    %v5200 = vunpack.c.l.b16 %v4434
    %v5201 = vunpack.c.h.b16 %v4434
    %v5202 = vunpack.c.l.b16 %v4435
    %v5203 = vunpack.c.h.b16 %v4435
    %v5204 = vpack.c.b16 %v4696, %v4692
    %v5205 = vpack.c.b16 %v4697, %v4693
    %v5206 = vpack.c.b16 %v4698, %v4694
    %v5207 = vpack.c.b16 %v4699, %v4695
    %v5208 = vpack.c.b16 %v4704, %v4700
    %v5209 = vpack.c.b16 %v4705, %v4701
    %v5210 = vpack.c.b16 %v4706, %v4702
    %v5211 = vpack.c.b16 %v4707, %v4703
    %v5212 = vpack.c.b16 %v4712, %v4708
    %v5213 = vpack.c.b16 %v4713, %v4709
    %v5214 = vpack.c.b16 %v4714, %v4710
    %v5215 = vpack.c.b16 %v4715, %v4711
    %v5216 = vpack.c.b16 %v4720, %v4716
    %v5217 = vpack.c.b16 %v4721, %v4717
    %v5218 = vpack.c.b16 %v4722, %v4718
    %v5219 = vpack.c.b16 %v4723, %v4719
    %v5220 = vpack.c.b16 %v4728, %v4724
    %v5221 = vpack.c.b16 %v4729, %v4725
    %v5222 = vpack.c.b16 %v4730, %v4726
    %v5223 = vpack.c.b16 %v4731, %v4727
    %v5224 = vpack.c.b16 %v4736, %v4732
    %v5225 = vpack.c.b16 %v4737, %v4733
    %v5226 = vpack.c.b16 %v4738, %v4734
    %v5227 = vpack.c.b16 %v4739, %v4735
    %v5228 = vpack.c.b16 %v4744, %v4740
    %v5229 = vpack.c.b16 %v4745, %v4741
    %v5230 = vpack.c.b16 %v4746, %v4742
    %v5231 = vpack.c.b16 %v4747, %v4743
    %v5232 = vpack.c.b16 %v4752, %v4748
    %v5233 = vpack.c.b16 %v4753, %v4749
    %v5234 = vpack.c.b16 %v4754, %v4750
    %v5235 = vpack.c.b16 %v4755, %v4751
    %v5236 = vpack.c.b16 %v4760, %v4756
    %v5237 = vpack.c.b16 %v4761, %v4757
    %v5238 = vpack.c.b16 %v4762, %v4758
    %v5239 = vpack.c.b16 %v4763, %v4759
    %v5240 = vpack.c.b16 %v4768, %v4764
    %v5241 = vpack.c.b16 %v4769, %v4765
    %v5242 = vpack.c.b16 %v4770, %v4766
    %v5243 = vpack.c.b16 %v4771, %v4767
    %v5244 = vpack.c.b16 %v4776, %v4772
    %v5245 = vpack.c.b16 %v4777, %v4773
    %v5246 = vpack.c.b16 %v4778, %v4774
    %v5247 = vpack.c.b16 %v4779, %v4775
    %v5248 = vpack.c.b16 %v4784, %v4780
    %v5249 = vpack.c.b16 %v4785, %v4781
    %v5250 = vpack.c.b16 %v4786, %v4782
    %v5251 = vpack.c.b16 %v4787, %v4783
    %v5252 = vpack.c.b16 %v4792, %v4788
    %v5253 = vpack.c.b16 %v4793, %v4789
    %v5254 = vpack.c.b16 %v4794, %v4790
    %v5255 = vpack.c.b16 %v4795, %v4791
    %v5256 = vpack.c.b16 %v4800, %v4796
    %v5257 = vpack.c.b16 %v4801, %v4797
    %v5258 = vpack.c.b16 %v4802, %v4798
    %v5259 = vpack.c.b16 %v4803, %v4799
    %v5260 = vpack.c.b16 %v4808, %v4804
    %v5261 = vpack.c.b16 %v4809, %v4805
    %v5262 = vpack.c.b16 %v4810, %v4806
    %v5263 = vpack.c.b16 %v4811, %v4807
    %v5264 = vpack.c.b16 %v4816, %v4812
    %v5265 = vpack.c.b16 %v4817, %v4813
    %v5266 = vpack.c.b16 %v4818, %v4814
    %v5267 = vpack.c.b16 %v4819, %v4815
    %v5268 = vpack.c.b16 %v4824, %v4820
    %v5269 = vpack.c.b16 %v4825, %v4821
    %v5270 = vpack.c.b16 %v4826, %v4822
    %v5271 = vpack.c.b16 %v4827, %v4823
    %v5272 = vpack.c.b16 %v4832, %v4828
    %v5273 = vpack.c.b16 %v4833, %v4829
    %v5274 = vpack.c.b16 %v4834, %v4830
    %v5275 = vpack.c.b16 %v4835, %v4831
    %v5276 = vpack.c.b16 %v4840, %v4836
    %v5277 = vpack.c.b16 %v4841, %v4837
    %v5278 = vpack.c.b16 %v4842, %v4838
    %v5279 = vpack.c.b16 %v4843, %v4839
    %v5280 = vpack.c.b16 %v4848, %v4844
    %v5281 = vpack.c.b16 %v4849, %v4845
    %v5282 = vpack.c.b16 %v4850, %v4846
    %v5283 = vpack.c.b16 %v4851, %v4847
    %v5284 = vpack.c.b16 %v4856, %v4852
    %v5285 = vpack.c.b16 %v4857, %v4853
    %v5286 = vpack.c.b16 %v4858, %v4854
    %v5287 = vpack.c.b16 %v4859, %v4855
    %v5288 = vpack.c.b16 %v4864, %v4860
    %v5289 = vpack.c.b16 %v4865, %v4861
    %v5290 = vpack.c.b16 %v4866, %v4862
    %v5291 = vpack.c.b16 %v4867, %v4863
    %v5292 = vpack.c.b16 %v4872, %v4868
    %v5293 = vpack.c.b16 %v4873, %v4869
    %v5294 = vpack.c.b16 %v4874, %v4870
    %v5295 = vpack.c.b16 %v4875, %v4871
    %v5296 = vpack.c.b16 %v4880, %v4876
    %v5297 = vpack.c.b16 %v4881, %v4877
    %v5298 = vpack.c.b16 %v4882, %v4878
    %v5299 = vpack.c.b16 %v4883, %v4879
    %v5300 = vpack.c.b16 %v4888, %v4884
    %v5301 = vpack.c.b16 %v4889, %v4885
    %v5302 = vpack.c.b16 %v4890, %v4886
    %v5303 = vpack.c.b16 %v4891, %v4887
    %v5304 = vpack.c.b16 %v4896, %v4892
    %v5305 = vpack.c.b16 %v4897, %v4893
    %v5306 = vpack.c.b16 %v4898, %v4894
    %v5307 = vpack.c.b16 %v4899, %v4895
    %v5308 = vpack.c.b16 %v4904, %v4900
    %v5309 = vpack.c.b16 %v4905, %v4901
    %v5310 = vpack.c.b16 %v4906, %v4902
    %v5311 = vpack.c.b16 %v4907, %v4903
    %v5312 = vpack.c.b16 %v4912, %v4908
    %v5313 = vpack.c.b16 %v4913, %v4909
    %v5314 = vpack.c.b16 %v4914, %v4910
    %v5315 = vpack.c.b16 %v4915, %v4911
    %v5316 = vpack.c.b16 %v4920, %v4916
    %v5317 = vpack.c.b16 %v4921, %v4917
    %v5318 = vpack.c.b16 %v4922, %v4918
    %v5319 = vpack.c.b16 %v4923, %v4919
    %v5320 = vpack.c.b16 %v4928, %v4924
    %v5321 = vpack.c.b16 %v4929, %v4925
    %v5322 = vpack.c.b16 %v4930, %v4926
    %v5323 = vpack.c.b16 %v4931, %v4927
    %v5324 = vpack.c.b16 %v4936, %v4932
    %v5325 = vpack.c.b16 %v4937, %v4933
    %v5326 = vpack.c.b16 %v4938, %v4934
    %v5327 = vpack.c.b16 %v4939, %v4935
    %v5328 = vpack.c.b16 %v4944, %v4940
    %v5329 = vpack.c.b16 %v4945, %v4941
    %v5330 = vpack.c.b16 %v4946, %v4942
    %v5331 = vpack.c.b16 %v4947, %v4943
    %v5332 = vpack.c.b16 %v4952, %v4948
    %v5333 = vpack.c.b16 %v4953, %v4949
    %v5334 = vpack.c.b16 %v4954, %v4950
    %v5335 = vpack.c.b16 %v4955, %v4951
    %v5336 = vpack.c.b16 %v4960, %v4956
    %v5337 = vpack.c.b16 %v4961, %v4957
    %v5338 = vpack.c.b16 %v4962, %v4958
    %v5339 = vpack.c.b16 %v4963, %v4959
    %v5340 = vpack.c.b16 %v4968, %v4964
    %v5341 = vpack.c.b16 %v4969, %v4965
    %v5342 = vpack.c.b16 %v4970, %v4966
    %v5343 = vpack.c.b16 %v4971, %v4967
    %v5344 = vpack.c.b16 %v4976, %v4972
    %v5345 = vpack.c.b16 %v4977, %v4973
    %v5346 = vpack.c.b16 %v4978, %v4974
    %v5347 = vpack.c.b16 %v4979, %v4975
    %v5348 = vpack.c.b16 %v4984, %v4980
    %v5349 = vpack.c.b16 %v4985, %v4981
    %v5350 = vpack.c.b16 %v4986, %v4982
    %v5351 = vpack.c.b16 %v4987, %v4983
    %v5352 = vpack.c.b16 %v4992, %v4988
    %v5353 = vpack.c.b16 %v4993, %v4989
    %v5354 = vpack.c.b16 %v4994, %v4990
    %v5355 = vpack.c.b16 %v4995, %v4991
    %v5356 = vpack.c.b16 %v5000, %v4996
    %v5357 = vpack.c.b16 %v5001, %v4997
    %v5358 = vpack.c.b16 %v5002, %v4998
    %v5359 = vpack.c.b16 %v5003, %v4999
    %v5360 = vpack.c.b16 %v5008, %v5004
    %v5361 = vpack.c.b16 %v5009, %v5005
    %v5362 = vpack.c.b16 %v5010, %v5006
    %v5363 = vpack.c.b16 %v5011, %v5007
    %v5364 = vpack.c.b16 %v5016, %v5012
    %v5365 = vpack.c.b16 %v5017, %v5013
    %v5366 = vpack.c.b16 %v5018, %v5014
    %v5367 = vpack.c.b16 %v5019, %v5015
    %v5368 = vpack.c.b16 %v5024, %v5020
    %v5369 = vpack.c.b16 %v5025, %v5021
    %v5370 = vpack.c.b16 %v5026, %v5022
    %v5371 = vpack.c.b16 %v5027, %v5023
    %v5372 = vpack.c.b16 %v5032, %v5028
    %v5373 = vpack.c.b16 %v5033, %v5029
    %v5374 = vpack.c.b16 %v5034, %v5030
    %v5375 = vpack.c.b16 %v5035, %v5031
    %v5376 = vpack.c.b16 %v5040, %v5036
    %v5377 = vpack.c.b16 %v5041, %v5037
    %v5378 = vpack.c.b16 %v5042, %v5038
    %v5379 = vpack.c.b16 %v5043, %v5039
    %v5380 = vpack.c.b16 %v5048, %v5044
    %v5381 = vpack.c.b16 %v5049, %v5045
    %v5382 = vpack.c.b16 %v5050, %v5046
    %v5383 = vpack.c.b16 %v5051, %v5047
    %v5384 = vpack.c.b16 %v5056, %v5052
    %v5385 = vpack.c.b16 %v5057, %v5053
    %v5386 = vpack.c.b16 %v5058, %v5054
    %v5387 = vpack.c.b16 %v5059, %v5055
    %v5388 = vpack.c.b16 %v5064, %v5060
    %v5389 = vpack.c.b16 %v5065, %v5061
    %v5390 = vpack.c.b16 %v5066, %v5062
    %v5391 = vpack.c.b16 %v5067, %v5063
    %v5392 = vpack.c.b16 %v5072, %v5068
    %v5393 = vpack.c.b16 %v5073, %v5069
    %v5394 = vpack.c.b16 %v5074, %v5070
    %v5395 = vpack.c.b16 %v5075, %v5071
    %v5396 = vpack.c.b16 %v5080, %v5076
    %v5397 = vpack.c.b16 %v5081, %v5077
    %v5398 = vpack.c.b16 %v5082, %v5078
    %v5399 = vpack.c.b16 %v5083, %v5079
    %v5400 = vpack.c.b16 %v5088, %v5084
    %v5401 = vpack.c.b16 %v5089, %v5085
    %v5402 = vpack.c.b16 %v5090, %v5086
    %v5403 = vpack.c.b16 %v5091, %v5087
    %v5404 = vpack.c.b16 %v5096, %v5092
    %v5405 = vpack.c.b16 %v5097, %v5093
    %v5406 = vpack.c.b16 %v5098, %v5094
    %v5407 = vpack.c.b16 %v5099, %v5095
    %v5408 = vpack.c.b16 %v5104, %v5100
    %v5409 = vpack.c.b16 %v5105, %v5101
    %v5410 = vpack.c.b16 %v5106, %v5102
    %v5411 = vpack.c.b16 %v5107, %v5103
    %v5412 = vpack.c.b16 %v5112, %v5108
    %v5413 = vpack.c.b16 %v5113, %v5109
    %v5414 = vpack.c.b16 %v5114, %v5110
    %v5415 = vpack.c.b16 %v5115, %v5111
    %v5416 = vpack.c.b16 %v5120, %v5116
    %v5417 = vpack.c.b16 %v5121, %v5117
    %v5418 = vpack.c.b16 %v5122, %v5118
    %v5419 = vpack.c.b16 %v5123, %v5119
    %v5420 = vpack.c.b16 %v5128, %v5124
    %v5421 = vpack.c.b16 %v5129, %v5125
    %v5422 = vpack.c.b16 %v5130, %v5126
    %v5423 = vpack.c.b16 %v5131, %v5127
    %v5424 = vpack.c.b16 %v5136, %v5132
    %v5425 = vpack.c.b16 %v5137, %v5133
    %v5426 = vpack.c.b16 %v5138, %v5134
    %v5427 = vpack.c.b16 %v5139, %v5135
    %v5428 = vpack.c.b16 %v5144, %v5140
    %v5429 = vpack.c.b16 %v5145, %v5141
    %v5430 = vpack.c.b16 %v5146, %v5142
    %v5431 = vpack.c.b16 %v5147, %v5143
    %v5432 = vpack.c.b16 %v5152, %v5148
    %v5433 = vpack.c.b16 %v5153, %v5149
    %v5434 = vpack.c.b16 %v5154, %v5150
    %v5435 = vpack.c.b16 %v5155, %v5151
    %v5436 = vpack.c.b16 %v5160, %v5156
    %v5437 = vpack.c.b16 %v5161, %v5157
    %v5438 = vpack.c.b16 %v5162, %v5158
    %v5439 = vpack.c.b16 %v5163, %v5159
    %v5440 = vpack.c.b16 %v5168, %v5164
    %v5441 = vpack.c.b16 %v5169, %v5165
    %v5442 = vpack.c.b16 %v5170, %v5166
    %v5443 = vpack.c.b16 %v5171, %v5167
    %v5444 = vpack.c.b16 %v5176, %v5172
    %v5445 = vpack.c.b16 %v5177, %v5173
    %v5446 = vpack.c.b16 %v5178, %v5174
    %v5447 = vpack.c.b16 %v5179, %v5175
    %v5448 = vpack.c.b16 %v5184, %v5180
    %v5449 = vpack.c.b16 %v5185, %v5181
    %v5450 = vpack.c.b16 %v5186, %v5182
    %v5451 = vpack.c.b16 %v5187, %v5183
    %v5452 = vpack.c.b16 %v5192, %v5188
    %v5453 = vpack.c.b16 %v5193, %v5189
    %v5454 = vpack.c.b16 %v5194, %v5190
    %v5455 = vpack.c.b16 %v5195, %v5191
    %v5456 = vpack.c.b16 %v5200, %v5196
    %v5457 = vpack.c.b16 %v5201, %v5197
    %v5458 = vpack.c.b16 %v5202, %v5198
    %v5459 = vpack.c.b16 %v5203, %v5199
    %5716 = vmatprep.subr.bf16.mxu0 %v5205
    %5717 = vmatpush1.bf16.msra.mxu0 %v5204
    %5718 = vmatprep.subr.bf16.mxu0 %v5209
    %5719 = vmatpush1.bf16.msra.mxu0 %v5208
    %5720 = vmatprep.subr.bf16.mxu0 %v5213
    %5721 = vmatpush1.bf16.msra.mxu0 %v5212
    %5722 = vmatprep.subr.bf16.mxu0 %v5217
    %5723 = vmatpush1.bf16.msra.mxu0 %v5216
    %5724 = vmatprep.subr.bf16.mxu0 %v5221
    %5725 = vmatpush1.bf16.msra.mxu0 %v5220
    %5726 = vmatprep.subr.bf16.mxu0 %v5225
    %5727 = vmatpush1.bf16.msra.mxu0 %v5224
    %5728 = vmatprep.subr.bf16.mxu0 %v5229
    %5729 = vmatpush1.bf16.msra.mxu0 %v5228
    %5730 = vmatprep.subr.bf16.mxu0 %v5233
    %5731 = vmatpush1.bf16.msra.mxu0 %v5232
    %5732 = vmatprep.subr.bf16.mxu0 %v5237
    %5733 = vmatpush1.bf16.msra.mxu0 %v5236
    %5734 = vmatprep.subr.bf16.mxu0 %v5241
    %5735 = vmatpush1.bf16.msra.mxu0 %v5240
    %5736 = vmatprep.subr.bf16.mxu0 %v5245
    %5737 = vmatpush1.bf16.msra.mxu0 %v5244
    %5738 = vmatprep.subr.bf16.mxu0 %v5249
    %5739 = vmatpush1.bf16.msra.mxu0 %v5248
    %5740 = vmatprep.subr.bf16.mxu0 %v5253
    %5741 = vmatpush1.bf16.msra.mxu0 %v5252
    %5742 = vmatprep.subr.bf16.mxu0 %v5257
    %5743 = vmatpush1.bf16.msra.mxu0 %v5256
    %5744 = vmatprep.subr.bf16.mxu0 %v5261
    %5745 = vmatpush1.bf16.msra.mxu0 %v5260
    %5746 = vmatprep.subr.bf16.mxu0 %v5265
    %5747 = vmatpush1.bf16.msra.mxu0 %v5264
    %5748 = vmatprep.mubr.bf16.mxu0 %v4172
    %5749 = vmatmul.mubr.bf16.gmra.mrb[0].mxu0 %v4171
    %v5750 = vpop.f32.mrb[0].mxu0
    %v5751 = vadd.f32 0.0, %v5750
    %v5752 = vpop.f32.mrb[0].mxu0
    %v5753 = vadd.f32 0.0, %v5752
    %v5754 = vpop.f32.mrb[0].mxu0
    %v5755 = vpop.f32.mrb[0].mxu0
    %5756 = vdwg.mxu0
    %5757 = vmatprep.subr.bf16.mxu0 %v5269
    %5758 = vmatpush1.bf16.msra.mxu0 %v5268
    %5759 = vmatprep.subr.bf16.mxu0 %v5273
    %5760 = vmatpush1.bf16.msra.mxu0 %v5272
    %5761 = vmatprep.subr.bf16.mxu0 %v5277
    %5762 = vmatpush1.bf16.msra.mxu0 %v5276
    %5763 = vmatprep.subr.bf16.mxu0 %v5281
    %5764 = vmatpush1.bf16.msra.mxu0 %v5280
    %5765 = vmatprep.subr.bf16.mxu0 %v5285
    %5766 = vmatpush1.bf16.msra.mxu0 %v5284
    %5767 = vmatprep.subr.bf16.mxu0 %v5289
    %5768 = vmatpush1.bf16.msra.mxu0 %v5288
    %5769 = vmatprep.subr.bf16.mxu0 %v5293
    %5770 = vmatpush1.bf16.msra.mxu0 %v5292
    %5771 = vmatprep.subr.bf16.mxu0 %v5297
    %5772 = vmatpush1.bf16.msra.mxu0 %v5296
    %5773 = vmatprep.subr.bf16.mxu0 %v5301
    %5774 = vmatpush1.bf16.msra.mxu0 %v5300
    %5775 = vmatprep.subr.bf16.mxu0 %v5305
    %5776 = vmatpush1.bf16.msra.mxu0 %v5304
    %5777 = vmatprep.subr.bf16.mxu0 %v5309
    %5778 = vmatpush1.bf16.msra.mxu0 %v5308
    %5779 = vmatprep.subr.bf16.mxu0 %v5313
    %5780 = vmatpush1.bf16.msra.mxu0 %v5312
    %5781 = vmatprep.subr.bf16.mxu0 %v5317
    %5782 = vmatpush1.bf16.msra.mxu0 %v5316
    %5783 = vmatprep.subr.bf16.mxu0 %v5321
    %5784 = vmatpush1.bf16.msra.mxu0 %v5320
    %5785 = vmatprep.subr.bf16.mxu0 %v5325
    %5786 = vmatpush1.bf16.msra.mxu0 %v5324
    %5787 = vmatprep.subr.bf16.mxu0 %v5329
    %5788 = vmatpush1.bf16.msra.mxu0 %v5328
    %5789 = vmatprep.mubr.bf16.mxu0 %v4174
    %5790 = vmatmul.mubr.bf16.gmra.mrb[0].mxu0 %v4173
    %v5791 = vpop.f32.mrb[0].mxu0
    %v5792 = vadd.f32 %v5751, %v5791
    %v5793 = vpop.f32.mrb[0].mxu0
    %v5794 = vadd.f32 %v5753, %v5793
    %v5795 = vpop.f32.mrb[0].mxu0
    %v5796 = vpop.f32.mrb[0].mxu0
    %5797 = vdwg.mxu0
    %5798 = vmatprep.subr.bf16.mxu0 %v5333
    %5799 = vmatpush1.bf16.msra.mxu0 %v5332
    %5800 = vmatprep.subr.bf16.mxu0 %v5337
    %5801 = vmatpush1.bf16.msra.mxu0 %v5336
    %5802 = vmatprep.subr.bf16.mxu0 %v5341
    %5803 = vmatpush1.bf16.msra.mxu0 %v5340
    %5804 = vmatprep.subr.bf16.mxu0 %v5345
    %5805 = vmatpush1.bf16.msra.mxu0 %v5344
    %5806 = vmatprep.subr.bf16.mxu0 %v5349
    %5807 = vmatpush1.bf16.msra.mxu0 %v5348
    %5808 = vmatprep.subr.bf16.mxu0 %v5353
    %5809 = vmatpush1.bf16.msra.mxu0 %v5352
    %5810 = vmatprep.subr.bf16.mxu0 %v5357
    %5811 = vmatpush1.bf16.msra.mxu0 %v5356
    %5812 = vmatprep.subr.bf16.mxu0 %v5361
    %5813 = vmatpush1.bf16.msra.mxu0 %v5360
    %5814 = vmatprep.subr.bf16.mxu0 %v5365
    %5815 = vmatpush1.bf16.msra.mxu0 %v5364
    %5816 = vmatprep.subr.bf16.mxu0 %v5369
    %5817 = vmatpush1.bf16.msra.mxu0 %v5368
    %5818 = vmatprep.subr.bf16.mxu0 %v5373
    %5819 = vmatpush1.bf16.msra.mxu0 %v5372
    %5820 = vmatprep.subr.bf16.mxu0 %v5377
    %5821 = vmatpush1.bf16.msra.mxu0 %v5376
    %5822 = vmatprep.subr.bf16.mxu0 %v5381
    %5823 = vmatpush1.bf16.msra.mxu0 %v5380
    %5824 = vmatprep.subr.bf16.mxu0 %v5385
    %5825 = vmatpush1.bf16.msra.mxu0 %v5384
    %5826 = vmatprep.subr.bf16.mxu0 %v5389
    %5827 = vmatpush1.bf16.msra.mxu0 %v5388
    %5828 = vmatprep.subr.bf16.mxu0 %v5393
    %5829 = vmatpush1.bf16.msra.mxu0 %v5392
    %5830 = vmatprep.mubr.bf16.mxu0 %v4176
    %5831 = vmatmul.mubr.bf16.gmra.mrb[0].mxu0 %v4175
    %v5832 = vpop.f32.mrb[0].mxu0
    %v5833 = vadd.f32 %v5792, %v5832
    %v5834 = vpop.f32.mrb[0].mxu0
    %v5835 = vadd.f32 %v5794, %v5834
    %v5836 = vpop.f32.mrb[0].mxu0
    %v5837 = vpop.f32.mrb[0].mxu0
    %5838 = vdwg.mxu0
    %5839 = vmatprep.subr.bf16.mxu0 %v5397
    %5840 = vmatpush1.bf16.msra.mxu0 %v5396
    %5841 = vmatprep.subr.bf16.mxu0 %v5401
    %5842 = vmatpush1.bf16.msra.mxu0 %v5400
    %5843 = vmatprep.subr.bf16.mxu0 %v5405
    %5844 = vmatpush1.bf16.msra.mxu0 %v5404
    %5845 = vmatprep.subr.bf16.mxu0 %v5409
    %5846 = vmatpush1.bf16.msra.mxu0 %v5408
    %5847 = vmatprep.subr.bf16.mxu0 %v5413
    %5848 = vmatpush1.bf16.msra.mxu0 %v5412
    %5849 = vmatprep.subr.bf16.mxu0 %v5417
    %5850 = vmatpush1.bf16.msra.mxu0 %v5416
    %5851 = vmatprep.subr.bf16.mxu0 %v5421
    %5852 = vmatpush1.bf16.msra.mxu0 %v5420
    %5853 = vmatprep.subr.bf16.mxu0 %v5425
    %5854 = vmatpush1.bf16.msra.mxu0 %v5424
    %5855 = vmatprep.subr.bf16.mxu0 %v5429
    %5856 = vmatpush1.bf16.msra.mxu0 %v5428
    %5857 = vmatprep.subr.bf16.mxu0 %v5433
    %5858 = vmatpush1.bf16.msra.mxu0 %v5432
    %5859 = vmatprep.subr.bf16.mxu0 %v5437
    %5860 = vmatpush1.bf16.msra.mxu0 %v5436
    %5861 = vmatprep.subr.bf16.mxu0 %v5441
    %5862 = vmatpush1.bf16.msra.mxu0 %v5440
    %5863 = vmatprep.subr.bf16.mxu0 %v5445
    %5864 = vmatpush1.bf16.msra.mxu0 %v5444
    %5865 = vmatprep.subr.bf16.mxu0 %v5449
    %5866 = vmatpush1.bf16.msra.mxu0 %v5448
    %5867 = vmatprep.subr.bf16.mxu0 %v5453
    %5868 = vmatpush1.bf16.msra.mxu0 %v5452
    %5869 = vmatprep.subr.bf16.mxu0 %v5457
    %5870 = vmatpush1.bf16.msra.mxu0 %v5456
    %5871 = vmatprep.mubr.bf16.mxu0 %v4178
    %5872 = vmatmul.mubr.bf16.gmra.mrb[0].mxu0 %v4177
    %v5873 = vpop.f32.mrb[0].mxu0
    %v5874 = vadd.f32 %v5833, %v5873
    %v5875 = vpop.f32.mrb[0].mxu0
    %v5876 = vadd.f32 %v5835, %v5875
    %v5877 = vpop.f32.mrb[0].mxu0
    %v5878 = vpop.f32.mrb[0].mxu0
    %5879 = vdwg.mxu0
    %5880 = vmatprep.subr.bf16.mxu0 %v5207
    %5881 = vmatpush1.bf16.msra.mxu0 %v5206
    %5882 = vmatprep.subr.bf16.mxu0 %v5211
    %5883 = vmatpush1.bf16.msra.mxu0 %v5210
    %5884 = vmatprep.subr.bf16.mxu0 %v5215
    %5885 = vmatpush1.bf16.msra.mxu0 %v5214
    %5886 = vmatprep.subr.bf16.mxu0 %v5219
    %5887 = vmatpush1.bf16.msra.mxu0 %v5218
    %5888 = vmatprep.subr.bf16.mxu0 %v5223
    %5889 = vmatpush1.bf16.msra.mxu0 %v5222
    %5890 = vmatprep.subr.bf16.mxu0 %v5227
    %5891 = vmatpush1.bf16.msra.mxu0 %v5226
    %5892 = vmatprep.subr.bf16.mxu0 %v5231
    %5893 = vmatpush1.bf16.msra.mxu0 %v5230
    %5894 = vmatprep.subr.bf16.mxu0 %v5235
    %5895 = vmatpush1.bf16.msra.mxu0 %v5234
    %5896 = vmatprep.subr.bf16.mxu0 %v5239
    %5897 = vmatpush1.bf16.msra.mxu0 %v5238
    %5898 = vmatprep.subr.bf16.mxu0 %v5243
    %5899 = vmatpush1.bf16.msra.mxu0 %v5242
    %5900 = vmatprep.subr.bf16.mxu0 %v5247
    %5901 = vmatpush1.bf16.msra.mxu0 %v5246
    %5902 = vmatprep.subr.bf16.mxu0 %v5251
    %5903 = vmatpush1.bf16.msra.mxu0 %v5250
    %5904 = vmatprep.subr.bf16.mxu0 %v5255
    %5905 = vmatpush1.bf16.msra.mxu0 %v5254
    %5906 = vmatprep.subr.bf16.mxu0 %v5259
    %5907 = vmatpush1.bf16.msra.mxu0 %v5258
    %5908 = vmatprep.subr.bf16.mxu0 %v5263
    %5909 = vmatpush1.bf16.msra.mxu0 %v5262
    %5910 = vmatprep.subr.bf16.mxu0 %v5267
    %5911 = vmatpush1.bf16.msra.mxu0 %v5266
    %5912 = vmatprep.mubr.bf16.mxu0 %v4172
    %5913 = vmatmul.mubr.bf16.gmra.mrb[0].mxu0 %v4171
    %v5914 = vpop.f32.mrb[0].mxu0
    %v5915 = vadd.f32 0.0, %v5914
    %v5916 = vpop.f32.mrb[0].mxu0
    %v5917 = vadd.f32 0.0, %v5916
    %v5918 = vpop.f32.mrb[0].mxu0
    %v5919 = vpop.f32.mrb[0].mxu0
    %5920 = vdwg.mxu0
    %5921 = vmatprep.subr.bf16.mxu0 %v5271
    %5922 = vmatpush1.bf16.msra.mxu0 %v5270
    %5923 = vmatprep.subr.bf16.mxu0 %v5275
    %5924 = vmatpush1.bf16.msra.mxu0 %v5274
    %5925 = vmatprep.subr.bf16.mxu0 %v5279
    %5926 = vmatpush1.bf16.msra.mxu0 %v5278
    %5927 = vmatprep.subr.bf16.mxu0 %v5283
    %5928 = vmatpush1.bf16.msra.mxu0 %v5282
    %5929 = vmatprep.subr.bf16.mxu0 %v5287
    %5930 = vmatpush1.bf16.msra.mxu0 %v5286
    %5931 = vmatprep.subr.bf16.mxu0 %v5291
    %5932 = vmatpush1.bf16.msra.mxu0 %v5290
    %5933 = vmatprep.subr.bf16.mxu0 %v5295
    %5934 = vmatpush1.bf16.msra.mxu0 %v5294
    %5935 = vmatprep.subr.bf16.mxu0 %v5299
    %5936 = vmatpush1.bf16.msra.mxu0 %v5298
    %5937 = vmatprep.subr.bf16.mxu0 %v5303
    %5938 = vmatpush1.bf16.msra.mxu0 %v5302
    %5939 = vmatprep.subr.bf16.mxu0 %v5307
    %5940 = vmatpush1.bf16.msra.mxu0 %v5306
    %5941 = vmatprep.subr.bf16.mxu0 %v5311
    %5942 = vmatpush1.bf16.msra.mxu0 %v5310
    %5943 = vmatprep.subr.bf16.mxu0 %v5315
    %5944 = vmatpush1.bf16.msra.mxu0 %v5314
    %5945 = vmatprep.subr.bf16.mxu0 %v5319
    %5946 = vmatpush1.bf16.msra.mxu0 %v5318
    %5947 = vmatprep.subr.bf16.mxu0 %v5323
    %5948 = vmatpush1.bf16.msra.mxu0 %v5322
    %5949 = vmatprep.subr.bf16.mxu0 %v5327
    %5950 = vmatpush1.bf16.msra.mxu0 %v5326
    %5951 = vmatprep.subr.bf16.mxu0 %v5331
    %5952 = vmatpush1.bf16.msra.mxu0 %v5330
    %5953 = vmatprep.mubr.bf16.mxu0 %v4174
    %5954 = vmatmul.mubr.bf16.gmra.mrb[0].mxu0 %v4173
    %v5955 = vpop.f32.mrb[0].mxu0
    %v5956 = vadd.f32 %v5915, %v5955
    %v5957 = vpop.f32.mrb[0].mxu0
    %v5958 = vadd.f32 %v5917, %v5957
    %v5959 = vpop.f32.mrb[0].mxu0
    %v5960 = vpop.f32.mrb[0].mxu0
    %5961 = vdwg.mxu0
    %5962 = vmatprep.subr.bf16.mxu0 %v5335
    %5963 = vmatpush1.bf16.msra.mxu0 %v5334
    %5964 = vmatprep.subr.bf16.mxu0 %v5339
    %5965 = vmatpush1.bf16.msra.mxu0 %v5338
    %5966 = vmatprep.subr.bf16.mxu0 %v5343
    %5967 = vmatpush1.bf16.msra.mxu0 %v5342
    %5968 = vmatprep.subr.bf16.mxu0 %v5347
    %5969 = vmatpush1.bf16.msra.mxu0 %v5346
    %5970 = vmatprep.subr.bf16.mxu0 %v5351
    %5971 = vmatpush1.bf16.msra.mxu0 %v5350
    %5972 = vmatprep.subr.bf16.mxu0 %v5355
    %5973 = vmatpush1.bf16.msra.mxu0 %v5354
    %5974 = vmatprep.subr.bf16.mxu0 %v5359
    %5975 = vmatpush1.bf16.msra.mxu0 %v5358
    %5976 = vmatprep.subr.bf16.mxu0 %v5363
    %5977 = vmatpush1.bf16.msra.mxu0 %v5362
    %5978 = vmatprep.subr.bf16.mxu0 %v5367
    %5979 = vmatpush1.bf16.msra.mxu0 %v5366
    %5980 = vmatprep.subr.bf16.mxu0 %v5371
    %5981 = vmatpush1.bf16.msra.mxu0 %v5370
    %5982 = vmatprep.subr.bf16.mxu0 %v5375
    %5983 = vmatpush1.bf16.msra.mxu0 %v5374
    %5984 = vmatprep.subr.bf16.mxu0 %v5379
    %5985 = vmatpush1.bf16.msra.mxu0 %v5378
    %5986 = vmatprep.subr.bf16.mxu0 %v5383
    %5987 = vmatpush1.bf16.msra.mxu0 %v5382
    %5988 = vmatprep.subr.bf16.mxu0 %v5387
    %5989 = vmatpush1.bf16.msra.mxu0 %v5386
    %5990 = vmatprep.subr.bf16.mxu0 %v5391
    %5991 = vmatpush1.bf16.msra.mxu0 %v5390
    %5992 = vmatprep.subr.bf16.mxu0 %v5395
    %5993 = vmatpush1.bf16.msra.mxu0 %v5394
    %5994 = vmatprep.mubr.bf16.mxu0 %v4176
    %5995 = vmatmul.mubr.bf16.gmra.mrb[0].mxu0 %v4175
    %v5996 = vpop.f32.mrb[0].mxu0
    %v5997 = vadd.f32 %v5956, %v5996
    %v5998 = vpop.f32.mrb[0].mxu0
    %v5999 = vadd.f32 %v5958, %v5998
    %v6000 = vpop.f32.mrb[0].mxu0
    %v6001 = vpop.f32.mrb[0].mxu0
    %6002 = vdwg.mxu0
    %6003 = vmatprep.subr.bf16.mxu0 %v5399
    %6004 = vmatpush1.bf16.msra.mxu0 %v5398
    %6005 = vmatprep.subr.bf16.mxu0 %v5403
    %6006 = vmatpush1.bf16.msra.mxu0 %v5402
    %6007 = vmatprep.subr.bf16.mxu0 %v5407
    %6008 = vmatpush1.bf16.msra.mxu0 %v5406
    %6009 = vmatprep.subr.bf16.mxu0 %v5411
    %6010 = vmatpush1.bf16.msra.mxu0 %v5410
    %6011 = vmatprep.subr.bf16.mxu0 %v5415
    %6012 = vmatpush1.bf16.msra.mxu0 %v5414
    %6013 = vmatprep.subr.bf16.mxu0 %v5419
    %6014 = vmatpush1.bf16.msra.mxu0 %v5418
    %6015 = vmatprep.subr.bf16.mxu0 %v5423
    %6016 = vmatpush1.bf16.msra.mxu0 %v5422
    %6017 = vmatprep.subr.bf16.mxu0 %v5427
    %6018 = vmatpush1.bf16.msra.mxu0 %v5426
    %6019 = vmatprep.subr.bf16.mxu0 %v5431
    %6020 = vmatpush1.bf16.msra.mxu0 %v5430
    %6021 = vmatprep.subr.bf16.mxu0 %v5435
    %6022 = vmatpush1.bf16.msra.mxu0 %v5434
    %6023 = vmatprep.subr.bf16.mxu0 %v5439
    %6024 = vmatpush1.bf16.msra.mxu0 %v5438
    %6025 = vmatprep.subr.bf16.mxu0 %v5443
    %6026 = vmatpush1.bf16.msra.mxu0 %v5442
    %6027 = vmatprep.subr.bf16.mxu0 %v5447
    %6028 = vmatpush1.bf16.msra.mxu0 %v5446
    %6029 = vmatprep.subr.bf16.mxu0 %v5451
    %6030 = vmatpush1.bf16.msra.mxu0 %v5450
    %6031 = vmatprep.subr.bf16.mxu0 %v5455
    %6032 = vmatpush1.bf16.msra.mxu0 %v5454
    %6033 = vmatprep.subr.bf16.mxu0 %v5459
    %6034 = vmatpush1.bf16.msra.mxu0 %v5458
    %6035 = vmatprep.mubr.bf16.mxu0 %v4178
    %6036 = vmatmul.mubr.bf16.gmra.mrb[0].mxu0 %v4177
    %v6037 = vpop.f32.mrb[0].mxu0
    %v6038 = vadd.f32 %v5997, %v6037
    %v6039 = vpop.f32.mrb[0].mxu0
    %v6040 = vadd.f32 %v5999, %v6039
    %v6041 = vpop.f32.mrb[0].mxu0
    %v6042 = vpop.f32.mrb[0].mxu0
    %6043 = vdwg.mxu0
    %v6044 = vadd.f32 %v3891, %v5874
    %v6045 = vadd.f32 %v3893, %v5876
    %v6046 = vadd.f32 %v4055, %v6038
    %v6047 = vadd.f32 %v4057, %v6040
    %s6048 = scalar_lea.vmem [#allocation3], 24
    %v6049 = vld [vmem:[%s6048] sm:$0xff]
    %v6051 = vlaneseq
    %v6052 = vshrl.u32 %v6051, 7
    %v6053 = vsub.s32 0, %v6052
    %v6054 = vrot.slane %v6049, %v6053
    %v6055 = vlaneseq
    %v6056 = vshrl.u32 %v6055, 7
    %v6057 = vsub.s32 1, %v6056
    %v6058 = vrot.slane %v6049, %v6057
    %v6059 = vlaneseq
    %v6060 = vshrl.u32 %v6059, 7
    %v6061 = vsub.s32 2, %v6060
    %v6062 = vrot.slane %v6049, %v6061
    %v6063 = vlaneseq
    %v6064 = vshrl.u32 %v6063, 7
    %v6065 = vsub.s32 3, %v6064
    %v6066 = vrot.slane %v6049, %v6065
    %v6067 = vlaneseq
    %v6068 = vshrl.u32 %v6067, 7
    %v6069 = vsub.s32 4, %v6068
    %v6070 = vrot.slane %v6049, %v6069
    %v6071 = vlaneseq
    %v6072 = vshrl.u32 %v6071, 7
    %v6073 = vsub.s32 5, %v6072
    %v6074 = vrot.slane %v6049, %v6073
    %v6075 = vlaneseq
    %v6076 = vshrl.u32 %v6075, 7
    %v6077 = vsub.s32 6, %v6076
    %v6078 = vrot.slane %v6049, %v6077
    %v6079 = vlaneseq
    %v6080 = vshrl.u32 %v6079, 7
    %v6081 = vsub.s32 7, %v6080
    %v6082 = vrot.slane %v6049, %v6081
    %v6091 = vmul.f32 %v97, %v6054
    %v6092 = vmul.f32 %v97, %v6058
    %v6093 = vmul.f32 %v97, %v6062
    %v6094 = vmul.f32 %v97, %v6066
    %v6095 = vmul.f32 %v97, %v6070
    %v6096 = vmul.f32 %v97, %v6074
    %v6097 = vmul.f32 %v97, %v6078
    %v6098 = vmul.f32 %v97, %v6082
    %s6099 = scalar_lea.vmem [#allocation5], 24
    %v6100 = vld [vmem:[%s6099] sm:$0xff]
    %v6102 = vlaneseq
    %v6103 = vshrl.u32 %v6102, 7
    %v6104 = vsub.s32 0, %v6103
    %v6105 = vrot.slane %v6100, %v6104
    %v6106 = vlaneseq
    %v6107 = vshrl.u32 %v6106, 7
    %v6108 = vsub.s32 1, %v6107
    %v6109 = vrot.slane %v6100, %v6108
    %v6110 = vlaneseq
    %v6111 = vshrl.u32 %v6110, 7
    %v6112 = vsub.s32 2, %v6111
    %v6113 = vrot.slane %v6100, %v6112
    %v6114 = vlaneseq
    %v6115 = vshrl.u32 %v6114, 7
    %v6116 = vsub.s32 3, %v6115
    %v6117 = vrot.slane %v6100, %v6116
    %v6118 = vlaneseq
    %v6119 = vshrl.u32 %v6118, 7
    %v6120 = vsub.s32 4, %v6119
    %v6121 = vrot.slane %v6100, %v6120
    %v6122 = vlaneseq
    %v6123 = vshrl.u32 %v6122, 7
    %v6124 = vsub.s32 5, %v6123
    %v6125 = vrot.slane %v6100, %v6124
    %v6126 = vlaneseq
    %v6127 = vshrl.u32 %v6126, 7
    %v6128 = vsub.s32 6, %v6127
    %v6129 = vrot.slane %v6100, %v6128
    %v6130 = vlaneseq
    %v6131 = vshrl.u32 %v6130, 7
    %v6132 = vsub.s32 7, %v6131
    %v6133 = vrot.slane %v6100, %v6132
    %v6142 = vadd.f32 %v6091, %v6105
    %v6143 = vadd.f32 %v6092, %v6109
    %v6144 = vadd.f32 %v6093, %v6113
    %v6145 = vadd.f32 %v6094, %v6117
    %v6146 = vadd.f32 %v6095, %v6121
    %v6147 = vadd.f32 %v6096, %v6125
    %v6148 = vadd.f32 %v6097, %v6129
    %v6149 = vadd.f32 %v6098, %v6133
    %v6150 = vtanh.pop %v6142
    %v6151 = vtanh.pop %v6143
    %v6152 = vtanh.pop %v6144
    %v6153 = vtanh.pop %v6145
    %v6154 = vtanh.pop %v6146
    %v6155 = vtanh.pop %v6147
    %v6156 = vtanh.pop %v6148
    %v6157 = vtanh.pop %v6149
    %v6158 = vpack.c.bf16 %v6150, %v6150
    %v6159 = vpack.c.bf16 %v6151, %v6151
    %v6160 = vpack.c.bf16 %v6152, %v6152
    %v6161 = vpack.c.bf16 %v6153, %v6153
    %v6162 = vpack.c.bf16 %v6154, %v6154
    %v6163 = vpack.c.bf16 %v6155, %v6155
    %v6164 = vpack.c.bf16 %v6156, %v6156
    %v6165 = vpack.c.bf16 %v6157, %v6157
    %s6166 = scalar_lea.vmem [#allocation7], 6144
    %v6167 = vld [vmem:[%s6166] sm:$0xff]
    %v6168 = vld [vmem:[%s6166 + $0x8] sm:$0xff]
    %v6169 = vld [vmem:[%s6166 + $0x10] sm:$0xff]
    %v6170 = vld [vmem:[%s6166 + $0x18] sm:$0xff]
    %v6171 = vld [vmem:[%s6166 + $0x20] sm:$0xff]
    %v6172 = vld [vmem:[%s6166 + $0x28] sm:$0xff]
    %v6173 = vld [vmem:[%s6166 + $0x30] sm:$0xff]
    %v6174 = vld [vmem:[%s6166 + $0x38] sm:$0xff]
    %v6175 = vld [vmem:[%s6166 + $0x40] sm:$0xff]
    %v6176 = vld [vmem:[%s6166 + $0x48] sm:$0xff]
    %v6177 = vld [vmem:[%s6166 + $0x50] sm:$0xff]
    %v6178 = vld [vmem:[%s6166 + $0x58] sm:$0xff]
    %v6179 = vld [vmem:[%s6166 + $0x60] sm:$0xff]
    %v6180 = vld [vmem:[%s6166 + $0x68] sm:$0xff]
    %v6181 = vld [vmem:[%s6166 + $0x70] sm:$0xff]
    %v6182 = vld [vmem:[%s6166 + $0x78] sm:$0xff]
    %v6183 = vld [vmem:[%s6166 + $0x80] sm:$0xff]
    %v6184 = vld [vmem:[%s6166 + $0x88] sm:$0xff]
    %v6185 = vld [vmem:[%s6166 + $0x90] sm:$0xff]
    %v6186 = vld [vmem:[%s6166 + $0x98] sm:$0xff]
    %v6187 = vld [vmem:[%s6166 + $0xa0] sm:$0xff]
    %v6188 = vld [vmem:[%s6166 + $0xa8] sm:$0xff]
    %v6189 = vld [vmem:[%s6166 + $0xb0] sm:$0xff]
    %v6190 = vld [vmem:[%s6166 + $0xb8] sm:$0xff]
    %v6191 = vld [vmem:[%s6166 + $0xc0] sm:$0xff]
    %v6192 = vld [vmem:[%s6166 + $0xc8] sm:$0xff]
    %v6193 = vld [vmem:[%s6166 + $0xd0] sm:$0xff]
    %v6194 = vld [vmem:[%s6166 + $0xd8] sm:$0xff]
    %v6195 = vld [vmem:[%s6166 + $0xe0] sm:$0xff]
    %v6196 = vld [vmem:[%s6166 + $0xe8] sm:$0xff]
    %v6197 = vld [vmem:[%s6166 + $0xf0] sm:$0xff]
    %v6198 = vld [vmem:[%s6166 + $0xf8] sm:$0xff]
    %v6199 = vld [vmem:[%s6166 + $0x100] sm:$0xff]
    %v6200 = vld [vmem:[%s6166 + $0x108] sm:$0xff]
    %v6201 = vld [vmem:[%s6166 + $0x110] sm:$0xff]
    %v6202 = vld [vmem:[%s6166 + $0x118] sm:$0xff]
    %v6203 = vld [vmem:[%s6166 + $0x120] sm:$0xff]
    %v6204 = vld [vmem:[%s6166 + $0x128] sm:$0xff]
    %v6205 = vld [vmem:[%s6166 + $0x130] sm:$0xff]
    %v6206 = vld [vmem:[%s6166 + $0x138] sm:$0xff]
    %v6207 = vld [vmem:[%s6166 + $0x140] sm:$0xff]
    %v6208 = vld [vmem:[%s6166 + $0x148] sm:$0xff]
    %v6209 = vld [vmem:[%s6166 + $0x150] sm:$0xff]
    %v6210 = vld [vmem:[%s6166 + $0x158] sm:$0xff]
    %v6211 = vld [vmem:[%s6166 + $0x160] sm:$0xff]
    %v6212 = vld [vmem:[%s6166 + $0x168] sm:$0xff]
    %v6213 = vld [vmem:[%s6166 + $0x170] sm:$0xff]
    %v6214 = vld [vmem:[%s6166 + $0x178] sm:$0xff]
    %v6215 = vld [vmem:[%s6166 + $0x180] sm:$0xff]
    %v6216 = vld [vmem:[%s6166 + $0x188] sm:$0xff]
    %v6217 = vld [vmem:[%s6166 + $0x190] sm:$0xff]
    %v6218 = vld [vmem:[%s6166 + $0x198] sm:$0xff]
    %v6219 = vld [vmem:[%s6166 + $0x1a0] sm:$0xff]
    %v6220 = vld [vmem:[%s6166 + $0x1a8] sm:$0xff]
    %v6221 = vld [vmem:[%s6166 + $0x1b0] sm:$0xff]
    %v6222 = vld [vmem:[%s6166 + $0x1b8] sm:$0xff]
    %v6223 = vld [vmem:[%s6166 + $0x1c0] sm:$0xff]
    %v6224 = vld [vmem:[%s6166 + $0x1c8] sm:$0xff]
    %v6225 = vld [vmem:[%s6166 + $0x1d0] sm:$0xff]
    %v6226 = vld [vmem:[%s6166 + $0x1d8] sm:$0xff]
    %v6227 = vld [vmem:[%s6166 + $0x1e0] sm:$0xff]
    %v6228 = vld [vmem:[%s6166 + $0x1e8] sm:$0xff]
    %v6229 = vld [vmem:[%s6166 + $0x1f0] sm:$0xff]
    %v6230 = vld [vmem:[%s6166 + $0x1f8] sm:$0xff]
    %v6231 = vld [vmem:[%s6166 + $0x200] sm:$0xff]
    %v6232 = vld [vmem:[%s6166 + $0x208] sm:$0xff]
    %v6233 = vld [vmem:[%s6166 + $0x210] sm:$0xff]
    %v6234 = vld [vmem:[%s6166 + $0x218] sm:$0xff]
    %v6235 = vld [vmem:[%s6166 + $0x220] sm:$0xff]
    %v6236 = vld [vmem:[%s6166 + $0x228] sm:$0xff]
    %v6237 = vld [vmem:[%s6166 + $0x230] sm:$0xff]
    %v6238 = vld [vmem:[%s6166 + $0x238] sm:$0xff]
    %v6239 = vld [vmem:[%s6166 + $0x240] sm:$0xff]
    %v6240 = vld [vmem:[%s6166 + $0x248] sm:$0xff]
    %v6241 = vld [vmem:[%s6166 + $0x250] sm:$0xff]
    %v6242 = vld [vmem:[%s6166 + $0x258] sm:$0xff]
    %v6243 = vld [vmem:[%s6166 + $0x260] sm:$0xff]
    %v6244 = vld [vmem:[%s6166 + $0x268] sm:$0xff]
    %v6245 = vld [vmem:[%s6166 + $0x270] sm:$0xff]
    %v6246 = vld [vmem:[%s6166 + $0x278] sm:$0xff]
    %v6247 = vld [vmem:[%s6166 + $0x280] sm:$0xff]
    %v6248 = vld [vmem:[%s6166 + $0x288] sm:$0xff]
    %v6249 = vld [vmem:[%s6166 + $0x290] sm:$0xff]
    %v6250 = vld [vmem:[%s6166 + $0x298] sm:$0xff]
    %v6251 = vld [vmem:[%s6166 + $0x2a0] sm:$0xff]
    %v6252 = vld [vmem:[%s6166 + $0x2a8] sm:$0xff]
    %v6253 = vld [vmem:[%s6166 + $0x2b0] sm:$0xff]
    %v6254 = vld [vmem:[%s6166 + $0x2b8] sm:$0xff]
    %v6255 = vld [vmem:[%s6166 + $0x2c0] sm:$0xff]
    %v6256 = vld [vmem:[%s6166 + $0x2c8] sm:$0xff]
    %v6257 = vld [vmem:[%s6166 + $0x2d0] sm:$0xff]
    %v6258 = vld [vmem:[%s6166 + $0x2d8] sm:$0xff]
    %v6259 = vld [vmem:[%s6166 + $0x2e0] sm:$0xff]
    %v6260 = vld [vmem:[%s6166 + $0x2e8] sm:$0xff]
    %v6261 = vld [vmem:[%s6166 + $0x2f0] sm:$0xff]
    %v6262 = vld [vmem:[%s6166 + $0x2f8] sm:$0xff]
    %v6263 = vld [vmem:[%s6166 + $0x300] sm:$0xff]
    %v6264 = vld [vmem:[%s6166 + $0x308] sm:$0xff]
    %v6265 = vld [vmem:[%s6166 + $0x310] sm:$0xff]
    %v6266 = vld [vmem:[%s6166 + $0x318] sm:$0xff]
    %v6267 = vld [vmem:[%s6166 + $0x320] sm:$0xff]
    %v6268 = vld [vmem:[%s6166 + $0x328] sm:$0xff]
    %v6269 = vld [vmem:[%s6166 + $0x330] sm:$0xff]
    %v6270 = vld [vmem:[%s6166 + $0x338] sm:$0xff]
    %v6271 = vld [vmem:[%s6166 + $0x340] sm:$0xff]
    %v6272 = vld [vmem:[%s6166 + $0x348] sm:$0xff]
    %v6273 = vld [vmem:[%s6166 + $0x350] sm:$0xff]
    %v6274 = vld [vmem:[%s6166 + $0x358] sm:$0xff]
    %v6275 = vld [vmem:[%s6166 + $0x360] sm:$0xff]
    %v6276 = vld [vmem:[%s6166 + $0x368] sm:$0xff]
    %v6277 = vld [vmem:[%s6166 + $0x370] sm:$0xff]
    %v6278 = vld [vmem:[%s6166 + $0x378] sm:$0xff]
    %v6279 = vld [vmem:[%s6166 + $0x380] sm:$0xff]
    %v6280 = vld [vmem:[%s6166 + $0x388] sm:$0xff]
    %v6281 = vld [vmem:[%s6166 + $0x390] sm:$0xff]
    %v6282 = vld [vmem:[%s6166 + $0x398] sm:$0xff]
    %v6283 = vld [vmem:[%s6166 + $0x3a0] sm:$0xff]
    %v6284 = vld [vmem:[%s6166 + $0x3a8] sm:$0xff]
    %v6285 = vld [vmem:[%s6166 + $0x3b0] sm:$0xff]
    %v6286 = vld [vmem:[%s6166 + $0x3b8] sm:$0xff]
    %v6287 = vld [vmem:[%s6166 + $0x3c0] sm:$0xff]
    %v6288 = vld [vmem:[%s6166 + $0x3c8] sm:$0xff]
    %v6289 = vld [vmem:[%s6166 + $0x3d0] sm:$0xff]
    %v6290 = vld [vmem:[%s6166 + $0x3d8] sm:$0xff]
    %v6291 = vld [vmem:[%s6166 + $0x3e0] sm:$0xff]
    %v6292 = vld [vmem:[%s6166 + $0x3e8] sm:$0xff]
    %v6293 = vld [vmem:[%s6166 + $0x3f0] sm:$0xff]
    %v6294 = vld [vmem:[%s6166 + $0x3f8] sm:$0xff]
    %v6295 = vld [vmem:[%s6166 + $0x400] sm:$0xff]
    %v6296 = vld [vmem:[%s6166 + $0x408] sm:$0xff]
    %v6297 = vld [vmem:[%s6166 + $0x410] sm:$0xff]
    %v6298 = vld [vmem:[%s6166 + $0x418] sm:$0xff]
    %v6299 = vld [vmem:[%s6166 + $0x420] sm:$0xff]
    %v6300 = vld [vmem:[%s6166 + $0x428] sm:$0xff]
    %v6301 = vld [vmem:[%s6166 + $0x430] sm:$0xff]
    %v6302 = vld [vmem:[%s6166 + $0x438] sm:$0xff]
    %v6303 = vld [vmem:[%s6166 + $0x440] sm:$0xff]
    %v6304 = vld [vmem:[%s6166 + $0x448] sm:$0xff]
    %v6305 = vld [vmem:[%s6166 + $0x450] sm:$0xff]
    %v6306 = vld [vmem:[%s6166 + $0x458] sm:$0xff]
    %v6307 = vld [vmem:[%s6166 + $0x460] sm:$0xff]
    %v6308 = vld [vmem:[%s6166 + $0x468] sm:$0xff]
    %v6309 = vld [vmem:[%s6166 + $0x470] sm:$0xff]
    %v6310 = vld [vmem:[%s6166 + $0x478] sm:$0xff]
    %v6311 = vld [vmem:[%s6166 + $0x480] sm:$0xff]
    %v6312 = vld [vmem:[%s6166 + $0x488] sm:$0xff]
    %v6313 = vld [vmem:[%s6166 + $0x490] sm:$0xff]
    %v6314 = vld [vmem:[%s6166 + $0x498] sm:$0xff]
    %v6315 = vld [vmem:[%s6166 + $0x4a0] sm:$0xff]
    %v6316 = vld [vmem:[%s6166 + $0x4a8] sm:$0xff]
    %v6317 = vld [vmem:[%s6166 + $0x4b0] sm:$0xff]
    %v6318 = vld [vmem:[%s6166 + $0x4b8] sm:$0xff]
    %v6319 = vld [vmem:[%s6166 + $0x4c0] sm:$0xff]
    %v6320 = vld [vmem:[%s6166 + $0x4c8] sm:$0xff]
    %v6321 = vld [vmem:[%s6166 + $0x4d0] sm:$0xff]
    %v6322 = vld [vmem:[%s6166 + $0x4d8] sm:$0xff]
    %v6323 = vld [vmem:[%s6166 + $0x4e0] sm:$0xff]
    %v6324 = vld [vmem:[%s6166 + $0x4e8] sm:$0xff]
    %v6325 = vld [vmem:[%s6166 + $0x4f0] sm:$0xff]
    %v6326 = vld [vmem:[%s6166 + $0x4f8] sm:$0xff]
    %v6327 = vld [vmem:[%s6166 + $0x500] sm:$0xff]
    %v6328 = vld [vmem:[%s6166 + $0x508] sm:$0xff]
    %v6329 = vld [vmem:[%s6166 + $0x510] sm:$0xff]
    %v6330 = vld [vmem:[%s6166 + $0x518] sm:$0xff]
    %v6331 = vld [vmem:[%s6166 + $0x520] sm:$0xff]
    %v6332 = vld [vmem:[%s6166 + $0x528] sm:$0xff]
    %v6333 = vld [vmem:[%s6166 + $0x530] sm:$0xff]
    %v6334 = vld [vmem:[%s6166 + $0x538] sm:$0xff]
    %v6335 = vld [vmem:[%s6166 + $0x540] sm:$0xff]
    %v6336 = vld [vmem:[%s6166 + $0x548] sm:$0xff]
    %v6337 = vld [vmem:[%s6166 + $0x550] sm:$0xff]
    %v6338 = vld [vmem:[%s6166 + $0x558] sm:$0xff]
    %v6339 = vld [vmem:[%s6166 + $0x560] sm:$0xff]
    %v6340 = vld [vmem:[%s6166 + $0x568] sm:$0xff]
    %v6341 = vld [vmem:[%s6166 + $0x570] sm:$0xff]
    %v6342 = vld [vmem:[%s6166 + $0x578] sm:$0xff]
    %v6343 = vld [vmem:[%s6166 + $0x580] sm:$0xff]
    %v6344 = vld [vmem:[%s6166 + $0x588] sm:$0xff]
    %v6345 = vld [vmem:[%s6166 + $0x590] sm:$0xff]
    %v6346 = vld [vmem:[%s6166 + $0x598] sm:$0xff]
    %v6347 = vld [vmem:[%s6166 + $0x5a0] sm:$0xff]
    %v6348 = vld [vmem:[%s6166 + $0x5a8] sm:$0xff]
    %v6349 = vld [vmem:[%s6166 + $0x5b0] sm:$0xff]
    %v6350 = vld [vmem:[%s6166 + $0x5b8] sm:$0xff]
    %v6351 = vld [vmem:[%s6166 + $0x5c0] sm:$0xff]
    %v6352 = vld [vmem:[%s6166 + $0x5c8] sm:$0xff]
    %v6353 = vld [vmem:[%s6166 + $0x5d0] sm:$0xff]
    %v6354 = vld [vmem:[%s6166 + $0x5d8] sm:$0xff]
    %v6355 = vld [vmem:[%s6166 + $0x5e0] sm:$0xff]
    %v6356 = vld [vmem:[%s6166 + $0x5e8] sm:$0xff]
    %v6357 = vld [vmem:[%s6166 + $0x5f0] sm:$0xff]
    %v6358 = vld [vmem:[%s6166 + $0x5f8] sm:$0xff]
    %v6359 = vld [vmem:[%s6166 + $0x600] sm:$0xff]
    %v6360 = vld [vmem:[%s6166 + $0x608] sm:$0xff]
    %v6361 = vld [vmem:[%s6166 + $0x610] sm:$0xff]
    %v6362 = vld [vmem:[%s6166 + $0x618] sm:$0xff]
    %v6363 = vld [vmem:[%s6166 + $0x620] sm:$0xff]
    %v6364 = vld [vmem:[%s6166 + $0x628] sm:$0xff]
    %v6365 = vld [vmem:[%s6166 + $0x630] sm:$0xff]
    %v6366 = vld [vmem:[%s6166 + $0x638] sm:$0xff]
    %v6367 = vld [vmem:[%s6166 + $0x640] sm:$0xff]
    %v6368 = vld [vmem:[%s6166 + $0x648] sm:$0xff]
    %v6369 = vld [vmem:[%s6166 + $0x650] sm:$0xff]
    %v6370 = vld [vmem:[%s6166 + $0x658] sm:$0xff]
    %v6371 = vld [vmem:[%s6166 + $0x660] sm:$0xff]
    %v6372 = vld [vmem:[%s6166 + $0x668] sm:$0xff]
    %v6373 = vld [vmem:[%s6166 + $0x670] sm:$0xff]
    %v6374 = vld [vmem:[%s6166 + $0x678] sm:$0xff]
    %v6375 = vld [vmem:[%s6166 + $0x680] sm:$0xff]
    %v6376 = vld [vmem:[%s6166 + $0x688] sm:$0xff]
    %v6377 = vld [vmem:[%s6166 + $0x690] sm:$0xff]
    %v6378 = vld [vmem:[%s6166 + $0x698] sm:$0xff]
    %v6379 = vld [vmem:[%s6166 + $0x6a0] sm:$0xff]
    %v6380 = vld [vmem:[%s6166 + $0x6a8] sm:$0xff]
    %v6381 = vld [vmem:[%s6166 + $0x6b0] sm:$0xff]
    %v6382 = vld [vmem:[%s6166 + $0x6b8] sm:$0xff]
    %v6383 = vld [vmem:[%s6166 + $0x6c0] sm:$0xff]
    %v6384 = vld [vmem:[%s6166 + $0x6c8] sm:$0xff]
    %v6385 = vld [vmem:[%s6166 + $0x6d0] sm:$0xff]
    %v6386 = vld [vmem:[%s6166 + $0x6d8] sm:$0xff]
    %v6387 = vld [vmem:[%s6166 + $0x6e0] sm:$0xff]
    %v6388 = vld [vmem:[%s6166 + $0x6e8] sm:$0xff]
    %v6389 = vld [vmem:[%s6166 + $0x6f0] sm:$0xff]
    %v6390 = vld [vmem:[%s6166 + $0x6f8] sm:$0xff]
    %v6391 = vld [vmem:[%s6166 + $0x700] sm:$0xff]
    %v6392 = vld [vmem:[%s6166 + $0x708] sm:$0xff]
    %v6393 = vld [vmem:[%s6166 + $0x710] sm:$0xff]
    %v6394 = vld [vmem:[%s6166 + $0x718] sm:$0xff]
    %v6395 = vld [vmem:[%s6166 + $0x720] sm:$0xff]
    %v6396 = vld [vmem:[%s6166 + $0x728] sm:$0xff]
    %v6397 = vld [vmem:[%s6166 + $0x730] sm:$0xff]
    %v6398 = vld [vmem:[%s6166 + $0x738] sm:$0xff]
    %v6399 = vld [vmem:[%s6166 + $0x740] sm:$0xff]
    %v6400 = vld [vmem:[%s6166 + $0x748] sm:$0xff]
    %v6401 = vld [vmem:[%s6166 + $0x750] sm:$0xff]
    %v6402 = vld [vmem:[%s6166 + $0x758] sm:$0xff]
    %v6403 = vld [vmem:[%s6166 + $0x760] sm:$0xff]
    %v6404 = vld [vmem:[%s6166 + $0x768] sm:$0xff]
    %v6405 = vld [vmem:[%s6166 + $0x770] sm:$0xff]
    %v6406 = vld [vmem:[%s6166 + $0x778] sm:$0xff]
    %v6407 = vld [vmem:[%s6166 + $0x780] sm:$0xff]
    %v6408 = vld [vmem:[%s6166 + $0x788] sm:$0xff]
    %v6409 = vld [vmem:[%s6166 + $0x790] sm:$0xff]
    %v6410 = vld [vmem:[%s6166 + $0x798] sm:$0xff]
    %v6411 = vld [vmem:[%s6166 + $0x7a0] sm:$0xff]
    %v6412 = vld [vmem:[%s6166 + $0x7a8] sm:$0xff]
    %v6413 = vld [vmem:[%s6166 + $0x7b0] sm:$0xff]
    %v6414 = vld [vmem:[%s6166 + $0x7b8] sm:$0xff]
    %v6415 = vld [vmem:[%s6166 + $0x7c0] sm:$0xff]
    %v6416 = vld [vmem:[%s6166 + $0x7c8] sm:$0xff]
    %v6417 = vld [vmem:[%s6166 + $0x7d0] sm:$0xff]
    %v6418 = vld [vmem:[%s6166 + $0x7d8] sm:$0xff]
    %v6419 = vld [vmem:[%s6166 + $0x7e0] sm:$0xff]
    %v6420 = vld [vmem:[%s6166 + $0x7e8] sm:$0xff]
    %v6421 = vld [vmem:[%s6166 + $0x7f0] sm:$0xff]
    %v6422 = vld [vmem:[%s6166 + $0x7f8] sm:$0xff]
    %v6679 = vunpack.c.l.b16 %v6167
    %v6680 = vunpack.c.h.b16 %v6167
    %v6681 = vunpack.c.l.b16 %v6168
    %v6682 = vunpack.c.h.b16 %v6168
    %v6683 = vunpack.c.l.b16 %v6169
    %v6684 = vunpack.c.h.b16 %v6169
    %v6685 = vunpack.c.l.b16 %v6170
    %v6686 = vunpack.c.h.b16 %v6170
    %v6687 = vunpack.c.l.b16 %v6171
    %v6688 = vunpack.c.h.b16 %v6171
    %v6689 = vunpack.c.l.b16 %v6172
    %v6690 = vunpack.c.h.b16 %v6172
    %v6691 = vunpack.c.l.b16 %v6173
    %v6692 = vunpack.c.h.b16 %v6173
    %v6693 = vunpack.c.l.b16 %v6174
    %v6694 = vunpack.c.h.b16 %v6174
    %v6695 = vunpack.c.l.b16 %v6175
    %v6696 = vunpack.c.h.b16 %v6175
    %v6697 = vunpack.c.l.b16 %v6176
    %v6698 = vunpack.c.h.b16 %v6176
    %v6699 = vunpack.c.l.b16 %v6177
    %v6700 = vunpack.c.h.b16 %v6177
    %v6701 = vunpack.c.l.b16 %v6178
    %v6702 = vunpack.c.h.b16 %v6178
    %v6703 = vunpack.c.l.b16 %v6179
    %v6704 = vunpack.c.h.b16 %v6179
    %v6705 = vunpack.c.l.b16 %v6180
    %v6706 = vunpack.c.h.b16 %v6180
    %v6707 = vunpack.c.l.b16 %v6181
    %v6708 = vunpack.c.h.b16 %v6181
    %v6709 = vunpack.c.l.b16 %v6182
    %v6710 = vunpack.c.h.b16 %v6182
    %v6711 = vunpack.c.l.b16 %v6183
    %v6712 = vunpack.c.h.b16 %v6183
    %v6713 = vunpack.c.l.b16 %v6184
    %v6714 = vunpack.c.h.b16 %v6184
    %v6715 = vunpack.c.l.b16 %v6185
    %v6716 = vunpack.c.h.b16 %v6185
    %v6717 = vunpack.c.l.b16 %v6186
    %v6718 = vunpack.c.h.b16 %v6186
    %v6719 = vunpack.c.l.b16 %v6187
    %v6720 = vunpack.c.h.b16 %v6187
    %v6721 = vunpack.c.l.b16 %v6188
    %v6722 = vunpack.c.h.b16 %v6188
    %v6723 = vunpack.c.l.b16 %v6189
    %v6724 = vunpack.c.h.b16 %v6189
    %v6725 = vunpack.c.l.b16 %v6190
    %v6726 = vunpack.c.h.b16 %v6190
    %v6727 = vunpack.c.l.b16 %v6191
    %v6728 = vunpack.c.h.b16 %v6191
    %v6729 = vunpack.c.l.b16 %v6192
    %v6730 = vunpack.c.h.b16 %v6192
    %v6731 = vunpack.c.l.b16 %v6193
    %v6732 = vunpack.c.h.b16 %v6193
    %v6733 = vunpack.c.l.b16 %v6194
    %v6734 = vunpack.c.h.b16 %v6194
    %v6735 = vunpack.c.l.b16 %v6195
    %v6736 = vunpack.c.h.b16 %v6195
    %v6737 = vunpack.c.l.b16 %v6196
    %v6738 = vunpack.c.h.b16 %v6196
    %v6739 = vunpack.c.l.b16 %v6197
    %v6740 = vunpack.c.h.b16 %v6197
    %v6741 = vunpack.c.l.b16 %v6198
    %v6742 = vunpack.c.h.b16 %v6198
    %v6743 = vunpack.c.l.b16 %v6199
    %v6744 = vunpack.c.h.b16 %v6199
    %v6745 = vunpack.c.l.b16 %v6200
    %v6746 = vunpack.c.h.b16 %v6200
    %v6747 = vunpack.c.l.b16 %v6201
    %v6748 = vunpack.c.h.b16 %v6201
    %v6749 = vunpack.c.l.b16 %v6202
    %v6750 = vunpack.c.h.b16 %v6202
    %v6751 = vunpack.c.l.b16 %v6203
    %v6752 = vunpack.c.h.b16 %v6203
    %v6753 = vunpack.c.l.b16 %v6204
    %v6754 = vunpack.c.h.b16 %v6204
    %v6755 = vunpack.c.l.b16 %v6205
    %v6756 = vunpack.c.h.b16 %v6205
    %v6757 = vunpack.c.l.b16 %v6206
    %v6758 = vunpack.c.h.b16 %v6206
    %v6759 = vunpack.c.l.b16 %v6207
    %v6760 = vunpack.c.h.b16 %v6207
    %v6761 = vunpack.c.l.b16 %v6208
    %v6762 = vunpack.c.h.b16 %v6208
    %v6763 = vunpack.c.l.b16 %v6209
    %v6764 = vunpack.c.h.b16 %v6209
    %v6765 = vunpack.c.l.b16 %v6210
    %v6766 = vunpack.c.h.b16 %v6210
    %v6767 = vunpack.c.l.b16 %v6211
    %v6768 = vunpack.c.h.b16 %v6211
    %v6769 = vunpack.c.l.b16 %v6212
    %v6770 = vunpack.c.h.b16 %v6212
    %v6771 = vunpack.c.l.b16 %v6213
    %v6772 = vunpack.c.h.b16 %v6213
    %v6773 = vunpack.c.l.b16 %v6214
    %v6774 = vunpack.c.h.b16 %v6214
    %v6775 = vunpack.c.l.b16 %v6215
    %v6776 = vunpack.c.h.b16 %v6215
    %v6777 = vunpack.c.l.b16 %v6216
    %v6778 = vunpack.c.h.b16 %v6216
    %v6779 = vunpack.c.l.b16 %v6217
    %v6780 = vunpack.c.h.b16 %v6217
    %v6781 = vunpack.c.l.b16 %v6218
    %v6782 = vunpack.c.h.b16 %v6218
    %v6783 = vunpack.c.l.b16 %v6219
    %v6784 = vunpack.c.h.b16 %v6219
    %v6785 = vunpack.c.l.b16 %v6220
    %v6786 = vunpack.c.h.b16 %v6220
    %v6787 = vunpack.c.l.b16 %v6221
    %v6788 = vunpack.c.h.b16 %v6221
    %v6789 = vunpack.c.l.b16 %v6222
    %v6790 = vunpack.c.h.b16 %v6222
    %v6791 = vunpack.c.l.b16 %v6223
    %v6792 = vunpack.c.h.b16 %v6223
    %v6793 = vunpack.c.l.b16 %v6224
    %v6794 = vunpack.c.h.b16 %v6224
    %v6795 = vunpack.c.l.b16 %v6225
    %v6796 = vunpack.c.h.b16 %v6225
    %v6797 = vunpack.c.l.b16 %v6226
    %v6798 = vunpack.c.h.b16 %v6226
    %v6799 = vunpack.c.l.b16 %v6227
    %v6800 = vunpack.c.h.b16 %v6227
    %v6801 = vunpack.c.l.b16 %v6228
    %v6802 = vunpack.c.h.b16 %v6228
    %v6803 = vunpack.c.l.b16 %v6229
    %v6804 = vunpack.c.h.b16 %v6229
    %v6805 = vunpack.c.l.b16 %v6230
    %v6806 = vunpack.c.h.b16 %v6230
    %v6807 = vunpack.c.l.b16 %v6231
    %v6808 = vunpack.c.h.b16 %v6231
    %v6809 = vunpack.c.l.b16 %v6232
    %v6810 = vunpack.c.h.b16 %v6232
    %v6811 = vunpack.c.l.b16 %v6233
    %v6812 = vunpack.c.h.b16 %v6233
    %v6813 = vunpack.c.l.b16 %v6234
    %v6814 = vunpack.c.h.b16 %v6234
    %v6815 = vunpack.c.l.b16 %v6235
    %v6816 = vunpack.c.h.b16 %v6235
    %v6817 = vunpack.c.l.b16 %v6236
    %v6818 = vunpack.c.h.b16 %v6236
    %v6819 = vunpack.c.l.b16 %v6237
    %v6820 = vunpack.c.h.b16 %v6237
    %v6821 = vunpack.c.l.b16 %v6238
    %v6822 = vunpack.c.h.b16 %v6238
    %v6823 = vunpack.c.l.b16 %v6239
    %v6824 = vunpack.c.h.b16 %v6239
    %v6825 = vunpack.c.l.b16 %v6240
    %v6826 = vunpack.c.h.b16 %v6240
    %v6827 = vunpack.c.l.b16 %v6241
    %v6828 = vunpack.c.h.b16 %v6241
    %v6829 = vunpack.c.l.b16 %v6242
    %v6830 = vunpack.c.h.b16 %v6242
    %v6831 = vunpack.c.l.b16 %v6243
    %v6832 = vunpack.c.h.b16 %v6243
    %v6833 = vunpack.c.l.b16 %v6244
    %v6834 = vunpack.c.h.b16 %v6244
    %v6835 = vunpack.c.l.b16 %v6245
    %v6836 = vunpack.c.h.b16 %v6245
    %v6837 = vunpack.c.l.b16 %v6246
    %v6838 = vunpack.c.h.b16 %v6246
    %v6839 = vunpack.c.l.b16 %v6247
    %v6840 = vunpack.c.h.b16 %v6247
    %v6841 = vunpack.c.l.b16 %v6248
    %v6842 = vunpack.c.h.b16 %v6248
    %v6843 = vunpack.c.l.b16 %v6249
    %v6844 = vunpack.c.h.b16 %v6249
    %v6845 = vunpack.c.l.b16 %v6250
    %v6846 = vunpack.c.h.b16 %v6250
    %v6847 = vunpack.c.l.b16 %v6251
    %v6848 = vunpack.c.h.b16 %v6251
    %v6849 = vunpack.c.l.b16 %v6252
    %v6850 = vunpack.c.h.b16 %v6252
    %v6851 = vunpack.c.l.b16 %v6253
    %v6852 = vunpack.c.h.b16 %v6253
    %v6853 = vunpack.c.l.b16 %v6254
    %v6854 = vunpack.c.h.b16 %v6254
    %v6855 = vunpack.c.l.b16 %v6255
    %v6856 = vunpack.c.h.b16 %v6255
    %v6857 = vunpack.c.l.b16 %v6256
    %v6858 = vunpack.c.h.b16 %v6256
    %v6859 = vunpack.c.l.b16 %v6257
    %v6860 = vunpack.c.h.b16 %v6257
    %v6861 = vunpack.c.l.b16 %v6258
    %v6862 = vunpack.c.h.b16 %v6258
    %v6863 = vunpack.c.l.b16 %v6259
    %v6864 = vunpack.c.h.b16 %v6259
    %v6865 = vunpack.c.l.b16 %v6260
    %v6866 = vunpack.c.h.b16 %v6260
    %v6867 = vunpack.c.l.b16 %v6261
    %v6868 = vunpack.c.h.b16 %v6261
    %v6869 = vunpack.c.l.b16 %v6262
    %v6870 = vunpack.c.h.b16 %v6262
    %v6871 = vunpack.c.l.b16 %v6263
    %v6872 = vunpack.c.h.b16 %v6263
    %v6873 = vunpack.c.l.b16 %v6264
    %v6874 = vunpack.c.h.b16 %v6264
    %v6875 = vunpack.c.l.b16 %v6265
    %v6876 = vunpack.c.h.b16 %v6265
    %v6877 = vunpack.c.l.b16 %v6266
    %v6878 = vunpack.c.h.b16 %v6266
    %v6879 = vunpack.c.l.b16 %v6267
    %v6880 = vunpack.c.h.b16 %v6267
    %v6881 = vunpack.c.l.b16 %v6268
    %v6882 = vunpack.c.h.b16 %v6268
    %v6883 = vunpack.c.l.b16 %v6269
    %v6884 = vunpack.c.h.b16 %v6269
    %v6885 = vunpack.c.l.b16 %v6270
    %v6886 = vunpack.c.h.b16 %v6270
    %v6887 = vunpack.c.l.b16 %v6271
    %v6888 = vunpack.c.h.b16 %v6271
    %v6889 = vunpack.c.l.b16 %v6272
    %v6890 = vunpack.c.h.b16 %v6272
    %v6891 = vunpack.c.l.b16 %v6273
    %v6892 = vunpack.c.h.b16 %v6273
    %v6893 = vunpack.c.l.b16 %v6274
    %v6894 = vunpack.c.h.b16 %v6274
    %v6895 = vunpack.c.l.b16 %v6275
    %v6896 = vunpack.c.h.b16 %v6275
    %v6897 = vunpack.c.l.b16 %v6276
    %v6898 = vunpack.c.h.b16 %v6276
    %v6899 = vunpack.c.l.b16 %v6277
    %v6900 = vunpack.c.h.b16 %v6277
    %v6901 = vunpack.c.l.b16 %v6278
    %v6902 = vunpack.c.h.b16 %v6278
    %v6903 = vunpack.c.l.b16 %v6279
    %v6904 = vunpack.c.h.b16 %v6279
    %v6905 = vunpack.c.l.b16 %v6280
    %v6906 = vunpack.c.h.b16 %v6280
    %v6907 = vunpack.c.l.b16 %v6281
    %v6908 = vunpack.c.h.b16 %v6281
    %v6909 = vunpack.c.l.b16 %v6282
    %v6910 = vunpack.c.h.b16 %v6282
    %v6911 = vunpack.c.l.b16 %v6283
    %v6912 = vunpack.c.h.b16 %v6283
    %v6913 = vunpack.c.l.b16 %v6284
    %v6914 = vunpack.c.h.b16 %v6284
    %v6915 = vunpack.c.l.b16 %v6285
    %v6916 = vunpack.c.h.b16 %v6285
    %v6917 = vunpack.c.l.b16 %v6286
    %v6918 = vunpack.c.h.b16 %v6286
    %v6919 = vunpack.c.l.b16 %v6287
    %v6920 = vunpack.c.h.b16 %v6287
    %v6921 = vunpack.c.l.b16 %v6288
    %v6922 = vunpack.c.h.b16 %v6288
    %v6923 = vunpack.c.l.b16 %v6289
    %v6924 = vunpack.c.h.b16 %v6289
    %v6925 = vunpack.c.l.b16 %v6290
    %v6926 = vunpack.c.h.b16 %v6290
    %v6927 = vunpack.c.l.b16 %v6291
    %v6928 = vunpack.c.h.b16 %v6291
    %v6929 = vunpack.c.l.b16 %v6292
    %v6930 = vunpack.c.h.b16 %v6292
    %v6931 = vunpack.c.l.b16 %v6293
    %v6932 = vunpack.c.h.b16 %v6293
    %v6933 = vunpack.c.l.b16 %v6294
    %v6934 = vunpack.c.h.b16 %v6294
    %v6935 = vunpack.c.l.b16 %v6295
    %v6936 = vunpack.c.h.b16 %v6295
    %v6937 = vunpack.c.l.b16 %v6296
    %v6938 = vunpack.c.h.b16 %v6296
    %v6939 = vunpack.c.l.b16 %v6297
    %v6940 = vunpack.c.h.b16 %v6297
    %v6941 = vunpack.c.l.b16 %v6298
    %v6942 = vunpack.c.h.b16 %v6298
    %v6943 = vunpack.c.l.b16 %v6299
    %v6944 = vunpack.c.h.b16 %v6299
    %v6945 = vunpack.c.l.b16 %v6300
    %v6946 = vunpack.c.h.b16 %v6300
    %v6947 = vunpack.c.l.b16 %v6301
    %v6948 = vunpack.c.h.b16 %v6301
    %v6949 = vunpack.c.l.b16 %v6302
    %v6950 = vunpack.c.h.b16 %v6302
    %v6951 = vunpack.c.l.b16 %v6303
    %v6952 = vunpack.c.h.b16 %v6303
    %v6953 = vunpack.c.l.b16 %v6304
    %v6954 = vunpack.c.h.b16 %v6304
    %v6955 = vunpack.c.l.b16 %v6305
    %v6956 = vunpack.c.h.b16 %v6305
    %v6957 = vunpack.c.l.b16 %v6306
    %v6958 = vunpack.c.h.b16 %v6306
    %v6959 = vunpack.c.l.b16 %v6307
    %v6960 = vunpack.c.h.b16 %v6307
    %v6961 = vunpack.c.l.b16 %v6308
    %v6962 = vunpack.c.h.b16 %v6308
    %v6963 = vunpack.c.l.b16 %v6309
    %v6964 = vunpack.c.h.b16 %v6309
    %v6965 = vunpack.c.l.b16 %v6310
    %v6966 = vunpack.c.h.b16 %v6310
    %v6967 = vunpack.c.l.b16 %v6311
    %v6968 = vunpack.c.h.b16 %v6311
    %v6969 = vunpack.c.l.b16 %v6312
    %v6970 = vunpack.c.h.b16 %v6312
    %v6971 = vunpack.c.l.b16 %v6313
    %v6972 = vunpack.c.h.b16 %v6313
    %v6973 = vunpack.c.l.b16 %v6314
    %v6974 = vunpack.c.h.b16 %v6314
    %v6975 = vunpack.c.l.b16 %v6315
    %v6976 = vunpack.c.h.b16 %v6315
    %v6977 = vunpack.c.l.b16 %v6316
    %v6978 = vunpack.c.h.b16 %v6316
    %v6979 = vunpack.c.l.b16 %v6317
    %v6980 = vunpack.c.h.b16 %v6317
    %v6981 = vunpack.c.l.b16 %v6318
    %v6982 = vunpack.c.h.b16 %v6318
    %v6983 = vunpack.c.l.b16 %v6319
    %v6984 = vunpack.c.h.b16 %v6319
    %v6985 = vunpack.c.l.b16 %v6320
    %v6986 = vunpack.c.h.b16 %v6320
    %v6987 = vunpack.c.l.b16 %v6321
    %v6988 = vunpack.c.h.b16 %v6321
    %v6989 = vunpack.c.l.b16 %v6322
    %v6990 = vunpack.c.h.b16 %v6322
    %v6991 = vunpack.c.l.b16 %v6323
    %v6992 = vunpack.c.h.b16 %v6323
    %v6993 = vunpack.c.l.b16 %v6324
    %v6994 = vunpack.c.h.b16 %v6324
    %v6995 = vunpack.c.l.b16 %v6325
    %v6996 = vunpack.c.h.b16 %v6325
    %v6997 = vunpack.c.l.b16 %v6326
    %v6998 = vunpack.c.h.b16 %v6326
    %v6999 = vunpack.c.l.b16 %v6327
    %v7000 = vunpack.c.h.b16 %v6327
    %v7001 = vunpack.c.l.b16 %v6328
    %v7002 = vunpack.c.h.b16 %v6328
    %v7003 = vunpack.c.l.b16 %v6329
    %v7004 = vunpack.c.h.b16 %v6329
    %v7005 = vunpack.c.l.b16 %v6330
    %v7006 = vunpack.c.h.b16 %v6330
    %v7007 = vunpack.c.l.b16 %v6331
    %v7008 = vunpack.c.h.b16 %v6331
    %v7009 = vunpack.c.l.b16 %v6332
    %v7010 = vunpack.c.h.b16 %v6332
    %v7011 = vunpack.c.l.b16 %v6333
    %v7012 = vunpack.c.h.b16 %v6333
    %v7013 = vunpack.c.l.b16 %v6334
    %v7014 = vunpack.c.h.b16 %v6334
    %v7015 = vunpack.c.l.b16 %v6335
    %v7016 = vunpack.c.h.b16 %v6335
    %v7017 = vunpack.c.l.b16 %v6336
    %v7018 = vunpack.c.h.b16 %v6336
    %v7019 = vunpack.c.l.b16 %v6337
    %v7020 = vunpack.c.h.b16 %v6337
    %v7021 = vunpack.c.l.b16 %v6338
    %v7022 = vunpack.c.h.b16 %v6338
    %v7023 = vunpack.c.l.b16 %v6339
    %v7024 = vunpack.c.h.b16 %v6339
    %v7025 = vunpack.c.l.b16 %v6340
    %v7026 = vunpack.c.h.b16 %v6340
    %v7027 = vunpack.c.l.b16 %v6341
    %v7028 = vunpack.c.h.b16 %v6341
    %v7029 = vunpack.c.l.b16 %v6342
    %v7030 = vunpack.c.h.b16 %v6342
    %v7031 = vunpack.c.l.b16 %v6343
    %v7032 = vunpack.c.h.b16 %v6343
    %v7033 = vunpack.c.l.b16 %v6344
    %v7034 = vunpack.c.h.b16 %v6344
    %v7035 = vunpack.c.l.b16 %v6345
    %v7036 = vunpack.c.h.b16 %v6345
    %v7037 = vunpack.c.l.b16 %v6346
    %v7038 = vunpack.c.h.b16 %v6346
    %v7039 = vunpack.c.l.b16 %v6347
    %v7040 = vunpack.c.h.b16 %v6347
    %v7041 = vunpack.c.l.b16 %v6348
    %v7042 = vunpack.c.h.b16 %v6348
    %v7043 = vunpack.c.l.b16 %v6349
    %v7044 = vunpack.c.h.b16 %v6349
    %v7045 = vunpack.c.l.b16 %v6350
    %v7046 = vunpack.c.h.b16 %v6350
    %v7047 = vunpack.c.l.b16 %v6351
    %v7048 = vunpack.c.h.b16 %v6351
    %v7049 = vunpack.c.l.b16 %v6352
    %v7050 = vunpack.c.h.b16 %v6352
    %v7051 = vunpack.c.l.b16 %v6353
    %v7052 = vunpack.c.h.b16 %v6353
    %v7053 = vunpack.c.l.b16 %v6354
    %v7054 = vunpack.c.h.b16 %v6354
    %v7055 = vunpack.c.l.b16 %v6355
    %v7056 = vunpack.c.h.b16 %v6355
    %v7057 = vunpack.c.l.b16 %v6356
    %v7058 = vunpack.c.h.b16 %v6356
    %v7059 = vunpack.c.l.b16 %v6357
    %v7060 = vunpack.c.h.b16 %v6357
    %v7061 = vunpack.c.l.b16 %v6358
    %v7062 = vunpack.c.h.b16 %v6358
    %v7063 = vunpack.c.l.b16 %v6359
    %v7064 = vunpack.c.h.b16 %v6359
    %v7065 = vunpack.c.l.b16 %v6360
    %v7066 = vunpack.c.h.b16 %v6360
    %v7067 = vunpack.c.l.b16 %v6361
    %v7068 = vunpack.c.h.b16 %v6361
    %v7069 = vunpack.c.l.b16 %v6362
    %v7070 = vunpack.c.h.b16 %v6362
    %v7071 = vunpack.c.l.b16 %v6363
    %v7072 = vunpack.c.h.b16 %v6363
    %v7073 = vunpack.c.l.b16 %v6364
    %v7074 = vunpack.c.h.b16 %v6364
    %v7075 = vunpack.c.l.b16 %v6365
    %v7076 = vunpack.c.h.b16 %v6365
    %v7077 = vunpack.c.l.b16 %v6366
    %v7078 = vunpack.c.h.b16 %v6366
    %v7079 = vunpack.c.l.b16 %v6367
    %v7080 = vunpack.c.h.b16 %v6367
    %v7081 = vunpack.c.l.b16 %v6368
    %v7082 = vunpack.c.h.b16 %v6368
    %v7083 = vunpack.c.l.b16 %v6369
    %v7084 = vunpack.c.h.b16 %v6369
    %v7085 = vunpack.c.l.b16 %v6370
    %v7086 = vunpack.c.h.b16 %v6370
    %v7087 = vunpack.c.l.b16 %v6371
    %v7088 = vunpack.c.h.b16 %v6371
    %v7089 = vunpack.c.l.b16 %v6372
    %v7090 = vunpack.c.h.b16 %v6372
    %v7091 = vunpack.c.l.b16 %v6373
    %v7092 = vunpack.c.h.b16 %v6373
    %v7093 = vunpack.c.l.b16 %v6374
    %v7094 = vunpack.c.h.b16 %v6374
    %v7095 = vunpack.c.l.b16 %v6375
    %v7096 = vunpack.c.h.b16 %v6375
    %v7097 = vunpack.c.l.b16 %v6376
    %v7098 = vunpack.c.h.b16 %v6376
    %v7099 = vunpack.c.l.b16 %v6377
    %v7100 = vunpack.c.h.b16 %v6377
    %v7101 = vunpack.c.l.b16 %v6378
    %v7102 = vunpack.c.h.b16 %v6378
    %v7103 = vunpack.c.l.b16 %v6379
    %v7104 = vunpack.c.h.b16 %v6379
    %v7105 = vunpack.c.l.b16 %v6380
    %v7106 = vunpack.c.h.b16 %v6380
    %v7107 = vunpack.c.l.b16 %v6381
    %v7108 = vunpack.c.h.b16 %v6381
    %v7109 = vunpack.c.l.b16 %v6382
    %v7110 = vunpack.c.h.b16 %v6382
    %v7111 = vunpack.c.l.b16 %v6383
    %v7112 = vunpack.c.h.b16 %v6383
    %v7113 = vunpack.c.l.b16 %v6384
    %v7114 = vunpack.c.h.b16 %v6384
    %v7115 = vunpack.c.l.b16 %v6385
    %v7116 = vunpack.c.h.b16 %v6385
    %v7117 = vunpack.c.l.b16 %v6386
    %v7118 = vunpack.c.h.b16 %v6386
    %v7119 = vunpack.c.l.b16 %v6387
    %v7120 = vunpack.c.h.b16 %v6387
    %v7121 = vunpack.c.l.b16 %v6388
    %v7122 = vunpack.c.h.b16 %v6388
    %v7123 = vunpack.c.l.b16 %v6389
    %v7124 = vunpack.c.h.b16 %v6389
    %v7125 = vunpack.c.l.b16 %v6390
    %v7126 = vunpack.c.h.b16 %v6390
    %v7127 = vunpack.c.l.b16 %v6391
    %v7128 = vunpack.c.h.b16 %v6391
    %v7129 = vunpack.c.l.b16 %v6392
    %v7130 = vunpack.c.h.b16 %v6392
    %v7131 = vunpack.c.l.b16 %v6393
    %v7132 = vunpack.c.h.b16 %v6393
    %v7133 = vunpack.c.l.b16 %v6394
    %v7134 = vunpack.c.h.b16 %v6394
    %v7135 = vunpack.c.l.b16 %v6395
    %v7136 = vunpack.c.h.b16 %v6395
    %v7137 = vunpack.c.l.b16 %v6396
    %v7138 = vunpack.c.h.b16 %v6396
    %v7139 = vunpack.c.l.b16 %v6397
    %v7140 = vunpack.c.h.b16 %v6397
    %v7141 = vunpack.c.l.b16 %v6398
    %v7142 = vunpack.c.h.b16 %v6398
    %v7143 = vunpack.c.l.b16 %v6399
    %v7144 = vunpack.c.h.b16 %v6399
    %v7145 = vunpack.c.l.b16 %v6400
    %v7146 = vunpack.c.h.b16 %v6400
    %v7147 = vunpack.c.l.b16 %v6401
    %v7148 = vunpack.c.h.b16 %v6401
    %v7149 = vunpack.c.l.b16 %v6402
    %v7150 = vunpack.c.h.b16 %v6402
    %v7151 = vunpack.c.l.b16 %v6403
    %v7152 = vunpack.c.h.b16 %v6403
    %v7153 = vunpack.c.l.b16 %v6404
    %v7154 = vunpack.c.h.b16 %v6404
    %v7155 = vunpack.c.l.b16 %v6405
    %v7156 = vunpack.c.h.b16 %v6405
    %v7157 = vunpack.c.l.b16 %v6406
    %v7158 = vunpack.c.h.b16 %v6406
    %v7159 = vunpack.c.l.b16 %v6407
    %v7160 = vunpack.c.h.b16 %v6407
    %v7161 = vunpack.c.l.b16 %v6408
    %v7162 = vunpack.c.h.b16 %v6408
    %v7163 = vunpack.c.l.b16 %v6409
    %v7164 = vunpack.c.h.b16 %v6409
    %v7165 = vunpack.c.l.b16 %v6410
    %v7166 = vunpack.c.h.b16 %v6410
    %v7167 = vunpack.c.l.b16 %v6411
    %v7168 = vunpack.c.h.b16 %v6411
    %v7169 = vunpack.c.l.b16 %v6412
    %v7170 = vunpack.c.h.b16 %v6412
    %v7171 = vunpack.c.l.b16 %v6413
    %v7172 = vunpack.c.h.b16 %v6413
    %v7173 = vunpack.c.l.b16 %v6414
    %v7174 = vunpack.c.h.b16 %v6414
    %v7175 = vunpack.c.l.b16 %v6415
    %v7176 = vunpack.c.h.b16 %v6415
    %v7177 = vunpack.c.l.b16 %v6416
    %v7178 = vunpack.c.h.b16 %v6416
    %v7179 = vunpack.c.l.b16 %v6417
    %v7180 = vunpack.c.h.b16 %v6417
    %v7181 = vunpack.c.l.b16 %v6418
    %v7182 = vunpack.c.h.b16 %v6418
    %v7183 = vunpack.c.l.b16 %v6419
    %v7184 = vunpack.c.h.b16 %v6419
    %v7185 = vunpack.c.l.b16 %v6420
    %v7186 = vunpack.c.h.b16 %v6420
    %v7187 = vunpack.c.l.b16 %v6421
    %v7188 = vunpack.c.h.b16 %v6421
    %v7189 = vunpack.c.l.b16 %v6422
    %v7190 = vunpack.c.h.b16 %v6422
    %v7191 = vpack.c.b16 %v6683, %v6679
    %v7192 = vpack.c.b16 %v6684, %v6680
    %v7193 = vpack.c.b16 %v6685, %v6681
    %v7194 = vpack.c.b16 %v6686, %v6682
    %v7195 = vpack.c.b16 %v6691, %v6687
    %v7196 = vpack.c.b16 %v6692, %v6688
    %v7197 = vpack.c.b16 %v6693, %v6689
    %v7198 = vpack.c.b16 %v6694, %v6690
    %v7199 = vpack.c.b16 %v6699, %v6695
    %v7200 = vpack.c.b16 %v6700, %v6696
    %v7201 = vpack.c.b16 %v6701, %v6697
    %v7202 = vpack.c.b16 %v6702, %v6698
    %v7203 = vpack.c.b16 %v6707, %v6703
    %v7204 = vpack.c.b16 %v6708, %v6704
    %v7205 = vpack.c.b16 %v6709, %v6705
    %v7206 = vpack.c.b16 %v6710, %v6706
    %v7207 = vpack.c.b16 %v6715, %v6711
    %v7208 = vpack.c.b16 %v6716, %v6712
    %v7209 = vpack.c.b16 %v6717, %v6713
    %v7210 = vpack.c.b16 %v6718, %v6714
    %v7211 = vpack.c.b16 %v6723, %v6719
    %v7212 = vpack.c.b16 %v6724, %v6720
    %v7213 = vpack.c.b16 %v6725, %v6721
    %v7214 = vpack.c.b16 %v6726, %v6722
    %v7215 = vpack.c.b16 %v6731, %v6727
    %v7216 = vpack.c.b16 %v6732, %v6728
    %v7217 = vpack.c.b16 %v6733, %v6729
    %v7218 = vpack.c.b16 %v6734, %v6730
    %v7219 = vpack.c.b16 %v6739, %v6735
    %v7220 = vpack.c.b16 %v6740, %v6736
    %v7221 = vpack.c.b16 %v6741, %v6737
    %v7222 = vpack.c.b16 %v6742, %v6738
    %v7223 = vpack.c.b16 %v6747, %v6743
    %v7224 = vpack.c.b16 %v6748, %v6744
    %v7225 = vpack.c.b16 %v6749, %v6745
    %v7226 = vpack.c.b16 %v6750, %v6746
    %v7227 = vpack.c.b16 %v6755, %v6751
    %v7228 = vpack.c.b16 %v6756, %v6752
    %v7229 = vpack.c.b16 %v6757, %v6753
    %v7230 = vpack.c.b16 %v6758, %v6754
    %v7231 = vpack.c.b16 %v6763, %v6759
    %v7232 = vpack.c.b16 %v6764, %v6760
    %v7233 = vpack.c.b16 %v6765, %v6761
    %v7234 = vpack.c.b16 %v6766, %v6762
    %v7235 = vpack.c.b16 %v6771, %v6767
    %v7236 = vpack.c.b16 %v6772, %v6768
    %v7237 = vpack.c.b16 %v6773, %v6769
    %v7238 = vpack.c.b16 %v6774, %v6770
    %v7239 = vpack.c.b16 %v6779, %v6775
    %v7240 = vpack.c.b16 %v6780, %v6776
    %v7241 = vpack.c.b16 %v6781, %v6777
    %v7242 = vpack.c.b16 %v6782, %v6778
    %v7243 = vpack.c.b16 %v6787, %v6783
    %v7244 = vpack.c.b16 %v6788, %v6784
    %v7245 = vpack.c.b16 %v6789, %v6785
    %v7246 = vpack.c.b16 %v6790, %v6786
    %v7247 = vpack.c.b16 %v6795, %v6791
    %v7248 = vpack.c.b16 %v6796, %v6792
    %v7249 = vpack.c.b16 %v6797, %v6793
    %v7250 = vpack.c.b16 %v6798, %v6794
    %v7251 = vpack.c.b16 %v6803, %v6799
    %v7252 = vpack.c.b16 %v6804, %v6800
    %v7253 = vpack.c.b16 %v6805, %v6801
    %v7254 = vpack.c.b16 %v6806, %v6802
    %v7255 = vpack.c.b16 %v6811, %v6807
    %v7256 = vpack.c.b16 %v6812, %v6808
    %v7257 = vpack.c.b16 %v6813, %v6809
    %v7258 = vpack.c.b16 %v6814, %v6810
    %v7259 = vpack.c.b16 %v6819, %v6815
    %v7260 = vpack.c.b16 %v6820, %v6816
    %v7261 = vpack.c.b16 %v6821, %v6817
    %v7262 = vpack.c.b16 %v6822, %v6818
    %v7263 = vpack.c.b16 %v6827, %v6823
    %v7264 = vpack.c.b16 %v6828, %v6824
    %v7265 = vpack.c.b16 %v6829, %v6825
    %v7266 = vpack.c.b16 %v6830, %v6826
    %v7267 = vpack.c.b16 %v6835, %v6831
    %v7268 = vpack.c.b16 %v6836, %v6832
    %v7269 = vpack.c.b16 %v6837, %v6833
    %v7270 = vpack.c.b16 %v6838, %v6834
    %v7271 = vpack.c.b16 %v6843, %v6839
    %v7272 = vpack.c.b16 %v6844, %v6840
    %v7273 = vpack.c.b16 %v6845, %v6841
    %v7274 = vpack.c.b16 %v6846, %v6842
    %v7275 = vpack.c.b16 %v6851, %v6847
    %v7276 = vpack.c.b16 %v6852, %v6848
    %v7277 = vpack.c.b16 %v6853, %v6849
    %v7278 = vpack.c.b16 %v6854, %v6850
    %v7279 = vpack.c.b16 %v6859, %v6855
    %v7280 = vpack.c.b16 %v6860, %v6856
    %v7281 = vpack.c.b16 %v6861, %v6857
    %v7282 = vpack.c.b16 %v6862, %v6858
    %v7283 = vpack.c.b16 %v6867, %v6863
    %v7284 = vpack.c.b16 %v6868, %v6864
    %v7285 = vpack.c.b16 %v6869, %v6865
    %v7286 = vpack.c.b16 %v6870, %v6866
    %v7287 = vpack.c.b16 %v6875, %v6871
    %v7288 = vpack.c.b16 %v6876, %v6872
    %v7289 = vpack.c.b16 %v6877, %v6873
    %v7290 = vpack.c.b16 %v6878, %v6874
    %v7291 = vpack.c.b16 %v6883, %v6879
    %v7292 = vpack.c.b16 %v6884, %v6880
    %v7293 = vpack.c.b16 %v6885, %v6881
    %v7294 = vpack.c.b16 %v6886, %v6882
    %v7295 = vpack.c.b16 %v6891, %v6887
    %v7296 = vpack.c.b16 %v6892, %v6888
    %v7297 = vpack.c.b16 %v6893, %v6889
    %v7298 = vpack.c.b16 %v6894, %v6890
    %v7299 = vpack.c.b16 %v6899, %v6895
    %v7300 = vpack.c.b16 %v6900, %v6896
    %v7301 = vpack.c.b16 %v6901, %v6897
    %v7302 = vpack.c.b16 %v6902, %v6898
    %v7303 = vpack.c.b16 %v6907, %v6903
    %v7304 = vpack.c.b16 %v6908, %v6904
    %v7305 = vpack.c.b16 %v6909, %v6905
    %v7306 = vpack.c.b16 %v6910, %v6906
    %v7307 = vpack.c.b16 %v6915, %v6911
    %v7308 = vpack.c.b16 %v6916, %v6912
    %v7309 = vpack.c.b16 %v6917, %v6913
    %v7310 = vpack.c.b16 %v6918, %v6914
    %v7311 = vpack.c.b16 %v6923, %v6919
    %v7312 = vpack.c.b16 %v6924, %v6920
    %v7313 = vpack.c.b16 %v6925, %v6921
    %v7314 = vpack.c.b16 %v6926, %v6922
    %v7315 = vpack.c.b16 %v6931, %v6927
    %v7316 = vpack.c.b16 %v6932, %v6928
    %v7317 = vpack.c.b16 %v6933, %v6929
    %v7318 = vpack.c.b16 %v6934, %v6930
    %v7319 = vpack.c.b16 %v6939, %v6935
    %v7320 = vpack.c.b16 %v6940, %v6936
    %v7321 = vpack.c.b16 %v6941, %v6937
    %v7322 = vpack.c.b16 %v6942, %v6938
    %v7323 = vpack.c.b16 %v6947, %v6943
    %v7324 = vpack.c.b16 %v6948, %v6944
    %v7325 = vpack.c.b16 %v6949, %v6945
    %v7326 = vpack.c.b16 %v6950, %v6946
    %v7327 = vpack.c.b16 %v6955, %v6951
    %v7328 = vpack.c.b16 %v6956, %v6952
    %v7329 = vpack.c.b16 %v6957, %v6953
    %v7330 = vpack.c.b16 %v6958, %v6954
    %v7331 = vpack.c.b16 %v6963, %v6959
    %v7332 = vpack.c.b16 %v6964, %v6960
    %v7333 = vpack.c.b16 %v6965, %v6961
    %v7334 = vpack.c.b16 %v6966, %v6962
    %v7335 = vpack.c.b16 %v6971, %v6967
    %v7336 = vpack.c.b16 %v6972, %v6968
    %v7337 = vpack.c.b16 %v6973, %v6969
    %v7338 = vpack.c.b16 %v6974, %v6970
    %v7339 = vpack.c.b16 %v6979, %v6975
    %v7340 = vpack.c.b16 %v6980, %v6976
    %v7341 = vpack.c.b16 %v6981, %v6977
    %v7342 = vpack.c.b16 %v6982, %v6978
    %v7343 = vpack.c.b16 %v6987, %v6983
    %v7344 = vpack.c.b16 %v6988, %v6984
    %v7345 = vpack.c.b16 %v6989, %v6985
    %v7346 = vpack.c.b16 %v6990, %v6986
    %v7347 = vpack.c.b16 %v6995, %v6991
    %v7348 = vpack.c.b16 %v6996, %v6992
    %v7349 = vpack.c.b16 %v6997, %v6993
    %v7350 = vpack.c.b16 %v6998, %v6994
    %v7351 = vpack.c.b16 %v7003, %v6999
    %v7352 = vpack.c.b16 %v7004, %v7000
    %v7353 = vpack.c.b16 %v7005, %v7001
    %v7354 = vpack.c.b16 %v7006, %v7002
    %v7355 = vpack.c.b16 %v7011, %v7007
    %v7356 = vpack.c.b16 %v7012, %v7008
    %v7357 = vpack.c.b16 %v7013, %v7009
    %v7358 = vpack.c.b16 %v7014, %v7010
    %v7359 = vpack.c.b16 %v7019, %v7015
    %v7360 = vpack.c.b16 %v7020, %v7016
    %v7361 = vpack.c.b16 %v7021, %v7017
    %v7362 = vpack.c.b16 %v7022, %v7018
    %v7363 = vpack.c.b16 %v7027, %v7023
    %v7364 = vpack.c.b16 %v7028, %v7024
    %v7365 = vpack.c.b16 %v7029, %v7025
    %v7366 = vpack.c.b16 %v7030, %v7026
    %v7367 = vpack.c.b16 %v7035, %v7031
    %v7368 = vpack.c.b16 %v7036, %v7032
    %v7369 = vpack.c.b16 %v7037, %v7033
    %v7370 = vpack.c.b16 %v7038, %v7034
    %v7371 = vpack.c.b16 %v7043, %v7039
    %v7372 = vpack.c.b16 %v7044, %v7040
    %v7373 = vpack.c.b16 %v7045, %v7041
    %v7374 = vpack.c.b16 %v7046, %v7042
    %v7375 = vpack.c.b16 %v7051, %v7047
    %v7376 = vpack.c.b16 %v7052, %v7048
    %v7377 = vpack.c.b16 %v7053, %v7049
    %v7378 = vpack.c.b16 %v7054, %v7050
    %v7379 = vpack.c.b16 %v7059, %v7055
    %v7380 = vpack.c.b16 %v7060, %v7056
    %v7381 = vpack.c.b16 %v7061, %v7057
    %v7382 = vpack.c.b16 %v7062, %v7058
    %v7383 = vpack.c.b16 %v7067, %v7063
    %v7384 = vpack.c.b16 %v7068, %v7064
    %v7385 = vpack.c.b16 %v7069, %v7065
    %v7386 = vpack.c.b16 %v7070, %v7066
    %v7387 = vpack.c.b16 %v7075, %v7071
    %v7388 = vpack.c.b16 %v7076, %v7072
    %v7389 = vpack.c.b16 %v7077, %v7073
    %v7390 = vpack.c.b16 %v7078, %v7074
    %v7391 = vpack.c.b16 %v7083, %v7079
    %v7392 = vpack.c.b16 %v7084, %v7080
    %v7393 = vpack.c.b16 %v7085, %v7081
    %v7394 = vpack.c.b16 %v7086, %v7082
    %v7395 = vpack.c.b16 %v7091, %v7087
    %v7396 = vpack.c.b16 %v7092, %v7088
    %v7397 = vpack.c.b16 %v7093, %v7089
    %v7398 = vpack.c.b16 %v7094, %v7090
    %v7399 = vpack.c.b16 %v7099, %v7095
    %v7400 = vpack.c.b16 %v7100, %v7096
    %v7401 = vpack.c.b16 %v7101, %v7097
    %v7402 = vpack.c.b16 %v7102, %v7098
    %v7403 = vpack.c.b16 %v7107, %v7103
    %v7404 = vpack.c.b16 %v7108, %v7104
    %v7405 = vpack.c.b16 %v7109, %v7105
    %v7406 = vpack.c.b16 %v7110, %v7106
    %v7407 = vpack.c.b16 %v7115, %v7111
    %v7408 = vpack.c.b16 %v7116, %v7112
    %v7409 = vpack.c.b16 %v7117, %v7113
    %v7410 = vpack.c.b16 %v7118, %v7114
    %v7411 = vpack.c.b16 %v7123, %v7119
    %v7412 = vpack.c.b16 %v7124, %v7120
    %v7413 = vpack.c.b16 %v7125, %v7121
    %v7414 = vpack.c.b16 %v7126, %v7122
    %v7415 = vpack.c.b16 %v7131, %v7127
    %v7416 = vpack.c.b16 %v7132, %v7128
    %v7417 = vpack.c.b16 %v7133, %v7129
    %v7418 = vpack.c.b16 %v7134, %v7130
    %v7419 = vpack.c.b16 %v7139, %v7135
    %v7420 = vpack.c.b16 %v7140, %v7136
    %v7421 = vpack.c.b16 %v7141, %v7137
    %v7422 = vpack.c.b16 %v7142, %v7138
    %v7423 = vpack.c.b16 %v7147, %v7143
    %v7424 = vpack.c.b16 %v7148, %v7144
    %v7425 = vpack.c.b16 %v7149, %v7145
    %v7426 = vpack.c.b16 %v7150, %v7146
    %v7427 = vpack.c.b16 %v7155, %v7151
    %v7428 = vpack.c.b16 %v7156, %v7152
    %v7429 = vpack.c.b16 %v7157, %v7153
    %v7430 = vpack.c.b16 %v7158, %v7154
    %v7431 = vpack.c.b16 %v7163, %v7159
    %v7432 = vpack.c.b16 %v7164, %v7160
    %v7433 = vpack.c.b16 %v7165, %v7161
    %v7434 = vpack.c.b16 %v7166, %v7162
    %v7435 = vpack.c.b16 %v7171, %v7167
    %v7436 = vpack.c.b16 %v7172, %v7168
    %v7437 = vpack.c.b16 %v7173, %v7169
    %v7438 = vpack.c.b16 %v7174, %v7170
    %v7439 = vpack.c.b16 %v7179, %v7175
    %v7440 = vpack.c.b16 %v7180, %v7176
    %v7441 = vpack.c.b16 %v7181, %v7177
    %v7442 = vpack.c.b16 %v7182, %v7178
    %v7443 = vpack.c.b16 %v7187, %v7183
    %v7444 = vpack.c.b16 %v7188, %v7184
    %v7445 = vpack.c.b16 %v7189, %v7185
    %v7446 = vpack.c.b16 %v7190, %v7186
    %7703 = vmatprep.subr.bf16.mxu0 %v7192
    %7704 = vmatpush1.bf16.msra.mxu0 %v7191
    %7705 = vmatprep.subr.bf16.mxu0 %v7196
    %7706 = vmatpush1.bf16.msra.mxu0 %v7195
    %7707 = vmatprep.subr.bf16.mxu0 %v7200
    %7708 = vmatpush1.bf16.msra.mxu0 %v7199
    %7709 = vmatprep.subr.bf16.mxu0 %v7204
    %7710 = vmatpush1.bf16.msra.mxu0 %v7203
    %7711 = vmatprep.subr.bf16.mxu0 %v7208
    %7712 = vmatpush1.bf16.msra.mxu0 %v7207
    %7713 = vmatprep.subr.bf16.mxu0 %v7212
    %7714 = vmatpush1.bf16.msra.mxu0 %v7211
    %7715 = vmatprep.subr.bf16.mxu0 %v7216
    %7716 = vmatpush1.bf16.msra.mxu0 %v7215
    %7717 = vmatprep.subr.bf16.mxu0 %v7220
    %7718 = vmatpush1.bf16.msra.mxu0 %v7219
    %7719 = vmatprep.subr.bf16.mxu0 %v7224
    %7720 = vmatpush1.bf16.msra.mxu0 %v7223
    %7721 = vmatprep.subr.bf16.mxu0 %v7228
    %7722 = vmatpush1.bf16.msra.mxu0 %v7227
    %7723 = vmatprep.subr.bf16.mxu0 %v7232
    %7724 = vmatpush1.bf16.msra.mxu0 %v7231
    %7725 = vmatprep.subr.bf16.mxu0 %v7236
    %7726 = vmatpush1.bf16.msra.mxu0 %v7235
    %7727 = vmatprep.subr.bf16.mxu0 %v7240
    %7728 = vmatpush1.bf16.msra.mxu0 %v7239
    %7729 = vmatprep.subr.bf16.mxu0 %v7244
    %7730 = vmatpush1.bf16.msra.mxu0 %v7243
    %7731 = vmatprep.subr.bf16.mxu0 %v7248
    %7732 = vmatpush1.bf16.msra.mxu0 %v7247
    %7733 = vmatprep.subr.bf16.mxu0 %v7252
    %7734 = vmatpush1.bf16.msra.mxu0 %v7251
    %7735 = vmatprep.mubr.bf16.mxu0 %v6159
    %7736 = vmatmul.mubr.bf16.gmra.mrb[0].mxu0 %v6158
    %v7737 = vpop.f32.mrb[0].mxu0
    %v7738 = vadd.f32 0.0, %v7737
    %v7739 = vpop.f32.mrb[0].mxu0
    %v7740 = vadd.f32 0.0, %v7739
    %v7741 = vpop.f32.mrb[0].mxu0
    %v7742 = vpop.f32.mrb[0].mxu0
    %7743 = vdwg.mxu0
    %7744 = vmatprep.subr.bf16.mxu0 %v7256
    %7745 = vmatpush1.bf16.msra.mxu0 %v7255
    %7746 = vmatprep.subr.bf16.mxu0 %v7260
    %7747 = vmatpush1.bf16.msra.mxu0 %v7259
    %7748 = vmatprep.subr.bf16.mxu0 %v7264
    %7749 = vmatpush1.bf16.msra.mxu0 %v7263
    %7750 = vmatprep.subr.bf16.mxu0 %v7268
    %7751 = vmatpush1.bf16.msra.mxu0 %v7267
    %7752 = vmatprep.subr.bf16.mxu0 %v7272
    %7753 = vmatpush1.bf16.msra.mxu0 %v7271
    %7754 = vmatprep.subr.bf16.mxu0 %v7276
    %7755 = vmatpush1.bf16.msra.mxu0 %v7275
    %7756 = vmatprep.subr.bf16.mxu0 %v7280
    %7757 = vmatpush1.bf16.msra.mxu0 %v7279
    %7758 = vmatprep.subr.bf16.mxu0 %v7284
    %7759 = vmatpush1.bf16.msra.mxu0 %v7283
    %7760 = vmatprep.subr.bf16.mxu0 %v7288
    %7761 = vmatpush1.bf16.msra.mxu0 %v7287
    %7762 = vmatprep.subr.bf16.mxu0 %v7292
    %7763 = vmatpush1.bf16.msra.mxu0 %v7291
    %7764 = vmatprep.subr.bf16.mxu0 %v7296
    %7765 = vmatpush1.bf16.msra.mxu0 %v7295
    %7766 = vmatprep.subr.bf16.mxu0 %v7300
    %7767 = vmatpush1.bf16.msra.mxu0 %v7299
    %7768 = vmatprep.subr.bf16.mxu0 %v7304
    %7769 = vmatpush1.bf16.msra.mxu0 %v7303
    %7770 = vmatprep.subr.bf16.mxu0 %v7308
    %7771 = vmatpush1.bf16.msra.mxu0 %v7307
    %7772 = vmatprep.subr.bf16.mxu0 %v7312
    %7773 = vmatpush1.bf16.msra.mxu0 %v7311
    %7774 = vmatprep.subr.bf16.mxu0 %v7316
    %7775 = vmatpush1.bf16.msra.mxu0 %v7315
    %7776 = vmatprep.mubr.bf16.mxu0 %v6161
    %7777 = vmatmul.mubr.bf16.gmra.mrb[0].mxu0 %v6160
    %v7778 = vpop.f32.mrb[0].mxu0
    %v7779 = vadd.f32 %v7738, %v7778
    %v7780 = vpop.f32.mrb[0].mxu0
    %v7781 = vadd.f32 %v7740, %v7780
    %v7782 = vpop.f32.mrb[0].mxu0
    %v7783 = vpop.f32.mrb[0].mxu0
    %7784 = vdwg.mxu0
    %7785 = vmatprep.subr.bf16.mxu0 %v7320
    %7786 = vmatpush1.bf16.msra.mxu0 %v7319
    %7787 = vmatprep.subr.bf16.mxu0 %v7324
    %7788 = vmatpush1.bf16.msra.mxu0 %v7323
    %7789 = vmatprep.subr.bf16.mxu0 %v7328
    %7790 = vmatpush1.bf16.msra.mxu0 %v7327
    %7791 = vmatprep.subr.bf16.mxu0 %v7332
    %7792 = vmatpush1.bf16.msra.mxu0 %v7331
    %7793 = vmatprep.subr.bf16.mxu0 %v7336
    %7794 = vmatpush1.bf16.msra.mxu0 %v7335
    %7795 = vmatprep.subr.bf16.mxu0 %v7340
    %7796 = vmatpush1.bf16.msra.mxu0 %v7339
    %7797 = vmatprep.subr.bf16.mxu0 %v7344
    %7798 = vmatpush1.bf16.msra.mxu0 %v7343
    %7799 = vmatprep.subr.bf16.mxu0 %v7348
    %7800 = vmatpush1.bf16.msra.mxu0 %v7347
    %7801 = vmatprep.subr.bf16.mxu0 %v7352
    %7802 = vmatpush1.bf16.msra.mxu0 %v7351
    %7803 = vmatprep.subr.bf16.mxu0 %v7356
    %7804 = vmatpush1.bf16.msra.mxu0 %v7355
    %7805 = vmatprep.subr.bf16.mxu0 %v7360
    %7806 = vmatpush1.bf16.msra.mxu0 %v7359
    %7807 = vmatprep.subr.bf16.mxu0 %v7364
    %7808 = vmatpush1.bf16.msra.mxu0 %v7363
    %7809 = vmatprep.subr.bf16.mxu0 %v7368
    %7810 = vmatpush1.bf16.msra.mxu0 %v7367
    %7811 = vmatprep.subr.bf16.mxu0 %v7372
    %7812 = vmatpush1.bf16.msra.mxu0 %v7371
    %7813 = vmatprep.subr.bf16.mxu0 %v7376
    %7814 = vmatpush1.bf16.msra.mxu0 %v7375
    %7815 = vmatprep.subr.bf16.mxu0 %v7380
    %7816 = vmatpush1.bf16.msra.mxu0 %v7379
    %7817 = vmatprep.mubr.bf16.mxu0 %v6163
    %7818 = vmatmul.mubr.bf16.gmra.mrb[0].mxu0 %v6162
    %v7819 = vpop.f32.mrb[0].mxu0
    %v7820 = vadd.f32 %v7779, %v7819
    %v7821 = vpop.f32.mrb[0].mxu0
    %v7822 = vadd.f32 %v7781, %v7821
    %v7823 = vpop.f32.mrb[0].mxu0
    %v7824 = vpop.f32.mrb[0].mxu0
    %7825 = vdwg.mxu0
    %7826 = vmatprep.subr.bf16.mxu0 %v7384
    %7827 = vmatpush1.bf16.msra.mxu0 %v7383
    %7828 = vmatprep.subr.bf16.mxu0 %v7388
    %7829 = vmatpush1.bf16.msra.mxu0 %v7387
    %7830 = vmatprep.subr.bf16.mxu0 %v7392
    %7831 = vmatpush1.bf16.msra.mxu0 %v7391
    %7832 = vmatprep.subr.bf16.mxu0 %v7396
    %7833 = vmatpush1.bf16.msra.mxu0 %v7395
    %7834 = vmatprep.subr.bf16.mxu0 %v7400
    %7835 = vmatpush1.bf16.msra.mxu0 %v7399
    %7836 = vmatprep.subr.bf16.mxu0 %v7404
    %7837 = vmatpush1.bf16.msra.mxu0 %v7403
    %7838 = vmatprep.subr.bf16.mxu0 %v7408
    %7839 = vmatpush1.bf16.msra.mxu0 %v7407
    %7840 = vmatprep.subr.bf16.mxu0 %v7412
    %7841 = vmatpush1.bf16.msra.mxu0 %v7411
    %7842 = vmatprep.subr.bf16.mxu0 %v7416
    %7843 = vmatpush1.bf16.msra.mxu0 %v7415
    %7844 = vmatprep.subr.bf16.mxu0 %v7420
    %7845 = vmatpush1.bf16.msra.mxu0 %v7419
    %7846 = vmatprep.subr.bf16.mxu0 %v7424
    %7847 = vmatpush1.bf16.msra.mxu0 %v7423
    %7848 = vmatprep.subr.bf16.mxu0 %v7428
    %7849 = vmatpush1.bf16.msra.mxu0 %v7427
    %7850 = vmatprep.subr.bf16.mxu0 %v7432
    %7851 = vmatpush1.bf16.msra.mxu0 %v7431
    %7852 = vmatprep.subr.bf16.mxu0 %v7436
    %7853 = vmatpush1.bf16.msra.mxu0 %v7435
    %7854 = vmatprep.subr.bf16.mxu0 %v7440
    %7855 = vmatpush1.bf16.msra.mxu0 %v7439
    %7856 = vmatprep.subr.bf16.mxu0 %v7444
    %7857 = vmatpush1.bf16.msra.mxu0 %v7443
    %7858 = vmatprep.mubr.bf16.mxu0 %v6165
    %7859 = vmatmul.mubr.bf16.gmra.mrb[0].mxu0 %v6164
    %v7860 = vpop.f32.mrb[0].mxu0
    %v7861 = vadd.f32 %v7820, %v7860
    %v7862 = vpop.f32.mrb[0].mxu0
    %v7863 = vadd.f32 %v7822, %v7862
    %v7864 = vpop.f32.mrb[0].mxu0
    %v7865 = vpop.f32.mrb[0].mxu0
    %7866 = vdwg.mxu0
    %7867 = vmatprep.subr.bf16.mxu0 %v7194
    %7868 = vmatpush1.bf16.msra.mxu0 %v7193
    %7869 = vmatprep.subr.bf16.mxu0 %v7198
    %7870 = vmatpush1.bf16.msra.mxu0 %v7197
    %7871 = vmatprep.subr.bf16.mxu0 %v7202
    %7872 = vmatpush1.bf16.msra.mxu0 %v7201
    %7873 = vmatprep.subr.bf16.mxu0 %v7206
    %7874 = vmatpush1.bf16.msra.mxu0 %v7205
    %7875 = vmatprep.subr.bf16.mxu0 %v7210
    %7876 = vmatpush1.bf16.msra.mxu0 %v7209
    %7877 = vmatprep.subr.bf16.mxu0 %v7214
    %7878 = vmatpush1.bf16.msra.mxu0 %v7213
    %7879 = vmatprep.subr.bf16.mxu0 %v7218
    %7880 = vmatpush1.bf16.msra.mxu0 %v7217
    %7881 = vmatprep.subr.bf16.mxu0 %v7222
    %7882 = vmatpush1.bf16.msra.mxu0 %v7221
    %7883 = vmatprep.subr.bf16.mxu0 %v7226
    %7884 = vmatpush1.bf16.msra.mxu0 %v7225
    %7885 = vmatprep.subr.bf16.mxu0 %v7230
    %7886 = vmatpush1.bf16.msra.mxu0 %v7229
    %7887 = vmatprep.subr.bf16.mxu0 %v7234
    %7888 = vmatpush1.bf16.msra.mxu0 %v7233
    %7889 = vmatprep.subr.bf16.mxu0 %v7238
    %7890 = vmatpush1.bf16.msra.mxu0 %v7237
    %7891 = vmatprep.subr.bf16.mxu0 %v7242
    %7892 = vmatpush1.bf16.msra.mxu0 %v7241
    %7893 = vmatprep.subr.bf16.mxu0 %v7246
    %7894 = vmatpush1.bf16.msra.mxu0 %v7245
    %7895 = vmatprep.subr.bf16.mxu0 %v7250
    %7896 = vmatpush1.bf16.msra.mxu0 %v7249
    %7897 = vmatprep.subr.bf16.mxu0 %v7254
    %7898 = vmatpush1.bf16.msra.mxu0 %v7253
    %7899 = vmatprep.mubr.bf16.mxu0 %v6159
    %7900 = vmatmul.mubr.bf16.gmra.mrb[0].mxu0 %v6158
    %v7901 = vpop.f32.mrb[0].mxu0
    %v7902 = vadd.f32 0.0, %v7901
    %v7903 = vpop.f32.mrb[0].mxu0
    %v7904 = vadd.f32 0.0, %v7903
    %v7905 = vpop.f32.mrb[0].mxu0
    %v7906 = vpop.f32.mrb[0].mxu0
    %7907 = vdwg.mxu0
    %7908 = vmatprep.subr.bf16.mxu0 %v7258
    %7909 = vmatpush1.bf16.msra.mxu0 %v7257
    %7910 = vmatprep.subr.bf16.mxu0 %v7262
    %7911 = vmatpush1.bf16.msra.mxu0 %v7261
    %7912 = vmatprep.subr.bf16.mxu0 %v7266
    %7913 = vmatpush1.bf16.msra.mxu0 %v7265
    %7914 = vmatprep.subr.bf16.mxu0 %v7270
    %7915 = vmatpush1.bf16.msra.mxu0 %v7269
    %7916 = vmatprep.subr.bf16.mxu0 %v7274
    %7917 = vmatpush1.bf16.msra.mxu0 %v7273
    %7918 = vmatprep.subr.bf16.mxu0 %v7278
    %7919 = vmatpush1.bf16.msra.mxu0 %v7277
    %7920 = vmatprep.subr.bf16.mxu0 %v7282
    %7921 = vmatpush1.bf16.msra.mxu0 %v7281
    %7922 = vmatprep.subr.bf16.mxu0 %v7286
    %7923 = vmatpush1.bf16.msra.mxu0 %v7285
    %7924 = vmatprep.subr.bf16.mxu0 %v7290
    %7925 = vmatpush1.bf16.msra.mxu0 %v7289
    %7926 = vmatprep.subr.bf16.mxu0 %v7294
    %7927 = vmatpush1.bf16.msra.mxu0 %v7293
    %7928 = vmatprep.subr.bf16.mxu0 %v7298
    %7929 = vmatpush1.bf16.msra.mxu0 %v7297
    %7930 = vmatprep.subr.bf16.mxu0 %v7302
    %7931 = vmatpush1.bf16.msra.mxu0 %v7301
    %7932 = vmatprep.subr.bf16.mxu0 %v7306
    %7933 = vmatpush1.bf16.msra.mxu0 %v7305
    %7934 = vmatprep.subr.bf16.mxu0 %v7310
    %7935 = vmatpush1.bf16.msra.mxu0 %v7309
    %7936 = vmatprep.subr.bf16.mxu0 %v7314
    %7937 = vmatpush1.bf16.msra.mxu0 %v7313
    %7938 = vmatprep.subr.bf16.mxu0 %v7318
    %7939 = vmatpush1.bf16.msra.mxu0 %v7317
    %7940 = vmatprep.mubr.bf16.mxu0 %v6161
    %7941 = vmatmul.mubr.bf16.gmra.mrb[0].mxu0 %v6160
    %v7942 = vpop.f32.mrb[0].mxu0
    %v7943 = vadd.f32 %v7902, %v7942
    %v7944 = vpop.f32.mrb[0].mxu0
    %v7945 = vadd.f32 %v7904, %v7944
    %v7946 = vpop.f32.mrb[0].mxu0
    %v7947 = vpop.f32.mrb[0].mxu0
    %7948 = vdwg.mxu0
    %7949 = vmatprep.subr.bf16.mxu0 %v7322
    %7950 = vmatpush1.bf16.msra.mxu0 %v7321
    %7951 = vmatprep.subr.bf16.mxu0 %v7326
    %7952 = vmatpush1.bf16.msra.mxu0 %v7325
    %7953 = vmatprep.subr.bf16.mxu0 %v7330
    %7954 = vmatpush1.bf16.msra.mxu0 %v7329
    %7955 = vmatprep.subr.bf16.mxu0 %v7334
    %7956 = vmatpush1.bf16.msra.mxu0 %v7333
    %7957 = vmatprep.subr.bf16.mxu0 %v7338
    %7958 = vmatpush1.bf16.msra.mxu0 %v7337
    %7959 = vmatprep.subr.bf16.mxu0 %v7342
    %7960 = vmatpush1.bf16.msra.mxu0 %v7341
    %7961 = vmatprep.subr.bf16.mxu0 %v7346
    %7962 = vmatpush1.bf16.msra.mxu0 %v7345
    %7963 = vmatprep.subr.bf16.mxu0 %v7350
    %7964 = vmatpush1.bf16.msra.mxu0 %v7349
    %7965 = vmatprep.subr.bf16.mxu0 %v7354
    %7966 = vmatpush1.bf16.msra.mxu0 %v7353
    %7967 = vmatprep.subr.bf16.mxu0 %v7358
    %7968 = vmatpush1.bf16.msra.mxu0 %v7357
    %7969 = vmatprep.subr.bf16.mxu0 %v7362
    %7970 = vmatpush1.bf16.msra.mxu0 %v7361
    %7971 = vmatprep.subr.bf16.mxu0 %v7366
    %7972 = vmatpush1.bf16.msra.mxu0 %v7365
    %7973 = vmatprep.subr.bf16.mxu0 %v7370
    %7974 = vmatpush1.bf16.msra.mxu0 %v7369
    %7975 = vmatprep.subr.bf16.mxu0 %v7374
    %7976 = vmatpush1.bf16.msra.mxu0 %v7373
    %7977 = vmatprep.subr.bf16.mxu0 %v7378
    %7978 = vmatpush1.bf16.msra.mxu0 %v7377
    %7979 = vmatprep.subr.bf16.mxu0 %v7382
    %7980 = vmatpush1.bf16.msra.mxu0 %v7381
    %7981 = vmatprep.mubr.bf16.mxu0 %v6163
    %7982 = vmatmul.mubr.bf16.gmra.mrb[0].mxu0 %v6162
    %v7983 = vpop.f32.mrb[0].mxu0
    %v7984 = vadd.f32 %v7943, %v7983
    %v7985 = vpop.f32.mrb[0].mxu0
    %v7986 = vadd.f32 %v7945, %v7985
    %v7987 = vpop.f32.mrb[0].mxu0
    %v7988 = vpop.f32.mrb[0].mxu0
    %7989 = vdwg.mxu0
    %7990 = vmatprep.subr.bf16.mxu0 %v7386
    %7991 = vmatpush1.bf16.msra.mxu0 %v7385
    %7992 = vmatprep.subr.bf16.mxu0 %v7390
    %7993 = vmatpush1.bf16.msra.mxu0 %v7389
    %7994 = vmatprep.subr.bf16.mxu0 %v7394
    %7995 = vmatpush1.bf16.msra.mxu0 %v7393
    %7996 = vmatprep.subr.bf16.mxu0 %v7398
    %7997 = vmatpush1.bf16.msra.mxu0 %v7397
    %7998 = vmatprep.subr.bf16.mxu0 %v7402
    %7999 = vmatpush1.bf16.msra.mxu0 %v7401
    %8000 = vmatprep.subr.bf16.mxu0 %v7406
    %8001 = vmatpush1.bf16.msra.mxu0 %v7405
    %8002 = vmatprep.subr.bf16.mxu0 %v7410
    %8003 = vmatpush1.bf16.msra.mxu0 %v7409
    %8004 = vmatprep.subr.bf16.mxu0 %v7414
    %8005 = vmatpush1.bf16.msra.mxu0 %v7413
    %8006 = vmatprep.subr.bf16.mxu0 %v7418
    %8007 = vmatpush1.bf16.msra.mxu0 %v7417
    %8008 = vmatprep.subr.bf16.mxu0 %v7422
    %8009 = vmatpush1.bf16.msra.mxu0 %v7421
    %8010 = vmatprep.subr.bf16.mxu0 %v7426
    %8011 = vmatpush1.bf16.msra.mxu0 %v7425
    %8012 = vmatprep.subr.bf16.mxu0 %v7430
    %8013 = vmatpush1.bf16.msra.mxu0 %v7429
    %8014 = vmatprep.subr.bf16.mxu0 %v7434
    %8015 = vmatpush1.bf16.msra.mxu0 %v7433
    %8016 = vmatprep.subr.bf16.mxu0 %v7438
    %8017 = vmatpush1.bf16.msra.mxu0 %v7437
    %8018 = vmatprep.subr.bf16.mxu0 %v7442
    %8019 = vmatpush1.bf16.msra.mxu0 %v7441
    %8020 = vmatprep.subr.bf16.mxu0 %v7446
    %8021 = vmatpush1.bf16.msra.mxu0 %v7445
    %8022 = vmatprep.mubr.bf16.mxu0 %v6165
    %8023 = vmatmul.mubr.bf16.gmra.mrb[0].mxu0 %v6164
    %v8024 = vpop.f32.mrb[0].mxu0
    %v8025 = vadd.f32 %v7984, %v8024
    %v8026 = vpop.f32.mrb[0].mxu0
    %v8027 = vadd.f32 %v7986, %v8026
    %v8028 = vpop.f32.mrb[0].mxu0
    %v8029 = vpop.f32.mrb[0].mxu0
    %8030 = vdwg.mxu0
    %v8031 = vadd.f32 %v6044, %v7861
    %v8032 = vadd.f32 %v6045, %v7863
    %v8033 = vadd.f32 %v6046, %v8025
    %v8034 = vadd.f32 %v6047, %v8027
    %s8035 = scalar_lea.vmem [#allocation3], 32
    %v8036 = vld [vmem:[%s8035] sm:$0xff]
    %v8038 = vlaneseq
    %v8039 = vshrl.u32 %v8038, 7
    %v8040 = vsub.s32 0, %v8039
    %v8041 = vrot.slane %v8036, %v8040
    %v8042 = vlaneseq
    %v8043 = vshrl.u32 %v8042, 7
    %v8044 = vsub.s32 1, %v8043
    %v8045 = vrot.slane %v8036, %v8044
    %v8046 = vlaneseq
    %v8047 = vshrl.u32 %v8046, 7
    %v8048 = vsub.s32 2, %v8047
    %v8049 = vrot.slane %v8036, %v8048
    %v8050 = vlaneseq
    %v8051 = vshrl.u32 %v8050, 7
    %v8052 = vsub.s32 3, %v8051
    %v8053 = vrot.slane %v8036, %v8052
    %v8054 = vlaneseq
    %v8055 = vshrl.u32 %v8054, 7
    %v8056 = vsub.s32 4, %v8055
    %v8057 = vrot.slane %v8036, %v8056
    %v8058 = vlaneseq
    %v8059 = vshrl.u32 %v8058, 7
    %v8060 = vsub.s32 5, %v8059
    %v8061 = vrot.slane %v8036, %v8060
    %v8062 = vlaneseq
    %v8063 = vshrl.u32 %v8062, 7
    %v8064 = vsub.s32 6, %v8063
    %v8065 = vrot.slane %v8036, %v8064
    %v8066 = vlaneseq
    %v8067 = vshrl.u32 %v8066, 7
    %v8068 = vsub.s32 7, %v8067
    %v8069 = vrot.slane %v8036, %v8068
    %v8078 = vmul.f32 %v97, %v8041
    %v8079 = vmul.f32 %v97, %v8045
    %v8080 = vmul.f32 %v97, %v8049
    %v8081 = vmul.f32 %v97, %v8053
    %v8082 = vmul.f32 %v97, %v8057
    %v8083 = vmul.f32 %v97, %v8061
    %v8084 = vmul.f32 %v97, %v8065
    %v8085 = vmul.f32 %v97, %v8069
    %s8086 = scalar_lea.vmem [#allocation5], 32
    %v8087 = vld [vmem:[%s8086] sm:$0xff]
    %v8089 = vlaneseq
    %v8090 = vshrl.u32 %v8089, 7
    %v8091 = vsub.s32 0, %v8090
    %v8092 = vrot.slane %v8087, %v8091
    %v8093 = vlaneseq
    %v8094 = vshrl.u32 %v8093, 7
    %v8095 = vsub.s32 1, %v8094
    %v8096 = vrot.slane %v8087, %v8095
    %v8097 = vlaneseq
    %v8098 = vshrl.u32 %v8097, 7
    %v8099 = vsub.s32 2, %v8098
    %v8100 = vrot.slane %v8087, %v8099
    %v8101 = vlaneseq
    %v8102 = vshrl.u32 %v8101, 7
    %v8103 = vsub.s32 3, %v8102
    %v8104 = vrot.slane %v8087, %v8103
    %v8105 = vlaneseq
    %v8106 = vshrl.u32 %v8105, 7
    %v8107 = vsub.s32 4, %v8106
    %v8108 = vrot.slane %v8087, %v8107
    %v8109 = vlaneseq
    %v8110 = vshrl.u32 %v8109, 7
    %v8111 = vsub.s32 5, %v8110
    %v8112 = vrot.slane %v8087, %v8111
    %v8113 = vlaneseq
    %v8114 = vshrl.u32 %v8113, 7
    %v8115 = vsub.s32 6, %v8114
    %v8116 = vrot.slane %v8087, %v8115
    %v8117 = vlaneseq
    %v8118 = vshrl.u32 %v8117, 7
    %v8119 = vsub.s32 7, %v8118
    %v8120 = vrot.slane %v8087, %v8119
    %v8129 = vadd.f32 %v8078, %v8092
    %v8130 = vadd.f32 %v8079, %v8096
    %v8131 = vadd.f32 %v8080, %v8100
    %v8132 = vadd.f32 %v8081, %v8104
    %v8133 = vadd.f32 %v8082, %v8108
    %v8134 = vadd.f32 %v8083, %v8112
    %v8135 = vadd.f32 %v8084, %v8116
    %v8136 = vadd.f32 %v8085, %v8120
    %v8137 = vtanh.pop %v8129
    %v8138 = vtanh.pop %v8130
    %v8139 = vtanh.pop %v8131
    %v8140 = vtanh.pop %v8132
    %v8141 = vtanh.pop %v8133
    %v8142 = vtanh.pop %v8134
    %v8143 = vtanh.pop %v8135
    %v8144 = vtanh.pop %v8136
    %v8145 = vpack.c.bf16 %v8137, %v8137
    %v8146 = vpack.c.bf16 %v8138, %v8138
    %v8147 = vpack.c.bf16 %v8139, %v8139
    %v8148 = vpack.c.bf16 %v8140, %v8140
    %v8149 = vpack.c.bf16 %v8141, %v8141
    %v8150 = vpack.c.bf16 %v8142, %v8142
    %v8151 = vpack.c.bf16 %v8143, %v8143
    %v8152 = vpack.c.bf16 %v8144, %v8144
    %s8153 = scalar_lea.vmem [#allocation7], 8192
    %v8154 = vld [vmem:[%s8153] sm:$0xff]
    %v8155 = vld [vmem:[%s8153 + $0x8] sm:$0xff]
    %v8156 = vld [vmem:[%s8153 + $0x10] sm:$0xff]
    %v8157 = vld [vmem:[%s8153 + $0x18] sm:$0xff]
    %v8158 = vld [vmem:[%s8153 + $0x20] sm:$0xff]
    %v8159 = vld [vmem:[%s8153 + $0x28] sm:$0xff]
    %v8160 = vld [vmem:[%s8153 + $0x30] sm:$0xff]
    %v8161 = vld [vmem:[%s8153 + $0x38] sm:$0xff]
    %v8162 = vld [vmem:[%s8153 + $0x40] sm:$0xff]
    %v8163 = vld [vmem:[%s8153 + $0x48] sm:$0xff]
    %v8164 = vld [vmem:[%s8153 + $0x50] sm:$0xff]
    %v8165 = vld [vmem:[%s8153 + $0x58] sm:$0xff]
    %v8166 = vld [vmem:[%s8153 + $0x60] sm:$0xff]
    %v8167 = vld [vmem:[%s8153 + $0x68] sm:$0xff]
    %v8168 = vld [vmem:[%s8153 + $0x70] sm:$0xff]
    %v8169 = vld [vmem:[%s8153 + $0x78] sm:$0xff]
    %v8170 = vld [vmem:[%s8153 + $0x80] sm:$0xff]
    %v8171 = vld [vmem:[%s8153 + $0x88] sm:$0xff]
    %v8172 = vld [vmem:[%s8153 + $0x90] sm:$0xff]
    %v8173 = vld [vmem:[%s8153 + $0x98] sm:$0xff]
    %v8174 = vld [vmem:[%s8153 + $0xa0] sm:$0xff]
    %v8175 = vld [vmem:[%s8153 + $0xa8] sm:$0xff]
    %v8176 = vld [vmem:[%s8153 + $0xb0] sm:$0xff]
    %v8177 = vld [vmem:[%s8153 + $0xb8] sm:$0xff]
    %v8178 = vld [vmem:[%s8153 + $0xc0] sm:$0xff]
    %v8179 = vld [vmem:[%s8153 + $0xc8] sm:$0xff]
    %v8180 = vld [vmem:[%s8153 + $0xd0] sm:$0xff]
    %v8181 = vld [vmem:[%s8153 + $0xd8] sm:$0xff]
    %v8182 = vld [vmem:[%s8153 + $0xe0] sm:$0xff]
    %v8183 = vld [vmem:[%s8153 + $0xe8] sm:$0xff]
    %v8184 = vld [vmem:[%s8153 + $0xf0] sm:$0xff]
    %v8185 = vld [vmem:[%s8153 + $0xf8] sm:$0xff]
    %v8186 = vld [vmem:[%s8153 + $0x100] sm:$0xff]
    %v8187 = vld [vmem:[%s8153 + $0x108] sm:$0xff]
    %v8188 = vld [vmem:[%s8153 + $0x110] sm:$0xff]
    %v8189 = vld [vmem:[%s8153 + $0x118] sm:$0xff]
    %v8190 = vld [vmem:[%s8153 + $0x120] sm:$0xff]
    %v8191 = vld [vmem:[%s8153 + $0x128] sm:$0xff]
    %v8192 = vld [vmem:[%s8153 + $0x130] sm:$0xff]
    %v8193 = vld [vmem:[%s8153 + $0x138] sm:$0xff]
    %v8194 = vld [vmem:[%s8153 + $0x140] sm:$0xff]
    %v8195 = vld [vmem:[%s8153 + $0x148] sm:$0xff]
    %v8196 = vld [vmem:[%s8153 + $0x150] sm:$0xff]
    %v8197 = vld [vmem:[%s8153 + $0x158] sm:$0xff]
    %v8198 = vld [vmem:[%s8153 + $0x160] sm:$0xff]
    %v8199 = vld [vmem:[%s8153 + $0x168] sm:$0xff]
    %v8200 = vld [vmem:[%s8153 + $0x170] sm:$0xff]
    %v8201 = vld [vmem:[%s8153 + $0x178] sm:$0xff]
    %v8202 = vld [vmem:[%s8153 + $0x180] sm:$0xff]
    %v8203 = vld [vmem:[%s8153 + $0x188] sm:$0xff]
    %v8204 = vld [vmem:[%s8153 + $0x190] sm:$0xff]
    %v8205 = vld [vmem:[%s8153 + $0x198] sm:$0xff]
    %v8206 = vld [vmem:[%s8153 + $0x1a0] sm:$0xff]
    %v8207 = vld [vmem:[%s8153 + $0x1a8] sm:$0xff]
    %v8208 = vld [vmem:[%s8153 + $0x1b0] sm:$0xff]
    %v8209 = vld [vmem:[%s8153 + $0x1b8] sm:$0xff]
    %v8210 = vld [vmem:[%s8153 + $0x1c0] sm:$0xff]
    %v8211 = vld [vmem:[%s8153 + $0x1c8] sm:$0xff]
    %v8212 = vld [vmem:[%s8153 + $0x1d0] sm:$0xff]
    %v8213 = vld [vmem:[%s8153 + $0x1d8] sm:$0xff]
    %v8214 = vld [vmem:[%s8153 + $0x1e0] sm:$0xff]
    %v8215 = vld [vmem:[%s8153 + $0x1e8] sm:$0xff]
    %v8216 = vld [vmem:[%s8153 + $0x1f0] sm:$0xff]
    %v8217 = vld [vmem:[%s8153 + $0x1f8] sm:$0xff]
    %v8218 = vld [vmem:[%s8153 + $0x200] sm:$0xff]
    %v8219 = vld [vmem:[%s8153 + $0x208] sm:$0xff]
    %v8220 = vld [vmem:[%s8153 + $0x210] sm:$0xff]
    %v8221 = vld [vmem:[%s8153 + $0x218] sm:$0xff]
    %v8222 = vld [vmem:[%s8153 + $0x220] sm:$0xff]
    %v8223 = vld [vmem:[%s8153 + $0x228] sm:$0xff]
    %v8224 = vld [vmem:[%s8153 + $0x230] sm:$0xff]
    %v8225 = vld [vmem:[%s8153 + $0x238] sm:$0xff]
    %v8226 = vld [vmem:[%s8153 + $0x240] sm:$0xff]
    %v8227 = vld [vmem:[%s8153 + $0x248] sm:$0xff]
    %v8228 = vld [vmem:[%s8153 + $0x250] sm:$0xff]
    %v8229 = vld [vmem:[%s8153 + $0x258] sm:$0xff]
    %v8230 = vld [vmem:[%s8153 + $0x260] sm:$0xff]
    %v8231 = vld [vmem:[%s8153 + $0x268] sm:$0xff]
    %v8232 = vld [vmem:[%s8153 + $0x270] sm:$0xff]
    %v8233 = vld [vmem:[%s8153 + $0x278] sm:$0xff]
    %v8234 = vld [vmem:[%s8153 + $0x280] sm:$0xff]
    %v8235 = vld [vmem:[%s8153 + $0x288] sm:$0xff]
    %v8236 = vld [vmem:[%s8153 + $0x290] sm:$0xff]
    %v8237 = vld [vmem:[%s8153 + $0x298] sm:$0xff]
    %v8238 = vld [vmem:[%s8153 + $0x2a0] sm:$0xff]
    %v8239 = vld [vmem:[%s8153 + $0x2a8] sm:$0xff]
    %v8240 = vld [vmem:[%s8153 + $0x2b0] sm:$0xff]
    %v8241 = vld [vmem:[%s8153 + $0x2b8] sm:$0xff]
    %v8242 = vld [vmem:[%s8153 + $0x2c0] sm:$0xff]
    %v8243 = vld [vmem:[%s8153 + $0x2c8] sm:$0xff]
    %v8244 = vld [vmem:[%s8153 + $0x2d0] sm:$0xff]
    %v8245 = vld [vmem:[%s8153 + $0x2d8] sm:$0xff]
    %v8246 = vld [vmem:[%s8153 + $0x2e0] sm:$0xff]
    %v8247 = vld [vmem:[%s8153 + $0x2e8] sm:$0xff]
    %v8248 = vld [vmem:[%s8153 + $0x2f0] sm:$0xff]
    %v8249 = vld [vmem:[%s8153 + $0x2f8] sm:$0xff]
    %v8250 = vld [vmem:[%s8153 + $0x300] sm:$0xff]
    %v8251 = vld [vmem:[%s8153 + $0x308] sm:$0xff]
    %v8252 = vld [vmem:[%s8153 + $0x310] sm:$0xff]
    %v8253 = vld [vmem:[%s8153 + $0x318] sm:$0xff]
    %v8254 = vld [vmem:[%s8153 + $0x320] sm:$0xff]
    %v8255 = vld [vmem:[%s8153 + $0x328] sm:$0xff]
    %v8256 = vld [vmem:[%s8153 + $0x330] sm:$0xff]
    %v8257 = vld [vmem:[%s8153 + $0x338] sm:$0xff]
    %v8258 = vld [vmem:[%s8153 + $0x340] sm:$0xff]
    %v8259 = vld [vmem:[%s8153 + $0x348] sm:$0xff]
    %v8260 = vld [vmem:[%s8153 + $0x350] sm:$0xff]
    %v8261 = vld [vmem:[%s8153 + $0x358] sm:$0xff]
    %v8262 = vld [vmem:[%s8153 + $0x360] sm:$0xff]
    %v8263 = vld [vmem:[%s8153 + $0x368] sm:$0xff]
    %v8264 = vld [vmem:[%s8153 + $0x370] sm:$0xff]
    %v8265 = vld [vmem:[%s8153 + $0x378] sm:$0xff]
    %v8266 = vld [vmem:[%s8153 + $0x380] sm:$0xff]
    %v8267 = vld [vmem:[%s8153 + $0x388] sm:$0xff]
    %v8268 = vld [vmem:[%s8153 + $0x390] sm:$0xff]
    %v8269 = vld [vmem:[%s8153 + $0x398] sm:$0xff]
    %v8270 = vld [vmem:[%s8153 + $0x3a0] sm:$0xff]
    %v8271 = vld [vmem:[%s8153 + $0x3a8] sm:$0xff]
    %v8272 = vld [vmem:[%s8153 + $0x3b0] sm:$0xff]
    %v8273 = vld [vmem:[%s8153 + $0x3b8] sm:$0xff]
    %v8274 = vld [vmem:[%s8153 + $0x3c0] sm:$0xff]
    %v8275 = vld [vmem:[%s8153 + $0x3c8] sm:$0xff]
    %v8276 = vld [vmem:[%s8153 + $0x3d0] sm:$0xff]
    %v8277 = vld [vmem:[%s8153 + $0x3d8] sm:$0xff]
    %v8278 = vld [vmem:[%s8153 + $0x3e0] sm:$0xff]
    %v8279 = vld [vmem:[%s8153 + $0x3e8] sm:$0xff]
    %v8280 = vld [vmem:[%s8153 + $0x3f0] sm:$0xff]
    %v8281 = vld [vmem:[%s8153 + $0x3f8] sm:$0xff]
    %v8282 = vld [vmem:[%s8153 + $0x400] sm:$0xff]
    %v8283 = vld [vmem:[%s8153 + $0x408] sm:$0xff]
    %v8284 = vld [vmem:[%s8153 + $0x410] sm:$0xff]
    %v8285 = vld [vmem:[%s8153 + $0x418] sm:$0xff]
    %v8286 = vld [vmem:[%s8153 + $0x420] sm:$0xff]
    %v8287 = vld [vmem:[%s8153 + $0x428] sm:$0xff]
    %v8288 = vld [vmem:[%s8153 + $0x430] sm:$0xff]
    %v8289 = vld [vmem:[%s8153 + $0x438] sm:$0xff]
    %v8290 = vld [vmem:[%s8153 + $0x440] sm:$0xff]
    %v8291 = vld [vmem:[%s8153 + $0x448] sm:$0xff]
    %v8292 = vld [vmem:[%s8153 + $0x450] sm:$0xff]
    %v8293 = vld [vmem:[%s8153 + $0x458] sm:$0xff]
    %v8294 = vld [vmem:[%s8153 + $0x460] sm:$0xff]
    %v8295 = vld [vmem:[%s8153 + $0x468] sm:$0xff]
    %v8296 = vld [vmem:[%s8153 + $0x470] sm:$0xff]
    %v8297 = vld [vmem:[%s8153 + $0x478] sm:$0xff]
    %v8298 = vld [vmem:[%s8153 + $0x480] sm:$0xff]
    %v8299 = vld [vmem:[%s8153 + $0x488] sm:$0xff]
    %v8300 = vld [vmem:[%s8153 + $0x490] sm:$0xff]
    %v8301 = vld [vmem:[%s8153 + $0x498] sm:$0xff]
    %v8302 = vld [vmem:[%s8153 + $0x4a0] sm:$0xff]
    %v8303 = vld [vmem:[%s8153 + $0x4a8] sm:$0xff]
    %v8304 = vld [vmem:[%s8153 + $0x4b0] sm:$0xff]
    %v8305 = vld [vmem:[%s8153 + $0x4b8] sm:$0xff]
    %v8306 = vld [vmem:[%s8153 + $0x4c0] sm:$0xff]
    %v8307 = vld [vmem:[%s8153 + $0x4c8] sm:$0xff]
    %v8308 = vld [vmem:[%s8153 + $0x4d0] sm:$0xff]
    %v8309 = vld [vmem:[%s8153 + $0x4d8] sm:$0xff]
    %v8310 = vld [vmem:[%s8153 + $0x4e0] sm:$0xff]
    %v8311 = vld [vmem:[%s8153 + $0x4e8] sm:$0xff]
    %v8312 = vld [vmem:[%s8153 + $0x4f0] sm:$0xff]
    %v8313 = vld [vmem:[%s8153 + $0x4f8] sm:$0xff]
    %v8314 = vld [vmem:[%s8153 + $0x500] sm:$0xff]
    %v8315 = vld [vmem:[%s8153 + $0x508] sm:$0xff]
    %v8316 = vld [vmem:[%s8153 + $0x510] sm:$0xff]
    %v8317 = vld [vmem:[%s8153 + $0x518] sm:$0xff]
    %v8318 = vld [vmem:[%s8153 + $0x520] sm:$0xff]
    %v8319 = vld [vmem:[%s8153 + $0x528] sm:$0xff]
    %v8320 = vld [vmem:[%s8153 + $0x530] sm:$0xff]
    %v8321 = vld [vmem:[%s8153 + $0x538] sm:$0xff]
    %v8322 = vld [vmem:[%s8153 + $0x540] sm:$0xff]
    %v8323 = vld [vmem:[%s8153 + $0x548] sm:$0xff]
    %v8324 = vld [vmem:[%s8153 + $0x550] sm:$0xff]
    %v8325 = vld [vmem:[%s8153 + $0x558] sm:$0xff]
    %v8326 = vld [vmem:[%s8153 + $0x560] sm:$0xff]
    %v8327 = vld [vmem:[%s8153 + $0x568] sm:$0xff]
    %v8328 = vld [vmem:[%s8153 + $0x570] sm:$0xff]
    %v8329 = vld [vmem:[%s8153 + $0x578] sm:$0xff]
    %v8330 = vld [vmem:[%s8153 + $0x580] sm:$0xff]
    %v8331 = vld [vmem:[%s8153 + $0x588] sm:$0xff]
    %v8332 = vld [vmem:[%s8153 + $0x590] sm:$0xff]
    %v8333 = vld [vmem:[%s8153 + $0x598] sm:$0xff]
    %v8334 = vld [vmem:[%s8153 + $0x5a0] sm:$0xff]
    %v8335 = vld [vmem:[%s8153 + $0x5a8] sm:$0xff]
    %v8336 = vld [vmem:[%s8153 + $0x5b0] sm:$0xff]
    %v8337 = vld [vmem:[%s8153 + $0x5b8] sm:$0xff]
    %v8338 = vld [vmem:[%s8153 + $0x5c0] sm:$0xff]
    %v8339 = vld [vmem:[%s8153 + $0x5c8] sm:$0xff]
    %v8340 = vld [vmem:[%s8153 + $0x5d0] sm:$0xff]
    %v8341 = vld [vmem:[%s8153 + $0x5d8] sm:$0xff]
    %v8342 = vld [vmem:[%s8153 + $0x5e0] sm:$0xff]
    %v8343 = vld [vmem:[%s8153 + $0x5e8] sm:$0xff]
    %v8344 = vld [vmem:[%s8153 + $0x5f0] sm:$0xff]
    %v8345 = vld [vmem:[%s8153 + $0x5f8] sm:$0xff]
    %v8346 = vld [vmem:[%s8153 + $0x600] sm:$0xff]
    %v8347 = vld [vmem:[%s8153 + $0x608] sm:$0xff]
    %v8348 = vld [vmem:[%s8153 + $0x610] sm:$0xff]
    %v8349 = vld [vmem:[%s8153 + $0x618] sm:$0xff]
    %v8350 = vld [vmem:[%s8153 + $0x620] sm:$0xff]
    %v8351 = vld [vmem:[%s8153 + $0x628] sm:$0xff]
    %v8352 = vld [vmem:[%s8153 + $0x630] sm:$0xff]
    %v8353 = vld [vmem:[%s8153 + $0x638] sm:$0xff]
    %v8354 = vld [vmem:[%s8153 + $0x640] sm:$0xff]
    %v8355 = vld [vmem:[%s8153 + $0x648] sm:$0xff]
    %v8356 = vld [vmem:[%s8153 + $0x650] sm:$0xff]
    %v8357 = vld [vmem:[%s8153 + $0x658] sm:$0xff]
    %v8358 = vld [vmem:[%s8153 + $0x660] sm:$0xff]
    %v8359 = vld [vmem:[%s8153 + $0x668] sm:$0xff]
    %v8360 = vld [vmem:[%s8153 + $0x670] sm:$0xff]
    %v8361 = vld [vmem:[%s8153 + $0x678] sm:$0xff]
    %v8362 = vld [vmem:[%s8153 + $0x680] sm:$0xff]
    %v8363 = vld [vmem:[%s8153 + $0x688] sm:$0xff]
    %v8364 = vld [vmem:[%s8153 + $0x690] sm:$0xff]
    %v8365 = vld [vmem:[%s8153 + $0x698] sm:$0xff]
    %v8366 = vld [vmem:[%s8153 + $0x6a0] sm:$0xff]
    %v8367 = vld [vmem:[%s8153 + $0x6a8] sm:$0xff]
    %v8368 = vld [vmem:[%s8153 + $0x6b0] sm:$0xff]
    %v8369 = vld [vmem:[%s8153 + $0x6b8] sm:$0xff]
    %v8370 = vld [vmem:[%s8153 + $0x6c0] sm:$0xff]
    %v8371 = vld [vmem:[%s8153 + $0x6c8] sm:$0xff]
    %v8372 = vld [vmem:[%s8153 + $0x6d0] sm:$0xff]
    %v8373 = vld [vmem:[%s8153 + $0x6d8] sm:$0xff]
    %v8374 = vld [vmem:[%s8153 + $0x6e0] sm:$0xff]
    %v8375 = vld [vmem:[%s8153 + $0x6e8] sm:$0xff]
    %v8376 = vld [vmem:[%s8153 + $0x6f0] sm:$0xff]
    %v8377 = vld [vmem:[%s8153 + $0x6f8] sm:$0xff]
    %v8378 = vld [vmem:[%s8153 + $0x700] sm:$0xff]
    %v8379 = vld [vmem:[%s8153 + $0x708] sm:$0xff]
    %v8380 = vld [vmem:[%s8153 + $0x710] sm:$0xff]
    %v8381 = vld [vmem:[%s8153 + $0x718] sm:$0xff]
    %v8382 = vld [vmem:[%s8153 + $0x720] sm:$0xff]
    %v8383 = vld [vmem:[%s8153 + $0x728] sm:$0xff]
    %v8384 = vld [vmem:[%s8153 + $0x730] sm:$0xff]
    %v8385 = vld [vmem:[%s8153 + $0x738] sm:$0xff]
    %v8386 = vld [vmem:[%s8153 + $0x740] sm:$0xff]
    %v8387 = vld [vmem:[%s8153 + $0x748] sm:$0xff]
    %v8388 = vld [vmem:[%s8153 + $0x750] sm:$0xff]
    %v8389 = vld [vmem:[%s8153 + $0x758] sm:$0xff]
    %v8390 = vld [vmem:[%s8153 + $0x760] sm:$0xff]
    %v8391 = vld [vmem:[%s8153 + $0x768] sm:$0xff]
    %v8392 = vld [vmem:[%s8153 + $0x770] sm:$0xff]
    %v8393 = vld [vmem:[%s8153 + $0x778] sm:$0xff]
    %v8394 = vld [vmem:[%s8153 + $0x780] sm:$0xff]
    %v8395 = vld [vmem:[%s8153 + $0x788] sm:$0xff]
    %v8396 = vld [vmem:[%s8153 + $0x790] sm:$0xff]
    %v8397 = vld [vmem:[%s8153 + $0x798] sm:$0xff]
    %v8398 = vld [vmem:[%s8153 + $0x7a0] sm:$0xff]
    %v8399 = vld [vmem:[%s8153 + $0x7a8] sm:$0xff]
    %v8400 = vld [vmem:[%s8153 + $0x7b0] sm:$0xff]
    %v8401 = vld [vmem:[%s8153 + $0x7b8] sm:$0xff]
    %v8402 = vld [vmem:[%s8153 + $0x7c0] sm:$0xff]
    %v8403 = vld [vmem:[%s8153 + $0x7c8] sm:$0xff]
    %v8404 = vld [vmem:[%s8153 + $0x7d0] sm:$0xff]
    %v8405 = vld [vmem:[%s8153 + $0x7d8] sm:$0xff]
    %v8406 = vld [vmem:[%s8153 + $0x7e0] sm:$0xff]
    %v8407 = vld [vmem:[%s8153 + $0x7e8] sm:$0xff]
    %v8408 = vld [vmem:[%s8153 + $0x7f0] sm:$0xff]
    %v8409 = vld [vmem:[%s8153 + $0x7f8] sm:$0xff]
    %v8666 = vunpack.c.l.b16 %v8154
    %v8667 = vunpack.c.h.b16 %v8154
    %v8668 = vunpack.c.l.b16 %v8155
    %v8669 = vunpack.c.h.b16 %v8155
    %v8670 = vunpack.c.l.b16 %v8156
    %v8671 = vunpack.c.h.b16 %v8156
    %v8672 = vunpack.c.l.b16 %v8157
    %v8673 = vunpack.c.h.b16 %v8157
    %v8674 = vunpack.c.l.b16 %v8158
    %v8675 = vunpack.c.h.b16 %v8158
    %v8676 = vunpack.c.l.b16 %v8159
    %v8677 = vunpack.c.h.b16 %v8159
    %v8678 = vunpack.c.l.b16 %v8160
    %v8679 = vunpack.c.h.b16 %v8160
    %v8680 = vunpack.c.l.b16 %v8161
    %v8681 = vunpack.c.h.b16 %v8161
    %v8682 = vunpack.c.l.b16 %v8162
    %v8683 = vunpack.c.h.b16 %v8162
    %v8684 = vunpack.c.l.b16 %v8163
    %v8685 = vunpack.c.h.b16 %v8163
    %v8686 = vunpack.c.l.b16 %v8164
    %v8687 = vunpack.c.h.b16 %v8164
    %v8688 = vunpack.c.l.b16 %v8165
    %v8689 = vunpack.c.h.b16 %v8165
    %v8690 = vunpack.c.l.b16 %v8166
    %v8691 = vunpack.c.h.b16 %v8166
    %v8692 = vunpack.c.l.b16 %v8167
    %v8693 = vunpack.c.h.b16 %v8167
    %v8694 = vunpack.c.l.b16 %v8168
    %v8695 = vunpack.c.h.b16 %v8168
    %v8696 = vunpack.c.l.b16 %v8169
    %v8697 = vunpack.c.h.b16 %v8169
    %v8698 = vunpack.c.l.b16 %v8170
    %v8699 = vunpack.c.h.b16 %v8170
    %v8700 = vunpack.c.l.b16 %v8171
    %v8701 = vunpack.c.h.b16 %v8171
    %v8702 = vunpack.c.l.b16 %v8172
    %v8703 = vunpack.c.h.b16 %v8172
    %v8704 = vunpack.c.l.b16 %v8173
    %v8705 = vunpack.c.h.b16 %v8173
    %v8706 = vunpack.c.l.b16 %v8174
    %v8707 = vunpack.c.h.b16 %v8174
    %v8708 = vunpack.c.l.b16 %v8175
    %v8709 = vunpack.c.h.b16 %v8175
    %v8710 = vunpack.c.l.b16 %v8176
    %v8711 = vunpack.c.h.b16 %v8176
    %v8712 = vunpack.c.l.b16 %v8177
    %v8713 = vunpack.c.h.b16 %v8177
    %v8714 = vunpack.c.l.b16 %v8178
    %v8715 = vunpack.c.h.b16 %v8178
    %v8716 = vunpack.c.l.b16 %v8179
    %v8717 = vunpack.c.h.b16 %v8179
    %v8718 = vunpack.c.l.b16 %v8180
    %v8719 = vunpack.c.h.b16 %v8180
    %v8720 = vunpack.c.l.b16 %v8181
    %v8721 = vunpack.c.h.b16 %v8181
    %v8722 = vunpack.c.l.b16 %v8182
    %v8723 = vunpack.c.h.b16 %v8182
    %v8724 = vunpack.c.l.b16 %v8183
    %v8725 = vunpack.c.h.b16 %v8183
    %v8726 = vunpack.c.l.b16 %v8184
    %v8727 = vunpack.c.h.b16 %v8184
    %v8728 = vunpack.c.l.b16 %v8185
    %v8729 = vunpack.c.h.b16 %v8185
    %v8730 = vunpack.c.l.b16 %v8186
    %v8731 = vunpack.c.h.b16 %v8186
    %v8732 = vunpack.c.l.b16 %v8187
    %v8733 = vunpack.c.h.b16 %v8187
    %v8734 = vunpack.c.l.b16 %v8188
    %v8735 = vunpack.c.h.b16 %v8188
    %v8736 = vunpack.c.l.b16 %v8189
    %v8737 = vunpack.c.h.b16 %v8189
    %v8738 = vunpack.c.l.b16 %v8190
    %v8739 = vunpack.c.h.b16 %v8190
    %v8740 = vunpack.c.l.b16 %v8191
    %v8741 = vunpack.c.h.b16 %v8191
    %v8742 = vunpack.c.l.b16 %v8192
    %v8743 = vunpack.c.h.b16 %v8192
    %v8744 = vunpack.c.l.b16 %v8193
    %v8745 = vunpack.c.h.b16 %v8193
    %v8746 = vunpack.c.l.b16 %v8194
    %v8747 = vunpack.c.h.b16 %v8194
    %v8748 = vunpack.c.l.b16 %v8195
    %v8749 = vunpack.c.h.b16 %v8195
    %v8750 = vunpack.c.l.b16 %v8196
    %v8751 = vunpack.c.h.b16 %v8196
    %v8752 = vunpack.c.l.b16 %v8197
    %v8753 = vunpack.c.h.b16 %v8197
    %v8754 = vunpack.c.l.b16 %v8198
    %v8755 = vunpack.c.h.b16 %v8198
    %v8756 = vunpack.c.l.b16 %v8199
    %v8757 = vunpack.c.h.b16 %v8199
    %v8758 = vunpack.c.l.b16 %v8200
    %v8759 = vunpack.c.h.b16 %v8200
    %v8760 = vunpack.c.l.b16 %v8201
    %v8761 = vunpack.c.h.b16 %v8201
    %v8762 = vunpack.c.l.b16 %v8202
    %v8763 = vunpack.c.h.b16 %v8202
    %v8764 = vunpack.c.l.b16 %v8203
    %v8765 = vunpack.c.h.b16 %v8203
    %v8766 = vunpack.c.l.b16 %v8204
    %v8767 = vunpack.c.h.b16 %v8204
    %v8768 = vunpack.c.l.b16 %v8205
    %v8769 = vunpack.c.h.b16 %v8205
    %v8770 = vunpack.c.l.b16 %v8206
    %v8771 = vunpack.c.h.b16 %v8206
    %v8772 = vunpack.c.l.b16 %v8207
    %v8773 = vunpack.c.h.b16 %v8207
    %v8774 = vunpack.c.l.b16 %v8208
    %v8775 = vunpack.c.h.b16 %v8208
    %v8776 = vunpack.c.l.b16 %v8209
    %v8777 = vunpack.c.h.b16 %v8209
    %v8778 = vunpack.c.l.b16 %v8210
    %v8779 = vunpack.c.h.b16 %v8210
    %v8780 = vunpack.c.l.b16 %v8211
    %v8781 = vunpack.c.h.b16 %v8211
    %v8782 = vunpack.c.l.b16 %v8212
    %v8783 = vunpack.c.h.b16 %v8212
    %v8784 = vunpack.c.l.b16 %v8213
    %v8785 = vunpack.c.h.b16 %v8213
    %v8786 = vunpack.c.l.b16 %v8214
    %v8787 = vunpack.c.h.b16 %v8214
    %v8788 = vunpack.c.l.b16 %v8215
    %v8789 = vunpack.c.h.b16 %v8215
    %v8790 = vunpack.c.l.b16 %v8216
    %v8791 = vunpack.c.h.b16 %v8216
    %v8792 = vunpack.c.l.b16 %v8217
    %v8793 = vunpack.c.h.b16 %v8217
    %v8794 = vunpack.c.l.b16 %v8218
    %v8795 = vunpack.c.h.b16 %v8218
    %v8796 = vunpack.c.l.b16 %v8219
    %v8797 = vunpack.c.h.b16 %v8219
    %v8798 = vunpack.c.l.b16 %v8220
    %v8799 = vunpack.c.h.b16 %v8220
    %v8800 = vunpack.c.l.b16 %v8221
    %v8801 = vunpack.c.h.b16 %v8221
    %v8802 = vunpack.c.l.b16 %v8222
    %v8803 = vunpack.c.h.b16 %v8222
    %v8804 = vunpack.c.l.b16 %v8223
    %v8805 = vunpack.c.h.b16 %v8223
    %v8806 = vunpack.c.l.b16 %v8224
    %v8807 = vunpack.c.h.b16 %v8224
    %v8808 = vunpack.c.l.b16 %v8225
    %v8809 = vunpack.c.h.b16 %v8225
    %v8810 = vunpack.c.l.b16 %v8226
    %v8811 = vunpack.c.h.b16 %v8226
    %v8812 = vunpack.c.l.b16 %v8227
    %v8813 = vunpack.c.h.b16 %v8227
    %v8814 = vunpack.c.l.b16 %v8228
    %v8815 = vunpack.c.h.b16 %v8228
    %v8816 = vunpack.c.l.b16 %v8229
    %v8817 = vunpack.c.h.b16 %v8229
    %v8818 = vunpack.c.l.b16 %v8230
    %v8819 = vunpack.c.h.b16 %v8230
    %v8820 = vunpack.c.l.b16 %v8231
    %v8821 = vunpack.c.h.b16 %v8231
    %v8822 = vunpack.c.l.b16 %v8232
    %v8823 = vunpack.c.h.b16 %v8232
    %v8824 = vunpack.c.l.b16 %v8233
    %v8825 = vunpack.c.h.b16 %v8233
    %v8826 = vunpack.c.l.b16 %v8234
    %v8827 = vunpack.c.h.b16 %v8234
    %v8828 = vunpack.c.l.b16 %v8235
    %v8829 = vunpack.c.h.b16 %v8235
    %v8830 = vunpack.c.l.b16 %v8236
    %v8831 = vunpack.c.h.b16 %v8236
    %v8832 = vunpack.c.l.b16 %v8237
    %v8833 = vunpack.c.h.b16 %v8237
    %v8834 = vunpack.c.l.b16 %v8238
    %v8835 = vunpack.c.h.b16 %v8238
    %v8836 = vunpack.c.l.b16 %v8239
    %v8837 = vunpack.c.h.b16 %v8239
    %v8838 = vunpack.c.l.b16 %v8240
    %v8839 = vunpack.c.h.b16 %v8240
    %v8840 = vunpack.c.l.b16 %v8241
    %v8841 = vunpack.c.h.b16 %v8241
    %v8842 = vunpack.c.l.b16 %v8242
    %v8843 = vunpack.c.h.b16 %v8242
    %v8844 = vunpack.c.l.b16 %v8243
    %v8845 = vunpack.c.h.b16 %v8243
    %v8846 = vunpack.c.l.b16 %v8244
    %v8847 = vunpack.c.h.b16 %v8244
    %v8848 = vunpack.c.l.b16 %v8245
    %v8849 = vunpack.c.h.b16 %v8245
    %v8850 = vunpack.c.l.b16 %v8246
    %v8851 = vunpack.c.h.b16 %v8246
    %v8852 = vunpack.c.l.b16 %v8247
    %v8853 = vunpack.c.h.b16 %v8247
    %v8854 = vunpack.c.l.b16 %v8248
    %v8855 = vunpack.c.h.b16 %v8248
    %v8856 = vunpack.c.l.b16 %v8249
    %v8857 = vunpack.c.h.b16 %v8249
    %v8858 = vunpack.c.l.b16 %v8250
    %v8859 = vunpack.c.h.b16 %v8250
    %v8860 = vunpack.c.l.b16 %v8251
    %v8861 = vunpack.c.h.b16 %v8251
    %v8862 = vunpack.c.l.b16 %v8252
    %v8863 = vunpack.c.h.b16 %v8252
    %v8864 = vunpack.c.l.b16 %v8253
    %v8865 = vunpack.c.h.b16 %v8253
    %v8866 = vunpack.c.l.b16 %v8254
    %v8867 = vunpack.c.h.b16 %v8254
    %v8868 = vunpack.c.l.b16 %v8255
    %v8869 = vunpack.c.h.b16 %v8255
    %v8870 = vunpack.c.l.b16 %v8256
    %v8871 = vunpack.c.h.b16 %v8256
    %v8872 = vunpack.c.l.b16 %v8257
    %v8873 = vunpack.c.h.b16 %v8257
    %v8874 = vunpack.c.l.b16 %v8258
    %v8875 = vunpack.c.h.b16 %v8258
    %v8876 = vunpack.c.l.b16 %v8259
    %v8877 = vunpack.c.h.b16 %v8259
    %v8878 = vunpack.c.l.b16 %v8260
    %v8879 = vunpack.c.h.b16 %v8260
    %v8880 = vunpack.c.l.b16 %v8261
    %v8881 = vunpack.c.h.b16 %v8261
    %v8882 = vunpack.c.l.b16 %v8262
    %v8883 = vunpack.c.h.b16 %v8262
    %v8884 = vunpack.c.l.b16 %v8263
    %v8885 = vunpack.c.h.b16 %v8263
    %v8886 = vunpack.c.l.b16 %v8264
    %v8887 = vunpack.c.h.b16 %v8264
    %v8888 = vunpack.c.l.b16 %v8265
    %v8889 = vunpack.c.h.b16 %v8265
    %v8890 = vunpack.c.l.b16 %v8266
    %v8891 = vunpack.c.h.b16 %v8266
    %v8892 = vunpack.c.l.b16 %v8267
    %v8893 = vunpack.c.h.b16 %v8267
    %v8894 = vunpack.c.l.b16 %v8268
    %v8895 = vunpack.c.h.b16 %v8268
    %v8896 = vunpack.c.l.b16 %v8269
    %v8897 = vunpack.c.h.b16 %v8269
    %v8898 = vunpack.c.l.b16 %v8270
    %v8899 = vunpack.c.h.b16 %v8270
    %v8900 = vunpack.c.l.b16 %v8271
    %v8901 = vunpack.c.h.b16 %v8271
    %v8902 = vunpack.c.l.b16 %v8272
    %v8903 = vunpack.c.h.b16 %v8272
    %v8904 = vunpack.c.l.b16 %v8273
    %v8905 = vunpack.c.h.b16 %v8273
    %v8906 = vunpack.c.l.b16 %v8274
    %v8907 = vunpack.c.h.b16 %v8274
    %v8908 = vunpack.c.l.b16 %v8275
    %v8909 = vunpack.c.h.b16 %v8275
    %v8910 = vunpack.c.l.b16 %v8276
    %v8911 = vunpack.c.h.b16 %v8276
    %v8912 = vunpack.c.l.b16 %v8277
    %v8913 = vunpack.c.h.b16 %v8277
    %v8914 = vunpack.c.l.b16 %v8278
    %v8915 = vunpack.c.h.b16 %v8278
    %v8916 = vunpack.c.l.b16 %v8279
    %v8917 = vunpack.c.h.b16 %v8279
    %v8918 = vunpack.c.l.b16 %v8280
    %v8919 = vunpack.c.h.b16 %v8280
    %v8920 = vunpack.c.l.b16 %v8281
    %v8921 = vunpack.c.h.b16 %v8281
    %v8922 = vunpack.c.l.b16 %v8282
    %v8923 = vunpack.c.h.b16 %v8282
    %v8924 = vunpack.c.l.b16 %v8283
    %v8925 = vunpack.c.h.b16 %v8283
    %v8926 = vunpack.c.l.b16 %v8284
    %v8927 = vunpack.c.h.b16 %v8284
    %v8928 = vunpack.c.l.b16 %v8285
    %v8929 = vunpack.c.h.b16 %v8285
    %v8930 = vunpack.c.l.b16 %v8286
    %v8931 = vunpack.c.h.b16 %v8286
    %v8932 = vunpack.c.l.b16 %v8287
    %v8933 = vunpack.c.h.b16 %v8287
    %v8934 = vunpack.c.l.b16 %v8288
    %v8935 = vunpack.c.h.b16 %v8288
    %v8936 = vunpack.c.l.b16 %v8289
    %v8937 = vunpack.c.h.b16 %v8289
    %v8938 = vunpack.c.l.b16 %v8290
    %v8939 = vunpack.c.h.b16 %v8290
    %v8940 = vunpack.c.l.b16 %v8291
    %v8941 = vunpack.c.h.b16 %v8291
    %v8942 = vunpack.c.l.b16 %v8292
    %v8943 = vunpack.c.h.b16 %v8292
    %v8944 = vunpack.c.l.b16 %v8293
    %v8945 = vunpack.c.h.b16 %v8293
    %v8946 = vunpack.c.l.b16 %v8294
    %v8947 = vunpack.c.h.b16 %v8294
    %v8948 = vunpack.c.l.b16 %v8295
    %v8949 = vunpack.c.h.b16 %v8295
    %v8950 = vunpack.c.l.b16 %v8296
    %v8951 = vunpack.c.h.b16 %v8296
    %v8952 = vunpack.c.l.b16 %v8297
    %v8953 = vunpack.c.h.b16 %v8297
    %v8954 = vunpack.c.l.b16 %v8298
    %v8955 = vunpack.c.h.b16 %v8298
    %v8956 = vunpack.c.l.b16 %v8299
    %v8957 = vunpack.c.h.b16 %v8299
    %v8958 = vunpack.c.l.b16 %v8300
    %v8959 = vunpack.c.h.b16 %v8300
    %v8960 = vunpack.c.l.b16 %v8301
    %v8961 = vunpack.c.h.b16 %v8301
    %v8962 = vunpack.c.l.b16 %v8302
    %v8963 = vunpack.c.h.b16 %v8302
    %v8964 = vunpack.c.l.b16 %v8303
    %v8965 = vunpack.c.h.b16 %v8303
    %v8966 = vunpack.c.l.b16 %v8304
    %v8967 = vunpack.c.h.b16 %v8304
    %v8968 = vunpack.c.l.b16 %v8305
    %v8969 = vunpack.c.h.b16 %v8305
    %v8970 = vunpack.c.l.b16 %v8306
    %v8971 = vunpack.c.h.b16 %v8306
    %v8972 = vunpack.c.l.b16 %v8307
    %v8973 = vunpack.c.h.b16 %v8307
    %v8974 = vunpack.c.l.b16 %v8308
    %v8975 = vunpack.c.h.b16 %v8308
    %v8976 = vunpack.c.l.b16 %v8309
    %v8977 = vunpack.c.h.b16 %v8309
    %v8978 = vunpack.c.l.b16 %v8310
    %v8979 = vunpack.c.h.b16 %v8310
    %v8980 = vunpack.c.l.b16 %v8311
    %v8981 = vunpack.c.h.b16 %v8311
    %v8982 = vunpack.c.l.b16 %v8312
    %v8983 = vunpack.c.h.b16 %v8312
    %v8984 = vunpack.c.l.b16 %v8313
    %v8985 = vunpack.c.h.b16 %v8313
    %v8986 = vunpack.c.l.b16 %v8314
    %v8987 = vunpack.c.h.b16 %v8314
    %v8988 = vunpack.c.l.b16 %v8315
    %v8989 = vunpack.c.h.b16 %v8315
    %v8990 = vunpack.c.l.b16 %v8316
    %v8991 = vunpack.c.h.b16 %v8316
    %v8992 = vunpack.c.l.b16 %v8317
    %v8993 = vunpack.c.h.b16 %v8317
    %v8994 = vunpack.c.l.b16 %v8318
    %v8995 = vunpack.c.h.b16 %v8318
    %v8996 = vunpack.c.l.b16 %v8319
    %v8997 = vunpack.c.h.b16 %v8319
    %v8998 = vunpack.c.l.b16 %v8320
    %v8999 = vunpack.c.h.b16 %v8320
    %v9000 = vunpack.c.l.b16 %v8321
    %v9001 = vunpack.c.h.b16 %v8321
    %v9002 = vunpack.c.l.b16 %v8322
    %v9003 = vunpack.c.h.b16 %v8322
    %v9004 = vunpack.c.l.b16 %v8323
    %v9005 = vunpack.c.h.b16 %v8323
    %v9006 = vunpack.c.l.b16 %v8324
    %v9007 = vunpack.c.h.b16 %v8324
    %v9008 = vunpack.c.l.b16 %v8325
    %v9009 = vunpack.c.h.b16 %v8325
    %v9010 = vunpack.c.l.b16 %v8326
    %v9011 = vunpack.c.h.b16 %v8326
    %v9012 = vunpack.c.l.b16 %v8327
    %v9013 = vunpack.c.h.b16 %v8327
    %v9014 = vunpack.c.l.b16 %v8328
    %v9015 = vunpack.c.h.b16 %v8328
    %v9016 = vunpack.c.l.b16 %v8329
    %v9017 = vunpack.c.h.b16 %v8329
    %v9018 = vunpack.c.l.b16 %v8330
    %v9019 = vunpack.c.h.b16 %v8330
    %v9020 = vunpack.c.l.b16 %v8331
    %v9021 = vunpack.c.h.b16 %v8331
    %v9022 = vunpack.c.l.b16 %v8332
    %v9023 = vunpack.c.h.b16 %v8332
    %v9024 = vunpack.c.l.b16 %v8333
    %v9025 = vunpack.c.h.b16 %v8333
    %v9026 = vunpack.c.l.b16 %v8334
    %v9027 = vunpack.c.h.b16 %v8334
    %v9028 = vunpack.c.l.b16 %v8335
    %v9029 = vunpack.c.h.b16 %v8335
    %v9030 = vunpack.c.l.b16 %v8336
    %v9031 = vunpack.c.h.b16 %v8336
    %v9032 = vunpack.c.l.b16 %v8337
    %v9033 = vunpack.c.h.b16 %v8337
    %v9034 = vunpack.c.l.b16 %v8338
    %v9035 = vunpack.c.h.b16 %v8338
    %v9036 = vunpack.c.l.b16 %v8339
    %v9037 = vunpack.c.h.b16 %v8339
    %v9038 = vunpack.c.l.b16 %v8340
    %v9039 = vunpack.c.h.b16 %v8340
    %v9040 = vunpack.c.l.b16 %v8341
    %v9041 = vunpack.c.h.b16 %v8341
    %v9042 = vunpack.c.l.b16 %v8342
    %v9043 = vunpack.c.h.b16 %v8342
    %v9044 = vunpack.c.l.b16 %v8343
    %v9045 = vunpack.c.h.b16 %v8343
    %v9046 = vunpack.c.l.b16 %v8344
    %v9047 = vunpack.c.h.b16 %v8344
    %v9048 = vunpack.c.l.b16 %v8345
    %v9049 = vunpack.c.h.b16 %v8345
    %v9050 = vunpack.c.l.b16 %v8346
    %v9051 = vunpack.c.h.b16 %v8346
    %v9052 = vunpack.c.l.b16 %v8347
    %v9053 = vunpack.c.h.b16 %v8347
    %v9054 = vunpack.c.l.b16 %v8348
    %v9055 = vunpack.c.h.b16 %v8348
    %v9056 = vunpack.c.l.b16 %v8349
    %v9057 = vunpack.c.h.b16 %v8349
    %v9058 = vunpack.c.l.b16 %v8350
    %v9059 = vunpack.c.h.b16 %v8350
    %v9060 = vunpack.c.l.b16 %v8351
    %v9061 = vunpack.c.h.b16 %v8351
    %v9062 = vunpack.c.l.b16 %v8352
    %v9063 = vunpack.c.h.b16 %v8352
    %v9064 = vunpack.c.l.b16 %v8353
    %v9065 = vunpack.c.h.b16 %v8353
    %v9066 = vunpack.c.l.b16 %v8354
    %v9067 = vunpack.c.h.b16 %v8354
    %v9068 = vunpack.c.l.b16 %v8355
    %v9069 = vunpack.c.h.b16 %v8355
    %v9070 = vunpack.c.l.b16 %v8356
    %v9071 = vunpack.c.h.b16 %v8356
    %v9072 = vunpack.c.l.b16 %v8357
    %v9073 = vunpack.c.h.b16 %v8357
    %v9074 = vunpack.c.l.b16 %v8358
    %v9075 = vunpack.c.h.b16 %v8358
    %v9076 = vunpack.c.l.b16 %v8359
    %v9077 = vunpack.c.h.b16 %v8359
    %v9078 = vunpack.c.l.b16 %v8360
    %v9079 = vunpack.c.h.b16 %v8360
    %v9080 = vunpack.c.l.b16 %v8361
    %v9081 = vunpack.c.h.b16 %v8361
    %v9082 = vunpack.c.l.b16 %v8362
    %v9083 = vunpack.c.h.b16 %v8362
    %v9084 = vunpack.c.l.b16 %v8363
    %v9085 = vunpack.c.h.b16 %v8363
    %v9086 = vunpack.c.l.b16 %v8364
    %v9087 = vunpack.c.h.b16 %v8364
    %v9088 = vunpack.c.l.b16 %v8365
    %v9089 = vunpack.c.h.b16 %v8365
    %v9090 = vunpack.c.l.b16 %v8366
    %v9091 = vunpack.c.h.b16 %v8366
    %v9092 = vunpack.c.l.b16 %v8367
    %v9093 = vunpack.c.h.b16 %v8367
    %v9094 = vunpack.c.l.b16 %v8368
    %v9095 = vunpack.c.h.b16 %v8368
    %v9096 = vunpack.c.l.b16 %v8369
    %v9097 = vunpack.c.h.b16 %v8369
    %v9098 = vunpack.c.l.b16 %v8370
    %v9099 = vunpack.c.h.b16 %v8370
    %v9100 = vunpack.c.l.b16 %v8371
    %v9101 = vunpack.c.h.b16 %v8371
    %v9102 = vunpack.c.l.b16 %v8372
    %v9103 = vunpack.c.h.b16 %v8372
    %v9104 = vunpack.c.l.b16 %v8373
    %v9105 = vunpack.c.h.b16 %v8373
    %v9106 = vunpack.c.l.b16 %v8374
    %v9107 = vunpack.c.h.b16 %v8374
    %v9108 = vunpack.c.l.b16 %v8375
    %v9109 = vunpack.c.h.b16 %v8375
    %v9110 = vunpack.c.l.b16 %v8376
    %v9111 = vunpack.c.h.b16 %v8376
    %v9112 = vunpack.c.l.b16 %v8377
    %v9113 = vunpack.c.h.b16 %v8377
    %v9114 = vunpack.c.l.b16 %v8378
    %v9115 = vunpack.c.h.b16 %v8378
    %v9116 = vunpack.c.l.b16 %v8379
    %v9117 = vunpack.c.h.b16 %v8379
    %v9118 = vunpack.c.l.b16 %v8380
    %v9119 = vunpack.c.h.b16 %v8380
    %v9120 = vunpack.c.l.b16 %v8381
    %v9121 = vunpack.c.h.b16 %v8381
    %v9122 = vunpack.c.l.b16 %v8382
    %v9123 = vunpack.c.h.b16 %v8382
    %v9124 = vunpack.c.l.b16 %v8383
    %v9125 = vunpack.c.h.b16 %v8383
    %v9126 = vunpack.c.l.b16 %v8384
    %v9127 = vunpack.c.h.b16 %v8384
    %v9128 = vunpack.c.l.b16 %v8385
    %v9129 = vunpack.c.h.b16 %v8385
    %v9130 = vunpack.c.l.b16 %v8386
    %v9131 = vunpack.c.h.b16 %v8386
    %v9132 = vunpack.c.l.b16 %v8387
    %v9133 = vunpack.c.h.b16 %v8387
    %v9134 = vunpack.c.l.b16 %v8388
    %v9135 = vunpack.c.h.b16 %v8388
    %v9136 = vunpack.c.l.b16 %v8389
    %v9137 = vunpack.c.h.b16 %v8389
    %v9138 = vunpack.c.l.b16 %v8390
    %v9139 = vunpack.c.h.b16 %v8390
    %v9140 = vunpack.c.l.b16 %v8391
    %v9141 = vunpack.c.h.b16 %v8391
    %v9142 = vunpack.c.l.b16 %v8392
    %v9143 = vunpack.c.h.b16 %v8392
    %v9144 = vunpack.c.l.b16 %v8393
    %v9145 = vunpack.c.h.b16 %v8393
    %v9146 = vunpack.c.l.b16 %v8394
    %v9147 = vunpack.c.h.b16 %v8394
    %v9148 = vunpack.c.l.b16 %v8395
    %v9149 = vunpack.c.h.b16 %v8395
    %v9150 = vunpack.c.l.b16 %v8396
    %v9151 = vunpack.c.h.b16 %v8396
    %v9152 = vunpack.c.l.b16 %v8397
    %v9153 = vunpack.c.h.b16 %v8397
    %v9154 = vunpack.c.l.b16 %v8398
    %v9155 = vunpack.c.h.b16 %v8398
    %v9156 = vunpack.c.l.b16 %v8399
    %v9157 = vunpack.c.h.b16 %v8399
    %v9158 = vunpack.c.l.b16 %v8400
    %v9159 = vunpack.c.h.b16 %v8400
    %v9160 = vunpack.c.l.b16 %v8401
    %v9161 = vunpack.c.h.b16 %v8401
    %v9162 = vunpack.c.l.b16 %v8402
    %v9163 = vunpack.c.h.b16 %v8402
    %v9164 = vunpack.c.l.b16 %v8403
    %v9165 = vunpack.c.h.b16 %v8403
    %v9166 = vunpack.c.l.b16 %v8404
    %v9167 = vunpack.c.h.b16 %v8404
    %v9168 = vunpack.c.l.b16 %v8405
    %v9169 = vunpack.c.h.b16 %v8405
    %v9170 = vunpack.c.l.b16 %v8406
    %v9171 = vunpack.c.h.b16 %v8406
    %v9172 = vunpack.c.l.b16 %v8407
    %v9173 = vunpack.c.h.b16 %v8407
    %v9174 = vunpack.c.l.b16 %v8408
    %v9175 = vunpack.c.h.b16 %v8408
    %v9176 = vunpack.c.l.b16 %v8409
    %v9177 = vunpack.c.h.b16 %v8409
    %v9178 = vpack.c.b16 %v8670, %v8666
    %v9179 = vpack.c.b16 %v8671, %v8667
    %v9180 = vpack.c.b16 %v8672, %v8668
    %v9181 = vpack.c.b16 %v8673, %v8669
    %v9182 = vpack.c.b16 %v8678, %v8674
    %v9183 = vpack.c.b16 %v8679, %v8675
    %v9184 = vpack.c.b16 %v8680, %v8676
    %v9185 = vpack.c.b16 %v8681, %v8677
    %v9186 = vpack.c.b16 %v8686, %v8682
    %v9187 = vpack.c.b16 %v8687, %v8683
    %v9188 = vpack.c.b16 %v8688, %v8684
    %v9189 = vpack.c.b16 %v8689, %v8685
    %v9190 = vpack.c.b16 %v8694, %v8690
    %v9191 = vpack.c.b16 %v8695, %v8691
    %v9192 = vpack.c.b16 %v8696, %v8692
    %v9193 = vpack.c.b16 %v8697, %v8693
    %v9194 = vpack.c.b16 %v8702, %v8698
    %v9195 = vpack.c.b16 %v8703, %v8699
    %v9196 = vpack.c.b16 %v8704, %v8700
    %v9197 = vpack.c.b16 %v8705, %v8701
    %v9198 = vpack.c.b16 %v8710, %v8706
    %v9199 = vpack.c.b16 %v8711, %v8707
    %v9200 = vpack.c.b16 %v8712, %v8708
    %v9201 = vpack.c.b16 %v8713, %v8709
    %v9202 = vpack.c.b16 %v8718, %v8714
    %v9203 = vpack.c.b16 %v8719, %v8715
    %v9204 = vpack.c.b16 %v8720, %v8716
    %v9205 = vpack.c.b16 %v8721, %v8717
    %v9206 = vpack.c.b16 %v8726, %v8722
    %v9207 = vpack.c.b16 %v8727, %v8723
    %v9208 = vpack.c.b16 %v8728, %v8724
    %v9209 = vpack.c.b16 %v8729, %v8725
    %v9210 = vpack.c.b16 %v8734, %v8730
    %v9211 = vpack.c.b16 %v8735, %v8731
    %v9212 = vpack.c.b16 %v8736, %v8732
    %v9213 = vpack.c.b16 %v8737, %v8733
    %v9214 = vpack.c.b16 %v8742, %v8738
    %v9215 = vpack.c.b16 %v8743, %v8739
    %v9216 = vpack.c.b16 %v8744, %v8740
    %v9217 = vpack.c.b16 %v8745, %v8741
    %v9218 = vpack.c.b16 %v8750, %v8746
    %v9219 = vpack.c.b16 %v8751, %v8747
    %v9220 = vpack.c.b16 %v8752, %v8748
    %v9221 = vpack.c.b16 %v8753, %v8749
    %v9222 = vpack.c.b16 %v8758, %v8754
    %v9223 = vpack.c.b16 %v8759, %v8755
    %v9224 = vpack.c.b16 %v8760, %v8756
    %v9225 = vpack.c.b16 %v8761, %v8757
    %v9226 = vpack.c.b16 %v8766, %v8762
    %v9227 = vpack.c.b16 %v8767, %v8763
    %v9228 = vpack.c.b16 %v8768, %v8764
    %v9229 = vpack.c.b16 %v8769, %v8765
    %v9230 = vpack.c.b16 %v8774, %v8770
    %v9231 = vpack.c.b16 %v8775, %v8771
    %v9232 = vpack.c.b16 %v8776, %v8772
    %v9233 = vpack.c.b16 %v8777, %v8773
    %v9234 = vpack.c.b16 %v8782, %v8778
    %v9235 = vpack.c.b16 %v8783, %v8779
    %v9236 = vpack.c.b16 %v8784, %v8780
    %v9237 = vpack.c.b16 %v8785, %v8781
    %v9238 = vpack.c.b16 %v8790, %v8786
    %v9239 = vpack.c.b16 %v8791, %v8787
    %v9240 = vpack.c.b16 %v8792, %v8788
    %v9241 = vpack.c.b16 %v8793, %v8789
    %v9242 = vpack.c.b16 %v8798, %v8794
    %v9243 = vpack.c.b16 %v8799, %v8795
    %v9244 = vpack.c.b16 %v8800, %v8796
    %v9245 = vpack.c.b16 %v8801, %v8797
    %v9246 = vpack.c.b16 %v8806, %v8802
    %v9247 = vpack.c.b16 %v8807, %v8803
    %v9248 = vpack.c.b16 %v8808, %v8804
    %v9249 = vpack.c.b16 %v8809, %v8805
    %v9250 = vpack.c.b16 %v8814, %v8810
    %v9251 = vpack.c.b16 %v8815, %v8811
    %v9252 = vpack.c.b16 %v8816, %v8812
    %v9253 = vpack.c.b16 %v8817, %v8813
    %v9254 = vpack.c.b16 %v8822, %v8818
    %v9255 = vpack.c.b16 %v8823, %v8819
    %v9256 = vpack.c.b16 %v8824, %v8820
    %v9257 = vpack.c.b16 %v8825, %v8821
    %v9258 = vpack.c.b16 %v8830, %v8826
    %v9259 = vpack.c.b16 %v8831, %v8827
    %v9260 = vpack.c.b16 %v8832, %v8828
    %v9261 = vpack.c.b16 %v8833, %v8829
    %v9262 = vpack.c.b16 %v8838, %v8834
    %v9263 = vpack.c.b16 %v8839, %v8835
    %v9264 = vpack.c.b16 %v8840, %v8836
    %v9265 = vpack.c.b16 %v8841, %v8837
    %v9266 = vpack.c.b16 %v8846, %v8842
    %v9267 = vpack.c.b16 %v8847, %v8843
    %v9268 = vpack.c.b16 %v8848, %v8844
    %v9269 = vpack.c.b16 %v8849, %v8845
    %v9270 = vpack.c.b16 %v8854, %v8850
    %v9271 = vpack.c.b16 %v8855, %v8851
    %v9272 = vpack.c.b16 %v8856, %v8852
    %v9273 = vpack.c.b16 %v8857, %v8853
    %v9274 = vpack.c.b16 %v8862, %v8858
    %v9275 = vpack.c.b16 %v8863, %v8859
    %v9276 = vpack.c.b16 %v8864, %v8860
    %v9277 = vpack.c.b16 %v8865, %v8861
    %v9278 = vpack.c.b16 %v8870, %v8866
    %v9279 = vpack.c.b16 %v8871, %v8867
    %v9280 = vpack.c.b16 %v8872, %v8868
    %v9281 = vpack.c.b16 %v8873, %v8869
    %v9282 = vpack.c.b16 %v8878, %v8874
    %v9283 = vpack.c.b16 %v8879, %v8875
    %v9284 = vpack.c.b16 %v8880, %v8876
    %v9285 = vpack.c.b16 %v8881, %v8877
    %v9286 = vpack.c.b16 %v8886, %v8882
    %v9287 = vpack.c.b16 %v8887, %v8883
    %v9288 = vpack.c.b16 %v8888, %v8884
    %v9289 = vpack.c.b16 %v8889, %v8885
    %v9290 = vpack.c.b16 %v8894, %v8890
    %v9291 = vpack.c.b16 %v8895, %v8891
    %v9292 = vpack.c.b16 %v8896, %v8892
    %v9293 = vpack.c.b16 %v8897, %v8893
    %v9294 = vpack.c.b16 %v8902, %v8898
    %v9295 = vpack.c.b16 %v8903, %v8899
    %v9296 = vpack.c.b16 %v8904, %v8900
    %v9297 = vpack.c.b16 %v8905, %v8901
    %v9298 = vpack.c.b16 %v8910, %v8906
    %v9299 = vpack.c.b16 %v8911, %v8907
    %v9300 = vpack.c.b16 %v8912, %v8908
    %v9301 = vpack.c.b16 %v8913, %v8909
    %v9302 = vpack.c.b16 %v8918, %v8914
    %v9303 = vpack.c.b16 %v8919, %v8915
    %v9304 = vpack.c.b16 %v8920, %v8916
    %v9305 = vpack.c.b16 %v8921, %v8917
    %v9306 = vpack.c.b16 %v8926, %v8922
    %v9307 = vpack.c.b16 %v8927, %v8923
    %v9308 = vpack.c.b16 %v8928, %v8924
    %v9309 = vpack.c.b16 %v8929, %v8925
    %v9310 = vpack.c.b16 %v8934, %v8930
    %v9311 = vpack.c.b16 %v8935, %v8931
    %v9312 = vpack.c.b16 %v8936, %v8932
    %v9313 = vpack.c.b16 %v8937, %v8933
    %v9314 = vpack.c.b16 %v8942, %v8938
    %v9315 = vpack.c.b16 %v8943, %v8939
    %v9316 = vpack.c.b16 %v8944, %v8940
    %v9317 = vpack.c.b16 %v8945, %v8941
    %v9318 = vpack.c.b16 %v8950, %v8946
    %v9319 = vpack.c.b16 %v8951, %v8947
    %v9320 = vpack.c.b16 %v8952, %v8948
    %v9321 = vpack.c.b16 %v8953, %v8949
    %v9322 = vpack.c.b16 %v8958, %v8954
    %v9323 = vpack.c.b16 %v8959, %v8955
    %v9324 = vpack.c.b16 %v8960, %v8956
    %v9325 = vpack.c.b16 %v8961, %v8957
    %v9326 = vpack.c.b16 %v8966, %v8962
    %v9327 = vpack.c.b16 %v8967, %v8963
    %v9328 = vpack.c.b16 %v8968, %v8964
    %v9329 = vpack.c.b16 %v8969, %v8965
    %v9330 = vpack.c.b16 %v8974, %v8970
    %v9331 = vpack.c.b16 %v8975, %v8971
    %v9332 = vpack.c.b16 %v8976, %v8972
    %v9333 = vpack.c.b16 %v8977, %v8973
    %v9334 = vpack.c.b16 %v8982, %v8978
    %v9335 = vpack.c.b16 %v8983, %v8979
    %v9336 = vpack.c.b16 %v8984, %v8980
    %v9337 = vpack.c.b16 %v8985, %v8981
    %v9338 = vpack.c.b16 %v8990, %v8986
    %v9339 = vpack.c.b16 %v8991, %v8987
    %v9340 = vpack.c.b16 %v8992, %v8988
    %v9341 = vpack.c.b16 %v8993, %v8989
    %v9342 = vpack.c.b16 %v8998, %v8994
    %v9343 = vpack.c.b16 %v8999, %v8995
    %v9344 = vpack.c.b16 %v9000, %v8996
    %v9345 = vpack.c.b16 %v9001, %v8997
    %v9346 = vpack.c.b16 %v9006, %v9002
    %v9347 = vpack.c.b16 %v9007, %v9003
    %v9348 = vpack.c.b16 %v9008, %v9004
    %v9349 = vpack.c.b16 %v9009, %v9005
    %v9350 = vpack.c.b16 %v9014, %v9010
    %v9351 = vpack.c.b16 %v9015, %v9011
    %v9352 = vpack.c.b16 %v9016, %v9012
    %v9353 = vpack.c.b16 %v9017, %v9013
    %v9354 = vpack.c.b16 %v9022, %v9018
    %v9355 = vpack.c.b16 %v9023, %v9019
    %v9356 = vpack.c.b16 %v9024, %v9020
    %v9357 = vpack.c.b16 %v9025, %v9021
    %v9358 = vpack.c.b16 %v9030, %v9026
    %v9359 = vpack.c.b16 %v9031, %v9027
    %v9360 = vpack.c.b16 %v9032, %v9028
    %v9361 = vpack.c.b16 %v9033, %v9029
    %v9362 = vpack.c.b16 %v9038, %v9034
    %v9363 = vpack.c.b16 %v9039, %v9035
    %v9364 = vpack.c.b16 %v9040, %v9036
    %v9365 = vpack.c.b16 %v9041, %v9037
    %v9366 = vpack.c.b16 %v9046, %v9042
    %v9367 = vpack.c.b16 %v9047, %v9043
    %v9368 = vpack.c.b16 %v9048, %v9044
    %v9369 = vpack.c.b16 %v9049, %v9045
    %v9370 = vpack.c.b16 %v9054, %v9050
    %v9371 = vpack.c.b16 %v9055, %v9051
    %v9372 = vpack.c.b16 %v9056, %v9052
    %v9373 = vpack.c.b16 %v9057, %v9053
    %v9374 = vpack.c.b16 %v9062, %v9058
    %v9375 = vpack.c.b16 %v9063, %v9059
    %v9376 = vpack.c.b16 %v9064, %v9060
    %v9377 = vpack.c.b16 %v9065, %v9061
    %v9378 = vpack.c.b16 %v9070, %v9066
    %v9379 = vpack.c.b16 %v9071, %v9067
    %v9380 = vpack.c.b16 %v9072, %v9068
    %v9381 = vpack.c.b16 %v9073, %v9069
    %v9382 = vpack.c.b16 %v9078, %v9074
    %v9383 = vpack.c.b16 %v9079, %v9075
    %v9384 = vpack.c.b16 %v9080, %v9076
    %v9385 = vpack.c.b16 %v9081, %v9077
    %v9386 = vpack.c.b16 %v9086, %v9082
    %v9387 = vpack.c.b16 %v9087, %v9083
    %v9388 = vpack.c.b16 %v9088, %v9084
    %v9389 = vpack.c.b16 %v9089, %v9085
    %v9390 = vpack.c.b16 %v9094, %v9090
    %v9391 = vpack.c.b16 %v9095, %v9091
    %v9392 = vpack.c.b16 %v9096, %v9092
    %v9393 = vpack.c.b16 %v9097, %v9093
    %v9394 = vpack.c.b16 %v9102, %v9098
    %v9395 = vpack.c.b16 %v9103, %v9099
    %v9396 = vpack.c.b16 %v9104, %v9100
    %v9397 = vpack.c.b16 %v9105, %v9101
    %v9398 = vpack.c.b16 %v9110, %v9106
    %v9399 = vpack.c.b16 %v9111, %v9107
    %v9400 = vpack.c.b16 %v9112, %v9108
    %v9401 = vpack.c.b16 %v9113, %v9109
    %v9402 = vpack.c.b16 %v9118, %v9114
    %v9403 = vpack.c.b16 %v9119, %v9115
    %v9404 = vpack.c.b16 %v9120, %v9116
    %v9405 = vpack.c.b16 %v9121, %v9117
    %v9406 = vpack.c.b16 %v9126, %v9122
    %v9407 = vpack.c.b16 %v9127, %v9123
    %v9408 = vpack.c.b16 %v9128, %v9124
    %v9409 = vpack.c.b16 %v9129, %v9125
    %v9410 = vpack.c.b16 %v9134, %v9130
    %v9411 = vpack.c.b16 %v9135, %v9131
    %v9412 = vpack.c.b16 %v9136, %v9132
    %v9413 = vpack.c.b16 %v9137, %v9133
    %v9414 = vpack.c.b16 %v9142, %v9138
    %v9415 = vpack.c.b16 %v9143, %v9139
    %v9416 = vpack.c.b16 %v9144, %v9140
    %v9417 = vpack.c.b16 %v9145, %v9141
    %v9418 = vpack.c.b16 %v9150, %v9146
    %v9419 = vpack.c.b16 %v9151, %v9147
    %v9420 = vpack.c.b16 %v9152, %v9148
    %v9421 = vpack.c.b16 %v9153, %v9149
    %v9422 = vpack.c.b16 %v9158, %v9154
    %v9423 = vpack.c.b16 %v9159, %v9155
    %v9424 = vpack.c.b16 %v9160, %v9156
    %v9425 = vpack.c.b16 %v9161, %v9157
    %v9426 = vpack.c.b16 %v9166, %v9162
    %v9427 = vpack.c.b16 %v9167, %v9163
    %v9428 = vpack.c.b16 %v9168, %v9164
    %v9429 = vpack.c.b16 %v9169, %v9165
    %v9430 = vpack.c.b16 %v9174, %v9170
    %v9431 = vpack.c.b16 %v9175, %v9171
    %v9432 = vpack.c.b16 %v9176, %v9172
    %v9433 = vpack.c.b16 %v9177, %v9173
    %9690 = vmatprep.subr.bf16.mxu0 %v9179
    %9691 = vmatpush1.bf16.msra.mxu0 %v9178
    %9692 = vmatprep.subr.bf16.mxu0 %v9183
    %9693 = vmatpush1.bf16.msra.mxu0 %v9182
    %9694 = vmatprep.subr.bf16.mxu0 %v9187
    %9695 = vmatpush1.bf16.msra.mxu0 %v9186
    %9696 = vmatprep.subr.bf16.mxu0 %v9191
    %9697 = vmatpush1.bf16.msra.mxu0 %v9190
    %9698 = vmatprep.subr.bf16.mxu0 %v9195
    %9699 = vmatpush1.bf16.msra.mxu0 %v9194
    %9700 = vmatprep.subr.bf16.mxu0 %v9199
    %9701 = vmatpush1.bf16.msra.mxu0 %v9198
    %9702 = vmatprep.subr.bf16.mxu0 %v9203
    %9703 = vmatpush1.bf16.msra.mxu0 %v9202
    %9704 = vmatprep.subr.bf16.mxu0 %v9207
    %9705 = vmatpush1.bf16.msra.mxu0 %v9206
    %9706 = vmatprep.subr.bf16.mxu0 %v9211
    %9707 = vmatpush1.bf16.msra.mxu0 %v9210
    %9708 = vmatprep.subr.bf16.mxu0 %v9215
    %9709 = vmatpush1.bf16.msra.mxu0 %v9214
    %9710 = vmatprep.subr.bf16.mxu0 %v9219
    %9711 = vmatpush1.bf16.msra.mxu0 %v9218
    %9712 = vmatprep.subr.bf16.mxu0 %v9223
    %9713 = vmatpush1.bf16.msra.mxu0 %v9222
    %9714 = vmatprep.subr.bf16.mxu0 %v9227
    %9715 = vmatpush1.bf16.msra.mxu0 %v9226
    %9716 = vmatprep.subr.bf16.mxu0 %v9231
    %9717 = vmatpush1.bf16.msra.mxu0 %v9230
    %9718 = vmatprep.subr.bf16.mxu0 %v9235
    %9719 = vmatpush1.bf16.msra.mxu0 %v9234
    %9720 = vmatprep.subr.bf16.mxu0 %v9239
    %9721 = vmatpush1.bf16.msra.mxu0 %v9238
    %9722 = vmatprep.mubr.bf16.mxu0 %v8146
    %9723 = vmatmul.mubr.bf16.gmra.mrb[0].mxu0 %v8145
    %v9724 = vpop.f32.mrb[0].mxu0
    %v9725 = vadd.f32 0.0, %v9724
    %v9726 = vpop.f32.mrb[0].mxu0
    %v9727 = vadd.f32 0.0, %v9726
    %v9728 = vpop.f32.mrb[0].mxu0
    %v9729 = vpop.f32.mrb[0].mxu0
    %9730 = vdwg.mxu0
    %9731 = vmatprep.subr.bf16.mxu0 %v9243
    %9732 = vmatpush1.bf16.msra.mxu0 %v9242
    %9733 = vmatprep.subr.bf16.mxu0 %v9247
    %9734 = vmatpush1.bf16.msra.mxu0 %v9246
    %9735 = vmatprep.subr.bf16.mxu0 %v9251
    %9736 = vmatpush1.bf16.msra.mxu0 %v9250
    %9737 = vmatprep.subr.bf16.mxu0 %v9255
    %9738 = vmatpush1.bf16.msra.mxu0 %v9254
    %9739 = vmatprep.subr.bf16.mxu0 %v9259
    %9740 = vmatpush1.bf16.msra.mxu0 %v9258
    %9741 = vmatprep.subr.bf16.mxu0 %v9263
    %9742 = vmatpush1.bf16.msra.mxu0 %v9262
    %9743 = vmatprep.subr.bf16.mxu0 %v9267
    %9744 = vmatpush1.bf16.msra.mxu0 %v9266
    %9745 = vmatprep.subr.bf16.mxu0 %v9271
    %9746 = vmatpush1.bf16.msra.mxu0 %v9270
    %9747 = vmatprep.subr.bf16.mxu0 %v9275
    %9748 = vmatpush1.bf16.msra.mxu0 %v9274
    %9749 = vmatprep.subr.bf16.mxu0 %v9279
    %9750 = vmatpush1.bf16.msra.mxu0 %v9278
    %9751 = vmatprep.subr.bf16.mxu0 %v9283
    %9752 = vmatpush1.bf16.msra.mxu0 %v9282
    %9753 = vmatprep.subr.bf16.mxu0 %v9287
    %9754 = vmatpush1.bf16.msra.mxu0 %v9286
    %9755 = vmatprep.subr.bf16.mxu0 %v9291
    %9756 = vmatpush1.bf16.msra.mxu0 %v9290
    %9757 = vmatprep.subr.bf16.mxu0 %v9295
    %9758 = vmatpush1.bf16.msra.mxu0 %v9294
    %9759 = vmatprep.subr.bf16.mxu0 %v9299
    %9760 = vmatpush1.bf16.msra.mxu0 %v9298
    %9761 = vmatprep.subr.bf16.mxu0 %v9303
    %9762 = vmatpush1.bf16.msra.mxu0 %v9302
    %9763 = vmatprep.mubr.bf16.mxu0 %v8148
    %9764 = vmatmul.mubr.bf16.gmra.mrb[0].mxu0 %v8147
    %v9765 = vpop.f32.mrb[0].mxu0
    %v9766 = vadd.f32 %v9725, %v9765
    %v9767 = vpop.f32.mrb[0].mxu0
    %v9768 = vadd.f32 %v9727, %v9767
    %v9769 = vpop.f32.mrb[0].mxu0
    %v9770 = vpop.f32.mrb[0].mxu0
    %9771 = vdwg.mxu0
    %9772 = vmatprep.subr.bf16.mxu0 %v9307
    %9773 = vmatpush1.bf16.msra.mxu0 %v9306
    %9774 = vmatprep.subr.bf16.mxu0 %v9311
    %9775 = vmatpush1.bf16.msra.mxu0 %v9310
    %9776 = vmatprep.subr.bf16.mxu0 %v9315
    %9777 = vmatpush1.bf16.msra.mxu0 %v9314
    %9778 = vmatprep.subr.bf16.mxu0 %v9319
    %9779 = vmatpush1.bf16.msra.mxu0 %v9318
    %9780 = vmatprep.subr.bf16.mxu0 %v9323
    %9781 = vmatpush1.bf16.msra.mxu0 %v9322
    %9782 = vmatprep.subr.bf16.mxu0 %v9327
    %9783 = vmatpush1.bf16.msra.mxu0 %v9326
    %9784 = vmatprep.subr.bf16.mxu0 %v9331
    %9785 = vmatpush1.bf16.msra.mxu0 %v9330
    %9786 = vmatprep.subr.bf16.mxu0 %v9335
    %9787 = vmatpush1.bf16.msra.mxu0 %v9334
    %9788 = vmatprep.subr.bf16.mxu0 %v9339
    %9789 = vmatpush1.bf16.msra.mxu0 %v9338
    %9790 = vmatprep.subr.bf16.mxu0 %v9343
    %9791 = vmatpush1.bf16.msra.mxu0 %v9342
    %9792 = vmatprep.subr.bf16.mxu0 %v9347
    %9793 = vmatpush1.bf16.msra.mxu0 %v9346
    %9794 = vmatprep.subr.bf16.mxu0 %v9351
    %9795 = vmatpush1.bf16.msra.mxu0 %v9350
    %9796 = vmatprep.subr.bf16.mxu0 %v9355
    %9797 = vmatpush1.bf16.msra.mxu0 %v9354
    %9798 = vmatprep.subr.bf16.mxu0 %v9359
    %9799 = vmatpush1.bf16.msra.mxu0 %v9358
    %9800 = vmatprep.subr.bf16.mxu0 %v9363
    %9801 = vmatpush1.bf16.msra.mxu0 %v9362
    %9802 = vmatprep.subr.bf16.mxu0 %v9367
    %9803 = vmatpush1.bf16.msra.mxu0 %v9366
    %9804 = vmatprep.mubr.bf16.mxu0 %v8150
    %9805 = vmatmul.mubr.bf16.gmra.mrb[0].mxu0 %v8149
    %v9806 = vpop.f32.mrb[0].mxu0
    %v9807 = vadd.f32 %v9766, %v9806
    %v9808 = vpop.f32.mrb[0].mxu0
    %v9809 = vadd.f32 %v9768, %v9808
    %v9810 = vpop.f32.mrb[0].mxu0
    %v9811 = vpop.f32.mrb[0].mxu0
    %9812 = vdwg.mxu0
    %9813 = vmatprep.subr.bf16.mxu0 %v9371
    %9814 = vmatpush1.bf16.msra.mxu0 %v9370
    %9815 = vmatprep.subr.bf16.mxu0 %v9375
    %9816 = vmatpush1.bf16.msra.mxu0 %v9374
    %9817 = vmatprep.subr.bf16.mxu0 %v9379
    %9818 = vmatpush1.bf16.msra.mxu0 %v9378
    %9819 = vmatprep.subr.bf16.mxu0 %v9383
    %9820 = vmatpush1.bf16.msra.mxu0 %v9382
    %9821 = vmatprep.subr.bf16.mxu0 %v9387
    %9822 = vmatpush1.bf16.msra.mxu0 %v9386
    %9823 = vmatprep.subr.bf16.mxu0 %v9391
    %9824 = vmatpush1.bf16.msra.mxu0 %v9390
    %9825 = vmatprep.subr.bf16.mxu0 %v9395
    %9826 = vmatpush1.bf16.msra.mxu0 %v9394
    %9827 = vmatprep.subr.bf16.mxu0 %v9399
    %9828 = vmatpush1.bf16.msra.mxu0 %v9398
    %9829 = vmatprep.subr.bf16.mxu0 %v9403
    %9830 = vmatpush1.bf16.msra.mxu0 %v9402
    %9831 = vmatprep.subr.bf16.mxu0 %v9407
    %9832 = vmatpush1.bf16.msra.mxu0 %v9406
    %9833 = vmatprep.subr.bf16.mxu0 %v9411
    %9834 = vmatpush1.bf16.msra.mxu0 %v9410
    %9835 = vmatprep.subr.bf16.mxu0 %v9415
    %9836 = vmatpush1.bf16.msra.mxu0 %v9414
    %9837 = vmatprep.subr.bf16.mxu0 %v9419
    %9838 = vmatpush1.bf16.msra.mxu0 %v9418
    %9839 = vmatprep.subr.bf16.mxu0 %v9423
    %9840 = vmatpush1.bf16.msra.mxu0 %v9422
    %9841 = vmatprep.subr.bf16.mxu0 %v9427
    %9842 = vmatpush1.bf16.msra.mxu0 %v9426
    %9843 = vmatprep.subr.bf16.mxu0 %v9431
    %9844 = vmatpush1.bf16.msra.mxu0 %v9430
    %9845 = vmatprep.mubr.bf16.mxu0 %v8152
    %9846 = vmatmul.mubr.bf16.gmra.mrb[0].mxu0 %v8151
    %v9847 = vpop.f32.mrb[0].mxu0
    %v9848 = vadd.f32 %v9807, %v9847
    %v9849 = vpop.f32.mrb[0].mxu0
    %v9850 = vadd.f32 %v9809, %v9849
    %v9851 = vpop.f32.mrb[0].mxu0
    %v9852 = vpop.f32.mrb[0].mxu0
    %9853 = vdwg.mxu0
    %9854 = vmatprep.subr.bf16.mxu0 %v9181
    %9855 = vmatpush1.bf16.msra.mxu0 %v9180
    %9856 = vmatprep.subr.bf16.mxu0 %v9185
    %9857 = vmatpush1.bf16.msra.mxu0 %v9184
    %9858 = vmatprep.subr.bf16.mxu0 %v9189
    %9859 = vmatpush1.bf16.msra.mxu0 %v9188
    %9860 = vmatprep.subr.bf16.mxu0 %v9193
    %9861 = vmatpush1.bf16.msra.mxu0 %v9192
    %9862 = vmatprep.subr.bf16.mxu0 %v9197
    %9863 = vmatpush1.bf16.msra.mxu0 %v9196
    %9864 = vmatprep.subr.bf16.mxu0 %v9201
    %9865 = vmatpush1.bf16.msra.mxu0 %v9200
    %9866 = vmatprep.subr.bf16.mxu0 %v9205
    %9867 = vmatpush1.bf16.msra.mxu0 %v9204
    %9868 = vmatprep.subr.bf16.mxu0 %v9209
    %9869 = vmatpush1.bf16.msra.mxu0 %v9208
    %9870 = vmatprep.subr.bf16.mxu0 %v9213
    %9871 = vmatpush1.bf16.msra.mxu0 %v9212
    %9872 = vmatprep.subr.bf16.mxu0 %v9217
    %9873 = vmatpush1.bf16.msra.mxu0 %v9216
    %9874 = vmatprep.subr.bf16.mxu0 %v9221
    %9875 = vmatpush1.bf16.msra.mxu0 %v9220
    %9876 = vmatprep.subr.bf16.mxu0 %v9225
    %9877 = vmatpush1.bf16.msra.mxu0 %v9224
    %9878 = vmatprep.subr.bf16.mxu0 %v9229
    %9879 = vmatpush1.bf16.msra.mxu0 %v9228
    %9880 = vmatprep.subr.bf16.mxu0 %v9233
    %9881 = vmatpush1.bf16.msra.mxu0 %v9232
    %9882 = vmatprep.subr.bf16.mxu0 %v9237
    %9883 = vmatpush1.bf16.msra.mxu0 %v9236
    %9884 = vmatprep.subr.bf16.mxu0 %v9241
    %9885 = vmatpush1.bf16.msra.mxu0 %v9240
    %9886 = vmatprep.mubr.bf16.mxu0 %v8146
    %9887 = vmatmul.mubr.bf16.gmra.mrb[0].mxu0 %v8145
    %v9888 = vpop.f32.mrb[0].mxu0
    %v9889 = vadd.f32 0.0, %v9888
    %v9890 = vpop.f32.mrb[0].mxu0
    %v9891 = vadd.f32 0.0, %v9890
    %v9892 = vpop.f32.mrb[0].mxu0
    %v9893 = vpop.f32.mrb[0].mxu0
    %9894 = vdwg.mxu0
    %9895 = vmatprep.subr.bf16.mxu0 %v9245
    %9896 = vmatpush1.bf16.msra.mxu0 %v9244
    %9897 = vmatprep.subr.bf16.mxu0 %v9249
    %9898 = vmatpush1.bf16.msra.mxu0 %v9248
    %9899 = vmatprep.subr.bf16.mxu0 %v9253
    %9900 = vmatpush1.bf16.msra.mxu0 %v9252
    %9901 = vmatprep.subr.bf16.mxu0 %v9257
    %9902 = vmatpush1.bf16.msra.mxu0 %v9256
    %9903 = vmatprep.subr.bf16.mxu0 %v9261
    %9904 = vmatpush1.bf16.msra.mxu0 %v9260
    %9905 = vmatprep.subr.bf16.mxu0 %v9265
    %9906 = vmatpush1.bf16.msra.mxu0 %v9264
    %9907 = vmatprep.subr.bf16.mxu0 %v9269
    %9908 = vmatpush1.bf16.msra.mxu0 %v9268
    %9909 = vmatprep.subr.bf16.mxu0 %v9273
    %9910 = vmatpush1.bf16.msra.mxu0 %v9272
    %9911 = vmatprep.subr.bf16.mxu0 %v9277
    %9912 = vmatpush1.bf16.msra.mxu0 %v9276
    %9913 = vmatprep.subr.bf16.mxu0 %v9281
    %9914 = vmatpush1.bf16.msra.mxu0 %v9280
    %9915 = vmatprep.subr.bf16.mxu0 %v9285
    %9916 = vmatpush1.bf16.msra.mxu0 %v9284
    %9917 = vmatprep.subr.bf16.mxu0 %v9289
    %9918 = vmatpush1.bf16.msra.mxu0 %v9288
    %9919 = vmatprep.subr.bf16.mxu0 %v9293
    %9920 = vmatpush1.bf16.msra.mxu0 %v9292
    %9921 = vmatprep.subr.bf16.mxu0 %v9297
    %9922 = vmatpush1.bf16.msra.mxu0 %v9296
    %9923 = vmatprep.subr.bf16.mxu0 %v9301
    %9924 = vmatpush1.bf16.msra.mxu0 %v9300
    %9925 = vmatprep.subr.bf16.mxu0 %v9305
    %9926 = vmatpush1.bf16.msra.mxu0 %v9304
    %9927 = vmatprep.mubr.bf16.mxu0 %v8148
    %9928 = vmatmul.mubr.bf16.gmra.mrb[0].mxu0 %v8147
    %v9929 = vpop.f32.mrb[0].mxu0
    %v9930 = vadd.f32 %v9889, %v9929
    %v9931 = vpop.f32.mrb[0].mxu0
    %v9932 = vadd.f32 %v9891, %v9931
    %v9933 = vpop.f32.mrb[0].mxu0
    %v9934 = vpop.f32.mrb[0].mxu0
    %9935 = vdwg.mxu0
    %9936 = vmatprep.subr.bf16.mxu0 %v9309
    %9937 = vmatpush1.bf16.msra.mxu0 %v9308
    %9938 = vmatprep.subr.bf16.mxu0 %v9313
    %9939 = vmatpush1.bf16.msra.mxu0 %v9312
    %9940 = vmatprep.subr.bf16.mxu0 %v9317
    %9941 = vmatpush1.bf16.msra.mxu0 %v9316
    %9942 = vmatprep.subr.bf16.mxu0 %v9321
    %9943 = vmatpush1.bf16.msra.mxu0 %v9320
    %9944 = vmatprep.subr.bf16.mxu0 %v9325
    %9945 = vmatpush1.bf16.msra.mxu0 %v9324
    %9946 = vmatprep.subr.bf16.mxu0 %v9329
    %9947 = vmatpush1.bf16.msra.mxu0 %v9328
    %9948 = vmatprep.subr.bf16.mxu0 %v9333
    %9949 = vmatpush1.bf16.msra.mxu0 %v9332
    %9950 = vmatprep.subr.bf16.mxu0 %v9337
    %9951 = vmatpush1.bf16.msra.mxu0 %v9336
    %9952 = vmatprep.subr.bf16.mxu0 %v9341
    %9953 = vmatpush1.bf16.msra.mxu0 %v9340
    %9954 = vmatprep.subr.bf16.mxu0 %v9345
    %9955 = vmatpush1.bf16.msra.mxu0 %v9344
    %9956 = vmatprep.subr.bf16.mxu0 %v9349
    %9957 = vmatpush1.bf16.msra.mxu0 %v9348
    %9958 = vmatprep.subr.bf16.mxu0 %v9353
    %9959 = vmatpush1.bf16.msra.mxu0 %v9352
    %9960 = vmatprep.subr.bf16.mxu0 %v9357
    %9961 = vmatpush1.bf16.msra.mxu0 %v9356
    %9962 = vmatprep.subr.bf16.mxu0 %v9361
    %9963 = vmatpush1.bf16.msra.mxu0 %v9360
    %9964 = vmatprep.subr.bf16.mxu0 %v9365
    %9965 = vmatpush1.bf16.msra.mxu0 %v9364
    %9966 = vmatprep.subr.bf16.mxu0 %v9369
    %9967 = vmatpush1.bf16.msra.mxu0 %v9368
    %9968 = vmatprep.mubr.bf16.mxu0 %v8150
    %9969 = vmatmul.mubr.bf16.gmra.mrb[0].mxu0 %v8149
    %v9970 = vpop.f32.mrb[0].mxu0
    %v9971 = vadd.f32 %v9930, %v9970
    %v9972 = vpop.f32.mrb[0].mxu0
    %v9973 = vadd.f32 %v9932, %v9972
    %v9974 = vpop.f32.mrb[0].mxu0
    %v9975 = vpop.f32.mrb[0].mxu0
    %9976 = vdwg.mxu0
    %9977 = vmatprep.subr.bf16.mxu0 %v9373
    %9978 = vmatpush1.bf16.msra.mxu0 %v9372
    %9979 = vmatprep.subr.bf16.mxu0 %v9377
    %9980 = vmatpush1.bf16.msra.mxu0 %v9376
    %9981 = vmatprep.subr.bf16.mxu0 %v9381
    %9982 = vmatpush1.bf16.msra.mxu0 %v9380
    %9983 = vmatprep.subr.bf16.mxu0 %v9385
    %9984 = vmatpush1.bf16.msra.mxu0 %v9384
    %9985 = vmatprep.subr.bf16.mxu0 %v9389
    %9986 = vmatpush1.bf16.msra.mxu0 %v9388
    %9987 = vmatprep.subr.bf16.mxu0 %v9393
    %9988 = vmatpush1.bf16.msra.mxu0 %v9392
    %9989 = vmatprep.subr.bf16.mxu0 %v9397
    %9990 = vmatpush1.bf16.msra.mxu0 %v9396
    %9991 = vmatprep.subr.bf16.mxu0 %v9401
    %9992 = vmatpush1.bf16.msra.mxu0 %v9400
    %9993 = vmatprep.subr.bf16.mxu0 %v9405
    %9994 = vmatpush1.bf16.msra.mxu0 %v9404
    %9995 = vmatprep.subr.bf16.mxu0 %v9409
    %9996 = vmatpush1.bf16.msra.mxu0 %v9408
    %9997 = vmatprep.subr.bf16.mxu0 %v9413
    %9998 = vmatpush1.bf16.msra.mxu0 %v9412
    %9999 = vmatprep.subr.bf16.mxu0 %v9417
    %10000 = vmatpush1.bf16.msra.mxu0 %v9416
    %10001 = vmatprep.subr.bf16.mxu0 %v9421
    %10002 = vmatpush1.bf16.msra.mxu0 %v9420
    %10003 = vmatprep.subr.bf16.mxu0 %v9425
    %10004 = vmatpush1.bf16.msra.mxu0 %v9424
    %10005 = vmatprep.subr.bf16.mxu0 %v9429
    %10006 = vmatpush1.bf16.msra.mxu0 %v9428
    %10007 = vmatprep.subr.bf16.mxu0 %v9433
    %10008 = vmatpush1.bf16.msra.mxu0 %v9432
    %10009 = vmatprep.mubr.bf16.mxu0 %v8152
    %10010 = vmatmul.mubr.bf16.gmra.mrb[0].mxu0 %v8151
    %v10011 = vpop.f32.mrb[0].mxu0
    %v10012 = vadd.f32 %v9971, %v10011
    %v10013 = vpop.f32.mrb[0].mxu0
    %v10014 = vadd.f32 %v9973, %v10013
    %v10015 = vpop.f32.mrb[0].mxu0
    %v10016 = vpop.f32.mrb[0].mxu0
    %10017 = vdwg.mxu0
    %v10018 = vadd.f32 %v8031, %v9848
    %v10019 = vadd.f32 %v8032, %v9850
    %v10020 = vadd.f32 %v8033, %v10012
    %v10021 = vadd.f32 %v8034, %v10014
    %v10022 = vld [vmem:[#allocation8] sm:$0xf]
    %v10024 = vlaneseq
    %v10025 = vshrl.u32 %v10024, 7
    %v10026 = vsub.s32 0, %v10025
    %v10027 = vrot.slane %v10022, %v10026
    %v10028 = vlaneseq
    %v10029 = vshrl.u32 %v10028, 7
    %v10030 = vsub.s32 1, %v10029
    %v10031 = vrot.slane %v10022, %v10030
    %v10032 = vlaneseq
    %v10033 = vshrl.u32 %v10032, 7
    %v10034 = vsub.s32 2, %v10033
    %v10035 = vrot.slane %v10022, %v10034
    %v10036 = vlaneseq
    %v10037 = vshrl.u32 %v10036, 7
    %v10038 = vsub.s32 3, %v10037
    %v10039 = vrot.slane %v10022, %v10038
    %v10044 = vadd.f32 %v10018, %v10027
    %v10045 = vadd.f32 %v10019, %v10031
    %v10046 = vadd.f32 %v10020, %v10035
    %v10047 = vadd.f32 %v10021, %v10039
    %v10048 = vtanh.pop %v10044
    %v10049 = vtanh.pop %v10045
    %v10050 = vtanh.pop %v10046
    %v10051 = vtanh.pop %v10047
    %v10052 = vld [vmem:[#allocation10] sm:$0xf]
    %v10054 = vlaneseq
    %v10055 = vshrl.u32 %v10054, 7
    %v10056 = vsub.s32 0, %v10055
    %v10057 = vrot.slane %v10052, %v10056
    %v10058 = vlaneseq
    %v10059 = vshrl.u32 %v10058, 7
    %v10060 = vsub.s32 1, %v10059
    %v10061 = vrot.slane %v10052, %v10060
    %v10062 = vlaneseq
    %v10063 = vshrl.u32 %v10062, 7
    %v10064 = vsub.s32 2, %v10063
    %v10065 = vrot.slane %v10052, %v10064
    %v10066 = vlaneseq
    %v10067 = vshrl.u32 %v10066, 7
    %v10068 = vsub.s32 3, %v10067
    %v10069 = vrot.slane %v10052, %v10068
    %v10074 = vmul.f32 %v10048, %v10057
    %v10075 = vmul.f32 %v10049, %v10061
    %v10076 = vmul.f32 %v10050, %v10065
    %v10077 = vmul.f32 %v10051, %v10069
    %v10078 = vadd.f32 %v10074, %v10075
    %v10079 = vadd.f32 %v10078, %v10076
    %v10080 = vadd.f32 %v10079, %v10077
    %10081 = vadd.xlane.f32.xlu0 %v10080
    %v10082 = vpop.xlane.xlu0 %10081
    %v10083 = vld [vmem:[#allocation2] sm:$0x1]
    %v10085 = vlaneseq
    %v10086 = vshrl.u32 %v10085, 7
    %v10087 = vsub.s32 0, %v10086
    %v10088 = vrot.slane %v10083, %v10087
    %v10090 = vadd.f32 %v10082, %v10088
    %vm10091 = vcmask 7168
    %10092 = vst.msk [vmem:[%s7] sm:$0xff] %vm10091, %v10090
    // Predicated region
    $region50: #{tpu_custom_call.1} parent=1 // pred_check
      _
    $region51: #{tpu_custom_call.1} parent=1 // pred_check_branch
      %10094 = sbr.rel (0) target = $region53
    $region52: #{tpu_custom_call.1} parent=1 // pred_region
      _
    $region53: #{tpu_custom_call.1} parent=1 // pred_fallthru
      _
    // Predicated region
    $region54: #{tpu_custom_call.1} parent=1 // pred_check
      _
    $region55: #{tpu_custom_call.1} parent=1 // pred_check_branch
      %10096 = sbr.rel (0) target = $region57
    $region56: #{tpu_custom_call.1} parent=1 // pred_region
      _
    $region57: #{tpu_custom_call.1} parent=1 // pred_fallthru
      _
    %10097 = vsyncpa [#allocation4], 1
    %10098 = vsyncpa [#allocation6], 1
    %10099 = vsyncpa [#allocation9], 1

</llo_original>
